<compile_context>
chip_gen: v7x
topology: tpu7x:2x2x1
jax: 0.10.0
libtpu: 0.0.40
codegen_flags: <defaults>
</compile_context>

<pallas_src>
import math

import jax
import jax.numpy as jnp
from jax import lax
from jax.experimental import pallas as pl
from jax.experimental.pallas import tpu as pltpu

BN_EPS = 1e-5
MXU_DTYPE = jnp.bfloat16           # MXU operand dtype (f32 accumulation)
ACT_DTYPE = jnp.bfloat16           # HBM dtype of conv intermediates y1 / y2
_VMEM_LIMIT = 48 * 1024 * 1024     # below v7x's 64 MiB physical VMEM


# ----------------------------- Pallas kernels ------------------------------ #

def _make_conv_kernel(h, w, c, fuse_bn_relu):
    """conv3x3 (SAME, no bias) on one image tile, optionally with a fused
    BN-affine + ReLU applied to the input tile first, emitting per-image
    per-channel sum / sum-of-squares partials for the following BatchNorm."""

    def kernel(x_ref, w_ref, *rest):
        if fuse_bn_relu:
            scale_ref, shift_ref, y_ref, sum_ref, ssq_ref = rest
        else:
            y_ref, sum_ref, ssq_ref = rest

        # --- input stage: (optional) BN1 affine + ReLU on the interior only ---
        xf = x_ref[...].astype(jnp.float32).reshape(h * w, c)
        if fuse_bn_relu:
            xf = jnp.maximum(xf * scale_ref[...] + shift_ref[...], 0.0)
        xf = xf.reshape(h, w, c)

        # --- zero halo written AFTER the affine: exact SAME padding ---
        zrow = jnp.zeros((1, w, c), jnp.float32)
        zcol = jnp.zeros((h + 2, 1, c), jnp.float32)
        xp = jnp.concatenate([zrow, xf, zrow], axis=0)        # (h+2, w,   c)
        xp = jnp.concatenate([zcol, xp, zcol], axis=1)        # (h+2, w+2, c)

        # --- im2col in VMEM: one K = 9*Cin matmul instead of 9 K = Cin matmuls ---
        cols = [xp[kh:kh + h, kw:kw + w, :]
                for kh in range(3) for kw in range(3)]
        patches = jnp.concatenate(cols, axis=-1).reshape(h * w, 9 * c)
        patches = patches.astype(MXU_DTYPE)                   # bf16 MXU operand

        acc = jnp.dot(patches, w_ref[...],                    # (h*w, cout) f32
                      preferred_element_type=jnp.float32)

        # --- outputs: bf16 activation + f32 batch-stat partials (this image) ---
        y_ref[...] = acc.astype(y_ref.dtype)
        sum_ref[...] = jnp.sum(acc, axis=0, keepdims=True)
        ssq_ref[...] = jnp.sum(acc * acc, axis=0, keepdims=True)

    return kernel


def bn_residual_kernel(y_ref, scale_ref, shift_ref, res_ref, o_ref):
    """Elementwise y*scale + shift + residual on a lane-dense (tr, L) slab."""
    y = y_ref[...].astype(jnp.float32)        # f32 VPU math (v5e has no bf16 VPU)
    o = y * scale_ref[...] + shift_ref[...] + res_ref[...].astype(jnp.float32)
    o_ref[...] = o.astype(o_ref.dtype)


# ------------------------------ pallas_call glue ---------------------------- #

def _conv3x3_stats(x_nhwc, w_flat, scale=None, shift=None):
    """3x3 SAME conv (no bias), optional fused input BN-affine+ReLU, plus
    per-channel batch sum / sum-of-squares.  Grid over the batch, 'parallel'."""
    n, h, w, c = x_nhwc.shape
    cout = w_flat.shape[1]
    fuse = scale is not None

    in_specs = [
        pl.BlockSpec((None, h, w, c), lambda i: (i, 0, 0, 0)),
        pl.BlockSpec((9 * c, cout), lambda i: (0, 0)),
    ]
    args = [x_nhwc, w_flat]
    if fuse:
        in_specs += [pl.BlockSpec((1, c), lambda i: (0, 0)),
                     pl.BlockSpec((1, c), lambda i: (0, 0))]
        args += [scale.reshape(1, c).astype(jnp.float32),
                 shift.reshape(1, c).astype(jnp.float32)]

    flops = 2 * n * h * w * 9 * c * cout
    bytes_accessed = int(
        n * h * w * c * jnp.dtype(x_nhwc.dtype).itemsize
        + w_flat.size * jnp.dtype(w_flat.dtype).itemsize
        + n * h * w * cout * jnp.dtype(ACT_DTYPE).itemsize
        + 2 * n * cout * 4)

    y, s, q = pl.pallas_call(
        _make_conv_kernel(h, w, c, fuse),
        out_shape=(
            jax.ShapeDtypeStruct((n, h * w, cout), ACT_DTYPE),
            jax.ShapeDtypeStruct((n, 1, cout), jnp.float32),   # per-step sum
            jax.ShapeDtypeStruct((n, 1, cout), jnp.float32),   # per-step sumsq
        ),
        grid_spec=pltpu.PrefetchScalarGridSpec(
            num_scalar_prefetch=0,
            grid=(n,),
            in_specs=in_specs,
            out_specs=(
                pl.BlockSpec((None, h * w, cout), lambda i: (i, 0, 0)),
                pl.BlockSpec((None, 1, cout), lambda i: (i, 0, 0)),
                pl.BlockSpec((None, 1, cout), lambda i: (i, 0, 0)),
            ),
        ),
        compiler_params=pltpu.CompilerParams(
            # Per-step partial stats -> no resident accumulator -> parallel grid
            # (both TensorCores on v7x; no-op on v5e/v6e).
            dimension_semantics=("parallel",),
            vmem_limit_bytes=_VMEM_LIMIT,
        ),
        cost_estimate=pl.CostEstimate(flops=flops, transcendentals=0,
                                      bytes_accessed=bytes_accessed),
    )(*args)
    # Tiny partial reduction in JAX glue.
    return y, jnp.sum(s, axis=0)[0], jnp.sum(q, axis=0)[0]


def _pick_lanes(total, c, max_lanes=4096):
    """Largest L <= max_lanes dividing `total` that is a multiple of 128 and C."""
    base = 128 * c // math.gcd(128, c)          # lcm(128, c)
    if total % base != 0:
        return None
    best = base
    k = 2
    while k * base <= min(total, max_lanes):
        if total % (k * base) == 0:
            best = k * base
        k += 1
    return best


def _pick_row_tile(rows, lanes, target_bytes=2 << 20):
    """Row-tile that keeps per-stream blocks around target_bytes (multiple of 8)."""
    target = max(8, target_bytes // (4 * lanes))
    if rows <= target:
        return rows
    t = int(target) - int(target) % 8
    while t >= 8:
        if rows % t == 0:
            return t
        t -= 8
    return rows


def _bn_residual(y2d, scale_row, shift_row, res2d):
    """out = y*scale + shift + residual on a lane-dense (rows, L) view."""
    rows, lanes = y2d.shape
    tr = _pick_row_tile(rows, lanes)

    return pl.pallas_call(
        bn_residual_kernel,
        out_shape=jax.ShapeDtypeStruct((rows, lanes), jnp.float32),
        grid_spec=pltpu.PrefetchScalarGridSpec(
            num_scalar_prefetch=0,
            grid=(rows // tr,),
            in_specs=[
                pl.BlockSpec((tr, lanes), lambda i: (i, 0)),
                pl.BlockSpec((1, lanes), lambda i: (0, 0)),
                pl.BlockSpec((1, lanes), lambda i: (0, 0)),
                pl.BlockSpec((tr, lanes), lambda i: (i, 0)),
            ],
            out_specs=pl.BlockSpec((tr, lanes), lambda i: (i, 0)),
        ),
        compiler_params=pltpu.CompilerParams(
            dimension_semantics=("parallel",),
            vmem_limit_bytes=_VMEM_LIMIT,
        ),
        cost_estimate=pl.CostEstimate(
            flops=3 * y2d.size, transcendentals=0,
            bytes_accessed=int(y2d.size * jnp.dtype(y2d.dtype).itemsize
                               + res2d.size * 4 + rows * lanes * 4
                               + 2 * 4 * lanes)),
    )(y2d, scale_row, shift_row, res2d)


# ------------------------------- JAX wrapper -------------------------------- #

def _weight_to_mat(w_oihw):
    """PyTorch Conv2d weight (Cout, Cin, 3, 3) -> (9*Cin, Cout), tap-major, bf16."""
    cout, cin, kh, kw = w_oihw.shape
    return (jnp.transpose(w_oihw, (2, 3, 1, 0))
            .reshape(kh * kw * cin, cout).astype(MXU_DTYPE))


def _bn_scale_shift(s, q, m, gamma, beta):
    """Fold BN (training mode, biased batch stats) into per-channel scale/shift."""
    mean = s / m
    var = q / m - mean * mean
    scale = gamma * lax.rsqrt(var + BN_EPS)
    shift = beta - mean * scale
    return scale, shift


def res_block_forward(x_nchw, params):
    """x + block(x), block = Conv3x3 -> BN -> ReLU -> Conv3x3 -> BN (train-mode BN).

    Conv biases are omitted inside the kernels: BatchNorm subtracts the batch
    mean right after each conv, which cancels a per-channel bias exactly.
    """
    n, c, h, w = x_nchw.shape
    x = jnp.transpose(x_nchw, (0, 2, 3, 1))               # NCHW -> NHWC, f32
    m = n * h * w

    w1 = _weight_to_mat(params["w1"])
    w2 = _weight_to_mat(params["w2"])

    # --- conv1 (+ batch stats); fold BN1 into a per-channel scale/shift ---
    y1, s1, q1 = _conv3x3_stats(x, w1)                    # y1: (n, h*w, c) bf16
    scale1, shift1 = _bn_scale_shift(s1, q1, m, params["g1"], params["be1"])

    # --- conv2 with BN1+ReLU fused into its prologue (+ batch stats) ---
    y2, s2, q2 = _conv3x3_stats(y1.reshape(n, h, w, c), w2, scale1, shift1)
    scale2, shift2 = _bn_scale_shift(s2, q2, m, params["g2"], params["be2"])

    # --- BN2 apply + residual add on a lane-dense view ---
    total = n * h * w * c
    lanes = _pick_lanes(total, c)
    if lanes is None:                                     # fallback: W*C lanes
        lanes = w * c
    rows = total // lanes
    out2d = _bn_residual(
        y2.reshape(rows, lanes),
        jnp.tile(scale2, lanes // c)[None, :].astype(jnp.float32),
        jnp.tile(shift2, lanes // c)[None, :].astype(jnp.float32),
        x.reshape(rows, lanes),
    )
    out = out2d.reshape(n, h, w, c)
    return jnp.transpose(out, (0, 3, 1, 2))               # NHWC -> NCHW


# --------------------------- pure-JAX reference ----------------------------- #

def _ref_conv_bn(x_nhwc, w_oihw, b, g, be, relu):
    y = lax.conv_general_dilated(
        x_nhwc.astype(jnp.float32), w_oihw.astype(jnp.float32),
        window_strides=(1, 1), padding="SAME",
        dimension_numbers=("NHWC", "OIHW", "NHWC")) + b
    mean = y.mean(axis=(0, 1, 2))
    var = ((y - mean) ** 2).mean(axis=(0, 1, 2))
    y = (y - mean) / jnp.sqrt(var + BN_EPS) * g + be
    return jnp.maximum(y, 0.0) if relu else y


def res_block_reference(x_nchw, params):
    x = jnp.transpose(x_nchw, (0, 2, 3, 1)).astype(jnp.float32)
    h = _ref_conv_bn(x, params["w1"], params["b1"], params["g1"], params["be1"], True)
    y = _ref_conv_bn(h, params["w2"], params["b2"], params["g2"], params["be2"], False)
    return jnp.transpose(x + y, (0, 3, 1, 2))


# ----------------------------------- main ----------------------------------- #

if __name__ == "__main__":
    N, C, H, W = 2, 4, 16, 16
    key = jax.random.PRNGKey(0)
    ks = jax.random.split(key, 9)

    x = jax.random.normal(ks[0], (N, C, H, W), jnp.float32)

    fan_in = C * 3 * 3
    bound = 1.0 / jnp.sqrt(jnp.float32(fan_in))
    params = {
        # Conv2d weights/biases in PyTorch layout (Cout, Cin, KH, KW) / (Cout,).
        "w1": jax.random.uniform(ks[1], (C, C, 3, 3), jnp.float32, -bound, bound),
        "b1": jax.random.uniform(ks[2], (C,), jnp.float32, -bound, bound),
        "w2": jax.random.uniform(ks[3], (C, C, 3, 3), jnp.float32, -bound, bound),
        "b2": jax.random.uniform(ks[4], (C,), jnp.float32, -bound, bound),
        # BatchNorm affine params.
        "g1": 1.0 + 0.1 * jax.random.normal(ks[5], (C,), jnp.float32),
        "be1": 0.1 * jax.random.normal(ks[6], (C,), jnp.float32),
        "g2": 1.0 + 0.1 * jax.random.normal(ks[7], (C,), jnp.float32),
        "be2": 0.1 * jax.random.normal(ks[8], (C,), jnp.float32),
    }

    out = jax.block_until_ready(jax.jit(res_block_forward)(x, params))
    ref = jax.block_until_ready(res_block_reference(x, params))

    assert out.shape == (N, C, H, W)
    # bf16 MXU operands + bf16 HBM intermediates (f32 accumulation/stats):
    # expected max |err| ~1e-2 at unit-scale activations -> bf16-appropriate tol.
    assert jnp.allclose(out, ref, atol=3e-2, rtol=3e-2), \
        float(jnp.max(jnp.abs(out - ref)))

    print("KERNEL_OK")
</pallas_src>

<mosaic_0001>
module attributes {stable_mosaic.version = 11 : i64} {
  func.func @kernel(%arg0: i32, %arg1: memref<1x16x16x4xf32, #tpu.memory_space<vmem>>, %arg2: memref<36x4xbf16, #tpu.memory_space<vmem>>, %arg3: memref<1x256x4xbf16, #tpu.memory_space<vmem>>, %arg4: memref<1x1x4xf32, #tpu.memory_space<vmem>>, %arg5: memref<1x1x4xf32, #tpu.memory_space<vmem>>) attributes {dimension_semantics = [#tpu.dimension_semantics<parallel>], iteration_bounds = array<i64: 2>, scalar_prefetch = 0 : i64, scratch_operands = 0 : i64, tpu.core_type = #tpu.core_type<tc>, window_params = [{transform_indices = @transform_0, window_bounds = array<i64: 1, 16, 16, 4>}, {pipeline_mode = #tpu.pipeline_mode<synchronous>, transform_indices = @transform_1, window_bounds = array<i64: 36, 4>}, {transform_indices = @transform_2, window_bounds = array<i64: 1, 256, 4>}, {transform_indices = @transform_3, window_bounds = array<i64: 1, 1, 4>}, {transform_indices = @transform_4, window_bounds = array<i64: 1, 1, 4>}]} {
    %c0 = arith.constant 0 : index
    %c0_0 = arith.constant 0 : index
    %c0_1 = arith.constant 0 : index
    %c0_2 = arith.constant 0 : index
    %0 = vector.load %arg1[%c0, %c0_0, %c0_1, %c0_2] : memref<1x16x16x4xf32, #tpu.memory_space<vmem>>, vector<1x16x16x4xf32>
    %1 = vector.shape_cast %0 : vector<1x16x16x4xf32> to vector<16x16x4xf32>
    %2 = vector.shape_cast %1 : vector<16x16x4xf32> to vector<256x4xf32>
    %3 = vector.shape_cast %2 : vector<256x4xf32> to vector<16x16x4xf32>
    %cst = arith.constant 0.000000e+00 : f32
    %4 = vector.broadcast %cst : f32 to vector<1x16x4xf32>
    %cst_3 = arith.constant 0.000000e+00 : f32
    %5 = vector.broadcast %cst_3 : f32 to vector<18x1x4xf32>
    %6 = tpu.concatenate %4, %3, %4 in 0 : vector<1x16x4xf32>, vector<16x16x4xf32>, vector<1x16x4xf32> -> vector<18x16x4xf32>
    %7 = tpu.concatenate %5, %6, %5 in 1 : vector<18x1x4xf32>, vector<18x16x4xf32>, vector<18x1x4xf32> -> vector<18x18x4xf32>
    %8 = vector.extract_strided_slice %7 {offsets = [0, 0, 0], sizes = [16, 16, 4], strides = [1, 1, 1]} : vector<18x18x4xf32> to vector<16x16x4xf32>
    %9 = vector.extract_strided_slice %7 {offsets = [0, 1, 0], sizes = [16, 16, 4], strides = [1, 1, 1]} : vector<18x18x4xf32> to vector<16x16x4xf32>
    %10 = vector.extract_strided_slice %7 {offsets = [0, 2, 0], sizes = [16, 16, 4], strides = [1, 1, 1]} : vector<18x18x4xf32> to vector<16x16x4xf32>
    %11 = vector.extract_strided_slice %7 {offsets = [1, 0, 0], sizes = [16, 16, 4], strides = [1, 1, 1]} : vector<18x18x4xf32> to vector<16x16x4xf32>
    %12 = vector.extract_strided_slice %7 {offsets = [1, 1, 0], sizes = [16, 16, 4], strides = [1, 1, 1]} : vector<18x18x4xf32> to vector<16x16x4xf32>
    %13 = vector.extract_strided_slice %7 {offsets = [1, 2, 0], sizes = [16, 16, 4], strides = [1, 1, 1]} : vector<18x18x4xf32> to vector<16x16x4xf32>
    %14 = vector.extract_strided_slice %7 {offsets = [2, 0, 0], sizes = [16, 16, 4], strides = [1, 1, 1]} : vector<18x18x4xf32> to vector<16x16x4xf32>
    %15 = vector.extract_strided_slice %7 {offsets = [2, 1, 0], sizes = [16, 16, 4], strides = [1, 1, 1]} : vector<18x18x4xf32> to vector<16x16x4xf32>
    %16 = vector.extract_strided_slice %7 {offsets = [2, 2, 0], sizes = [16, 16, 4], strides = [1, 1, 1]} : vector<18x18x4xf32> to vector<16x16x4xf32>
    %17 = tpu.concatenate %8, %9, %10, %11, %12, %13, %14, %15, %16 in 2 : vector<16x16x4xf32>, vector<16x16x4xf32>, vector<16x16x4xf32>, vector<16x16x4xf32>, vector<16x16x4xf32>, vector<16x16x4xf32>, vector<16x16x4xf32>, vector<16x16x4xf32>, vector<16x16x4xf32> -> vector<16x16x36xf32>
    %18 = vector.shape_cast %17 : vector<16x16x36xf32> to vector<256x36xf32>
    %19 = arith.truncf %18 : vector<256x36xf32> to vector<256x36xbf16>
    %c0_4 = arith.constant 0 : index
    %c0_5 = arith.constant 0 : index
    %20 = vector.load %arg2[%c0_4, %c0_5] : memref<36x4xbf16, #tpu.memory_space<vmem>>, vector<36x4xbf16>
    %cst_6 = arith.constant dense<0.000000e+00> : vector<256x4xf32>
    %21 = tpu.matmul %19, %20, %cst_6 {dimension_numbers = #tpu.dot_dimension_numbers<[1], [0], [0], [1], [0, 0, 1, 1], [], []>} : vector<256x36xbf16>, vector<36x4xbf16>, vector<256x4xf32> -> vector<256x4xf32>
    %22 = arith.truncf %21 : vector<256x4xf32> to vector<256x4xbf16>
    %c0_7 = arith.constant 0 : index
    %c0_8 = arith.constant 0 : index
    %c0_9 = arith.constant 0 : index
    %23 = vector.load %arg3[%c0_7, %c0_8, %c0_9] : memref<1x256x4xbf16, #tpu.memory_space<vmem>>, vector<1x256x4xbf16>
    %24 = vector.shape_cast %23 : vector<1x256x4xbf16> to vector<256x4xbf16>
    %25 = vector.shape_cast %22 : vector<256x4xbf16> to vector<1x256x4xbf16>
    tpu.vector_store %arg3[%c0_7, %c0_8, %c0_9], %25 {strides = array<i32>} : memref<1x256x4xbf16, #tpu.memory_space<vmem>>, vector<1x256x4xbf16>,
    %cst_10 = arith.constant dense<0.000000e+00> : vector<4xf32>
    %26 = vector.multi_reduction <add>, %21, %cst_10 [0] : vector<256x4xf32> to vector<4xf32>
    %27 = vector.shape_cast %26 : vector<4xf32> to vector<1x4xf32>
    %c0_11 = arith.constant 0 : index
    %c0_12 = arith.constant 0 : index
    %c0_13 = arith.constant 0 : index
    %28 = vector.load %arg4[%c0_11, %c0_12, %c0_13] : memref<1x1x4xf32, #tpu.memory_space<vmem>>, vector<1x1x4xf32>
    %29 = vector.shape_cast %28 : vector<1x1x4xf32> to vector<1x4xf32>
    %30 = vector.shape_cast %27 : vector<1x4xf32> to vector<1x1x4xf32>
    tpu.vector_store %arg4[%c0_11, %c0_12, %c0_13], %30 {strides = array<i32>} : memref<1x1x4xf32, #tpu.memory_space<vmem>>, vector<1x1x4xf32>,
    %31 = arith.mulf %21, %21 : vector<256x4xf32>
    %cst_14 = arith.constant dense<0.000000e+00> : vector<4xf32>
    %32 = vector.multi_reduction <add>, %31, %cst_14 [0] : vector<256x4xf32> to vector<4xf32>
    %33 = vector.shape_cast %32 : vector<4xf32> to vector<1x4xf32>
    %c0_15 = arith.constant 0 : index
    %c0_16 = arith.constant 0 : index
    %c0_17 = arith.constant 0 : index
    %34 = vector.load %arg5[%c0_15, %c0_16, %c0_17] : memref<1x1x4xf32, #tpu.memory_space<vmem>>, vector<1x1x4xf32>
    %35 = vector.shape_cast %34 : vector<1x1x4xf32> to vector<1x4xf32>
    %36 = vector.shape_cast %33 : vector<1x4xf32> to vector<1x1x4xf32>
    tpu.vector_store %arg5[%c0_15, %c0_16, %c0_17], %36 {strides = array<i32>} : memref<1x1x4xf32, #tpu.memory_space<vmem>>, vector<1x1x4xf32>,
    return
  }
  func.func @transform_0(%arg0: i32) -> (i32, i32, i32, i32) {
    %c0_i32 = arith.constant 0 : i32
    %c0_i32_0 = arith.constant 0 : i32
    %c0_i32_1 = arith.constant 0 : i32
    %c0_i32_2 = arith.constant 0 : i32
    return %arg0, %c0_i32, %c0_i32_0, %c0_i32_1 : i32, i32, i32, i32
  }
  func.func @transform_1(%arg0: i32) -> (i32, i32) {
    %c0_i32 = arith.constant 0 : i32
    %c0_i32_0 = arith.constant 0 : i32
    %c0_i32_1 = arith.constant 0 : i32
    return %c0_i32, %c0_i32_0 : i32, i32
  }
  func.func @transform_2(%arg0: i32) -> (i32, i32, i32) {
    %c0_i32 = arith.constant 0 : i32
    %c0_i32_0 = arith.constant 0 : i32
    %c0_i32_1 = arith.constant 0 : i32
    return %arg0, %c0_i32, %c0_i32_0 : i32, i32, i32
  }
  func.func @transform_3(%arg0: i32) -> (i32, i32, i32) {
    %c0_i32 = arith.constant 0 : i32
    %c0_i32_0 = arith.constant 0 : i32
    %c0_i32_1 = arith.constant 0 : i32
    return %arg0, %c0_i32, %c0_i32_0 : i32, i32, i32
  }
  func.func @transform_4(%arg0: i32) -> (i32, i32, i32) {
    %c0_i32 = arith.constant 0 : i32
    %c0_i32_0 = arith.constant 0 : i32
    %c0_i32_1 = arith.constant 0 : i32
    return %arg0, %c0_i32, %c0_i32_0 : i32, i32, i32
  }
}

module attributes {stable_mosaic.version = 11 : i64} {
  func.func @kernel(%arg0: i32, %arg1: memref<1x16x16x4xbf16, #tpu.memory_space<vmem>>, %arg2: memref<36x4xbf16, #tpu.memory_space<vmem>>, %arg3: memref<1x4xf32, #tpu.memory_space<vmem>>, %arg4: memref<1x4xf32, #tpu.memory_space<vmem>>, %arg5: memref<1x256x4xbf16, #tpu.memory_space<vmem>>, %arg6: memref<1x1x4xf32, #tpu.memory_space<vmem>>, %arg7: memref<1x1x4xf32, #tpu.memory_space<vmem>>) attributes {dimension_semantics = [#tpu.dimension_semantics<parallel>], iteration_bounds = array<i64: 2>, scalar_prefetch = 0 : i64, scratch_operands = 0 : i64, tpu.core_type = #tpu.core_type<tc>, window_params = [{transform_indices = @transform_0, window_bounds = array<i64: 1, 16, 16, 4>}, {pipeline_mode = #tpu.pipeline_mode<synchronous>, transform_indices = @transform_1, window_bounds = array<i64: 36, 4>}, {pipeline_mode = #tpu.pipeline_mode<synchronous>, transform_indices = @transform_2, window_bounds = array<i64: 1, 4>}, {pipeline_mode = #tpu.pipeline_mode<synchronous>, transform_indices = @transform_3, window_bounds = array<i64: 1, 4>}, {transform_indices = @transform_4, window_bounds = array<i64: 1, 256, 4>}, {transform_indices = @transform_5, window_bounds = array<i64: 1, 1, 4>}, {transform_indices = @transform_6, window_bounds = array<i64: 1, 1, 4>}]} {
    %c0 = arith.constant 0 : index
    %c0_0 = arith.constant 0 : index
    %c0_1 = arith.constant 0 : index
    %c0_2 = arith.constant 0 : index
    %0 = vector.load %arg1[%c0, %c0_0, %c0_1, %c0_2] : memref<1x16x16x4xbf16, #tpu.memory_space<vmem>>, vector<1x16x16x4xbf16>
    %1 = vector.shape_cast %0 : vector<1x16x16x4xbf16> to vector<16x16x4xbf16>
    %2 = arith.extf %1 : vector<16x16x4xbf16> to vector<16x16x4xf32>
    %3 = vector.shape_cast %2 : vector<16x16x4xf32> to vector<256x4xf32>
    %c0_3 = arith.constant 0 : index
    %c0_4 = arith.constant 0 : index
    %4 = vector.load %arg3[%c0_3, %c0_4] : memref<1x4xf32, #tpu.memory_space<vmem>>, vector<1x4xf32>
    %5 = vector.broadcast %4 : vector<1x4xf32> to vector<256x4xf32>
    %6 = arith.mulf %3, %5 : vector<256x4xf32>
    %c0_5 = arith.constant 0 : index
    %c0_6 = arith.constant 0 : index
    %7 = vector.load %arg4[%c0_5, %c0_6] : memref<1x4xf32, #tpu.memory_space<vmem>>, vector<1x4xf32>
    %8 = vector.broadcast %7 : vector<1x4xf32> to vector<256x4xf32>
    %9 = arith.addf %6, %8 : vector<256x4xf32>
    %cst = arith.constant 0.000000e+00 : f32
    %10 = vector.broadcast %cst : f32 to vector<256x4xf32>
    %11 = arith.maximumf %9, %10 : vector<256x4xf32>
    %12 = vector.shape_cast %11 : vector<256x4xf32> to vector<16x16x4xf32>
    %cst_7 = arith.constant 0.000000e+00 : f32
    %13 = vector.broadcast %cst_7 : f32 to vector<1x16x4xf32>
    %cst_8 = arith.constant 0.000000e+00 : f32
    %14 = vector.broadcast %cst_8 : f32 to vector<18x1x4xf32>
    %15 = tpu.concatenate %13, %12, %13 in 0 : vector<1x16x4xf32>, vector<16x16x4xf32>, vector<1x16x4xf32> -> vector<18x16x4xf32>
    %16 = tpu.concatenate %14, %15, %14 in 1 : vector<18x1x4xf32>, vector<18x16x4xf32>, vector<18x1x4xf32> -> vector<18x18x4xf32>
    %17 = vector.extract_strided_slice %16 {offsets = [0, 0, 0], sizes = [16, 16, 4], strides = [1, 1, 1]} : vector<18x18x4xf32> to vector<16x16x4xf32>
    %18 = vector.extract_strided_slice %16 {offsets = [0, 1, 0], sizes = [16, 16, 4], strides = [1, 1, 1]} : vector<18x18x4xf32> to vector<16x16x4xf32>
    %19 = vector.extract_strided_slice %16 {offsets = [0, 2, 0], sizes = [16, 16, 4], strides = [1, 1, 1]} : vector<18x18x4xf32> to vector<16x16x4xf32>
    %20 = vector.extract_strided_slice %16 {offsets = [1, 0, 0], sizes = [16, 16, 4], strides = [1, 1, 1]} : vector<18x18x4xf32> to vector<16x16x4xf32>
    %21 = vector.extract_strided_slice %16 {offsets = [1, 1, 0], sizes = [16, 16, 4], strides = [1, 1, 1]} : vector<18x18x4xf32> to vector<16x16x4xf32>
    %22 = vector.extract_strided_slice %16 {offsets = [1, 2, 0], sizes = [16, 16, 4], strides = [1, 1, 1]} : vector<18x18x4xf32> to vector<16x16x4xf32>
    %23 = vector.extract_strided_slice %16 {offsets = [2, 0, 0], sizes = [16, 16, 4], strides = [1, 1, 1]} : vector<18x18x4xf32> to vector<16x16x4xf32>
    %24 = vector.extract_strided_slice %16 {offsets = [2, 1, 0], sizes = [16, 16, 4], strides = [1, 1, 1]} : vector<18x18x4xf32> to vector<16x16x4xf32>
    %25 = vector.extract_strided_slice %16 {offsets = [2, 2, 0], sizes = [16, 16, 4], strides = [1, 1, 1]} : vector<18x18x4xf32> to vector<16x16x4xf32>
    %26 = tpu.concatenate %17, %18, %19, %20, %21, %22, %23, %24, %25 in 2 : vector<16x16x4xf32>, vector<16x16x4xf32>, vector<16x16x4xf32>, vector<16x16x4xf32>, vector<16x16x4xf32>, vector<16x16x4xf32>, vector<16x16x4xf32>, vector<16x16x4xf32>, vector<16x16x4xf32> -> vector<16x16x36xf32>
    %27 = vector.shape_cast %26 : vector<16x16x36xf32> to vector<256x36xf32>
    %28 = arith.truncf %27 : vector<256x36xf32> to vector<256x36xbf16>
    %c0_9 = arith.constant 0 : index
    %c0_10 = arith.constant 0 : index
    %29 = vector.load %arg2[%c0_9, %c0_10] : memref<36x4xbf16, #tpu.memory_space<vmem>>, vector<36x4xbf16>
    %cst_11 = arith.constant dense<0.000000e+00> : vector<256x4xf32>
    %30 = tpu.matmul %28, %29, %cst_11 {dimension_numbers = #tpu.dot_dimension_numbers<[1], [0], [0], [1], [0, 0, 1, 1], [], []>} : vector<256x36xbf16>, vector<36x4xbf16>, vector<256x4xf32> -> vector<256x4xf32>
    %31 = arith.truncf %30 : vector<256x4xf32> to vector<256x4xbf16>
    %c0_12 = arith.constant 0 : index
    %c0_13 = arith.constant 0 : index
    %c0_14 = arith.constant 0 : index
    %32 = vector.load %arg5[%c0_12, %c0_13, %c0_14] : memref<1x256x4xbf16, #tpu.memory_space<vmem>>, vector<1x256x4xbf16>
    %33 = vector.shape_cast %32 : vector<1x256x4xbf16> to vector<256x4xbf16>
    %34 = vector.shape_cast %31 : vector<256x4xbf16> to vector<1x256x4xbf16>
    tpu.vector_store %arg5[%c0_12, %c0_13, %c0_14], %34 {strides = array<i32>} : memref<1x256x4xbf16, #tpu.memory_space<vmem>>, vector<1x256x4xbf16>,
    %cst_15 = arith.constant dense<0.000000e+00> : vector<4xf32>
    %35 = vector.multi_reduction <add>, %30, %cst_15 [0] : vector<256x4xf32> to vector<4xf32>
    %36 = vector.shape_cast %35 : vector<4xf32> to vector<1x4xf32>
    %c0_16 = arith.constant 0 : index
    %c0_17 = arith.constant 0 : index
    %c0_18 = arith.constant 0 : index
    %37 = vector.load %arg6[%c0_16, %c0_17, %c0_18] : memref<1x1x4xf32, #tpu.memory_space<vmem>>, vector<1x1x4xf32>
    %38 = vector.shape_cast %37 : vector<1x1x4xf32> to vector<1x4xf32>
    %39 = vector.shape_cast %36 : vector<1x4xf32> to vector<1x1x4xf32>
    tpu.vector_store %arg6[%c0_16, %c0_17, %c0_18], %39 {strides = array<i32>} : memref<1x1x4xf32, #tpu.memory_space<vmem>>, vector<1x1x4xf32>,
    %40 = arith.mulf %30, %30 : vector<256x4xf32>
    %cst_19 = arith.constant dense<0.000000e+00> : vector<4xf32>
    %41 = vector.multi_reduction <add>, %40, %cst_19 [0] : vector<256x4xf32> to vector<4xf32>
    %42 = vector.shape_cast %41 : vector<4xf32> to vector<1x4xf32>
    %c0_20 = arith.constant 0 : index
    %c0_21 = arith.constant 0 : index
    %c0_22 = arith.constant 0 : index
    %43 = vector.load %arg7[%c0_20, %c0_21, %c0_22] : memref<1x1x4xf32, #tpu.memory_space<vmem>>, vector<1x1x4xf32>
    %44 = vector.shape_cast %43 : vector<1x1x4xf32> to vector<1x4xf32>
    %45 = vector.shape_cast %42 : vector<1x4xf32> to vector<1x1x4xf32>
    tpu.vector_store %arg7[%c0_20, %c0_21, %c0_22], %45 {strides = array<i32>} : memref<1x1x4xf32, #tpu.memory_space<vmem>>, vector<1x1x4xf32>,
    return
  }
  func.func @transform_0(%arg0: i32) -> (i32, i32, i32, i32) {
    %c0_i32 = arith.constant 0 : i32
    %c0_i32_0 = arith.constant 0 : i32
    %c0_i32_1 = arith.constant 0 : i32
    %c0_i32_2 = arith.constant 0 : i32
    return %arg0, %c0_i32, %c0_i32_0, %c0_i32_1 : i32, i32, i32, i32
  }
  func.func @transform_1(%arg0: i32) -> (i32, i32) {
    %c0_i32 = arith.constant 0 : i32
    %c0_i32_0 = arith.constant 0 : i32
    %c0_i32_1 = arith.constant 0 : i32
    return %c0_i32, %c0_i32_0 : i32, i32
  }
  func.func @transform_2(%arg0: i32) -> (i32, i32) {
    %c0_i32 = arith.constant 0 : i32
    %c0_i32_0 = arith.constant 0 : i32
    %c0_i32_1 = arith.constant 0 : i32
    return %c0_i32, %c0_i32_0 : i32, i32
  }
  func.func @transform_3(%arg0: i32) -> (i32, i32) {
    %c0_i32 = arith.constant 0 : i32
    %c0_i32_0 = arith.constant 0 : i32
    %c0_i32_1 = arith.constant 0 : i32
    return %c0_i32, %c0_i32_0 : i32, i32
  }
  func.func @transform_4(%arg0: i32) -> (i32, i32, i32) {
    %c0_i32 = arith.constant 0 : i32
    %c0_i32_0 = arith.constant 0 : i32
    %c0_i32_1 = arith.constant 0 : i32
    return %arg0, %c0_i32, %c0_i32_0 : i32, i32, i32
  }
  func.func @transform_5(%arg0: i32) -> (i32, i32, i32) {
    %c0_i32 = arith.constant 0 : i32
    %c0_i32_0 = arith.constant 0 : i32
    %c0_i32_1 = arith.constant 0 : i32
    return %arg0, %c0_i32, %c0_i32_0 : i32, i32, i32
  }
  func.func @transform_6(%arg0: i32) -> (i32, i32, i32) {
    %c0_i32 = arith.constant 0 : i32
    %c0_i32_0 = arith.constant 0 : i32
    %c0_i32_1 = arith.constant 0 : i32
    return %arg0, %c0_i32, %c0_i32_0 : i32, i32, i32
  }
}

module attributes {stable_mosaic.version = 11 : i64} {
  func.func @bn_residual_kernel(%arg0: i32, %arg1: memref<1x2048xbf16, #tpu.memory_space<vmem>>, %arg2: memref<1x2048xf32, #tpu.memory_space<vmem>>, %arg3: memref<1x2048xf32, #tpu.memory_space<vmem>>, %arg4: memref<1x2048xf32, #tpu.memory_space<vmem>>, %arg5: memref<1x2048xf32, #tpu.memory_space<vmem>>) attributes {dimension_semantics = [#tpu.dimension_semantics<parallel>], iteration_bounds = array<i64: 1>, scalar_prefetch = 0 : i64, scratch_operands = 0 : i64, tpu.core_type = #tpu.core_type<tc>, window_params = [{transform_indices = @transform_0, window_bounds = array<i64: 1, 2048>}, {pipeline_mode = #tpu.pipeline_mode<synchronous>, transform_indices = @transform_1, window_bounds = array<i64: 1, 2048>}, {pipeline_mode = #tpu.pipeline_mode<synchronous>, transform_indices = @transform_2, window_bounds = array<i64: 1, 2048>}, {transform_indices = @transform_3, window_bounds = array<i64: 1, 2048>}, {transform_indices = @transform_4, window_bounds = array<i64: 1, 2048>}]} {
    %c0 = arith.constant 0 : index
    %c0_0 = arith.constant 0 : index
    %0 = vector.load %arg1[%c0, %c0_0] : memref<1x2048xbf16, #tpu.memory_space<vmem>>, vector<1x2048xbf16>
    %1 = arith.extf %0 : vector<1x2048xbf16> to vector<1x2048xf32>
    %c0_1 = arith.constant 0 : index
    %c0_2 = arith.constant 0 : index
    %2 = vector.load %arg2[%c0_1, %c0_2] : memref<1x2048xf32, #tpu.memory_space<vmem>>, vector<1x2048xf32>
    %3 = arith.mulf %1, %2 : vector<1x2048xf32>
    %c0_3 = arith.constant 0 : index
    %c0_4 = arith.constant 0 : index
    %4 = vector.load %arg3[%c0_3, %c0_4] : memref<1x2048xf32, #tpu.memory_space<vmem>>, vector<1x2048xf32>
    %5 = arith.addf %3, %4 : vector<1x2048xf32>
    %c0_5 = arith.constant 0 : index
    %c0_6 = arith.constant 0 : index
    %6 = vector.load %arg4[%c0_5, %c0_6] : memref<1x2048xf32, #tpu.memory_space<vmem>>, vector<1x2048xf32>
    %7 = arith.addf %5, %6 : vector<1x2048xf32>
    %c0_7 = arith.constant 0 : index
    %c0_8 = arith.constant 0 : index
    %8 = vector.load %arg5[%c0_7, %c0_8] : memref<1x2048xf32, #tpu.memory_space<vmem>>, vector<1x2048xf32>
    tpu.vector_store %arg5[%c0_7, %c0_8], %7 {strides = array<i32>} : memref<1x2048xf32, #tpu.memory_space<vmem>>, vector<1x2048xf32>,
    return
  }
  func.func @transform_0(%arg0: i32) -> (i32, i32) {
    %c0_i32 = arith.constant 0 : i32
    %c0_i32_0 = arith.constant 0 : i32
    return %arg0, %c0_i32 : i32, i32
  }
  func.func @transform_1(%arg0: i32) -> (i32, i32) {
    %c0_i32 = arith.constant 0 : i32
    %c0_i32_0 = arith.constant 0 : i32
    %c0_i32_1 = arith.constant 0 : i32
    return %c0_i32, %c0_i32_0 : i32, i32
  }
  func.func @transform_2(%arg0: i32) -> (i32, i32) {
    %c0_i32 = arith.constant 0 : i32
    %c0_i32_0 = arith.constant 0 : i32
    %c0_i32_1 = arith.constant 0 : i32
    return %c0_i32, %c0_i32_0 : i32, i32
  }
  func.func @transform_3(%arg0: i32) -> (i32, i32) {
    %c0_i32 = arith.constant 0 : i32
    %c0_i32_0 = arith.constant 0 : i32
    return %arg0, %c0_i32 : i32, i32
  }
  func.func @transform_4(%arg0: i32) -> (i32, i32) {
    %c0_i32 = arith.constant 0 : i32
    %c0_i32_0 = arith.constant 0 : i32
    return %arg0, %c0_i32 : i32, i32
  }
}

</mosaic_0001>

<llo_original>
// kernel: tile.18
$region0: #{tile.18}
  #allocation0 [shape = 's32[1]{0}', space=sflag, size = 0x4, scoped, tag = 'scoped memory for tile.18']
  %s0 = inlined_call_operand.vmem [shape: f32[4], index: 0, kind: input, shape index: {}]
  %s1 = inlined_call_operand.vmem [shape: f32[512,4], index: 1, kind: output, shape index: {}]
  // Predicated region
  $region2: #{tile.18} parent=0 // pred_check
    _
  $region3: #{tile.18} parent=0 // pred_check_branch
    %3 = sbr.rel (0) target = $region5
  $region4: #{tile.18} parent=0 // pred_region
    _
  $region5: #{tile.18} parent=0 // pred_fallthru
    _
  %v4 = vld [vmem:[%s0] ss:$0 sm:$0xff]
  %5 = vst [vmem:[%s1] sm:$0xff] %v4
  %s6 = scalar_lea.vmem %s1, 8
  %7 = vst [vmem:[%s6] sm:$0xff] %v4
  %s8 = scalar_lea.vmem %s1, 16
  %9 = vst [vmem:[%s8] sm:$0xff] %v4
  %s10 = scalar_lea.vmem %s1, 24
  %11 = vst [vmem:[%s10] sm:$0xff] %v4
  %s12 = scalar_lea.vmem %s1, 32
  %13 = vst [vmem:[%s12] sm:$0xff] %v4
  %s14 = scalar_lea.vmem %s1, 40
  %15 = vst [vmem:[%s14] sm:$0xff] %v4
  %s16 = scalar_lea.vmem %s1, 48
  %17 = vst [vmem:[%s16] sm:$0xff] %v4
  %s18 = scalar_lea.vmem %s1, 56
  %19 = vst [vmem:[%s18] sm:$0xff] %v4
  %s20 = scalar_lea.vmem %s1, 64
  %21 = vst [vmem:[%s20] sm:$0xff] %v4
  %s22 = scalar_lea.vmem %s1, 72
  %23 = vst [vmem:[%s22] sm:$0xff] %v4
  %s24 = scalar_lea.vmem %s1, 80
  %25 = vst [vmem:[%s24] sm:$0xff] %v4
  %s26 = scalar_lea.vmem %s1, 88
  %27 = vst [vmem:[%s26] sm:$0xff] %v4
  %s28 = scalar_lea.vmem %s1, 96
  %29 = vst [vmem:[%s28] sm:$0xff] %v4
  %s30 = scalar_lea.vmem %s1, 104
  %31 = vst [vmem:[%s30] sm:$0xff] %v4
  %s32 = scalar_lea.vmem %s1, 112
  %33 = vst [vmem:[%s32] sm:$0xff] %v4
  %s34 = scalar_lea.vmem %s1, 120
  %35 = vst [vmem:[%s34] sm:$0xff] %v4
  %s36 = scalar_lea.vmem %s1, 128
  %37 = vst [vmem:[%s36] sm:$0xff] %v4
  %s38 = scalar_lea.vmem %s1, 136
  %39 = vst [vmem:[%s38] sm:$0xff] %v4
  %s40 = scalar_lea.vmem %s1, 144
  %41 = vst [vmem:[%s40] sm:$0xff] %v4
  %s42 = scalar_lea.vmem %s1, 152
  %43 = vst [vmem:[%s42] sm:$0xff] %v4
  %s44 = scalar_lea.vmem %s1, 160
  %45 = vst [vmem:[%s44] sm:$0xff] %v4
  %s46 = scalar_lea.vmem %s1, 168
  %47 = vst [vmem:[%s46] sm:$0xff] %v4
  %s48 = scalar_lea.vmem %s1, 176
  %49 = vst [vmem:[%s48] sm:$0xff] %v4
  %s50 = scalar_lea.vmem %s1, 184
  %51 = vst [vmem:[%s50] sm:$0xff] %v4
  %s52 = scalar_lea.vmem %s1, 192
  %53 = vst [vmem:[%s52] sm:$0xff] %v4
  %s54 = scalar_lea.vmem %s1, 200
  %55 = vst [vmem:[%s54] sm:$0xff] %v4
  %s56 = scalar_lea.vmem %s1, 208
  %57 = vst [vmem:[%s56] sm:$0xff] %v4
  %s58 = scalar_lea.vmem %s1, 216
  %59 = vst [vmem:[%s58] sm:$0xff] %v4
  %s60 = scalar_lea.vmem %s1, 224
  %61 = vst [vmem:[%s60] sm:$0xff] %v4
  %s62 = scalar_lea.vmem %s1, 232
  %63 = vst [vmem:[%s62] sm:$0xff] %v4
  %s64 = scalar_lea.vmem %s1, 240
  %65 = vst [vmem:[%s64] sm:$0xff] %v4
  %s66 = scalar_lea.vmem %s1, 248
  %67 = vst [vmem:[%s66] sm:$0xff] %v4
  %s68 = scalar_lea.vmem %s1, 256
  %69 = vst [vmem:[%s68] sm:$0xff] %v4
  %s70 = scalar_lea.vmem %s1, 264
  %71 = vst [vmem:[%s70] sm:$0xff] %v4
  %s72 = scalar_lea.vmem %s1, 272
  %73 = vst [vmem:[%s72] sm:$0xff] %v4
  %s74 = scalar_lea.vmem %s1, 280
  %75 = vst [vmem:[%s74] sm:$0xff] %v4
  %s76 = scalar_lea.vmem %s1, 288
  %77 = vst [vmem:[%s76] sm:$0xff] %v4
  %s78 = scalar_lea.vmem %s1, 296
  %79 = vst [vmem:[%s78] sm:$0xff] %v4
  %s80 = scalar_lea.vmem %s1, 304
  %81 = vst [vmem:[%s80] sm:$0xff] %v4
  %s82 = scalar_lea.vmem %s1, 312
  %83 = vst [vmem:[%s82] sm:$0xff] %v4
  %s84 = scalar_lea.vmem %s1, 320
  %85 = vst [vmem:[%s84] sm:$0xff] %v4
  %s86 = scalar_lea.vmem %s1, 328
  %87 = vst [vmem:[%s86] sm:$0xff] %v4
  %s88 = scalar_lea.vmem %s1, 336
  %89 = vst [vmem:[%s88] sm:$0xff] %v4
  %s90 = scalar_lea.vmem %s1, 344
  %91 = vst [vmem:[%s90] sm:$0xff] %v4
  %s92 = scalar_lea.vmem %s1, 352
  %93 = vst [vmem:[%s92] sm:$0xff] %v4
  %s94 = scalar_lea.vmem %s1, 360
  %95 = vst [vmem:[%s94] sm:$0xff] %v4
  %s96 = scalar_lea.vmem %s1, 368
  %97 = vst [vmem:[%s96] sm:$0xff] %v4
  %s98 = scalar_lea.vmem %s1, 376
  %99 = vst [vmem:[%s98] sm:$0xff] %v4
  %s100 = scalar_lea.vmem %s1, 384
  %101 = vst [vmem:[%s100] sm:$0xff] %v4
  %s102 = scalar_lea.vmem %s1, 392
  %103 = vst [vmem:[%s102] sm:$0xff] %v4
  %s104 = scalar_lea.vmem %s1, 400
  %105 = vst [vmem:[%s104] sm:$0xff] %v4
  %s106 = scalar_lea.vmem %s1, 408
  %107 = vst [vmem:[%s106] sm:$0xff] %v4
  %s108 = scalar_lea.vmem %s1, 416
  %109 = vst [vmem:[%s108] sm:$0xff] %v4
  %s110 = scalar_lea.vmem %s1, 424
  %111 = vst [vmem:[%s110] sm:$0xff] %v4
  %s112 = scalar_lea.vmem %s1, 432
  %113 = vst [vmem:[%s112] sm:$0xff] %v4
  %s114 = scalar_lea.vmem %s1, 440
  %115 = vst [vmem:[%s114] sm:$0xff] %v4
  %s116 = scalar_lea.vmem %s1, 448
  %117 = vst [vmem:[%s116] sm:$0xff] %v4
  %s118 = scalar_lea.vmem %s1, 456
  %119 = vst [vmem:[%s118] sm:$0xff] %v4
  %s120 = scalar_lea.vmem %s1, 464
  %121 = vst [vmem:[%s120] sm:$0xff] %v4
  %s122 = scalar_lea.vmem %s1, 472
  %123 = vst [vmem:[%s122] sm:$0xff] %v4
  %s124 = scalar_lea.vmem %s1, 480
  %125 = vst [vmem:[%s124] sm:$0xff] %v4
  %s126 = scalar_lea.vmem %s1, 488
  %127 = vst [vmem:[%s126] sm:$0xff] %v4
  %s128 = scalar_lea.vmem %s1, 496
  %129 = vst [vmem:[%s128] sm:$0xff] %v4
  %s130 = scalar_lea.vmem %s1, 504
  %131 = vst [vmem:[%s130] sm:$0xff] %v4

// kernel: tile.19
$region0: #{tile.19}
  %s0 = inlined_call_operand.vmem [shape: f32[512,4], index: 0, kind: input, shape index: {}]
  %s1 = inlined_call_operand.vmem [shape: f32[1,2048], index: 1, kind: output, shape index: {}]
  $region1: #{tile.19} parent=0
    #allocation0 [shape = 'u8[65536]{0}', space=vmem, size = 0x10000, scoped, tag = 'scoped mem for output reshape']
    %v2 = vld [vmem:[%s0] sm:$0x1]
    %s3 = scalar_lea.vmem %s0, 31
    %v4 = vld [vmem:[%s3] sm:$0x2]
    %vm5 = vcmask 1041409
    %v6 = vsel %vm5, %v4, %v2
    %s7 = scalar_lea.vmem %s0, 62
    %v8 = vld [vmem:[%s7] sm:$0x4]
    %vm9 = vcmask 1042434
    %v10 = vsel %vm9, %v8, %v6
    %s11 = scalar_lea.vmem %s0, 93
    %v12 = vld [vmem:[%s11] sm:$0x8]
    %vm13 = vcmask 1043459
    %v14 = vsel %vm13, %v12, %v10
    %s15 = scalar_lea.vmem %s0, 124
    %v16 = vld [vmem:[%s15] sm:$0x10]
    %vm17 = vcmask 1044484
    %v18 = vsel %vm17, %v16, %v14
    %s19 = scalar_lea.vmem %s0, 155
    %v20 = vld [vmem:[%s19] sm:$0x20]
    %vm21 = vcmask 1045509
    %v22 = vsel %vm21, %v20, %v18
    %s23 = scalar_lea.vmem %s0, 186
    %v24 = vld [vmem:[%s23] sm:$0x40]
    %vm25 = vcmask 1046534
    %v26 = vsel %vm25, %v24, %v22
    %s27 = scalar_lea.vmem %s0, 217
    %v28 = vld [vmem:[%s27] sm:$0x80]
    %vm29 = vcmask 1047559
    %v30 = vsel %vm29, %v28, %v26
    %vm31 = vcmask 31744
    %32 = vst.msk [vmem:[#allocation0] ss:$8 sm:$0xf] %vm31, %v30
    %33 = vst.msk [vmem:[#allocation0] ss:$8 sm:$0xf0] %vm31, %v30
    %s34 = scalar_lea.vmem %s0, 256
    %v35 = vld [vmem:[%s34] sm:$0x1]
    %s36 = scalar_lea.vmem %s0, 287
    %v37 = vld [vmem:[%s36] sm:$0x2]
    %vm38 = vcmask 1041409
    %v39 = vsel %vm38, %v37, %v35
    %s40 = scalar_lea.vmem %s0, 318
    %v41 = vld [vmem:[%s40] sm:$0x4]
    %vm42 = vcmask 1042434
    %v43 = vsel %vm42, %v41, %v39
    %s44 = scalar_lea.vmem %s0, 349
    %v45 = vld [vmem:[%s44] sm:$0x8]
    %vm46 = vcmask 1043459
    %v47 = vsel %vm46, %v45, %v43
    %s48 = scalar_lea.vmem %s0, 380
    %v49 = vld [vmem:[%s48] sm:$0x10]
    %vm50 = vcmask 1044484
    %v51 = vsel %vm50, %v49, %v47
    %s52 = scalar_lea.vmem %s0, 411
    %v53 = vld [vmem:[%s52] sm:$0x20]
    %vm54 = vcmask 1045509
    %v55 = vsel %vm54, %v53, %v51
    %s56 = scalar_lea.vmem %s0, 442
    %v57 = vld [vmem:[%s56] sm:$0x40]
    %vm58 = vcmask 1046534
    %v59 = vsel %vm58, %v57, %v55
    %s60 = scalar_lea.vmem %s0, 473
    %v61 = vld [vmem:[%s60] sm:$0x80]
    %vm62 = vcmask 1047559
    %v63 = vsel %vm62, %v61, %v59
    %vm64 = vcmask 31744
    %s65 = scalar_lea.vmem [#allocation0], 64
    %66 = vst.msk [vmem:[%s65] ss:$8 sm:$0xf] %vm64, %v63
    %s67 = scalar_lea.vmem [#allocation0], 64
    %68 = vst.msk [vmem:[%s67] ss:$8 sm:$0xf0] %vm64, %v63
    %s69 = scalar_lea.vmem %s0, 31
    %v70 = vld [vmem:[%s69] sm:$0x1]
    %s71 = scalar_lea.vmem %s0, 62
    %v72 = vld [vmem:[%s71] sm:$0x2]
    %vm73 = vcmask 1041409
    %v74 = vsel %vm73, %v72, %v70
    %s75 = scalar_lea.vmem %s0, 93
    %v76 = vld [vmem:[%s75] sm:$0x4]
    %vm77 = vcmask 1042434
    %v78 = vsel %vm77, %v76, %v74
    %s79 = scalar_lea.vmem %s0, 124
    %v80 = vld [vmem:[%s79] sm:$0x8]
    %vm81 = vcmask 1043459
    %v82 = vsel %vm81, %v80, %v78
    %s83 = scalar_lea.vmem %s0, 155
    %v84 = vld [vmem:[%s83] sm:$0x10]
    %vm85 = vcmask 1044484
    %v86 = vsel %vm85, %v84, %v82
    %s87 = scalar_lea.vmem %s0, 186
    %v88 = vld [vmem:[%s87] sm:$0x20]
    %vm89 = vcmask 1045509
    %v90 = vsel %vm89, %v88, %v86
    %s91 = scalar_lea.vmem %s0, 217
    %v92 = vld [vmem:[%s91] sm:$0x40]
    %vm93 = vcmask 1046534
    %v94 = vsel %vm93, %v92, %v90
    %s95 = scalar_lea.vmem %s0, 248
    %v96 = vld [vmem:[%s95] sm:$0x80]
    %vm97 = vcmask 1047559
    %v98 = vsel %vm97, %v96, %v94
    %99 = vrot.lane.b32.xlu0 %v98, 124
    %v100 = vpop.permute.xlu0 %99
    %vm101 = vcmask 1048544
    %102 = vst.msk [vmem:[#allocation0] ss:$8 sm:$0xf] %vm101, %v100
    %103 = vst.msk [vmem:[#allocation0] ss:$8 sm:$0xf0] %vm101, %v100
    %s104 = scalar_lea.vmem %s0, 287
    %v105 = vld [vmem:[%s104] sm:$0x1]
    %s106 = scalar_lea.vmem %s0, 318
    %v107 = vld [vmem:[%s106] sm:$0x2]
    %vm108 = vcmask 1041409
    %v109 = vsel %vm108, %v107, %v105
    %s110 = scalar_lea.vmem %s0, 349
    %v111 = vld [vmem:[%s110] sm:$0x4]
    %vm112 = vcmask 1042434
    %v113 = vsel %vm112, %v111, %v109
    %s114 = scalar_lea.vmem %s0, 380
    %v115 = vld [vmem:[%s114] sm:$0x8]
    %vm116 = vcmask 1043459
    %v117 = vsel %vm116, %v115, %v113
    %s118 = scalar_lea.vmem %s0, 411
    %v119 = vld [vmem:[%s118] sm:$0x10]
    %vm120 = vcmask 1044484
    %v121 = vsel %vm120, %v119, %v117
    %s122 = scalar_lea.vmem %s0, 442
    %v123 = vld [vmem:[%s122] sm:$0x20]
    %vm124 = vcmask 1045509
    %v125 = vsel %vm124, %v123, %v121
    %s126 = scalar_lea.vmem %s0, 473
    %v127 = vld [vmem:[%s126] sm:$0x40]
    %vm128 = vcmask 1046534
    %v129 = vsel %vm128, %v127, %v125
    %s130 = scalar_lea.vmem %s0, 504
    %v131 = vld [vmem:[%s130] sm:$0x80]
    %vm132 = vcmask 1047559
    %v133 = vsel %vm132, %v131, %v129
    %134 = vrot.lane.b32.xlu0 %v133, 124
    %v135 = vpop.permute.xlu0 %134
    %vm136 = vcmask 1048544
    %s137 = scalar_lea.vmem [#allocation0], 64
    %138 = vst.msk [vmem:[%s137] ss:$8 sm:$0xf] %vm136, %v135
    %s139 = scalar_lea.vmem [#allocation0], 64
    %140 = vst.msk [vmem:[%s139] ss:$8 sm:$0xf0] %vm136, %v135
    %s141 = scalar_lea.vmem %s0, 30
    %v142 = vld [vmem:[%s141] sm:$0x1]
    %s143 = scalar_lea.vmem %s0, 61
    %v144 = vld [vmem:[%s143] sm:$0x2]
    %vm145 = vcmask 1041409
    %v146 = vsel %vm145, %v144, %v142
    %s147 = scalar_lea.vmem %s0, 92
    %v148 = vld [vmem:[%s147] sm:$0x4]
    %vm149 = vcmask 1042434
    %v150 = vsel %vm149, %v148, %v146
    %s151 = scalar_lea.vmem %s0, 123
    %v152 = vld [vmem:[%s151] sm:$0x8]
    %vm153 = vcmask 1043459
    %v154 = vsel %vm153, %v152, %v150
    %s155 = scalar_lea.vmem %s0, 154
    %v156 = vld [vmem:[%s155] sm:$0x10]
    %vm157 = vcmask 1044484
    %v158 = vsel %vm157, %v156, %v154
    %s159 = scalar_lea.vmem %s0, 185
    %v160 = vld [vmem:[%s159] sm:$0x20]
    %vm161 = vcmask 1045509
    %v162 = vsel %vm161, %v160, %v158
    %s163 = scalar_lea.vmem %s0, 216
    %v164 = vld [vmem:[%s163] sm:$0x40]
    %vm165 = vcmask 1046534
    %v166 = vsel %vm165, %v164, %v162
    %s167 = scalar_lea.vmem %s0, 247
    %v168 = vld [vmem:[%s167] sm:$0x80]
    %vm169 = vcmask 1047559
    %v170 = vsel %vm169, %v168, %v166
    %171 = vrot.lane.b32.xlu0 %v170, 120
    %v172 = vpop.permute.xlu0 %171
    %vm173 = vcmask 1015744
    %174 = vst.msk [vmem:[#allocation0] ss:$8 sm:$0xf] %vm173, %v172
    %175 = vst.msk [vmem:[#allocation0] ss:$8 sm:$0xf0] %vm173, %v172
    %s176 = scalar_lea.vmem %s0, 286
    %v177 = vld [vmem:[%s176] sm:$0x1]
    %s178 = scalar_lea.vmem %s0, 317
    %v179 = vld [vmem:[%s178] sm:$0x2]
    %vm180 = vcmask 1041409
    %v181 = vsel %vm180, %v179, %v177
    %s182 = scalar_lea.vmem %s0, 348
    %v183 = vld [vmem:[%s182] sm:$0x4]
    %vm184 = vcmask 1042434
    %v185 = vsel %vm184, %v183, %v181
    %s186 = scalar_lea.vmem %s0, 379
    %v187 = vld [vmem:[%s186] sm:$0x8]
    %vm188 = vcmask 1043459
    %v189 = vsel %vm188, %v187, %v185
    %s190 = scalar_lea.vmem %s0, 410
    %v191 = vld [vmem:[%s190] sm:$0x10]
    %vm192 = vcmask 1044484
    %v193 = vsel %vm192, %v191, %v189
    %s194 = scalar_lea.vmem %s0, 441
    %v195 = vld [vmem:[%s194] sm:$0x20]
    %vm196 = vcmask 1045509
    %v197 = vsel %vm196, %v195, %v193
    %s198 = scalar_lea.vmem %s0, 472
    %v199 = vld [vmem:[%s198] sm:$0x40]
    %vm200 = vcmask 1046534
    %v201 = vsel %vm200, %v199, %v197
    %s202 = scalar_lea.vmem %s0, 503
    %v203 = vld [vmem:[%s202] sm:$0x80]
    %vm204 = vcmask 1047559
    %v205 = vsel %vm204, %v203, %v201
    %206 = vrot.lane.b32.xlu0 %v205, 120
    %v207 = vpop.permute.xlu0 %206
    %vm208 = vcmask 1015744
    %s209 = scalar_lea.vmem [#allocation0], 64
    %210 = vst.msk [vmem:[%s209] ss:$8 sm:$0xf] %vm208, %v207
    %s211 = scalar_lea.vmem [#allocation0], 64
    %212 = vst.msk [vmem:[%s211] ss:$8 sm:$0xf0] %vm208, %v207
    %s213 = scalar_lea.vmem %s0, 29
    %v214 = vld [vmem:[%s213] sm:$0x1]
    %s215 = scalar_lea.vmem %s0, 60
    %v216 = vld [vmem:[%s215] sm:$0x2]
    %vm217 = vcmask 1041409
    %v218 = vsel %vm217, %v216, %v214
    %s219 = scalar_lea.vmem %s0, 91
    %v220 = vld [vmem:[%s219] sm:$0x4]
    %vm221 = vcmask 1042434
    %v222 = vsel %vm221, %v220, %v218
    %s223 = scalar_lea.vmem %s0, 122
    %v224 = vld [vmem:[%s223] sm:$0x8]
    %vm225 = vcmask 1043459
    %v226 = vsel %vm225, %v224, %v222
    %s227 = scalar_lea.vmem %s0, 153
    %v228 = vld [vmem:[%s227] sm:$0x10]
    %vm229 = vcmask 1044484
    %v230 = vsel %vm229, %v228, %v226
    %s231 = scalar_lea.vmem %s0, 184
    %v232 = vld [vmem:[%s231] sm:$0x20]
    %vm233 = vcmask 1045509
    %v234 = vsel %vm233, %v232, %v230
    %s235 = scalar_lea.vmem %s0, 215
    %v236 = vld [vmem:[%s235] sm:$0x40]
    %vm237 = vcmask 1046534
    %v238 = vsel %vm237, %v236, %v234
    %s239 = scalar_lea.vmem %s0, 246
    %v240 = vld [vmem:[%s239] sm:$0x80]
    %vm241 = vcmask 1047559
    %v242 = vsel %vm241, %v240, %v238
    %243 = vrot.lane.b32.xlu0 %v242, 116
    %v244 = vpop.permute.xlu0 %243
    %vm245 = vcmask 982944
    %246 = vst.msk [vmem:[#allocation0] ss:$8 sm:$0xf] %vm245, %v244
    %247 = vst.msk [vmem:[#allocation0] ss:$8 sm:$0xf0] %vm245, %v244
    %s248 = scalar_lea.vmem %s0, 285
    %v249 = vld [vmem:[%s248] sm:$0x1]
    %s250 = scalar_lea.vmem %s0, 316
    %v251 = vld [vmem:[%s250] sm:$0x2]
    %vm252 = vcmask 1041409
    %v253 = vsel %vm252, %v251, %v249
    %s254 = scalar_lea.vmem %s0, 347
    %v255 = vld [vmem:[%s254] sm:$0x4]
    %vm256 = vcmask 1042434
    %v257 = vsel %vm256, %v255, %v253
    %s258 = scalar_lea.vmem %s0, 378
    %v259 = vld [vmem:[%s258] sm:$0x8]
    %vm260 = vcmask 1043459
    %v261 = vsel %vm260, %v259, %v257
    %s262 = scalar_lea.vmem %s0, 409
    %v263 = vld [vmem:[%s262] sm:$0x10]
    %vm264 = vcmask 1044484
    %v265 = vsel %vm264, %v263, %v261
    %s266 = scalar_lea.vmem %s0, 440
    %v267 = vld [vmem:[%s266] sm:$0x20]
    %vm268 = vcmask 1045509
    %v269 = vsel %vm268, %v267, %v265
    %s270 = scalar_lea.vmem %s0, 471
    %v271 = vld [vmem:[%s270] sm:$0x40]
    %vm272 = vcmask 1046534
    %v273 = vsel %vm272, %v271, %v269
    %s274 = scalar_lea.vmem %s0, 502
    %v275 = vld [vmem:[%s274] sm:$0x80]
    %vm276 = vcmask 1047559
    %v277 = vsel %vm276, %v275, %v273
    %278 = vrot.lane.b32.xlu0 %v277, 116
    %v279 = vpop.permute.xlu0 %278
    %vm280 = vcmask 982944
    %s281 = scalar_lea.vmem [#allocation0], 64
    %282 = vst.msk [vmem:[%s281] ss:$8 sm:$0xf] %vm280, %v279
    %s283 = scalar_lea.vmem [#allocation0], 64
    %284 = vst.msk [vmem:[%s283] ss:$8 sm:$0xf0] %vm280, %v279
    %s285 = scalar_lea.vmem %s0, 28
    %v286 = vld [vmem:[%s285] sm:$0x1]
    %s287 = scalar_lea.vmem %s0, 59
    %v288 = vld [vmem:[%s287] sm:$0x2]
    %vm289 = vcmask 1041409
    %v290 = vsel %vm289, %v288, %v286
    %s291 = scalar_lea.vmem %s0, 90
    %v292 = vld [vmem:[%s291] sm:$0x4]
    %vm293 = vcmask 1042434
    %v294 = vsel %vm293, %v292, %v290
    %s295 = scalar_lea.vmem %s0, 121
    %v296 = vld [vmem:[%s295] sm:$0x8]
    %vm297 = vcmask 1043459
    %v298 = vsel %vm297, %v296, %v294
    %s299 = scalar_lea.vmem %s0, 152
    %v300 = vld [vmem:[%s299] sm:$0x10]
    %vm301 = vcmask 1044484
    %v302 = vsel %vm301, %v300, %v298
    %s303 = scalar_lea.vmem %s0, 183
    %v304 = vld [vmem:[%s303] sm:$0x20]
    %vm305 = vcmask 1045509
    %v306 = vsel %vm305, %v304, %v302
    %s307 = scalar_lea.vmem %s0, 214
    %v308 = vld [vmem:[%s307] sm:$0x40]
    %vm309 = vcmask 1046534
    %v310 = vsel %vm309, %v308, %v306
    %s311 = scalar_lea.vmem %s0, 245
    %v312 = vld [vmem:[%s311] sm:$0x80]
    %vm313 = vcmask 1047559
    %v314 = vsel %vm313, %v312, %v310
    %315 = vrot.lane.b32.xlu0 %v314, 112
    %v316 = vpop.permute.xlu0 %315
    %vm317 = vcmask 950144
    %318 = vst.msk [vmem:[#allocation0] ss:$8 sm:$0xf] %vm317, %v316
    %319 = vst.msk [vmem:[#allocation0] ss:$8 sm:$0xf0] %vm317, %v316
    %s320 = scalar_lea.vmem %s0, 284
    %v321 = vld [vmem:[%s320] sm:$0x1]
    %s322 = scalar_lea.vmem %s0, 315
    %v323 = vld [vmem:[%s322] sm:$0x2]
    %vm324 = vcmask 1041409
    %v325 = vsel %vm324, %v323, %v321
    %s326 = scalar_lea.vmem %s0, 346
    %v327 = vld [vmem:[%s326] sm:$0x4]
    %vm328 = vcmask 1042434
    %v329 = vsel %vm328, %v327, %v325
    %s330 = scalar_lea.vmem %s0, 377
    %v331 = vld [vmem:[%s330] sm:$0x8]
    %vm332 = vcmask 1043459
    %v333 = vsel %vm332, %v331, %v329
    %s334 = scalar_lea.vmem %s0, 408
    %v335 = vld [vmem:[%s334] sm:$0x10]
    %vm336 = vcmask 1044484
    %v337 = vsel %vm336, %v335, %v333
    %s338 = scalar_lea.vmem %s0, 439
    %v339 = vld [vmem:[%s338] sm:$0x20]
    %vm340 = vcmask 1045509
    %v341 = vsel %vm340, %v339, %v337
    %s342 = scalar_lea.vmem %s0, 470
    %v343 = vld [vmem:[%s342] sm:$0x40]
    %vm344 = vcmask 1046534
    %v345 = vsel %vm344, %v343, %v341
    %s346 = scalar_lea.vmem %s0, 501
    %v347 = vld [vmem:[%s346] sm:$0x80]
    %vm348 = vcmask 1047559
    %v349 = vsel %vm348, %v347, %v345
    %350 = vrot.lane.b32.xlu0 %v349, 112
    %v351 = vpop.permute.xlu0 %350
    %vm352 = vcmask 950144
    %s353 = scalar_lea.vmem [#allocation0], 64
    %354 = vst.msk [vmem:[%s353] ss:$8 sm:$0xf] %vm352, %v351
    %s355 = scalar_lea.vmem [#allocation0], 64
    %356 = vst.msk [vmem:[%s355] ss:$8 sm:$0xf0] %vm352, %v351
    %s357 = scalar_lea.vmem %s0, 27
    %v358 = vld [vmem:[%s357] sm:$0x1]
    %s359 = scalar_lea.vmem %s0, 58
    %v360 = vld [vmem:[%s359] sm:$0x2]
    %vm361 = vcmask 1041409
    %v362 = vsel %vm361, %v360, %v358
    %s363 = scalar_lea.vmem %s0, 89
    %v364 = vld [vmem:[%s363] sm:$0x4]
    %vm365 = vcmask 1042434
    %v366 = vsel %vm365, %v364, %v362
    %s367 = scalar_lea.vmem %s0, 120
    %v368 = vld [vmem:[%s367] sm:$0x8]
    %vm369 = vcmask 1043459
    %v370 = vsel %vm369, %v368, %v366
    %s371 = scalar_lea.vmem %s0, 151
    %v372 = vld [vmem:[%s371] sm:$0x10]
    %vm373 = vcmask 1044484
    %v374 = vsel %vm373, %v372, %v370
    %s375 = scalar_lea.vmem %s0, 182
    %v376 = vld [vmem:[%s375] sm:$0x20]
    %vm377 = vcmask 1045509
    %v378 = vsel %vm377, %v376, %v374
    %s379 = scalar_lea.vmem %s0, 213
    %v380 = vld [vmem:[%s379] sm:$0x40]
    %vm381 = vcmask 1046534
    %v382 = vsel %vm381, %v380, %v378
    %s383 = scalar_lea.vmem %s0, 244
    %v384 = vld [vmem:[%s383] sm:$0x80]
    %vm385 = vcmask 1047559
    %v386 = vsel %vm385, %v384, %v382
    %387 = vrot.lane.b32.xlu0 %v386, 108
    %v388 = vpop.permute.xlu0 %387
    %vm389 = vcmask 917344
    %390 = vst.msk [vmem:[#allocation0] ss:$8 sm:$0xf] %vm389, %v388
    %391 = vst.msk [vmem:[#allocation0] ss:$8 sm:$0xf0] %vm389, %v388
    %s392 = scalar_lea.vmem %s0, 283
    %v393 = vld [vmem:[%s392] sm:$0x1]
    %s394 = scalar_lea.vmem %s0, 314
    %v395 = vld [vmem:[%s394] sm:$0x2]
    %vm396 = vcmask 1041409
    %v397 = vsel %vm396, %v395, %v393
    %s398 = scalar_lea.vmem %s0, 345
    %v399 = vld [vmem:[%s398] sm:$0x4]
    %vm400 = vcmask 1042434
    %v401 = vsel %vm400, %v399, %v397
    %s402 = scalar_lea.vmem %s0, 376
    %v403 = vld [vmem:[%s402] sm:$0x8]
    %vm404 = vcmask 1043459
    %v405 = vsel %vm404, %v403, %v401
    %s406 = scalar_lea.vmem %s0, 407
    %v407 = vld [vmem:[%s406] sm:$0x10]
    %vm408 = vcmask 1044484
    %v409 = vsel %vm408, %v407, %v405
    %s410 = scalar_lea.vmem %s0, 438
    %v411 = vld [vmem:[%s410] sm:$0x20]
    %vm412 = vcmask 1045509
    %v413 = vsel %vm412, %v411, %v409
    %s414 = scalar_lea.vmem %s0, 469
    %v415 = vld [vmem:[%s414] sm:$0x40]
    %vm416 = vcmask 1046534
    %v417 = vsel %vm416, %v415, %v413
    %s418 = scalar_lea.vmem %s0, 500
    %v419 = vld [vmem:[%s418] sm:$0x80]
    %vm420 = vcmask 1047559
    %v421 = vsel %vm420, %v419, %v417
    %422 = vrot.lane.b32.xlu0 %v421, 108
    %v423 = vpop.permute.xlu0 %422
    %vm424 = vcmask 917344
    %s425 = scalar_lea.vmem [#allocation0], 64
    %426 = vst.msk [vmem:[%s425] ss:$8 sm:$0xf] %vm424, %v423
    %s427 = scalar_lea.vmem [#allocation0], 64
    %428 = vst.msk [vmem:[%s427] ss:$8 sm:$0xf0] %vm424, %v423
    %s429 = scalar_lea.vmem %s0, 26
    %v430 = vld [vmem:[%s429] sm:$0x1]
    %s431 = scalar_lea.vmem %s0, 57
    %v432 = vld [vmem:[%s431] sm:$0x2]
    %vm433 = vcmask 1041409
    %v434 = vsel %vm433, %v432, %v430
    %s435 = scalar_lea.vmem %s0, 88
    %v436 = vld [vmem:[%s435] sm:$0x4]
    %vm437 = vcmask 1042434
    %v438 = vsel %vm437, %v436, %v434
    %s439 = scalar_lea.vmem %s0, 119
    %v440 = vld [vmem:[%s439] sm:$0x8]
    %vm441 = vcmask 1043459
    %v442 = vsel %vm441, %v440, %v438
    %s443 = scalar_lea.vmem %s0, 150
    %v444 = vld [vmem:[%s443] sm:$0x10]
    %vm445 = vcmask 1044484
    %v446 = vsel %vm445, %v444, %v442
    %s447 = scalar_lea.vmem %s0, 181
    %v448 = vld [vmem:[%s447] sm:$0x20]
    %vm449 = vcmask 1045509
    %v450 = vsel %vm449, %v448, %v446
    %s451 = scalar_lea.vmem %s0, 212
    %v452 = vld [vmem:[%s451] sm:$0x40]
    %vm453 = vcmask 1046534
    %v454 = vsel %vm453, %v452, %v450
    %s455 = scalar_lea.vmem %s0, 243
    %v456 = vld [vmem:[%s455] sm:$0x80]
    %vm457 = vcmask 1047559
    %v458 = vsel %vm457, %v456, %v454
    %459 = vrot.lane.b32.xlu0 %v458, 104
    %v460 = vpop.permute.xlu0 %459
    %vm461 = vcmask 884544
    %462 = vst.msk [vmem:[#allocation0] ss:$8 sm:$0xf] %vm461, %v460
    %463 = vst.msk [vmem:[#allocation0] ss:$8 sm:$0xf0] %vm461, %v460
    %s464 = scalar_lea.vmem %s0, 282
    %v465 = vld [vmem:[%s464] sm:$0x1]
    %s466 = scalar_lea.vmem %s0, 313
    %v467 = vld [vmem:[%s466] sm:$0x2]
    %vm468 = vcmask 1041409
    %v469 = vsel %vm468, %v467, %v465
    %s470 = scalar_lea.vmem %s0, 344
    %v471 = vld [vmem:[%s470] sm:$0x4]
    %vm472 = vcmask 1042434
    %v473 = vsel %vm472, %v471, %v469
    %s474 = scalar_lea.vmem %s0, 375
    %v475 = vld [vmem:[%s474] sm:$0x8]
    %vm476 = vcmask 1043459
    %v477 = vsel %vm476, %v475, %v473
    %s478 = scalar_lea.vmem %s0, 406
    %v479 = vld [vmem:[%s478] sm:$0x10]
    %vm480 = vcmask 1044484
    %v481 = vsel %vm480, %v479, %v477
    %s482 = scalar_lea.vmem %s0, 437
    %v483 = vld [vmem:[%s482] sm:$0x20]
    %vm484 = vcmask 1045509
    %v485 = vsel %vm484, %v483, %v481
    %s486 = scalar_lea.vmem %s0, 468
    %v487 = vld [vmem:[%s486] sm:$0x40]
    %vm488 = vcmask 1046534
    %v489 = vsel %vm488, %v487, %v485
    %s490 = scalar_lea.vmem %s0, 499
    %v491 = vld [vmem:[%s490] sm:$0x80]
    %vm492 = vcmask 1047559
    %v493 = vsel %vm492, %v491, %v489
    %494 = vrot.lane.b32.xlu0 %v493, 104
    %v495 = vpop.permute.xlu0 %494
    %vm496 = vcmask 884544
    %s497 = scalar_lea.vmem [#allocation0], 64
    %498 = vst.msk [vmem:[%s497] ss:$8 sm:$0xf] %vm496, %v495
    %s499 = scalar_lea.vmem [#allocation0], 64
    %500 = vst.msk [vmem:[%s499] ss:$8 sm:$0xf0] %vm496, %v495
    %s501 = scalar_lea.vmem %s0, 25
    %v502 = vld [vmem:[%s501] sm:$0x1]
    %s503 = scalar_lea.vmem %s0, 56
    %v504 = vld [vmem:[%s503] sm:$0x2]
    %vm505 = vcmask 1041409
    %v506 = vsel %vm505, %v504, %v502
    %s507 = scalar_lea.vmem %s0, 87
    %v508 = vld [vmem:[%s507] sm:$0x4]
    %vm509 = vcmask 1042434
    %v510 = vsel %vm509, %v508, %v506
    %s511 = scalar_lea.vmem %s0, 118
    %v512 = vld [vmem:[%s511] sm:$0x8]
    %vm513 = vcmask 1043459
    %v514 = vsel %vm513, %v512, %v510
    %s515 = scalar_lea.vmem %s0, 149
    %v516 = vld [vmem:[%s515] sm:$0x10]
    %vm517 = vcmask 1044484
    %v518 = vsel %vm517, %v516, %v514
    %s519 = scalar_lea.vmem %s0, 180
    %v520 = vld [vmem:[%s519] sm:$0x20]
    %vm521 = vcmask 1045509
    %v522 = vsel %vm521, %v520, %v518
    %s523 = scalar_lea.vmem %s0, 211
    %v524 = vld [vmem:[%s523] sm:$0x40]
    %vm525 = vcmask 1046534
    %v526 = vsel %vm525, %v524, %v522
    %s527 = scalar_lea.vmem %s0, 242
    %v528 = vld [vmem:[%s527] sm:$0x80]
    %vm529 = vcmask 1047559
    %v530 = vsel %vm529, %v528, %v526
    %531 = vrot.lane.b32.xlu0 %v530, 100
    %v532 = vpop.permute.xlu0 %531
    %vm533 = vcmask 851744
    %534 = vst.msk [vmem:[#allocation0] ss:$8 sm:$0xf] %vm533, %v532
    %535 = vst.msk [vmem:[#allocation0] ss:$8 sm:$0xf0] %vm533, %v532
    %s536 = scalar_lea.vmem %s0, 281
    %v537 = vld [vmem:[%s536] sm:$0x1]
    %s538 = scalar_lea.vmem %s0, 312
    %v539 = vld [vmem:[%s538] sm:$0x2]
    %vm540 = vcmask 1041409
    %v541 = vsel %vm540, %v539, %v537
    %s542 = scalar_lea.vmem %s0, 343
    %v543 = vld [vmem:[%s542] sm:$0x4]
    %vm544 = vcmask 1042434
    %v545 = vsel %vm544, %v543, %v541
    %s546 = scalar_lea.vmem %s0, 374
    %v547 = vld [vmem:[%s546] sm:$0x8]
    %vm548 = vcmask 1043459
    %v549 = vsel %vm548, %v547, %v545
    %s550 = scalar_lea.vmem %s0, 405
    %v551 = vld [vmem:[%s550] sm:$0x10]
    %vm552 = vcmask 1044484
    %v553 = vsel %vm552, %v551, %v549
    %s554 = scalar_lea.vmem %s0, 436
    %v555 = vld [vmem:[%s554] sm:$0x20]
    %vm556 = vcmask 1045509
    %v557 = vsel %vm556, %v555, %v553
    %s558 = scalar_lea.vmem %s0, 467
    %v559 = vld [vmem:[%s558] sm:$0x40]
    %vm560 = vcmask 1046534
    %v561 = vsel %vm560, %v559, %v557
    %s562 = scalar_lea.vmem %s0, 498
    %v563 = vld [vmem:[%s562] sm:$0x80]
    %vm564 = vcmask 1047559
    %v565 = vsel %vm564, %v563, %v561
    %566 = vrot.lane.b32.xlu0 %v565, 100
    %v567 = vpop.permute.xlu0 %566
    %vm568 = vcmask 851744
    %s569 = scalar_lea.vmem [#allocation0], 64
    %570 = vst.msk [vmem:[%s569] ss:$8 sm:$0xf] %vm568, %v567
    %s571 = scalar_lea.vmem [#allocation0], 64
    %572 = vst.msk [vmem:[%s571] ss:$8 sm:$0xf0] %vm568, %v567
    %s573 = scalar_lea.vmem %s0, 24
    %v574 = vld [vmem:[%s573] sm:$0x1]
    %s575 = scalar_lea.vmem %s0, 55
    %v576 = vld [vmem:[%s575] sm:$0x2]
    %vm577 = vcmask 1041409
    %v578 = vsel %vm577, %v576, %v574
    %s579 = scalar_lea.vmem %s0, 86
    %v580 = vld [vmem:[%s579] sm:$0x4]
    %vm581 = vcmask 1042434
    %v582 = vsel %vm581, %v580, %v578
    %s583 = scalar_lea.vmem %s0, 117
    %v584 = vld [vmem:[%s583] sm:$0x8]
    %vm585 = vcmask 1043459
    %v586 = vsel %vm585, %v584, %v582
    %s587 = scalar_lea.vmem %s0, 148
    %v588 = vld [vmem:[%s587] sm:$0x10]
    %vm589 = vcmask 1044484
    %v590 = vsel %vm589, %v588, %v586
    %s591 = scalar_lea.vmem %s0, 179
    %v592 = vld [vmem:[%s591] sm:$0x20]
    %vm593 = vcmask 1045509
    %v594 = vsel %vm593, %v592, %v590
    %s595 = scalar_lea.vmem %s0, 210
    %v596 = vld [vmem:[%s595] sm:$0x40]
    %vm597 = vcmask 1046534
    %v598 = vsel %vm597, %v596, %v594
    %s599 = scalar_lea.vmem %s0, 241
    %v600 = vld [vmem:[%s599] sm:$0x80]
    %vm601 = vcmask 1047559
    %v602 = vsel %vm601, %v600, %v598
    %603 = vrot.lane.b32.xlu0 %v602, 96
    %v604 = vpop.permute.xlu0 %603
    %vm605 = vcmask 818944
    %606 = vst.msk [vmem:[#allocation0] ss:$8 sm:$0xf] %vm605, %v604
    %607 = vst.msk [vmem:[#allocation0] ss:$8 sm:$0xf0] %vm605, %v604
    %s608 = scalar_lea.vmem %s0, 280
    %v609 = vld [vmem:[%s608] sm:$0x1]
    %s610 = scalar_lea.vmem %s0, 311
    %v611 = vld [vmem:[%s610] sm:$0x2]
    %vm612 = vcmask 1041409
    %v613 = vsel %vm612, %v611, %v609
    %s614 = scalar_lea.vmem %s0, 342
    %v615 = vld [vmem:[%s614] sm:$0x4]
    %vm616 = vcmask 1042434
    %v617 = vsel %vm616, %v615, %v613
    %s618 = scalar_lea.vmem %s0, 373
    %v619 = vld [vmem:[%s618] sm:$0x8]
    %vm620 = vcmask 1043459
    %v621 = vsel %vm620, %v619, %v617
    %s622 = scalar_lea.vmem %s0, 404
    %v623 = vld [vmem:[%s622] sm:$0x10]
    %vm624 = vcmask 1044484
    %v625 = vsel %vm624, %v623, %v621
    %s626 = scalar_lea.vmem %s0, 435
    %v627 = vld [vmem:[%s626] sm:$0x20]
    %vm628 = vcmask 1045509
    %v629 = vsel %vm628, %v627, %v625
    %s630 = scalar_lea.vmem %s0, 466
    %v631 = vld [vmem:[%s630] sm:$0x40]
    %vm632 = vcmask 1046534
    %v633 = vsel %vm632, %v631, %v629
    %s634 = scalar_lea.vmem %s0, 497
    %v635 = vld [vmem:[%s634] sm:$0x80]
    %vm636 = vcmask 1047559
    %v637 = vsel %vm636, %v635, %v633
    %638 = vrot.lane.b32.xlu0 %v637, 96
    %v639 = vpop.permute.xlu0 %638
    %vm640 = vcmask 818944
    %s641 = scalar_lea.vmem [#allocation0], 64
    %642 = vst.msk [vmem:[%s641] ss:$8 sm:$0xf] %vm640, %v639
    %s643 = scalar_lea.vmem [#allocation0], 64
    %644 = vst.msk [vmem:[%s643] ss:$8 sm:$0xf0] %vm640, %v639
    %s645 = scalar_lea.vmem %s0, 23
    %v646 = vld [vmem:[%s645] sm:$0x1]
    %s647 = scalar_lea.vmem %s0, 54
    %v648 = vld [vmem:[%s647] sm:$0x2]
    %vm649 = vcmask 1041409
    %v650 = vsel %vm649, %v648, %v646
    %s651 = scalar_lea.vmem %s0, 85
    %v652 = vld [vmem:[%s651] sm:$0x4]
    %vm653 = vcmask 1042434
    %v654 = vsel %vm653, %v652, %v650
    %s655 = scalar_lea.vmem %s0, 116
    %v656 = vld [vmem:[%s655] sm:$0x8]
    %vm657 = vcmask 1043459
    %v658 = vsel %vm657, %v656, %v654
    %s659 = scalar_lea.vmem %s0, 147
    %v660 = vld [vmem:[%s659] sm:$0x10]
    %vm661 = vcmask 1044484
    %v662 = vsel %vm661, %v660, %v658
    %s663 = scalar_lea.vmem %s0, 178
    %v664 = vld [vmem:[%s663] sm:$0x20]
    %vm665 = vcmask 1045509
    %v666 = vsel %vm665, %v664, %v662
    %s667 = scalar_lea.vmem %s0, 209
    %v668 = vld [vmem:[%s667] sm:$0x40]
    %vm669 = vcmask 1046534
    %v670 = vsel %vm669, %v668, %v666
    %s671 = scalar_lea.vmem %s0, 240
    %v672 = vld [vmem:[%s671] sm:$0x80]
    %vm673 = vcmask 1047559
    %v674 = vsel %vm673, %v672, %v670
    %675 = vrot.lane.b32.xlu0 %v674, 92
    %v676 = vpop.permute.xlu0 %675
    %vm677 = vcmask 786144
    %678 = vst.msk [vmem:[#allocation0] ss:$8 sm:$0xf] %vm677, %v676
    %679 = vst.msk [vmem:[#allocation0] ss:$8 sm:$0xf0] %vm677, %v676
    %s680 = scalar_lea.vmem %s0, 279
    %v681 = vld [vmem:[%s680] sm:$0x1]
    %s682 = scalar_lea.vmem %s0, 310
    %v683 = vld [vmem:[%s682] sm:$0x2]
    %vm684 = vcmask 1041409
    %v685 = vsel %vm684, %v683, %v681
    %s686 = scalar_lea.vmem %s0, 341
    %v687 = vld [vmem:[%s686] sm:$0x4]
    %vm688 = vcmask 1042434
    %v689 = vsel %vm688, %v687, %v685
    %s690 = scalar_lea.vmem %s0, 372
    %v691 = vld [vmem:[%s690] sm:$0x8]
    %vm692 = vcmask 1043459
    %v693 = vsel %vm692, %v691, %v689
    %s694 = scalar_lea.vmem %s0, 403
    %v695 = vld [vmem:[%s694] sm:$0x10]
    %vm696 = vcmask 1044484
    %v697 = vsel %vm696, %v695, %v693
    %s698 = scalar_lea.vmem %s0, 434
    %v699 = vld [vmem:[%s698] sm:$0x20]
    %vm700 = vcmask 1045509
    %v701 = vsel %vm700, %v699, %v697
    %s702 = scalar_lea.vmem %s0, 465
    %v703 = vld [vmem:[%s702] sm:$0x40]
    %vm704 = vcmask 1046534
    %v705 = vsel %vm704, %v703, %v701
    %s706 = scalar_lea.vmem %s0, 496
    %v707 = vld [vmem:[%s706] sm:$0x80]
    %vm708 = vcmask 1047559
    %v709 = vsel %vm708, %v707, %v705
    %710 = vrot.lane.b32.xlu0 %v709, 92
    %v711 = vpop.permute.xlu0 %710
    %vm712 = vcmask 786144
    %s713 = scalar_lea.vmem [#allocation0], 64
    %714 = vst.msk [vmem:[%s713] ss:$8 sm:$0xf] %vm712, %v711
    %s715 = scalar_lea.vmem [#allocation0], 64
    %716 = vst.msk [vmem:[%s715] ss:$8 sm:$0xf0] %vm712, %v711
    %s717 = scalar_lea.vmem %s0, 22
    %v718 = vld [vmem:[%s717] sm:$0x1]
    %s719 = scalar_lea.vmem %s0, 53
    %v720 = vld [vmem:[%s719] sm:$0x2]
    %vm721 = vcmask 1041409
    %v722 = vsel %vm721, %v720, %v718
    %s723 = scalar_lea.vmem %s0, 84
    %v724 = vld [vmem:[%s723] sm:$0x4]
    %vm725 = vcmask 1042434
    %v726 = vsel %vm725, %v724, %v722
    %s727 = scalar_lea.vmem %s0, 115
    %v728 = vld [vmem:[%s727] sm:$0x8]
    %vm729 = vcmask 1043459
    %v730 = vsel %vm729, %v728, %v726
    %s731 = scalar_lea.vmem %s0, 146
    %v732 = vld [vmem:[%s731] sm:$0x10]
    %vm733 = vcmask 1044484
    %v734 = vsel %vm733, %v732, %v730
    %s735 = scalar_lea.vmem %s0, 177
    %v736 = vld [vmem:[%s735] sm:$0x20]
    %vm737 = vcmask 1045509
    %v738 = vsel %vm737, %v736, %v734
    %s739 = scalar_lea.vmem %s0, 208
    %v740 = vld [vmem:[%s739] sm:$0x40]
    %vm741 = vcmask 1046534
    %v742 = vsel %vm741, %v740, %v738
    %s743 = scalar_lea.vmem %s0, 239
    %v744 = vld [vmem:[%s743] sm:$0x80]
    %vm745 = vcmask 1047559
    %v746 = vsel %vm745, %v744, %v742
    %747 = vrot.lane.b32.xlu0 %v746, 88
    %v748 = vpop.permute.xlu0 %747
    %vm749 = vcmask 753344
    %750 = vst.msk [vmem:[#allocation0] ss:$8 sm:$0xf] %vm749, %v748
    %751 = vst.msk [vmem:[#allocation0] ss:$8 sm:$0xf0] %vm749, %v748
    %s752 = scalar_lea.vmem %s0, 278
    %v753 = vld [vmem:[%s752] sm:$0x1]
    %s754 = scalar_lea.vmem %s0, 309
    %v755 = vld [vmem:[%s754] sm:$0x2]
    %vm756 = vcmask 1041409
    %v757 = vsel %vm756, %v755, %v753
    %s758 = scalar_lea.vmem %s0, 340
    %v759 = vld [vmem:[%s758] sm:$0x4]
    %vm760 = vcmask 1042434
    %v761 = vsel %vm760, %v759, %v757
    %s762 = scalar_lea.vmem %s0, 371
    %v763 = vld [vmem:[%s762] sm:$0x8]
    %vm764 = vcmask 1043459
    %v765 = vsel %vm764, %v763, %v761
    %s766 = scalar_lea.vmem %s0, 402
    %v767 = vld [vmem:[%s766] sm:$0x10]
    %vm768 = vcmask 1044484
    %v769 = vsel %vm768, %v767, %v765
    %s770 = scalar_lea.vmem %s0, 433
    %v771 = vld [vmem:[%s770] sm:$0x20]
    %vm772 = vcmask 1045509
    %v773 = vsel %vm772, %v771, %v769
    %s774 = scalar_lea.vmem %s0, 464
    %v775 = vld [vmem:[%s774] sm:$0x40]
    %vm776 = vcmask 1046534
    %v777 = vsel %vm776, %v775, %v773
    %s778 = scalar_lea.vmem %s0, 495
    %v779 = vld [vmem:[%s778] sm:$0x80]
    %vm780 = vcmask 1047559
    %v781 = vsel %vm780, %v779, %v777
    %782 = vrot.lane.b32.xlu0 %v781, 88
    %v783 = vpop.permute.xlu0 %782
    %vm784 = vcmask 753344
    %s785 = scalar_lea.vmem [#allocation0], 64
    %786 = vst.msk [vmem:[%s785] ss:$8 sm:$0xf] %vm784, %v783
    %s787 = scalar_lea.vmem [#allocation0], 64
    %788 = vst.msk [vmem:[%s787] ss:$8 sm:$0xf0] %vm784, %v783
    %s789 = scalar_lea.vmem %s0, 21
    %v790 = vld [vmem:[%s789] sm:$0x1]
    %s791 = scalar_lea.vmem %s0, 52
    %v792 = vld [vmem:[%s791] sm:$0x2]
    %vm793 = vcmask 1041409
    %v794 = vsel %vm793, %v792, %v790
    %s795 = scalar_lea.vmem %s0, 83
    %v796 = vld [vmem:[%s795] sm:$0x4]
    %vm797 = vcmask 1042434
    %v798 = vsel %vm797, %v796, %v794
    %s799 = scalar_lea.vmem %s0, 114
    %v800 = vld [vmem:[%s799] sm:$0x8]
    %vm801 = vcmask 1043459
    %v802 = vsel %vm801, %v800, %v798
    %s803 = scalar_lea.vmem %s0, 145
    %v804 = vld [vmem:[%s803] sm:$0x10]
    %vm805 = vcmask 1044484
    %v806 = vsel %vm805, %v804, %v802
    %s807 = scalar_lea.vmem %s0, 176
    %v808 = vld [vmem:[%s807] sm:$0x20]
    %vm809 = vcmask 1045509
    %v810 = vsel %vm809, %v808, %v806
    %s811 = scalar_lea.vmem %s0, 207
    %v812 = vld [vmem:[%s811] sm:$0x40]
    %vm813 = vcmask 1046534
    %v814 = vsel %vm813, %v812, %v810
    %s815 = scalar_lea.vmem %s0, 238
    %v816 = vld [vmem:[%s815] sm:$0x80]
    %vm817 = vcmask 1047559
    %v818 = vsel %vm817, %v816, %v814
    %819 = vrot.lane.b32.xlu0 %v818, 84
    %v820 = vpop.permute.xlu0 %819
    %vm821 = vcmask 720544
    %822 = vst.msk [vmem:[#allocation0] ss:$8 sm:$0xf] %vm821, %v820
    %823 = vst.msk [vmem:[#allocation0] ss:$8 sm:$0xf0] %vm821, %v820
    %s824 = scalar_lea.vmem %s0, 277
    %v825 = vld [vmem:[%s824] sm:$0x1]
    %s826 = scalar_lea.vmem %s0, 308
    %v827 = vld [vmem:[%s826] sm:$0x2]
    %vm828 = vcmask 1041409
    %v829 = vsel %vm828, %v827, %v825
    %s830 = scalar_lea.vmem %s0, 339
    %v831 = vld [vmem:[%s830] sm:$0x4]
    %vm832 = vcmask 1042434
    %v833 = vsel %vm832, %v831, %v829
    %s834 = scalar_lea.vmem %s0, 370
    %v835 = vld [vmem:[%s834] sm:$0x8]
    %vm836 = vcmask 1043459
    %v837 = vsel %vm836, %v835, %v833
    %s838 = scalar_lea.vmem %s0, 401
    %v839 = vld [vmem:[%s838] sm:$0x10]
    %vm840 = vcmask 1044484
    %v841 = vsel %vm840, %v839, %v837
    %s842 = scalar_lea.vmem %s0, 432
    %v843 = vld [vmem:[%s842] sm:$0x20]
    %vm844 = vcmask 1045509
    %v845 = vsel %vm844, %v843, %v841
    %s846 = scalar_lea.vmem %s0, 463
    %v847 = vld [vmem:[%s846] sm:$0x40]
    %vm848 = vcmask 1046534
    %v849 = vsel %vm848, %v847, %v845
    %s850 = scalar_lea.vmem %s0, 494
    %v851 = vld [vmem:[%s850] sm:$0x80]
    %vm852 = vcmask 1047559
    %v853 = vsel %vm852, %v851, %v849
    %854 = vrot.lane.b32.xlu0 %v853, 84
    %v855 = vpop.permute.xlu0 %854
    %vm856 = vcmask 720544
    %s857 = scalar_lea.vmem [#allocation0], 64
    %858 = vst.msk [vmem:[%s857] ss:$8 sm:$0xf] %vm856, %v855
    %s859 = scalar_lea.vmem [#allocation0], 64
    %860 = vst.msk [vmem:[%s859] ss:$8 sm:$0xf0] %vm856, %v855
    %s861 = scalar_lea.vmem %s0, 20
    %v862 = vld [vmem:[%s861] sm:$0x1]
    %s863 = scalar_lea.vmem %s0, 51
    %v864 = vld [vmem:[%s863] sm:$0x2]
    %vm865 = vcmask 1041409
    %v866 = vsel %vm865, %v864, %v862
    %s867 = scalar_lea.vmem %s0, 82
    %v868 = vld [vmem:[%s867] sm:$0x4]
    %vm869 = vcmask 1042434
    %v870 = vsel %vm869, %v868, %v866
    %s871 = scalar_lea.vmem %s0, 113
    %v872 = vld [vmem:[%s871] sm:$0x8]
    %vm873 = vcmask 1043459
    %v874 = vsel %vm873, %v872, %v870
    %s875 = scalar_lea.vmem %s0, 144
    %v876 = vld [vmem:[%s875] sm:$0x10]
    %vm877 = vcmask 1044484
    %v878 = vsel %vm877, %v876, %v874
    %s879 = scalar_lea.vmem %s0, 175
    %v880 = vld [vmem:[%s879] sm:$0x20]
    %vm881 = vcmask 1045509
    %v882 = vsel %vm881, %v880, %v878
    %s883 = scalar_lea.vmem %s0, 206
    %v884 = vld [vmem:[%s883] sm:$0x40]
    %vm885 = vcmask 1046534
    %v886 = vsel %vm885, %v884, %v882
    %s887 = scalar_lea.vmem %s0, 237
    %v888 = vld [vmem:[%s887] sm:$0x80]
    %vm889 = vcmask 1047559
    %v890 = vsel %vm889, %v888, %v886
    %891 = vrot.lane.b32.xlu0 %v890, 80
    %v892 = vpop.permute.xlu0 %891
    %vm893 = vcmask 687744
    %894 = vst.msk [vmem:[#allocation0] ss:$8 sm:$0xf] %vm893, %v892
    %895 = vst.msk [vmem:[#allocation0] ss:$8 sm:$0xf0] %vm893, %v892
    %s896 = scalar_lea.vmem %s0, 276
    %v897 = vld [vmem:[%s896] sm:$0x1]
    %s898 = scalar_lea.vmem %s0, 307
    %v899 = vld [vmem:[%s898] sm:$0x2]
    %vm900 = vcmask 1041409
    %v901 = vsel %vm900, %v899, %v897
    %s902 = scalar_lea.vmem %s0, 338
    %v903 = vld [vmem:[%s902] sm:$0x4]
    %vm904 = vcmask 1042434
    %v905 = vsel %vm904, %v903, %v901
    %s906 = scalar_lea.vmem %s0, 369
    %v907 = vld [vmem:[%s906] sm:$0x8]
    %vm908 = vcmask 1043459
    %v909 = vsel %vm908, %v907, %v905
    %s910 = scalar_lea.vmem %s0, 400
    %v911 = vld [vmem:[%s910] sm:$0x10]
    %vm912 = vcmask 1044484
    %v913 = vsel %vm912, %v911, %v909
    %s914 = scalar_lea.vmem %s0, 431
    %v915 = vld [vmem:[%s914] sm:$0x20]
    %vm916 = vcmask 1045509
    %v917 = vsel %vm916, %v915, %v913
    %s918 = scalar_lea.vmem %s0, 462
    %v919 = vld [vmem:[%s918] sm:$0x40]
    %vm920 = vcmask 1046534
    %v921 = vsel %vm920, %v919, %v917
    %s922 = scalar_lea.vmem %s0, 493
    %v923 = vld [vmem:[%s922] sm:$0x80]
    %vm924 = vcmask 1047559
    %v925 = vsel %vm924, %v923, %v921
    %926 = vrot.lane.b32.xlu0 %v925, 80
    %v927 = vpop.permute.xlu0 %926
    %vm928 = vcmask 687744
    %s929 = scalar_lea.vmem [#allocation0], 64
    %930 = vst.msk [vmem:[%s929] ss:$8 sm:$0xf] %vm928, %v927
    %s931 = scalar_lea.vmem [#allocation0], 64
    %932 = vst.msk [vmem:[%s931] ss:$8 sm:$0xf0] %vm928, %v927
    %s933 = scalar_lea.vmem %s0, 19
    %v934 = vld [vmem:[%s933] sm:$0x1]
    %s935 = scalar_lea.vmem %s0, 50
    %v936 = vld [vmem:[%s935] sm:$0x2]
    %vm937 = vcmask 1041409
    %v938 = vsel %vm937, %v936, %v934
    %s939 = scalar_lea.vmem %s0, 81
    %v940 = vld [vmem:[%s939] sm:$0x4]
    %vm941 = vcmask 1042434
    %v942 = vsel %vm941, %v940, %v938
    %s943 = scalar_lea.vmem %s0, 112
    %v944 = vld [vmem:[%s943] sm:$0x8]
    %vm945 = vcmask 1043459
    %v946 = vsel %vm945, %v944, %v942
    %s947 = scalar_lea.vmem %s0, 143
    %v948 = vld [vmem:[%s947] sm:$0x10]
    %vm949 = vcmask 1044484
    %v950 = vsel %vm949, %v948, %v946
    %s951 = scalar_lea.vmem %s0, 174
    %v952 = vld [vmem:[%s951] sm:$0x20]
    %vm953 = vcmask 1045509
    %v954 = vsel %vm953, %v952, %v950
    %s955 = scalar_lea.vmem %s0, 205
    %v956 = vld [vmem:[%s955] sm:$0x40]
    %vm957 = vcmask 1046534
    %v958 = vsel %vm957, %v956, %v954
    %s959 = scalar_lea.vmem %s0, 236
    %v960 = vld [vmem:[%s959] sm:$0x80]
    %vm961 = vcmask 1047559
    %v962 = vsel %vm961, %v960, %v958
    %963 = vrot.lane.b32.xlu0 %v962, 76
    %v964 = vpop.permute.xlu0 %963
    %vm965 = vcmask 654944
    %966 = vst.msk [vmem:[#allocation0] ss:$8 sm:$0xf] %vm965, %v964
    %967 = vst.msk [vmem:[#allocation0] ss:$8 sm:$0xf0] %vm965, %v964
    %s968 = scalar_lea.vmem %s0, 275
    %v969 = vld [vmem:[%s968] sm:$0x1]
    %s970 = scalar_lea.vmem %s0, 306
    %v971 = vld [vmem:[%s970] sm:$0x2]
    %vm972 = vcmask 1041409
    %v973 = vsel %vm972, %v971, %v969
    %s974 = scalar_lea.vmem %s0, 337
    %v975 = vld [vmem:[%s974] sm:$0x4]
    %vm976 = vcmask 1042434
    %v977 = vsel %vm976, %v975, %v973
    %s978 = scalar_lea.vmem %s0, 368
    %v979 = vld [vmem:[%s978] sm:$0x8]
    %vm980 = vcmask 1043459
    %v981 = vsel %vm980, %v979, %v977
    %s982 = scalar_lea.vmem %s0, 399
    %v983 = vld [vmem:[%s982] sm:$0x10]
    %vm984 = vcmask 1044484
    %v985 = vsel %vm984, %v983, %v981
    %s986 = scalar_lea.vmem %s0, 430
    %v987 = vld [vmem:[%s986] sm:$0x20]
    %vm988 = vcmask 1045509
    %v989 = vsel %vm988, %v987, %v985
    %s990 = scalar_lea.vmem %s0, 461
    %v991 = vld [vmem:[%s990] sm:$0x40]
    %vm992 = vcmask 1046534
    %v993 = vsel %vm992, %v991, %v989
    %s994 = scalar_lea.vmem %s0, 492
    %v995 = vld [vmem:[%s994] sm:$0x80]
    %vm996 = vcmask 1047559
    %v997 = vsel %vm996, %v995, %v993
    %998 = vrot.lane.b32.xlu0 %v997, 76
    %v999 = vpop.permute.xlu0 %998
    %vm1000 = vcmask 654944
    %s1001 = scalar_lea.vmem [#allocation0], 64
    %1002 = vst.msk [vmem:[%s1001] ss:$8 sm:$0xf] %vm1000, %v999
    %s1003 = scalar_lea.vmem [#allocation0], 64
    %1004 = vst.msk [vmem:[%s1003] ss:$8 sm:$0xf0] %vm1000, %v999
    %s1005 = scalar_lea.vmem %s0, 18
    %v1006 = vld [vmem:[%s1005] sm:$0x1]
    %s1007 = scalar_lea.vmem %s0, 49
    %v1008 = vld [vmem:[%s1007] sm:$0x2]
    %vm1009 = vcmask 1041409
    %v1010 = vsel %vm1009, %v1008, %v1006
    %s1011 = scalar_lea.vmem %s0, 80
    %v1012 = vld [vmem:[%s1011] sm:$0x4]
    %vm1013 = vcmask 1042434
    %v1014 = vsel %vm1013, %v1012, %v1010
    %s1015 = scalar_lea.vmem %s0, 111
    %v1016 = vld [vmem:[%s1015] sm:$0x8]
    %vm1017 = vcmask 1043459
    %v1018 = vsel %vm1017, %v1016, %v1014
    %s1019 = scalar_lea.vmem %s0, 142
    %v1020 = vld [vmem:[%s1019] sm:$0x10]
    %vm1021 = vcmask 1044484
    %v1022 = vsel %vm1021, %v1020, %v1018
    %s1023 = scalar_lea.vmem %s0, 173
    %v1024 = vld [vmem:[%s1023] sm:$0x20]
    %vm1025 = vcmask 1045509
    %v1026 = vsel %vm1025, %v1024, %v1022
    %s1027 = scalar_lea.vmem %s0, 204
    %v1028 = vld [vmem:[%s1027] sm:$0x40]
    %vm1029 = vcmask 1046534
    %v1030 = vsel %vm1029, %v1028, %v1026
    %s1031 = scalar_lea.vmem %s0, 235
    %v1032 = vld [vmem:[%s1031] sm:$0x80]
    %vm1033 = vcmask 1047559
    %v1034 = vsel %vm1033, %v1032, %v1030
    %1035 = vrot.lane.b32.xlu0 %v1034, 72
    %v1036 = vpop.permute.xlu0 %1035
    %vm1037 = vcmask 622144
    %1038 = vst.msk [vmem:[#allocation0] ss:$8 sm:$0xf] %vm1037, %v1036
    %1039 = vst.msk [vmem:[#allocation0] ss:$8 sm:$0xf0] %vm1037, %v1036
    %s1040 = scalar_lea.vmem %s0, 274
    %v1041 = vld [vmem:[%s1040] sm:$0x1]
    %s1042 = scalar_lea.vmem %s0, 305
    %v1043 = vld [vmem:[%s1042] sm:$0x2]
    %vm1044 = vcmask 1041409
    %v1045 = vsel %vm1044, %v1043, %v1041
    %s1046 = scalar_lea.vmem %s0, 336
    %v1047 = vld [vmem:[%s1046] sm:$0x4]
    %vm1048 = vcmask 1042434
    %v1049 = vsel %vm1048, %v1047, %v1045
    %s1050 = scalar_lea.vmem %s0, 367
    %v1051 = vld [vmem:[%s1050] sm:$0x8]
    %vm1052 = vcmask 1043459
    %v1053 = vsel %vm1052, %v1051, %v1049
    %s1054 = scalar_lea.vmem %s0, 398
    %v1055 = vld [vmem:[%s1054] sm:$0x10]
    %vm1056 = vcmask 1044484
    %v1057 = vsel %vm1056, %v1055, %v1053
    %s1058 = scalar_lea.vmem %s0, 429
    %v1059 = vld [vmem:[%s1058] sm:$0x20]
    %vm1060 = vcmask 1045509
    %v1061 = vsel %vm1060, %v1059, %v1057
    %s1062 = scalar_lea.vmem %s0, 460
    %v1063 = vld [vmem:[%s1062] sm:$0x40]
    %vm1064 = vcmask 1046534
    %v1065 = vsel %vm1064, %v1063, %v1061
    %s1066 = scalar_lea.vmem %s0, 491
    %v1067 = vld [vmem:[%s1066] sm:$0x80]
    %vm1068 = vcmask 1047559
    %v1069 = vsel %vm1068, %v1067, %v1065
    %1070 = vrot.lane.b32.xlu0 %v1069, 72
    %v1071 = vpop.permute.xlu0 %1070
    %vm1072 = vcmask 622144
    %s1073 = scalar_lea.vmem [#allocation0], 64
    %1074 = vst.msk [vmem:[%s1073] ss:$8 sm:$0xf] %vm1072, %v1071
    %s1075 = scalar_lea.vmem [#allocation0], 64
    %1076 = vst.msk [vmem:[%s1075] ss:$8 sm:$0xf0] %vm1072, %v1071
    %s1077 = scalar_lea.vmem %s0, 17
    %v1078 = vld [vmem:[%s1077] sm:$0x1]
    %s1079 = scalar_lea.vmem %s0, 48
    %v1080 = vld [vmem:[%s1079] sm:$0x2]
    %vm1081 = vcmask 1041409
    %v1082 = vsel %vm1081, %v1080, %v1078
    %s1083 = scalar_lea.vmem %s0, 79
    %v1084 = vld [vmem:[%s1083] sm:$0x4]
    %vm1085 = vcmask 1042434
    %v1086 = vsel %vm1085, %v1084, %v1082
    %s1087 = scalar_lea.vmem %s0, 110
    %v1088 = vld [vmem:[%s1087] sm:$0x8]
    %vm1089 = vcmask 1043459
    %v1090 = vsel %vm1089, %v1088, %v1086
    %s1091 = scalar_lea.vmem %s0, 141
    %v1092 = vld [vmem:[%s1091] sm:$0x10]
    %vm1093 = vcmask 1044484
    %v1094 = vsel %vm1093, %v1092, %v1090
    %s1095 = scalar_lea.vmem %s0, 172
    %v1096 = vld [vmem:[%s1095] sm:$0x20]
    %vm1097 = vcmask 1045509
    %v1098 = vsel %vm1097, %v1096, %v1094
    %s1099 = scalar_lea.vmem %s0, 203
    %v1100 = vld [vmem:[%s1099] sm:$0x40]
    %vm1101 = vcmask 1046534
    %v1102 = vsel %vm1101, %v1100, %v1098
    %s1103 = scalar_lea.vmem %s0, 234
    %v1104 = vld [vmem:[%s1103] sm:$0x80]
    %vm1105 = vcmask 1047559
    %v1106 = vsel %vm1105, %v1104, %v1102
    %1107 = vrot.lane.b32.xlu0 %v1106, 68
    %v1108 = vpop.permute.xlu0 %1107
    %vm1109 = vcmask 589344
    %1110 = vst.msk [vmem:[#allocation0] ss:$8 sm:$0xf] %vm1109, %v1108
    %1111 = vst.msk [vmem:[#allocation0] ss:$8 sm:$0xf0] %vm1109, %v1108
    %s1112 = scalar_lea.vmem %s0, 273
    %v1113 = vld [vmem:[%s1112] sm:$0x1]
    %s1114 = scalar_lea.vmem %s0, 304
    %v1115 = vld [vmem:[%s1114] sm:$0x2]
    %vm1116 = vcmask 1041409
    %v1117 = vsel %vm1116, %v1115, %v1113
    %s1118 = scalar_lea.vmem %s0, 335
    %v1119 = vld [vmem:[%s1118] sm:$0x4]
    %vm1120 = vcmask 1042434
    %v1121 = vsel %vm1120, %v1119, %v1117
    %s1122 = scalar_lea.vmem %s0, 366
    %v1123 = vld [vmem:[%s1122] sm:$0x8]
    %vm1124 = vcmask 1043459
    %v1125 = vsel %vm1124, %v1123, %v1121
    %s1126 = scalar_lea.vmem %s0, 397
    %v1127 = vld [vmem:[%s1126] sm:$0x10]
    %vm1128 = vcmask 1044484
    %v1129 = vsel %vm1128, %v1127, %v1125
    %s1130 = scalar_lea.vmem %s0, 428
    %v1131 = vld [vmem:[%s1130] sm:$0x20]
    %vm1132 = vcmask 1045509
    %v1133 = vsel %vm1132, %v1131, %v1129
    %s1134 = scalar_lea.vmem %s0, 459
    %v1135 = vld [vmem:[%s1134] sm:$0x40]
    %vm1136 = vcmask 1046534
    %v1137 = vsel %vm1136, %v1135, %v1133
    %s1138 = scalar_lea.vmem %s0, 490
    %v1139 = vld [vmem:[%s1138] sm:$0x80]
    %vm1140 = vcmask 1047559
    %v1141 = vsel %vm1140, %v1139, %v1137
    %1142 = vrot.lane.b32.xlu0 %v1141, 68
    %v1143 = vpop.permute.xlu0 %1142
    %vm1144 = vcmask 589344
    %s1145 = scalar_lea.vmem [#allocation0], 64
    %1146 = vst.msk [vmem:[%s1145] ss:$8 sm:$0xf] %vm1144, %v1143
    %s1147 = scalar_lea.vmem [#allocation0], 64
    %1148 = vst.msk [vmem:[%s1147] ss:$8 sm:$0xf0] %vm1144, %v1143
    %s1149 = scalar_lea.vmem %s0, 16
    %v1150 = vld [vmem:[%s1149] sm:$0x1]
    %s1151 = scalar_lea.vmem %s0, 47
    %v1152 = vld [vmem:[%s1151] sm:$0x2]
    %vm1153 = vcmask 1041409
    %v1154 = vsel %vm1153, %v1152, %v1150
    %s1155 = scalar_lea.vmem %s0, 78
    %v1156 = vld [vmem:[%s1155] sm:$0x4]
    %vm1157 = vcmask 1042434
    %v1158 = vsel %vm1157, %v1156, %v1154
    %s1159 = scalar_lea.vmem %s0, 109
    %v1160 = vld [vmem:[%s1159] sm:$0x8]
    %vm1161 = vcmask 1043459
    %v1162 = vsel %vm1161, %v1160, %v1158
    %s1163 = scalar_lea.vmem %s0, 140
    %v1164 = vld [vmem:[%s1163] sm:$0x10]
    %vm1165 = vcmask 1044484
    %v1166 = vsel %vm1165, %v1164, %v1162
    %s1167 = scalar_lea.vmem %s0, 171
    %v1168 = vld [vmem:[%s1167] sm:$0x20]
    %vm1169 = vcmask 1045509
    %v1170 = vsel %vm1169, %v1168, %v1166
    %s1171 = scalar_lea.vmem %s0, 202
    %v1172 = vld [vmem:[%s1171] sm:$0x40]
    %vm1173 = vcmask 1046534
    %v1174 = vsel %vm1173, %v1172, %v1170
    %s1175 = scalar_lea.vmem %s0, 233
    %v1176 = vld [vmem:[%s1175] sm:$0x80]
    %vm1177 = vcmask 1047559
    %v1178 = vsel %vm1177, %v1176, %v1174
    %1179 = vrot.lane.b32.xlu0 %v1178, 64
    %v1180 = vpop.permute.xlu0 %1179
    %vm1181 = vcmask 556544
    %1182 = vst.msk [vmem:[#allocation0] ss:$8 sm:$0xf] %vm1181, %v1180
    %1183 = vst.msk [vmem:[#allocation0] ss:$8 sm:$0xf0] %vm1181, %v1180
    %s1184 = scalar_lea.vmem %s0, 272
    %v1185 = vld [vmem:[%s1184] sm:$0x1]
    %s1186 = scalar_lea.vmem %s0, 303
    %v1187 = vld [vmem:[%s1186] sm:$0x2]
    %vm1188 = vcmask 1041409
    %v1189 = vsel %vm1188, %v1187, %v1185
    %s1190 = scalar_lea.vmem %s0, 334
    %v1191 = vld [vmem:[%s1190] sm:$0x4]
    %vm1192 = vcmask 1042434
    %v1193 = vsel %vm1192, %v1191, %v1189
    %s1194 = scalar_lea.vmem %s0, 365
    %v1195 = vld [vmem:[%s1194] sm:$0x8]
    %vm1196 = vcmask 1043459
    %v1197 = vsel %vm1196, %v1195, %v1193
    %s1198 = scalar_lea.vmem %s0, 396
    %v1199 = vld [vmem:[%s1198] sm:$0x10]
    %vm1200 = vcmask 1044484
    %v1201 = vsel %vm1200, %v1199, %v1197
    %s1202 = scalar_lea.vmem %s0, 427
    %v1203 = vld [vmem:[%s1202] sm:$0x20]
    %vm1204 = vcmask 1045509
    %v1205 = vsel %vm1204, %v1203, %v1201
    %s1206 = scalar_lea.vmem %s0, 458
    %v1207 = vld [vmem:[%s1206] sm:$0x40]
    %vm1208 = vcmask 1046534
    %v1209 = vsel %vm1208, %v1207, %v1205
    %s1210 = scalar_lea.vmem %s0, 489
    %v1211 = vld [vmem:[%s1210] sm:$0x80]
    %vm1212 = vcmask 1047559
    %v1213 = vsel %vm1212, %v1211, %v1209
    %1214 = vrot.lane.b32.xlu0 %v1213, 64
    %v1215 = vpop.permute.xlu0 %1214
    %vm1216 = vcmask 556544
    %s1217 = scalar_lea.vmem [#allocation0], 64
    %1218 = vst.msk [vmem:[%s1217] ss:$8 sm:$0xf] %vm1216, %v1215
    %s1219 = scalar_lea.vmem [#allocation0], 64
    %1220 = vst.msk [vmem:[%s1219] ss:$8 sm:$0xf0] %vm1216, %v1215
    %s1221 = scalar_lea.vmem %s0, 15
    %v1222 = vld [vmem:[%s1221] sm:$0x1]
    %s1223 = scalar_lea.vmem %s0, 46
    %v1224 = vld [vmem:[%s1223] sm:$0x2]
    %vm1225 = vcmask 1041409
    %v1226 = vsel %vm1225, %v1224, %v1222
    %s1227 = scalar_lea.vmem %s0, 77
    %v1228 = vld [vmem:[%s1227] sm:$0x4]
    %vm1229 = vcmask 1042434
    %v1230 = vsel %vm1229, %v1228, %v1226
    %s1231 = scalar_lea.vmem %s0, 108
    %v1232 = vld [vmem:[%s1231] sm:$0x8]
    %vm1233 = vcmask 1043459
    %v1234 = vsel %vm1233, %v1232, %v1230
    %s1235 = scalar_lea.vmem %s0, 139
    %v1236 = vld [vmem:[%s1235] sm:$0x10]
    %vm1237 = vcmask 1044484
    %v1238 = vsel %vm1237, %v1236, %v1234
    %s1239 = scalar_lea.vmem %s0, 170
    %v1240 = vld [vmem:[%s1239] sm:$0x20]
    %vm1241 = vcmask 1045509
    %v1242 = vsel %vm1241, %v1240, %v1238
    %s1243 = scalar_lea.vmem %s0, 201
    %v1244 = vld [vmem:[%s1243] sm:$0x40]
    %vm1245 = vcmask 1046534
    %v1246 = vsel %vm1245, %v1244, %v1242
    %s1247 = scalar_lea.vmem %s0, 232
    %v1248 = vld [vmem:[%s1247] sm:$0x80]
    %vm1249 = vcmask 1047559
    %v1250 = vsel %vm1249, %v1248, %v1246
    %1251 = vrot.lane.b32.xlu0 %v1250, 60
    %v1252 = vpop.permute.xlu0 %1251
    %vm1253 = vcmask 523744
    %1254 = vst.msk [vmem:[#allocation0] ss:$8 sm:$0xf] %vm1253, %v1252
    %1255 = vst.msk [vmem:[#allocation0] ss:$8 sm:$0xf0] %vm1253, %v1252
    %s1256 = scalar_lea.vmem %s0, 271
    %v1257 = vld [vmem:[%s1256] sm:$0x1]
    %s1258 = scalar_lea.vmem %s0, 302
    %v1259 = vld [vmem:[%s1258] sm:$0x2]
    %vm1260 = vcmask 1041409
    %v1261 = vsel %vm1260, %v1259, %v1257
    %s1262 = scalar_lea.vmem %s0, 333
    %v1263 = vld [vmem:[%s1262] sm:$0x4]
    %vm1264 = vcmask 1042434
    %v1265 = vsel %vm1264, %v1263, %v1261
    %s1266 = scalar_lea.vmem %s0, 364
    %v1267 = vld [vmem:[%s1266] sm:$0x8]
    %vm1268 = vcmask 1043459
    %v1269 = vsel %vm1268, %v1267, %v1265
    %s1270 = scalar_lea.vmem %s0, 395
    %v1271 = vld [vmem:[%s1270] sm:$0x10]
    %vm1272 = vcmask 1044484
    %v1273 = vsel %vm1272, %v1271, %v1269
    %s1274 = scalar_lea.vmem %s0, 426
    %v1275 = vld [vmem:[%s1274] sm:$0x20]
    %vm1276 = vcmask 1045509
    %v1277 = vsel %vm1276, %v1275, %v1273
    %s1278 = scalar_lea.vmem %s0, 457
    %v1279 = vld [vmem:[%s1278] sm:$0x40]
    %vm1280 = vcmask 1046534
    %v1281 = vsel %vm1280, %v1279, %v1277
    %s1282 = scalar_lea.vmem %s0, 488
    %v1283 = vld [vmem:[%s1282] sm:$0x80]
    %vm1284 = vcmask 1047559
    %v1285 = vsel %vm1284, %v1283, %v1281
    %1286 = vrot.lane.b32.xlu0 %v1285, 60
    %v1287 = vpop.permute.xlu0 %1286
    %vm1288 = vcmask 523744
    %s1289 = scalar_lea.vmem [#allocation0], 64
    %1290 = vst.msk [vmem:[%s1289] ss:$8 sm:$0xf] %vm1288, %v1287
    %s1291 = scalar_lea.vmem [#allocation0], 64
    %1292 = vst.msk [vmem:[%s1291] ss:$8 sm:$0xf0] %vm1288, %v1287
    %s1293 = scalar_lea.vmem %s0, 14
    %v1294 = vld [vmem:[%s1293] sm:$0x1]
    %s1295 = scalar_lea.vmem %s0, 45
    %v1296 = vld [vmem:[%s1295] sm:$0x2]
    %vm1297 = vcmask 1041409
    %v1298 = vsel %vm1297, %v1296, %v1294
    %s1299 = scalar_lea.vmem %s0, 76
    %v1300 = vld [vmem:[%s1299] sm:$0x4]
    %vm1301 = vcmask 1042434
    %v1302 = vsel %vm1301, %v1300, %v1298
    %s1303 = scalar_lea.vmem %s0, 107
    %v1304 = vld [vmem:[%s1303] sm:$0x8]
    %vm1305 = vcmask 1043459
    %v1306 = vsel %vm1305, %v1304, %v1302
    %s1307 = scalar_lea.vmem %s0, 138
    %v1308 = vld [vmem:[%s1307] sm:$0x10]
    %vm1309 = vcmask 1044484
    %v1310 = vsel %vm1309, %v1308, %v1306
    %s1311 = scalar_lea.vmem %s0, 169
    %v1312 = vld [vmem:[%s1311] sm:$0x20]
    %vm1313 = vcmask 1045509
    %v1314 = vsel %vm1313, %v1312, %v1310
    %s1315 = scalar_lea.vmem %s0, 200
    %v1316 = vld [vmem:[%s1315] sm:$0x40]
    %vm1317 = vcmask 1046534
    %v1318 = vsel %vm1317, %v1316, %v1314
    %s1319 = scalar_lea.vmem %s0, 231
    %v1320 = vld [vmem:[%s1319] sm:$0x80]
    %vm1321 = vcmask 1047559
    %v1322 = vsel %vm1321, %v1320, %v1318
    %1323 = vrot.lane.b32.xlu0 %v1322, 56
    %v1324 = vpop.permute.xlu0 %1323
    %vm1325 = vcmask 490944
    %1326 = vst.msk [vmem:[#allocation0] ss:$8 sm:$0xf] %vm1325, %v1324
    %1327 = vst.msk [vmem:[#allocation0] ss:$8 sm:$0xf0] %vm1325, %v1324
    %s1328 = scalar_lea.vmem %s0, 270
    %v1329 = vld [vmem:[%s1328] sm:$0x1]
    %s1330 = scalar_lea.vmem %s0, 301
    %v1331 = vld [vmem:[%s1330] sm:$0x2]
    %vm1332 = vcmask 1041409
    %v1333 = vsel %vm1332, %v1331, %v1329
    %s1334 = scalar_lea.vmem %s0, 332
    %v1335 = vld [vmem:[%s1334] sm:$0x4]
    %vm1336 = vcmask 1042434
    %v1337 = vsel %vm1336, %v1335, %v1333
    %s1338 = scalar_lea.vmem %s0, 363
    %v1339 = vld [vmem:[%s1338] sm:$0x8]
    %vm1340 = vcmask 1043459
    %v1341 = vsel %vm1340, %v1339, %v1337
    %s1342 = scalar_lea.vmem %s0, 394
    %v1343 = vld [vmem:[%s1342] sm:$0x10]
    %vm1344 = vcmask 1044484
    %v1345 = vsel %vm1344, %v1343, %v1341
    %s1346 = scalar_lea.vmem %s0, 425
    %v1347 = vld [vmem:[%s1346] sm:$0x20]
    %vm1348 = vcmask 1045509
    %v1349 = vsel %vm1348, %v1347, %v1345
    %s1350 = scalar_lea.vmem %s0, 456
    %v1351 = vld [vmem:[%s1350] sm:$0x40]
    %vm1352 = vcmask 1046534
    %v1353 = vsel %vm1352, %v1351, %v1349
    %s1354 = scalar_lea.vmem %s0, 487
    %v1355 = vld [vmem:[%s1354] sm:$0x80]
    %vm1356 = vcmask 1047559
    %v1357 = vsel %vm1356, %v1355, %v1353
    %1358 = vrot.lane.b32.xlu0 %v1357, 56
    %v1359 = vpop.permute.xlu0 %1358
    %vm1360 = vcmask 490944
    %s1361 = scalar_lea.vmem [#allocation0], 64
    %1362 = vst.msk [vmem:[%s1361] ss:$8 sm:$0xf] %vm1360, %v1359
    %s1363 = scalar_lea.vmem [#allocation0], 64
    %1364 = vst.msk [vmem:[%s1363] ss:$8 sm:$0xf0] %vm1360, %v1359
    %s1365 = scalar_lea.vmem %s0, 13
    %v1366 = vld [vmem:[%s1365] sm:$0x1]
    %s1367 = scalar_lea.vmem %s0, 44
    %v1368 = vld [vmem:[%s1367] sm:$0x2]
    %vm1369 = vcmask 1041409
    %v1370 = vsel %vm1369, %v1368, %v1366
    %s1371 = scalar_lea.vmem %s0, 75
    %v1372 = vld [vmem:[%s1371] sm:$0x4]
    %vm1373 = vcmask 1042434
    %v1374 = vsel %vm1373, %v1372, %v1370
    %s1375 = scalar_lea.vmem %s0, 106
    %v1376 = vld [vmem:[%s1375] sm:$0x8]
    %vm1377 = vcmask 1043459
    %v1378 = vsel %vm1377, %v1376, %v1374
    %s1379 = scalar_lea.vmem %s0, 137
    %v1380 = vld [vmem:[%s1379] sm:$0x10]
    %vm1381 = vcmask 1044484
    %v1382 = vsel %vm1381, %v1380, %v1378
    %s1383 = scalar_lea.vmem %s0, 168
    %v1384 = vld [vmem:[%s1383] sm:$0x20]
    %vm1385 = vcmask 1045509
    %v1386 = vsel %vm1385, %v1384, %v1382
    %s1387 = scalar_lea.vmem %s0, 199
    %v1388 = vld [vmem:[%s1387] sm:$0x40]
    %vm1389 = vcmask 1046534
    %v1390 = vsel %vm1389, %v1388, %v1386
    %s1391 = scalar_lea.vmem %s0, 230
    %v1392 = vld [vmem:[%s1391] sm:$0x80]
    %vm1393 = vcmask 1047559
    %v1394 = vsel %vm1393, %v1392, %v1390
    %1395 = vrot.lane.b32.xlu0 %v1394, 52
    %v1396 = vpop.permute.xlu0 %1395
    %vm1397 = vcmask 458144
    %1398 = vst.msk [vmem:[#allocation0] ss:$8 sm:$0xf] %vm1397, %v1396
    %1399 = vst.msk [vmem:[#allocation0] ss:$8 sm:$0xf0] %vm1397, %v1396
    %s1400 = scalar_lea.vmem %s0, 269
    %v1401 = vld [vmem:[%s1400] sm:$0x1]
    %s1402 = scalar_lea.vmem %s0, 300
    %v1403 = vld [vmem:[%s1402] sm:$0x2]
    %vm1404 = vcmask 1041409
    %v1405 = vsel %vm1404, %v1403, %v1401
    %s1406 = scalar_lea.vmem %s0, 331
    %v1407 = vld [vmem:[%s1406] sm:$0x4]
    %vm1408 = vcmask 1042434
    %v1409 = vsel %vm1408, %v1407, %v1405
    %s1410 = scalar_lea.vmem %s0, 362
    %v1411 = vld [vmem:[%s1410] sm:$0x8]
    %vm1412 = vcmask 1043459
    %v1413 = vsel %vm1412, %v1411, %v1409
    %s1414 = scalar_lea.vmem %s0, 393
    %v1415 = vld [vmem:[%s1414] sm:$0x10]
    %vm1416 = vcmask 1044484
    %v1417 = vsel %vm1416, %v1415, %v1413
    %s1418 = scalar_lea.vmem %s0, 424
    %v1419 = vld [vmem:[%s1418] sm:$0x20]
    %vm1420 = vcmask 1045509
    %v1421 = vsel %vm1420, %v1419, %v1417
    %s1422 = scalar_lea.vmem %s0, 455
    %v1423 = vld [vmem:[%s1422] sm:$0x40]
    %vm1424 = vcmask 1046534
    %v1425 = vsel %vm1424, %v1423, %v1421
    %s1426 = scalar_lea.vmem %s0, 486
    %v1427 = vld [vmem:[%s1426] sm:$0x80]
    %vm1428 = vcmask 1047559
    %v1429 = vsel %vm1428, %v1427, %v1425
    %1430 = vrot.lane.b32.xlu0 %v1429, 52
    %v1431 = vpop.permute.xlu0 %1430
    %vm1432 = vcmask 458144
    %s1433 = scalar_lea.vmem [#allocation0], 64
    %1434 = vst.msk [vmem:[%s1433] ss:$8 sm:$0xf] %vm1432, %v1431
    %s1435 = scalar_lea.vmem [#allocation0], 64
    %1436 = vst.msk [vmem:[%s1435] ss:$8 sm:$0xf0] %vm1432, %v1431
    %s1437 = scalar_lea.vmem %s0, 12
    %v1438 = vld [vmem:[%s1437] sm:$0x1]
    %s1439 = scalar_lea.vmem %s0, 43
    %v1440 = vld [vmem:[%s1439] sm:$0x2]
    %vm1441 = vcmask 1041409
    %v1442 = vsel %vm1441, %v1440, %v1438
    %s1443 = scalar_lea.vmem %s0, 74
    %v1444 = vld [vmem:[%s1443] sm:$0x4]
    %vm1445 = vcmask 1042434
    %v1446 = vsel %vm1445, %v1444, %v1442
    %s1447 = scalar_lea.vmem %s0, 105
    %v1448 = vld [vmem:[%s1447] sm:$0x8]
    %vm1449 = vcmask 1043459
    %v1450 = vsel %vm1449, %v1448, %v1446
    %s1451 = scalar_lea.vmem %s0, 136
    %v1452 = vld [vmem:[%s1451] sm:$0x10]
    %vm1453 = vcmask 1044484
    %v1454 = vsel %vm1453, %v1452, %v1450
    %s1455 = scalar_lea.vmem %s0, 167
    %v1456 = vld [vmem:[%s1455] sm:$0x20]
    %vm1457 = vcmask 1045509
    %v1458 = vsel %vm1457, %v1456, %v1454
    %s1459 = scalar_lea.vmem %s0, 198
    %v1460 = vld [vmem:[%s1459] sm:$0x40]
    %vm1461 = vcmask 1046534
    %v1462 = vsel %vm1461, %v1460, %v1458
    %s1463 = scalar_lea.vmem %s0, 229
    %v1464 = vld [vmem:[%s1463] sm:$0x80]
    %vm1465 = vcmask 1047559
    %v1466 = vsel %vm1465, %v1464, %v1462
    %1467 = vrot.lane.b32.xlu0 %v1466, 48
    %v1468 = vpop.permute.xlu0 %1467
    %vm1469 = vcmask 425344
    %1470 = vst.msk [vmem:[#allocation0] ss:$8 sm:$0xf] %vm1469, %v1468
    %1471 = vst.msk [vmem:[#allocation0] ss:$8 sm:$0xf0] %vm1469, %v1468
    %s1472 = scalar_lea.vmem %s0, 268
    %v1473 = vld [vmem:[%s1472] sm:$0x1]
    %s1474 = scalar_lea.vmem %s0, 299
    %v1475 = vld [vmem:[%s1474] sm:$0x2]
    %vm1476 = vcmask 1041409
    %v1477 = vsel %vm1476, %v1475, %v1473
    %s1478 = scalar_lea.vmem %s0, 330
    %v1479 = vld [vmem:[%s1478] sm:$0x4]
    %vm1480 = vcmask 1042434
    %v1481 = vsel %vm1480, %v1479, %v1477
    %s1482 = scalar_lea.vmem %s0, 361
    %v1483 = vld [vmem:[%s1482] sm:$0x8]
    %vm1484 = vcmask 1043459
    %v1485 = vsel %vm1484, %v1483, %v1481
    %s1486 = scalar_lea.vmem %s0, 392
    %v1487 = vld [vmem:[%s1486] sm:$0x10]
    %vm1488 = vcmask 1044484
    %v1489 = vsel %vm1488, %v1487, %v1485
    %s1490 = scalar_lea.vmem %s0, 423
    %v1491 = vld [vmem:[%s1490] sm:$0x20]
    %vm1492 = vcmask 1045509
    %v1493 = vsel %vm1492, %v1491, %v1489
    %s1494 = scalar_lea.vmem %s0, 454
    %v1495 = vld [vmem:[%s1494] sm:$0x40]
    %vm1496 = vcmask 1046534
    %v1497 = vsel %vm1496, %v1495, %v1493
    %s1498 = scalar_lea.vmem %s0, 485
    %v1499 = vld [vmem:[%s1498] sm:$0x80]
    %vm1500 = vcmask 1047559
    %v1501 = vsel %vm1500, %v1499, %v1497
    %1502 = vrot.lane.b32.xlu0 %v1501, 48
    %v1503 = vpop.permute.xlu0 %1502
    %vm1504 = vcmask 425344
    %s1505 = scalar_lea.vmem [#allocation0], 64
    %1506 = vst.msk [vmem:[%s1505] ss:$8 sm:$0xf] %vm1504, %v1503
    %s1507 = scalar_lea.vmem [#allocation0], 64
    %1508 = vst.msk [vmem:[%s1507] ss:$8 sm:$0xf0] %vm1504, %v1503
    %s1509 = scalar_lea.vmem %s0, 11
    %v1510 = vld [vmem:[%s1509] sm:$0x1]
    %s1511 = scalar_lea.vmem %s0, 42
    %v1512 = vld [vmem:[%s1511] sm:$0x2]
    %vm1513 = vcmask 1041409
    %v1514 = vsel %vm1513, %v1512, %v1510
    %s1515 = scalar_lea.vmem %s0, 73
    %v1516 = vld [vmem:[%s1515] sm:$0x4]
    %vm1517 = vcmask 1042434
    %v1518 = vsel %vm1517, %v1516, %v1514
    %s1519 = scalar_lea.vmem %s0, 104
    %v1520 = vld [vmem:[%s1519] sm:$0x8]
    %vm1521 = vcmask 1043459
    %v1522 = vsel %vm1521, %v1520, %v1518
    %s1523 = scalar_lea.vmem %s0, 135
    %v1524 = vld [vmem:[%s1523] sm:$0x10]
    %vm1525 = vcmask 1044484
    %v1526 = vsel %vm1525, %v1524, %v1522
    %s1527 = scalar_lea.vmem %s0, 166
    %v1528 = vld [vmem:[%s1527] sm:$0x20]
    %vm1529 = vcmask 1045509
    %v1530 = vsel %vm1529, %v1528, %v1526
    %s1531 = scalar_lea.vmem %s0, 197
    %v1532 = vld [vmem:[%s1531] sm:$0x40]
    %vm1533 = vcmask 1046534
    %v1534 = vsel %vm1533, %v1532, %v1530
    %s1535 = scalar_lea.vmem %s0, 228
    %v1536 = vld [vmem:[%s1535] sm:$0x80]
    %vm1537 = vcmask 1047559
    %v1538 = vsel %vm1537, %v1536, %v1534
    %1539 = vrot.lane.b32.xlu0 %v1538, 44
    %v1540 = vpop.permute.xlu0 %1539
    %vm1541 = vcmask 392544
    %1542 = vst.msk [vmem:[#allocation0] ss:$8 sm:$0xf] %vm1541, %v1540
    %1543 = vst.msk [vmem:[#allocation0] ss:$8 sm:$0xf0] %vm1541, %v1540
    %s1544 = scalar_lea.vmem %s0, 267
    %v1545 = vld [vmem:[%s1544] sm:$0x1]
    %s1546 = scalar_lea.vmem %s0, 298
    %v1547 = vld [vmem:[%s1546] sm:$0x2]
    %vm1548 = vcmask 1041409
    %v1549 = vsel %vm1548, %v1547, %v1545
    %s1550 = scalar_lea.vmem %s0, 329
    %v1551 = vld [vmem:[%s1550] sm:$0x4]
    %vm1552 = vcmask 1042434
    %v1553 = vsel %vm1552, %v1551, %v1549
    %s1554 = scalar_lea.vmem %s0, 360
    %v1555 = vld [vmem:[%s1554] sm:$0x8]
    %vm1556 = vcmask 1043459
    %v1557 = vsel %vm1556, %v1555, %v1553
    %s1558 = scalar_lea.vmem %s0, 391
    %v1559 = vld [vmem:[%s1558] sm:$0x10]
    %vm1560 = vcmask 1044484
    %v1561 = vsel %vm1560, %v1559, %v1557
    %s1562 = scalar_lea.vmem %s0, 422
    %v1563 = vld [vmem:[%s1562] sm:$0x20]
    %vm1564 = vcmask 1045509
    %v1565 = vsel %vm1564, %v1563, %v1561
    %s1566 = scalar_lea.vmem %s0, 453
    %v1567 = vld [vmem:[%s1566] sm:$0x40]
    %vm1568 = vcmask 1046534
    %v1569 = vsel %vm1568, %v1567, %v1565
    %s1570 = scalar_lea.vmem %s0, 484
    %v1571 = vld [vmem:[%s1570] sm:$0x80]
    %vm1572 = vcmask 1047559
    %v1573 = vsel %vm1572, %v1571, %v1569
    %1574 = vrot.lane.b32.xlu0 %v1573, 44
    %v1575 = vpop.permute.xlu0 %1574
    %vm1576 = vcmask 392544
    %s1577 = scalar_lea.vmem [#allocation0], 64
    %1578 = vst.msk [vmem:[%s1577] ss:$8 sm:$0xf] %vm1576, %v1575
    %s1579 = scalar_lea.vmem [#allocation0], 64
    %1580 = vst.msk [vmem:[%s1579] ss:$8 sm:$0xf0] %vm1576, %v1575
    %s1581 = scalar_lea.vmem %s0, 10
    %v1582 = vld [vmem:[%s1581] sm:$0x1]
    %s1583 = scalar_lea.vmem %s0, 41
    %v1584 = vld [vmem:[%s1583] sm:$0x2]
    %vm1585 = vcmask 1041409
    %v1586 = vsel %vm1585, %v1584, %v1582
    %s1587 = scalar_lea.vmem %s0, 72
    %v1588 = vld [vmem:[%s1587] sm:$0x4]
    %vm1589 = vcmask 1042434
    %v1590 = vsel %vm1589, %v1588, %v1586
    %s1591 = scalar_lea.vmem %s0, 103
    %v1592 = vld [vmem:[%s1591] sm:$0x8]
    %vm1593 = vcmask 1043459
    %v1594 = vsel %vm1593, %v1592, %v1590
    %s1595 = scalar_lea.vmem %s0, 134
    %v1596 = vld [vmem:[%s1595] sm:$0x10]
    %vm1597 = vcmask 1044484
    %v1598 = vsel %vm1597, %v1596, %v1594
    %s1599 = scalar_lea.vmem %s0, 165
    %v1600 = vld [vmem:[%s1599] sm:$0x20]
    %vm1601 = vcmask 1045509
    %v1602 = vsel %vm1601, %v1600, %v1598
    %s1603 = scalar_lea.vmem %s0, 196
    %v1604 = vld [vmem:[%s1603] sm:$0x40]
    %vm1605 = vcmask 1046534
    %v1606 = vsel %vm1605, %v1604, %v1602
    %s1607 = scalar_lea.vmem %s0, 227
    %v1608 = vld [vmem:[%s1607] sm:$0x80]
    %vm1609 = vcmask 1047559
    %v1610 = vsel %vm1609, %v1608, %v1606
    %1611 = vrot.lane.b32.xlu0 %v1610, 40
    %v1612 = vpop.permute.xlu0 %1611
    %vm1613 = vcmask 359744
    %1614 = vst.msk [vmem:[#allocation0] ss:$8 sm:$0xf] %vm1613, %v1612
    %1615 = vst.msk [vmem:[#allocation0] ss:$8 sm:$0xf0] %vm1613, %v1612
    %s1616 = scalar_lea.vmem %s0, 266
    %v1617 = vld [vmem:[%s1616] sm:$0x1]
    %s1618 = scalar_lea.vmem %s0, 297
    %v1619 = vld [vmem:[%s1618] sm:$0x2]
    %vm1620 = vcmask 1041409
    %v1621 = vsel %vm1620, %v1619, %v1617
    %s1622 = scalar_lea.vmem %s0, 328
    %v1623 = vld [vmem:[%s1622] sm:$0x4]
    %vm1624 = vcmask 1042434
    %v1625 = vsel %vm1624, %v1623, %v1621
    %s1626 = scalar_lea.vmem %s0, 359
    %v1627 = vld [vmem:[%s1626] sm:$0x8]
    %vm1628 = vcmask 1043459
    %v1629 = vsel %vm1628, %v1627, %v1625
    %s1630 = scalar_lea.vmem %s0, 390
    %v1631 = vld [vmem:[%s1630] sm:$0x10]
    %vm1632 = vcmask 1044484
    %v1633 = vsel %vm1632, %v1631, %v1629
    %s1634 = scalar_lea.vmem %s0, 421
    %v1635 = vld [vmem:[%s1634] sm:$0x20]
    %vm1636 = vcmask 1045509
    %v1637 = vsel %vm1636, %v1635, %v1633
    %s1638 = scalar_lea.vmem %s0, 452
    %v1639 = vld [vmem:[%s1638] sm:$0x40]
    %vm1640 = vcmask 1046534
    %v1641 = vsel %vm1640, %v1639, %v1637
    %s1642 = scalar_lea.vmem %s0, 483
    %v1643 = vld [vmem:[%s1642] sm:$0x80]
    %vm1644 = vcmask 1047559
    %v1645 = vsel %vm1644, %v1643, %v1641
    %1646 = vrot.lane.b32.xlu0 %v1645, 40
    %v1647 = vpop.permute.xlu0 %1646
    %vm1648 = vcmask 359744
    %s1649 = scalar_lea.vmem [#allocation0], 64
    %1650 = vst.msk [vmem:[%s1649] ss:$8 sm:$0xf] %vm1648, %v1647
    %s1651 = scalar_lea.vmem [#allocation0], 64
    %1652 = vst.msk [vmem:[%s1651] ss:$8 sm:$0xf0] %vm1648, %v1647
    %s1653 = scalar_lea.vmem %s0, 9
    %v1654 = vld [vmem:[%s1653] sm:$0x1]
    %s1655 = scalar_lea.vmem %s0, 40
    %v1656 = vld [vmem:[%s1655] sm:$0x2]
    %vm1657 = vcmask 1041409
    %v1658 = vsel %vm1657, %v1656, %v1654
    %s1659 = scalar_lea.vmem %s0, 71
    %v1660 = vld [vmem:[%s1659] sm:$0x4]
    %vm1661 = vcmask 1042434
    %v1662 = vsel %vm1661, %v1660, %v1658
    %s1663 = scalar_lea.vmem %s0, 102
    %v1664 = vld [vmem:[%s1663] sm:$0x8]
    %vm1665 = vcmask 1043459
    %v1666 = vsel %vm1665, %v1664, %v1662
    %s1667 = scalar_lea.vmem %s0, 133
    %v1668 = vld [vmem:[%s1667] sm:$0x10]
    %vm1669 = vcmask 1044484
    %v1670 = vsel %vm1669, %v1668, %v1666
    %s1671 = scalar_lea.vmem %s0, 164
    %v1672 = vld [vmem:[%s1671] sm:$0x20]
    %vm1673 = vcmask 1045509
    %v1674 = vsel %vm1673, %v1672, %v1670
    %s1675 = scalar_lea.vmem %s0, 195
    %v1676 = vld [vmem:[%s1675] sm:$0x40]
    %vm1677 = vcmask 1046534
    %v1678 = vsel %vm1677, %v1676, %v1674
    %s1679 = scalar_lea.vmem %s0, 226
    %v1680 = vld [vmem:[%s1679] sm:$0x80]
    %vm1681 = vcmask 1047559
    %v1682 = vsel %vm1681, %v1680, %v1678
    %1683 = vrot.lane.b32.xlu0 %v1682, 36
    %v1684 = vpop.permute.xlu0 %1683
    %vm1685 = vcmask 326944
    %1686 = vst.msk [vmem:[#allocation0] ss:$8 sm:$0xf] %vm1685, %v1684
    %1687 = vst.msk [vmem:[#allocation0] ss:$8 sm:$0xf0] %vm1685, %v1684
    %s1688 = scalar_lea.vmem %s0, 265
    %v1689 = vld [vmem:[%s1688] sm:$0x1]
    %s1690 = scalar_lea.vmem %s0, 296
    %v1691 = vld [vmem:[%s1690] sm:$0x2]
    %vm1692 = vcmask 1041409
    %v1693 = vsel %vm1692, %v1691, %v1689
    %s1694 = scalar_lea.vmem %s0, 327
    %v1695 = vld [vmem:[%s1694] sm:$0x4]
    %vm1696 = vcmask 1042434
    %v1697 = vsel %vm1696, %v1695, %v1693
    %s1698 = scalar_lea.vmem %s0, 358
    %v1699 = vld [vmem:[%s1698] sm:$0x8]
    %vm1700 = vcmask 1043459
    %v1701 = vsel %vm1700, %v1699, %v1697
    %s1702 = scalar_lea.vmem %s0, 389
    %v1703 = vld [vmem:[%s1702] sm:$0x10]
    %vm1704 = vcmask 1044484
    %v1705 = vsel %vm1704, %v1703, %v1701
    %s1706 = scalar_lea.vmem %s0, 420
    %v1707 = vld [vmem:[%s1706] sm:$0x20]
    %vm1708 = vcmask 1045509
    %v1709 = vsel %vm1708, %v1707, %v1705
    %s1710 = scalar_lea.vmem %s0, 451
    %v1711 = vld [vmem:[%s1710] sm:$0x40]
    %vm1712 = vcmask 1046534
    %v1713 = vsel %vm1712, %v1711, %v1709
    %s1714 = scalar_lea.vmem %s0, 482
    %v1715 = vld [vmem:[%s1714] sm:$0x80]
    %vm1716 = vcmask 1047559
    %v1717 = vsel %vm1716, %v1715, %v1713
    %1718 = vrot.lane.b32.xlu0 %v1717, 36
    %v1719 = vpop.permute.xlu0 %1718
    %vm1720 = vcmask 326944
    %s1721 = scalar_lea.vmem [#allocation0], 64
    %1722 = vst.msk [vmem:[%s1721] ss:$8 sm:$0xf] %vm1720, %v1719
    %s1723 = scalar_lea.vmem [#allocation0], 64
    %1724 = vst.msk [vmem:[%s1723] ss:$8 sm:$0xf0] %vm1720, %v1719
    %s1725 = scalar_lea.vmem %s0, 8
    %v1726 = vld [vmem:[%s1725] sm:$0x1]
    %s1727 = scalar_lea.vmem %s0, 39
    %v1728 = vld [vmem:[%s1727] sm:$0x2]
    %vm1729 = vcmask 1041409
    %v1730 = vsel %vm1729, %v1728, %v1726
    %s1731 = scalar_lea.vmem %s0, 70
    %v1732 = vld [vmem:[%s1731] sm:$0x4]
    %vm1733 = vcmask 1042434
    %v1734 = vsel %vm1733, %v1732, %v1730
    %s1735 = scalar_lea.vmem %s0, 101
    %v1736 = vld [vmem:[%s1735] sm:$0x8]
    %vm1737 = vcmask 1043459
    %v1738 = vsel %vm1737, %v1736, %v1734
    %s1739 = scalar_lea.vmem %s0, 132
    %v1740 = vld [vmem:[%s1739] sm:$0x10]
    %vm1741 = vcmask 1044484
    %v1742 = vsel %vm1741, %v1740, %v1738
    %s1743 = scalar_lea.vmem %s0, 163
    %v1744 = vld [vmem:[%s1743] sm:$0x20]
    %vm1745 = vcmask 1045509
    %v1746 = vsel %vm1745, %v1744, %v1742
    %s1747 = scalar_lea.vmem %s0, 194
    %v1748 = vld [vmem:[%s1747] sm:$0x40]
    %vm1749 = vcmask 1046534
    %v1750 = vsel %vm1749, %v1748, %v1746
    %s1751 = scalar_lea.vmem %s0, 225
    %v1752 = vld [vmem:[%s1751] sm:$0x80]
    %vm1753 = vcmask 1047559
    %v1754 = vsel %vm1753, %v1752, %v1750
    %1755 = vrot.lane.b32.xlu0 %v1754, 32
    %v1756 = vpop.permute.xlu0 %1755
    %vm1757 = vcmask 294144
    %1758 = vst.msk [vmem:[#allocation0] ss:$8 sm:$0xf] %vm1757, %v1756
    %1759 = vst.msk [vmem:[#allocation0] ss:$8 sm:$0xf0] %vm1757, %v1756
    %s1760 = scalar_lea.vmem %s0, 264
    %v1761 = vld [vmem:[%s1760] sm:$0x1]
    %s1762 = scalar_lea.vmem %s0, 295
    %v1763 = vld [vmem:[%s1762] sm:$0x2]
    %vm1764 = vcmask 1041409
    %v1765 = vsel %vm1764, %v1763, %v1761
    %s1766 = scalar_lea.vmem %s0, 326
    %v1767 = vld [vmem:[%s1766] sm:$0x4]
    %vm1768 = vcmask 1042434
    %v1769 = vsel %vm1768, %v1767, %v1765
    %s1770 = scalar_lea.vmem %s0, 357
    %v1771 = vld [vmem:[%s1770] sm:$0x8]
    %vm1772 = vcmask 1043459
    %v1773 = vsel %vm1772, %v1771, %v1769
    %s1774 = scalar_lea.vmem %s0, 388
    %v1775 = vld [vmem:[%s1774] sm:$0x10]
    %vm1776 = vcmask 1044484
    %v1777 = vsel %vm1776, %v1775, %v1773
    %s1778 = scalar_lea.vmem %s0, 419
    %v1779 = vld [vmem:[%s1778] sm:$0x20]
    %vm1780 = vcmask 1045509
    %v1781 = vsel %vm1780, %v1779, %v1777
    %s1782 = scalar_lea.vmem %s0, 450
    %v1783 = vld [vmem:[%s1782] sm:$0x40]
    %vm1784 = vcmask 1046534
    %v1785 = vsel %vm1784, %v1783, %v1781
    %s1786 = scalar_lea.vmem %s0, 481
    %v1787 = vld [vmem:[%s1786] sm:$0x80]
    %vm1788 = vcmask 1047559
    %v1789 = vsel %vm1788, %v1787, %v1785
    %1790 = vrot.lane.b32.xlu0 %v1789, 32
    %v1791 = vpop.permute.xlu0 %1790
    %vm1792 = vcmask 294144
    %s1793 = scalar_lea.vmem [#allocation0], 64
    %1794 = vst.msk [vmem:[%s1793] ss:$8 sm:$0xf] %vm1792, %v1791
    %s1795 = scalar_lea.vmem [#allocation0], 64
    %1796 = vst.msk [vmem:[%s1795] ss:$8 sm:$0xf0] %vm1792, %v1791
    %s1797 = scalar_lea.vmem %s0, 7
    %v1798 = vld [vmem:[%s1797] sm:$0x1]
    %s1799 = scalar_lea.vmem %s0, 38
    %v1800 = vld [vmem:[%s1799] sm:$0x2]
    %vm1801 = vcmask 1041409
    %v1802 = vsel %vm1801, %v1800, %v1798
    %s1803 = scalar_lea.vmem %s0, 69
    %v1804 = vld [vmem:[%s1803] sm:$0x4]
    %vm1805 = vcmask 1042434
    %v1806 = vsel %vm1805, %v1804, %v1802
    %s1807 = scalar_lea.vmem %s0, 100
    %v1808 = vld [vmem:[%s1807] sm:$0x8]
    %vm1809 = vcmask 1043459
    %v1810 = vsel %vm1809, %v1808, %v1806
    %s1811 = scalar_lea.vmem %s0, 131
    %v1812 = vld [vmem:[%s1811] sm:$0x10]
    %vm1813 = vcmask 1044484
    %v1814 = vsel %vm1813, %v1812, %v1810
    %s1815 = scalar_lea.vmem %s0, 162
    %v1816 = vld [vmem:[%s1815] sm:$0x20]
    %vm1817 = vcmask 1045509
    %v1818 = vsel %vm1817, %v1816, %v1814
    %s1819 = scalar_lea.vmem %s0, 193
    %v1820 = vld [vmem:[%s1819] sm:$0x40]
    %vm1821 = vcmask 1046534
    %v1822 = vsel %vm1821, %v1820, %v1818
    %s1823 = scalar_lea.vmem %s0, 224
    %v1824 = vld [vmem:[%s1823] sm:$0x80]
    %vm1825 = vcmask 1047559
    %v1826 = vsel %vm1825, %v1824, %v1822
    %1827 = vrot.lane.b32.xlu0 %v1826, 28
    %v1828 = vpop.permute.xlu0 %1827
    %vm1829 = vcmask 261344
    %1830 = vst.msk [vmem:[#allocation0] ss:$8 sm:$0xf] %vm1829, %v1828
    %1831 = vst.msk [vmem:[#allocation0] ss:$8 sm:$0xf0] %vm1829, %v1828
    %s1832 = scalar_lea.vmem %s0, 263
    %v1833 = vld [vmem:[%s1832] sm:$0x1]
    %s1834 = scalar_lea.vmem %s0, 294
    %v1835 = vld [vmem:[%s1834] sm:$0x2]
    %vm1836 = vcmask 1041409
    %v1837 = vsel %vm1836, %v1835, %v1833
    %s1838 = scalar_lea.vmem %s0, 325
    %v1839 = vld [vmem:[%s1838] sm:$0x4]
    %vm1840 = vcmask 1042434
    %v1841 = vsel %vm1840, %v1839, %v1837
    %s1842 = scalar_lea.vmem %s0, 356
    %v1843 = vld [vmem:[%s1842] sm:$0x8]
    %vm1844 = vcmask 1043459
    %v1845 = vsel %vm1844, %v1843, %v1841
    %s1846 = scalar_lea.vmem %s0, 387
    %v1847 = vld [vmem:[%s1846] sm:$0x10]
    %vm1848 = vcmask 1044484
    %v1849 = vsel %vm1848, %v1847, %v1845
    %s1850 = scalar_lea.vmem %s0, 418
    %v1851 = vld [vmem:[%s1850] sm:$0x20]
    %vm1852 = vcmask 1045509
    %v1853 = vsel %vm1852, %v1851, %v1849
    %s1854 = scalar_lea.vmem %s0, 449
    %v1855 = vld [vmem:[%s1854] sm:$0x40]
    %vm1856 = vcmask 1046534
    %v1857 = vsel %vm1856, %v1855, %v1853
    %s1858 = scalar_lea.vmem %s0, 480
    %v1859 = vld [vmem:[%s1858] sm:$0x80]
    %vm1860 = vcmask 1047559
    %v1861 = vsel %vm1860, %v1859, %v1857
    %1862 = vrot.lane.b32.xlu0 %v1861, 28
    %v1863 = vpop.permute.xlu0 %1862
    %vm1864 = vcmask 261344
    %s1865 = scalar_lea.vmem [#allocation0], 64
    %1866 = vst.msk [vmem:[%s1865] ss:$8 sm:$0xf] %vm1864, %v1863
    %s1867 = scalar_lea.vmem [#allocation0], 64
    %1868 = vst.msk [vmem:[%s1867] ss:$8 sm:$0xf0] %vm1864, %v1863
    %s1869 = scalar_lea.vmem %s0, 6
    %v1870 = vld [vmem:[%s1869] sm:$0x1]
    %s1871 = scalar_lea.vmem %s0, 37
    %v1872 = vld [vmem:[%s1871] sm:$0x2]
    %vm1873 = vcmask 1041409
    %v1874 = vsel %vm1873, %v1872, %v1870
    %s1875 = scalar_lea.vmem %s0, 68
    %v1876 = vld [vmem:[%s1875] sm:$0x4]
    %vm1877 = vcmask 1042434
    %v1878 = vsel %vm1877, %v1876, %v1874
    %s1879 = scalar_lea.vmem %s0, 99
    %v1880 = vld [vmem:[%s1879] sm:$0x8]
    %vm1881 = vcmask 1043459
    %v1882 = vsel %vm1881, %v1880, %v1878
    %s1883 = scalar_lea.vmem %s0, 130
    %v1884 = vld [vmem:[%s1883] sm:$0x10]
    %vm1885 = vcmask 1044484
    %v1886 = vsel %vm1885, %v1884, %v1882
    %s1887 = scalar_lea.vmem %s0, 161
    %v1888 = vld [vmem:[%s1887] sm:$0x20]
    %vm1889 = vcmask 1045509
    %v1890 = vsel %vm1889, %v1888, %v1886
    %s1891 = scalar_lea.vmem %s0, 192
    %v1892 = vld [vmem:[%s1891] sm:$0x40]
    %vm1893 = vcmask 1046534
    %v1894 = vsel %vm1893, %v1892, %v1890
    %s1895 = scalar_lea.vmem %s0, 223
    %v1896 = vld [vmem:[%s1895] sm:$0x80]
    %vm1897 = vcmask 1047559
    %v1898 = vsel %vm1897, %v1896, %v1894
    %1899 = vrot.lane.b32.xlu0 %v1898, 24
    %v1900 = vpop.permute.xlu0 %1899
    %vm1901 = vcmask 228544
    %1902 = vst.msk [vmem:[#allocation0] ss:$8 sm:$0xf] %vm1901, %v1900
    %1903 = vst.msk [vmem:[#allocation0] ss:$8 sm:$0xf0] %vm1901, %v1900
    %s1904 = scalar_lea.vmem %s0, 262
    %v1905 = vld [vmem:[%s1904] sm:$0x1]
    %s1906 = scalar_lea.vmem %s0, 293
    %v1907 = vld [vmem:[%s1906] sm:$0x2]
    %vm1908 = vcmask 1041409
    %v1909 = vsel %vm1908, %v1907, %v1905
    %s1910 = scalar_lea.vmem %s0, 324
    %v1911 = vld [vmem:[%s1910] sm:$0x4]
    %vm1912 = vcmask 1042434
    %v1913 = vsel %vm1912, %v1911, %v1909
    %s1914 = scalar_lea.vmem %s0, 355
    %v1915 = vld [vmem:[%s1914] sm:$0x8]
    %vm1916 = vcmask 1043459
    %v1917 = vsel %vm1916, %v1915, %v1913
    %s1918 = scalar_lea.vmem %s0, 386
    %v1919 = vld [vmem:[%s1918] sm:$0x10]
    %vm1920 = vcmask 1044484
    %v1921 = vsel %vm1920, %v1919, %v1917
    %s1922 = scalar_lea.vmem %s0, 417
    %v1923 = vld [vmem:[%s1922] sm:$0x20]
    %vm1924 = vcmask 1045509
    %v1925 = vsel %vm1924, %v1923, %v1921
    %s1926 = scalar_lea.vmem %s0, 448
    %v1927 = vld [vmem:[%s1926] sm:$0x40]
    %vm1928 = vcmask 1046534
    %v1929 = vsel %vm1928, %v1927, %v1925
    %s1930 = scalar_lea.vmem %s0, 479
    %v1931 = vld [vmem:[%s1930] sm:$0x80]
    %vm1932 = vcmask 1047559
    %v1933 = vsel %vm1932, %v1931, %v1929
    %1934 = vrot.lane.b32.xlu0 %v1933, 24
    %v1935 = vpop.permute.xlu0 %1934
    %vm1936 = vcmask 228544
    %s1937 = scalar_lea.vmem [#allocation0], 64
    %1938 = vst.msk [vmem:[%s1937] ss:$8 sm:$0xf] %vm1936, %v1935
    %s1939 = scalar_lea.vmem [#allocation0], 64
    %1940 = vst.msk [vmem:[%s1939] ss:$8 sm:$0xf0] %vm1936, %v1935
    %s1941 = scalar_lea.vmem %s0, 5
    %v1942 = vld [vmem:[%s1941] sm:$0x1]
    %s1943 = scalar_lea.vmem %s0, 36
    %v1944 = vld [vmem:[%s1943] sm:$0x2]
    %vm1945 = vcmask 1041409
    %v1946 = vsel %vm1945, %v1944, %v1942
    %s1947 = scalar_lea.vmem %s0, 67
    %v1948 = vld [vmem:[%s1947] sm:$0x4]
    %vm1949 = vcmask 1042434
    %v1950 = vsel %vm1949, %v1948, %v1946
    %s1951 = scalar_lea.vmem %s0, 98
    %v1952 = vld [vmem:[%s1951] sm:$0x8]
    %vm1953 = vcmask 1043459
    %v1954 = vsel %vm1953, %v1952, %v1950
    %s1955 = scalar_lea.vmem %s0, 129
    %v1956 = vld [vmem:[%s1955] sm:$0x10]
    %vm1957 = vcmask 1044484
    %v1958 = vsel %vm1957, %v1956, %v1954
    %s1959 = scalar_lea.vmem %s0, 160
    %v1960 = vld [vmem:[%s1959] sm:$0x20]
    %vm1961 = vcmask 1045509
    %v1962 = vsel %vm1961, %v1960, %v1958
    %s1963 = scalar_lea.vmem %s0, 191
    %v1964 = vld [vmem:[%s1963] sm:$0x40]
    %vm1965 = vcmask 1046534
    %v1966 = vsel %vm1965, %v1964, %v1962
    %s1967 = scalar_lea.vmem %s0, 222
    %v1968 = vld [vmem:[%s1967] sm:$0x80]
    %vm1969 = vcmask 1047559
    %v1970 = vsel %vm1969, %v1968, %v1966
    %1971 = vrot.lane.b32.xlu0 %v1970, 20
    %v1972 = vpop.permute.xlu0 %1971
    %vm1973 = vcmask 195744
    %1974 = vst.msk [vmem:[#allocation0] ss:$8 sm:$0xf] %vm1973, %v1972
    %1975 = vst.msk [vmem:[#allocation0] ss:$8 sm:$0xf0] %vm1973, %v1972
    %s1976 = scalar_lea.vmem %s0, 261
    %v1977 = vld [vmem:[%s1976] sm:$0x1]
    %s1978 = scalar_lea.vmem %s0, 292
    %v1979 = vld [vmem:[%s1978] sm:$0x2]
    %vm1980 = vcmask 1041409
    %v1981 = vsel %vm1980, %v1979, %v1977
    %s1982 = scalar_lea.vmem %s0, 323
    %v1983 = vld [vmem:[%s1982] sm:$0x4]
    %vm1984 = vcmask 1042434
    %v1985 = vsel %vm1984, %v1983, %v1981
    %s1986 = scalar_lea.vmem %s0, 354
    %v1987 = vld [vmem:[%s1986] sm:$0x8]
    %vm1988 = vcmask 1043459
    %v1989 = vsel %vm1988, %v1987, %v1985
    %s1990 = scalar_lea.vmem %s0, 385
    %v1991 = vld [vmem:[%s1990] sm:$0x10]
    %vm1992 = vcmask 1044484
    %v1993 = vsel %vm1992, %v1991, %v1989
    %s1994 = scalar_lea.vmem %s0, 416
    %v1995 = vld [vmem:[%s1994] sm:$0x20]
    %vm1996 = vcmask 1045509
    %v1997 = vsel %vm1996, %v1995, %v1993
    %s1998 = scalar_lea.vmem %s0, 447
    %v1999 = vld [vmem:[%s1998] sm:$0x40]
    %vm2000 = vcmask 1046534
    %v2001 = vsel %vm2000, %v1999, %v1997
    %s2002 = scalar_lea.vmem %s0, 478
    %v2003 = vld [vmem:[%s2002] sm:$0x80]
    %vm2004 = vcmask 1047559
    %v2005 = vsel %vm2004, %v2003, %v2001
    %2006 = vrot.lane.b32.xlu0 %v2005, 20
    %v2007 = vpop.permute.xlu0 %2006
    %vm2008 = vcmask 195744
    %s2009 = scalar_lea.vmem [#allocation0], 64
    %2010 = vst.msk [vmem:[%s2009] ss:$8 sm:$0xf] %vm2008, %v2007
    %s2011 = scalar_lea.vmem [#allocation0], 64
    %2012 = vst.msk [vmem:[%s2011] ss:$8 sm:$0xf0] %vm2008, %v2007
    %s2013 = scalar_lea.vmem %s0, 4
    %v2014 = vld [vmem:[%s2013] sm:$0x1]
    %s2015 = scalar_lea.vmem %s0, 35
    %v2016 = vld [vmem:[%s2015] sm:$0x2]
    %vm2017 = vcmask 1041409
    %v2018 = vsel %vm2017, %v2016, %v2014
    %s2019 = scalar_lea.vmem %s0, 66
    %v2020 = vld [vmem:[%s2019] sm:$0x4]
    %vm2021 = vcmask 1042434
    %v2022 = vsel %vm2021, %v2020, %v2018
    %s2023 = scalar_lea.vmem %s0, 97
    %v2024 = vld [vmem:[%s2023] sm:$0x8]
    %vm2025 = vcmask 1043459
    %v2026 = vsel %vm2025, %v2024, %v2022
    %s2027 = scalar_lea.vmem %s0, 128
    %v2028 = vld [vmem:[%s2027] sm:$0x10]
    %vm2029 = vcmask 1044484
    %v2030 = vsel %vm2029, %v2028, %v2026
    %s2031 = scalar_lea.vmem %s0, 159
    %v2032 = vld [vmem:[%s2031] sm:$0x20]
    %vm2033 = vcmask 1045509
    %v2034 = vsel %vm2033, %v2032, %v2030
    %s2035 = scalar_lea.vmem %s0, 190
    %v2036 = vld [vmem:[%s2035] sm:$0x40]
    %vm2037 = vcmask 1046534
    %v2038 = vsel %vm2037, %v2036, %v2034
    %s2039 = scalar_lea.vmem %s0, 221
    %v2040 = vld [vmem:[%s2039] sm:$0x80]
    %vm2041 = vcmask 1047559
    %v2042 = vsel %vm2041, %v2040, %v2038
    %2043 = vrot.lane.b32.xlu0 %v2042, 16
    %v2044 = vpop.permute.xlu0 %2043
    %vm2045 = vcmask 162944
    %2046 = vst.msk [vmem:[#allocation0] ss:$8 sm:$0xf] %vm2045, %v2044
    %2047 = vst.msk [vmem:[#allocation0] ss:$8 sm:$0xf0] %vm2045, %v2044
    %s2048 = scalar_lea.vmem %s0, 260
    %v2049 = vld [vmem:[%s2048] sm:$0x1]
    %s2050 = scalar_lea.vmem %s0, 291
    %v2051 = vld [vmem:[%s2050] sm:$0x2]
    %vm2052 = vcmask 1041409
    %v2053 = vsel %vm2052, %v2051, %v2049
    %s2054 = scalar_lea.vmem %s0, 322
    %v2055 = vld [vmem:[%s2054] sm:$0x4]
    %vm2056 = vcmask 1042434
    %v2057 = vsel %vm2056, %v2055, %v2053
    %s2058 = scalar_lea.vmem %s0, 353
    %v2059 = vld [vmem:[%s2058] sm:$0x8]
    %vm2060 = vcmask 1043459
    %v2061 = vsel %vm2060, %v2059, %v2057
    %s2062 = scalar_lea.vmem %s0, 384
    %v2063 = vld [vmem:[%s2062] sm:$0x10]
    %vm2064 = vcmask 1044484
    %v2065 = vsel %vm2064, %v2063, %v2061
    %s2066 = scalar_lea.vmem %s0, 415
    %v2067 = vld [vmem:[%s2066] sm:$0x20]
    %vm2068 = vcmask 1045509
    %v2069 = vsel %vm2068, %v2067, %v2065
    %s2070 = scalar_lea.vmem %s0, 446
    %v2071 = vld [vmem:[%s2070] sm:$0x40]
    %vm2072 = vcmask 1046534
    %v2073 = vsel %vm2072, %v2071, %v2069
    %s2074 = scalar_lea.vmem %s0, 477
    %v2075 = vld [vmem:[%s2074] sm:$0x80]
    %vm2076 = vcmask 1047559
    %v2077 = vsel %vm2076, %v2075, %v2073
    %2078 = vrot.lane.b32.xlu0 %v2077, 16
    %v2079 = vpop.permute.xlu0 %2078
    %vm2080 = vcmask 162944
    %s2081 = scalar_lea.vmem [#allocation0], 64
    %2082 = vst.msk [vmem:[%s2081] ss:$8 sm:$0xf] %vm2080, %v2079
    %s2083 = scalar_lea.vmem [#allocation0], 64
    %2084 = vst.msk [vmem:[%s2083] ss:$8 sm:$0xf0] %vm2080, %v2079
    %s2085 = scalar_lea.vmem %s0, 3
    %v2086 = vld [vmem:[%s2085] sm:$0x1]
    %s2087 = scalar_lea.vmem %s0, 34
    %v2088 = vld [vmem:[%s2087] sm:$0x2]
    %vm2089 = vcmask 1041409
    %v2090 = vsel %vm2089, %v2088, %v2086
    %s2091 = scalar_lea.vmem %s0, 65
    %v2092 = vld [vmem:[%s2091] sm:$0x4]
    %vm2093 = vcmask 1042434
    %v2094 = vsel %vm2093, %v2092, %v2090
    %s2095 = scalar_lea.vmem %s0, 96
    %v2096 = vld [vmem:[%s2095] sm:$0x8]
    %vm2097 = vcmask 1043459
    %v2098 = vsel %vm2097, %v2096, %v2094
    %s2099 = scalar_lea.vmem %s0, 127
    %v2100 = vld [vmem:[%s2099] sm:$0x10]
    %vm2101 = vcmask 1044484
    %v2102 = vsel %vm2101, %v2100, %v2098
    %s2103 = scalar_lea.vmem %s0, 158
    %v2104 = vld [vmem:[%s2103] sm:$0x20]
    %vm2105 = vcmask 1045509
    %v2106 = vsel %vm2105, %v2104, %v2102
    %s2107 = scalar_lea.vmem %s0, 189
    %v2108 = vld [vmem:[%s2107] sm:$0x40]
    %vm2109 = vcmask 1046534
    %v2110 = vsel %vm2109, %v2108, %v2106
    %s2111 = scalar_lea.vmem %s0, 220
    %v2112 = vld [vmem:[%s2111] sm:$0x80]
    %vm2113 = vcmask 1047559
    %v2114 = vsel %vm2113, %v2112, %v2110
    %2115 = vrot.lane.b32.xlu0 %v2114, 12
    %v2116 = vpop.permute.xlu0 %2115
    %vm2117 = vcmask 130144
    %2118 = vst.msk [vmem:[#allocation0] ss:$8 sm:$0xf] %vm2117, %v2116
    %2119 = vst.msk [vmem:[#allocation0] ss:$8 sm:$0xf0] %vm2117, %v2116
    %s2120 = scalar_lea.vmem %s0, 259
    %v2121 = vld [vmem:[%s2120] sm:$0x1]
    %s2122 = scalar_lea.vmem %s0, 290
    %v2123 = vld [vmem:[%s2122] sm:$0x2]
    %vm2124 = vcmask 1041409
    %v2125 = vsel %vm2124, %v2123, %v2121
    %s2126 = scalar_lea.vmem %s0, 321
    %v2127 = vld [vmem:[%s2126] sm:$0x4]
    %vm2128 = vcmask 1042434
    %v2129 = vsel %vm2128, %v2127, %v2125
    %s2130 = scalar_lea.vmem %s0, 352
    %v2131 = vld [vmem:[%s2130] sm:$0x8]
    %vm2132 = vcmask 1043459
    %v2133 = vsel %vm2132, %v2131, %v2129
    %s2134 = scalar_lea.vmem %s0, 383
    %v2135 = vld [vmem:[%s2134] sm:$0x10]
    %vm2136 = vcmask 1044484
    %v2137 = vsel %vm2136, %v2135, %v2133
    %s2138 = scalar_lea.vmem %s0, 414
    %v2139 = vld [vmem:[%s2138] sm:$0x20]
    %vm2140 = vcmask 1045509
    %v2141 = vsel %vm2140, %v2139, %v2137
    %s2142 = scalar_lea.vmem %s0, 445
    %v2143 = vld [vmem:[%s2142] sm:$0x40]
    %vm2144 = vcmask 1046534
    %v2145 = vsel %vm2144, %v2143, %v2141
    %s2146 = scalar_lea.vmem %s0, 476
    %v2147 = vld [vmem:[%s2146] sm:$0x80]
    %vm2148 = vcmask 1047559
    %v2149 = vsel %vm2148, %v2147, %v2145
    %2150 = vrot.lane.b32.xlu0 %v2149, 12
    %v2151 = vpop.permute.xlu0 %2150
    %vm2152 = vcmask 130144
    %s2153 = scalar_lea.vmem [#allocation0], 64
    %2154 = vst.msk [vmem:[%s2153] ss:$8 sm:$0xf] %vm2152, %v2151
    %s2155 = scalar_lea.vmem [#allocation0], 64
    %2156 = vst.msk [vmem:[%s2155] ss:$8 sm:$0xf0] %vm2152, %v2151
    %s2157 = scalar_lea.vmem %s0, 2
    %v2158 = vld [vmem:[%s2157] sm:$0x1]
    %s2159 = scalar_lea.vmem %s0, 33
    %v2160 = vld [vmem:[%s2159] sm:$0x2]
    %vm2161 = vcmask 1041409
    %v2162 = vsel %vm2161, %v2160, %v2158
    %s2163 = scalar_lea.vmem %s0, 64
    %v2164 = vld [vmem:[%s2163] sm:$0x4]
    %vm2165 = vcmask 1042434
    %v2166 = vsel %vm2165, %v2164, %v2162
    %s2167 = scalar_lea.vmem %s0, 95
    %v2168 = vld [vmem:[%s2167] sm:$0x8]
    %vm2169 = vcmask 1043459
    %v2170 = vsel %vm2169, %v2168, %v2166
    %s2171 = scalar_lea.vmem %s0, 126
    %v2172 = vld [vmem:[%s2171] sm:$0x10]
    %vm2173 = vcmask 1044484
    %v2174 = vsel %vm2173, %v2172, %v2170
    %s2175 = scalar_lea.vmem %s0, 157
    %v2176 = vld [vmem:[%s2175] sm:$0x20]
    %vm2177 = vcmask 1045509
    %v2178 = vsel %vm2177, %v2176, %v2174
    %s2179 = scalar_lea.vmem %s0, 188
    %v2180 = vld [vmem:[%s2179] sm:$0x40]
    %vm2181 = vcmask 1046534
    %v2182 = vsel %vm2181, %v2180, %v2178
    %s2183 = scalar_lea.vmem %s0, 219
    %v2184 = vld [vmem:[%s2183] sm:$0x80]
    %vm2185 = vcmask 1047559
    %v2186 = vsel %vm2185, %v2184, %v2182
    %2187 = vrot.lane.b32.xlu0 %v2186, 8
    %v2188 = vpop.permute.xlu0 %2187
    %vm2189 = vcmask 97344
    %2190 = vst.msk [vmem:[#allocation0] ss:$8 sm:$0xf] %vm2189, %v2188
    %2191 = vst.msk [vmem:[#allocation0] ss:$8 sm:$0xf0] %vm2189, %v2188
    %s2192 = scalar_lea.vmem %s0, 258
    %v2193 = vld [vmem:[%s2192] sm:$0x1]
    %s2194 = scalar_lea.vmem %s0, 289
    %v2195 = vld [vmem:[%s2194] sm:$0x2]
    %vm2196 = vcmask 1041409
    %v2197 = vsel %vm2196, %v2195, %v2193
    %s2198 = scalar_lea.vmem %s0, 320
    %v2199 = vld [vmem:[%s2198] sm:$0x4]
    %vm2200 = vcmask 1042434
    %v2201 = vsel %vm2200, %v2199, %v2197
    %s2202 = scalar_lea.vmem %s0, 351
    %v2203 = vld [vmem:[%s2202] sm:$0x8]
    %vm2204 = vcmask 1043459
    %v2205 = vsel %vm2204, %v2203, %v2201
    %s2206 = scalar_lea.vmem %s0, 382
    %v2207 = vld [vmem:[%s2206] sm:$0x10]
    %vm2208 = vcmask 1044484
    %v2209 = vsel %vm2208, %v2207, %v2205
    %s2210 = scalar_lea.vmem %s0, 413
    %v2211 = vld [vmem:[%s2210] sm:$0x20]
    %vm2212 = vcmask 1045509
    %v2213 = vsel %vm2212, %v2211, %v2209
    %s2214 = scalar_lea.vmem %s0, 444
    %v2215 = vld [vmem:[%s2214] sm:$0x40]
    %vm2216 = vcmask 1046534
    %v2217 = vsel %vm2216, %v2215, %v2213
    %s2218 = scalar_lea.vmem %s0, 475
    %v2219 = vld [vmem:[%s2218] sm:$0x80]
    %vm2220 = vcmask 1047559
    %v2221 = vsel %vm2220, %v2219, %v2217
    %2222 = vrot.lane.b32.xlu0 %v2221, 8
    %v2223 = vpop.permute.xlu0 %2222
    %vm2224 = vcmask 97344
    %s2225 = scalar_lea.vmem [#allocation0], 64
    %2226 = vst.msk [vmem:[%s2225] ss:$8 sm:$0xf] %vm2224, %v2223
    %s2227 = scalar_lea.vmem [#allocation0], 64
    %2228 = vst.msk [vmem:[%s2227] ss:$8 sm:$0xf0] %vm2224, %v2223
    %s2229 = scalar_lea.vmem %s0, 1
    %v2230 = vld [vmem:[%s2229] sm:$0x1]
    %s2231 = scalar_lea.vmem %s0, 32
    %v2232 = vld [vmem:[%s2231] sm:$0x2]
    %vm2233 = vcmask 1041409
    %v2234 = vsel %vm2233, %v2232, %v2230
    %s2235 = scalar_lea.vmem %s0, 63
    %v2236 = vld [vmem:[%s2235] sm:$0x4]
    %vm2237 = vcmask 1042434
    %v2238 = vsel %vm2237, %v2236, %v2234
    %s2239 = scalar_lea.vmem %s0, 94
    %v2240 = vld [vmem:[%s2239] sm:$0x8]
    %vm2241 = vcmask 1043459
    %v2242 = vsel %vm2241, %v2240, %v2238
    %s2243 = scalar_lea.vmem %s0, 125
    %v2244 = vld [vmem:[%s2243] sm:$0x10]
    %vm2245 = vcmask 1044484
    %v2246 = vsel %vm2245, %v2244, %v2242
    %s2247 = scalar_lea.vmem %s0, 156
    %v2248 = vld [vmem:[%s2247] sm:$0x20]
    %vm2249 = vcmask 1045509
    %v2250 = vsel %vm2249, %v2248, %v2246
    %s2251 = scalar_lea.vmem %s0, 187
    %v2252 = vld [vmem:[%s2251] sm:$0x40]
    %vm2253 = vcmask 1046534
    %v2254 = vsel %vm2253, %v2252, %v2250
    %s2255 = scalar_lea.vmem %s0, 218
    %v2256 = vld [vmem:[%s2255] sm:$0x80]
    %vm2257 = vcmask 1047559
    %v2258 = vsel %vm2257, %v2256, %v2254
    %2259 = vrot.lane.b32.xlu0 %v2258, 4
    %v2260 = vpop.permute.xlu0 %2259
    %vm2261 = vcmask 64544
    %2262 = vst.msk [vmem:[#allocation0] ss:$8 sm:$0xf] %vm2261, %v2260
    %2263 = vst.msk [vmem:[#allocation0] ss:$8 sm:$0xf0] %vm2261, %v2260
    %s2264 = scalar_lea.vmem %s0, 257
    %v2265 = vld [vmem:[%s2264] sm:$0x1]
    %s2266 = scalar_lea.vmem %s0, 288
    %v2267 = vld [vmem:[%s2266] sm:$0x2]
    %vm2268 = vcmask 1041409
    %v2269 = vsel %vm2268, %v2267, %v2265
    %s2270 = scalar_lea.vmem %s0, 319
    %v2271 = vld [vmem:[%s2270] sm:$0x4]
    %vm2272 = vcmask 1042434
    %v2273 = vsel %vm2272, %v2271, %v2269
    %s2274 = scalar_lea.vmem %s0, 350
    %v2275 = vld [vmem:[%s2274] sm:$0x8]
    %vm2276 = vcmask 1043459
    %v2277 = vsel %vm2276, %v2275, %v2273
    %s2278 = scalar_lea.vmem %s0, 381
    %v2279 = vld [vmem:[%s2278] sm:$0x10]
    %vm2280 = vcmask 1044484
    %v2281 = vsel %vm2280, %v2279, %v2277
    %s2282 = scalar_lea.vmem %s0, 412
    %v2283 = vld [vmem:[%s2282] sm:$0x20]
    %vm2284 = vcmask 1045509
    %v2285 = vsel %vm2284, %v2283, %v2281
    %s2286 = scalar_lea.vmem %s0, 443
    %v2287 = vld [vmem:[%s2286] sm:$0x40]
    %vm2288 = vcmask 1046534
    %v2289 = vsel %vm2288, %v2287, %v2285
    %s2290 = scalar_lea.vmem %s0, 474
    %v2291 = vld [vmem:[%s2290] sm:$0x80]
    %vm2292 = vcmask 1047559
    %v2293 = vsel %vm2292, %v2291, %v2289
    %2294 = vrot.lane.b32.xlu0 %v2293, 4
    %v2295 = vpop.permute.xlu0 %2294
    %vm2296 = vcmask 64544
    %s2297 = scalar_lea.vmem [#allocation0], 64
    %2298 = vst.msk [vmem:[%s2297] ss:$8 sm:$0xf] %vm2296, %v2295
    %s2299 = scalar_lea.vmem [#allocation0], 64
    %2300 = vst.msk [vmem:[%s2299] ss:$8 sm:$0xf0] %vm2296, %v2295
    %s2302 = sshllo.u32 0, 1
    %v2304 = vld [vmem:[#allocation0] sm:%s2302]
    %s2305 = sshllo.u32 0, 1
    %2306 = vst [vmem:[%s1] sm:%s2305] %v2304
    %s2307 = scalar_lea.vmem [#allocation0], 8
    %v2308 = vld [vmem:[%s2307] sm:%s2302]
    %s2309 = sshllo.u32 0, 1
    %s2310 = scalar_lea.vmem %s1, 1
    %2311 = vst [vmem:[%s2310] sm:%s2309] %v2308
    %s2312 = scalar_lea.vmem [#allocation0], 16
    %v2313 = vld [vmem:[%s2312] sm:%s2302]
    %s2314 = sshllo.u32 0, 1
    %s2315 = smul.addr 1, 2
    %s2316 = scalar_lea.vmem %s1, %s2315
    %2317 = vst [vmem:[%s2316] sm:%s2314] %v2313
    %s2318 = scalar_lea.vmem [#allocation0], 24
    %v2319 = vld [vmem:[%s2318] sm:%s2302]
    %s2320 = sshllo.u32 0, 1
    %s2321 = smul.addr 1, 3
    %s2322 = scalar_lea.vmem %s1, %s2321
    %2323 = vst [vmem:[%s2322] sm:%s2320] %v2319
    %s2324 = scalar_lea.vmem [#allocation0], 32
    %v2325 = vld [vmem:[%s2324] sm:%s2302]
    %s2326 = sshllo.u32 0, 1
    %s2327 = smul.addr 1, 4
    %s2328 = scalar_lea.vmem %s1, %s2327
    %2329 = vst [vmem:[%s2328] sm:%s2326] %v2325
    %s2330 = scalar_lea.vmem [#allocation0], 40
    %v2331 = vld [vmem:[%s2330] sm:%s2302]
    %s2332 = sshllo.u32 0, 1
    %s2333 = smul.addr 1, 5
    %s2334 = scalar_lea.vmem %s1, %s2333
    %2335 = vst [vmem:[%s2334] sm:%s2332] %v2331
    %s2336 = scalar_lea.vmem [#allocation0], 48
    %v2337 = vld [vmem:[%s2336] sm:%s2302]
    %s2338 = sshllo.u32 0, 1
    %s2339 = smul.addr 1, 6
    %s2340 = scalar_lea.vmem %s1, %s2339
    %2341 = vst [vmem:[%s2340] sm:%s2338] %v2337
    %s2342 = scalar_lea.vmem [#allocation0], 56
    %v2343 = vld [vmem:[%s2342] sm:%s2302]
    %s2344 = sshllo.u32 0, 1
    %s2345 = smul.addr 1, 7
    %s2346 = scalar_lea.vmem %s1, %s2345
    %2347 = vst [vmem:[%s2346] sm:%s2344] %v2343
    %s2348 = scalar_lea.vmem [#allocation0], 64
    %v2349 = vld [vmem:[%s2348] sm:%s2302]
    %s2350 = sshllo.u32 0, 1
    %s2351 = smul.addr 1, 8
    %s2352 = scalar_lea.vmem %s1, %s2351
    %2353 = vst [vmem:[%s2352] sm:%s2350] %v2349
    %s2354 = scalar_lea.vmem [#allocation0], 72
    %v2355 = vld [vmem:[%s2354] sm:%s2302]
    %s2356 = sshllo.u32 0, 1
    %s2357 = smul.addr 1, 9
    %s2358 = scalar_lea.vmem %s1, %s2357
    %2359 = vst [vmem:[%s2358] sm:%s2356] %v2355
    %s2360 = scalar_lea.vmem [#allocation0], 80
    %v2361 = vld [vmem:[%s2360] sm:%s2302]
    %s2362 = sshllo.u32 0, 1
    %s2363 = smul.addr 1, 10
    %s2364 = scalar_lea.vmem %s1, %s2363
    %2365 = vst [vmem:[%s2364] sm:%s2362] %v2361
    %s2366 = scalar_lea.vmem [#allocation0], 88
    %v2367 = vld [vmem:[%s2366] sm:%s2302]
    %s2368 = sshllo.u32 0, 1
    %s2369 = smul.addr 1, 11
    %s2370 = scalar_lea.vmem %s1, %s2369
    %2371 = vst [vmem:[%s2370] sm:%s2368] %v2367
    %s2372 = scalar_lea.vmem [#allocation0], 96
    %v2373 = vld [vmem:[%s2372] sm:%s2302]
    %s2374 = sshllo.u32 0, 1
    %s2375 = smul.addr 1, 12
    %s2376 = scalar_lea.vmem %s1, %s2375
    %2377 = vst [vmem:[%s2376] sm:%s2374] %v2373
    %s2378 = scalar_lea.vmem [#allocation0], 104
    %v2379 = vld [vmem:[%s2378] sm:%s2302]
    %s2380 = sshllo.u32 0, 1
    %s2381 = smul.addr 1, 13
    %s2382 = scalar_lea.vmem %s1, %s2381
    %2383 = vst [vmem:[%s2382] sm:%s2380] %v2379
    %s2384 = scalar_lea.vmem [#allocation0], 112
    %v2385 = vld [vmem:[%s2384] sm:%s2302]
    %s2386 = sshllo.u32 0, 1
    %s2387 = smul.addr 1, 14
    %s2388 = scalar_lea.vmem %s1, %s2387
    %2389 = vst [vmem:[%s2388] sm:%s2386] %v2385
    %s2390 = scalar_lea.vmem [#allocation0], 120
    %v2391 = vld [vmem:[%s2390] sm:%s2302]
    %s2392 = sshllo.u32 0, 1
    %s2393 = smul.addr 1, 15
    %s2394 = scalar_lea.vmem %s1, %s2393
    %2395 = vst [vmem:[%s2394] sm:%s2392] %v2391

// kernel: res_block_forward.3
$region0: #{res_block_forward.3}
  #allocation0 [shape = 'u32[]', space=smem, size = 0x4, offset = 0x4, fixed_abs, tag = 'smem constant byte address 0x4 - core index']
  #allocation1 [shape = 'u32[144,128]{1,0:T(1,128)}', space=vmem, size = 0x12000, scoped, tag = 'internal scratch']
  %s0 = inlined_call_operand.vmem [shape: f32[2,16,16,4], index: 0, kind: input, shape index: {}]
  %s1 = inlined_call_operand.vmem [shape: bf16[36,4], index: 1, kind: input, shape index: {}]
  %s2 = inlined_call_operand.vmem [shape: bf16[2,256,4], index: 2, kind: output, shape index: {0}]
  %s3 = inlined_call_operand.vmem [shape: f32[2,1,4], index: 3, kind: output, shape index: {1}]
  %s4 = inlined_call_operand.vmem [shape: f32[2,1,4], index: 4, kind: output, shape index: {2}]
  %5 = xla_tuple %s2, %s3, %s4
  %s6 = sld [smem:[#allocation0]]
  $region57: #{res_block_forward.3} parent=0
    _
  %s8 = ssub.s32 1, %s6
  %s9 = scalar_select 0, %s8, %s6
  loop: start=0, step=1, limit=4
  $region2: #{res_block_forward.3} parent=0 // loop_pre_header
    _
  $region3: #{res_block_forward.3} parent=0 // loop_header
    %s11 = sphi 0, %s15
    %p12 = scmp.ge.s32.totalorder %s11, 4
    %s21 = sphi 0, %s23
    %s24 = sphi 0, %s21
    %s25 = sphi 0, %s24
    %s41 = sphi 0, %s25
    %s45 = sphi 0, %s45
    %s47 = sphi 0, %s45
    %s48 = sphi 0, %s47
    %s62 = sphi 0, %s48
    %s68 = sphi 0, %s70
    %s71 = sphi 0, %s68
    %s72 = sphi 0, %s71
    %s88 = sphi 0, %s72
    %s94 = sphi 0, %s96
    %s97 = sphi 0, %s94
    %s98 = sphi 0, %s97
    %s114 = sphi 0, %s98
    %s120 = sphi 0, %s122
    %s123 = sphi 0, %s120
    %s124 = sphi 0, %s123
    %s140 = sphi 0, %s124
  $region4: #{res_block_forward.3} parent=0 // loop_header_branch
    %14 = sbr.rel (%p12) target = $region8
  $region5: #{res_block_forward.3} parent=0 // loop_body
    %s16 = ssub.s32 %s11, 1
    %s17 = ssub.s32 %s11, 2
    %s18 = sadd.s32 %s11, 1
    %s19 = ssub.s32 %s11, %s18
    %p20 = scmp.eq.s32.totalorder %s19, 0
    %s22 = sadd.s32 %s21, 1
    %s23 = scalar_select %p20, %s21, %s22
    %p26 = pneg %p20
    %p27 = scmp.eq.s32.totalorder %s11, 1
    %p28 = por %p26, %p27
    %p29 = scmp.ne.s32.totalorder %s21, %s24
    %p30 = scmp.eq.s32.totalorder %s11, 0
    %p31 = por %p29, %p30
    %p32 = scmp.ne.s32.totalorder %s21, %s24
    %p33 = scmp.eq.s32.totalorder %s16, 1
    %p34 = por %p32, %p33
    %p35 = scmp.ne.s32.totalorder %s24, %s25
    %p36 = scmp.eq.s32.totalorder %s16, 0
    %p37 = por %p35, %p36
    %p38 = scmp.ne.s32.totalorder %s24, %s25
    %p39 = scmp.eq.s32.totalorder %s17, 1
    %p40 = por %p38, %p39
    %p42 = scmp.ne.s32.totalorder %s25, %s41
    %p43 = scmp.eq.s32.totalorder %s17, 0
    %p44 = por %p42, %p43
    %s46 = sadd.s32 %s45, 1
    %p49 = scmp.eq.s32.totalorder %s11, 1
    %p50 = scmp.ne.s32.totalorder %s45, %s47
    %p51 = scmp.eq.s32.totalorder %s11, 0
    %p52 = por %p50, %p51
    %p53 = scmp.ne.s32.totalorder %s45, %s47
    %p54 = scmp.eq.s32.totalorder %s16, 1
    %p55 = por %p53, %p54
    %p56 = scmp.ne.s32.totalorder %s47, %s48
    %p57 = scmp.eq.s32.totalorder %s16, 0
    %p58 = por %p56, %p57
    %p59 = scmp.ne.s32.totalorder %s47, %s48
    %p60 = scmp.eq.s32.totalorder %s17, 1
    %p61 = por %p59, %p60
    %p63 = scmp.ne.s32.totalorder %s48, %s62
    %p64 = scmp.eq.s32.totalorder %s17, 0
    %p65 = por %p63, %p64
    %s66 = ssub.s32 %s11, %s18
    %p67 = scmp.eq.s32.totalorder %s66, 0
    %s69 = sadd.s32 %s68, 1
    %s70 = scalar_select %p67, %s68, %s69
    %p73 = pneg %p67
    %p74 = scmp.eq.s32.totalorder %s11, 1
    %p75 = por %p73, %p74
    %p76 = scmp.ne.s32.totalorder %s68, %s71
    %p77 = scmp.eq.s32.totalorder %s11, 0
    %p78 = por %p76, %p77
    %p79 = scmp.ne.s32.totalorder %s68, %s71
    %p80 = scmp.eq.s32.totalorder %s16, 1
    %p81 = por %p79, %p80
    %p82 = scmp.ne.s32.totalorder %s71, %s72
    %p83 = scmp.eq.s32.totalorder %s16, 0
    %p84 = por %p82, %p83
    %p85 = scmp.ne.s32.totalorder %s71, %s72
    %p86 = scmp.eq.s32.totalorder %s17, 1
    %p87 = por %p85, %p86
    %p89 = scmp.ne.s32.totalorder %s72, %s88
    %p90 = scmp.eq.s32.totalorder %s17, 0
    %p91 = por %p89, %p90
    %s92 = ssub.s32 %s11, %s18
    %p93 = scmp.eq.s32.totalorder %s92, 0
    %s95 = sadd.s32 %s94, 1
    %s96 = scalar_select %p93, %s94, %s95
    %p99 = pneg %p93
    %p100 = scmp.eq.s32.totalorder %s11, 1
    %p101 = por %p99, %p100
    %p102 = scmp.ne.s32.totalorder %s94, %s97
    %p103 = scmp.eq.s32.totalorder %s11, 0
    %p104 = por %p102, %p103
    %p105 = scmp.ne.s32.totalorder %s94, %s97
    %p106 = scmp.eq.s32.totalorder %s16, 1
    %p107 = por %p105, %p106
    %p108 = scmp.ne.s32.totalorder %s97, %s98
    %p109 = scmp.eq.s32.totalorder %s16, 0
    %p110 = por %p108, %p109
    %p111 = scmp.ne.s32.totalorder %s97, %s98
    %p112 = scmp.eq.s32.totalorder %s17, 1
    %p113 = por %p111, %p112
    %p115 = scmp.ne.s32.totalorder %s98, %s114
    %p116 = scmp.eq.s32.totalorder %s17, 0
    %p117 = por %p115, %p116
    %s118 = ssub.s32 %s11, %s18
    %p119 = scmp.eq.s32.totalorder %s118, 0
    %s121 = sadd.s32 %s120, 1
    %s122 = scalar_select %p119, %s120, %s121
    %p125 = pneg %p119
    %p126 = scmp.eq.s32.totalorder %s11, 1
    %p127 = por %p125, %p126
    %p128 = scmp.ne.s32.totalorder %s120, %s123
    %p129 = scmp.eq.s32.totalorder %s11, 0
    %p130 = por %p128, %p129
    %p131 = scmp.ne.s32.totalorder %s120, %s123
    %p132 = scmp.eq.s32.totalorder %s16, 1
    %p133 = por %p131, %p132
    %p134 = scmp.ne.s32.totalorder %s123, %s124
    %p135 = scmp.eq.s32.totalorder %s16, 0
    %p136 = por %p134, %p135
    %p137 = scmp.ne.s32.totalorder %s123, %s124
    %p138 = scmp.eq.s32.totalorder %s17, 1
    %p139 = por %p137, %p138
    %p141 = scmp.ne.s32.totalorder %s124, %s140
    %p142 = scmp.eq.s32.totalorder %s17, 0
    %p143 = por %p141, %p142
    %p144 = scmp.le.s32.totalorder 1, %s11
    %p145 = scmp.lt.s32.totalorder %s11, 3
    %p146 = pnand %p144, %p145
    %p147 = pneg %p146
    // Predicated region
    $region9: #{res_block_forward.3} parent=5 // pred_check
      _
    $region10: #{res_block_forward.3} parent=5 // pred_check_branch
      %149 = sbr.rel (%p146) target = $region12
    $region11: #{res_block_forward.3} parent=5 // pred_region
      %s150 = ssub.s32 %s11, 1
      // Predicated region
      $region13: #{res_block_forward.3} parent=11 // pred_check
        %p151 = pneg %p58
      $region14: #{res_block_forward.3} parent=11 // pred_check_branch
        %153 = sbr.rel (%p151) target = $region16
      $region15: #{res_block_forward.3} parent=11 // pred_region
        _
      $region16: #{res_block_forward.3} parent=11 // pred_fallthru
        _
    $region12: #{res_block_forward.3} parent=5 // pred_fallthru
      _
    %p154 = scmp.lt.s32.totalorder %s11, 2
    // Predicated region
    $region17: #{res_block_forward.3} parent=5 // pred_check
      %p155 = pneg %p154
    $region18: #{res_block_forward.3} parent=5 // pred_check_branch
      %157 = sbr.rel (%p155) target = $region20
    $region19: #{res_block_forward.3} parent=5 // pred_region
      // Predicated region
      $region21: #{res_block_forward.3} parent=19 // pred_check
        %p158 = pneg %p31
      $region22: #{res_block_forward.3} parent=19 // pred_check_branch
        %160 = sbr.rel (%p158) target = $region24
      $region23: #{res_block_forward.3} parent=19 // pred_region
        %p161 = scmp.lt.s32.totalorder %s11, 1
        %s162 = scalar_select %p161, %s11, 1
        %s163 = smul.addr %s162, 32
        %s164 = smul.addr %s163, 8
        %s165 = scalar_lea.vmem %s0, %s164
      $region24: #{res_block_forward.3} parent=19 // pred_fallthru
        _
    $region20: #{res_block_forward.3} parent=5 // pred_fallthru
      _
    %p166 = scmp.le.s32.totalorder 1, %s11
    %p167 = scmp.lt.s32.totalorder %s11, 3
    %p168 = pnand %p166, %p167
    %p169 = pneg %p168
    // Predicated region
    $region25: #{res_block_forward.3} parent=5 // pred_check
      _
    $region26: #{res_block_forward.3} parent=5 // pred_check_branch
      %171 = sbr.rel (%p168) target = $region28
    $region27: #{res_block_forward.3} parent=5 // pred_region
      %s172 = ssub.s32 %s11, 1
      %p173 = scmp.lt.s32.totalorder %s16, 1
      %s174 = scalar_select %p173, %s16, 1
      %s175 = smul.addr %s174, 32
      %s176 = smul.addr %s175, 8
      %s177 = scalar_lea.vmem %s0, %s176
      %p178 = pneg %p37
      %p179 = pneg %p34
      %p180 = pneg %p58
      %p181 = pneg %p55
      %p182 = pneg %p84
      %p183 = pneg %p81
      %p184 = scmp.lt.s32.totalorder %s16, 1
      %s185 = scalar_select %p184, %s16, 1
      %s186 = smul.addr %s185, 32
      %s187 = smul.addr %s186, 4
      %s188 = scalar_lea.vmem %s2, %s187
      %p189 = pneg %p110
      %p190 = pneg %p107
      %p191 = scmp.lt.s32.totalorder %s16, 1
      %s192 = scalar_select %p191, %s16, 1
      %s193 = scalar_lea.vmem %s3, %s192
      %p194 = pneg %p136
      %p195 = pneg %p133
      %p196 = scmp.lt.s32.totalorder %s16, 1
      %s197 = scalar_select %p196, %s16, 1
      %s198 = scalar_lea.vmem %s4, %s197
      %p199 = scmp.lt.s32.totalorder %s16, 1
      %s200 = scalar_select %p199, %s16, 1
      %s201 = smul.addr %s200, 32
      %s202 = smul.addr %s201, 8
      %s203 = scalar_lea.vmem %s0, %s202
      %p204 = scmp.lt.s32.totalorder %s16, 1
      %s205 = scalar_select %p204, %s16, 1
      %s206 = smul.addr %s205, 32
      %s207 = smul.addr %s206, 4
      %s208 = scalar_lea.vmem %s2, %s207
      %p209 = scmp.lt.s32.totalorder %s16, 1
      %s210 = scalar_select %p209, %s16, 1
      %s211 = scalar_lea.vmem %s3, %s210
      %p212 = scmp.lt.s32.totalorder %s16, 1
      %s213 = scalar_select %p212, %s16, 1
      %s214 = scalar_lea.vmem %s4, %s213
      %v216 = vld [vmem:[%s203] sm:$0xff]
      %v217 = vld [vmem:[%s203 + $0x8] sm:$0xff]
      %v218 = vld [vmem:[%s203 + $0x10] sm:$0xff]
      %v219 = vld [vmem:[%s203 + $0x18] sm:$0xff]
      %v220 = vld [vmem:[%s203 + $0x20] sm:$0xff]
      %v221 = vld [vmem:[%s203 + $0x28] sm:$0xff]
      %v222 = vld [vmem:[%s203 + $0x30] sm:$0xff]
      %v223 = vld [vmem:[%s203 + $0x38] sm:$0xff]
      %v224 = vld [vmem:[%s203 + $0x40] sm:$0xff]
      %v225 = vld [vmem:[%s203 + $0x48] sm:$0xff]
      %v226 = vld [vmem:[%s203 + $0x50] sm:$0xff]
      %v227 = vld [vmem:[%s203 + $0x58] sm:$0xff]
      %v228 = vld [vmem:[%s203 + $0x60] sm:$0xff]
      %v229 = vld [vmem:[%s203 + $0x68] sm:$0xff]
      %v230 = vld [vmem:[%s203 + $0x70] sm:$0xff]
      %v231 = vld [vmem:[%s203 + $0x78] sm:$0xff]
      %v232 = vld [vmem:[%s203 + $0x80] sm:$0xff]
      %v233 = vld [vmem:[%s203 + $0x88] sm:$0xff]
      %v234 = vld [vmem:[%s203 + $0x90] sm:$0xff]
      %v235 = vld [vmem:[%s203 + $0x98] sm:$0xff]
      %v236 = vld [vmem:[%s203 + $0xa0] sm:$0xff]
      %v237 = vld [vmem:[%s203 + $0xa8] sm:$0xff]
      %v238 = vld [vmem:[%s203 + $0xb0] sm:$0xff]
      %v239 = vld [vmem:[%s203 + $0xb8] sm:$0xff]
      %v240 = vld [vmem:[%s203 + $0xc0] sm:$0xff]
      %v241 = vld [vmem:[%s203 + $0xc8] sm:$0xff]
      %v242 = vld [vmem:[%s203 + $0xd0] sm:$0xff]
      %v243 = vld [vmem:[%s203 + $0xd8] sm:$0xff]
      %v244 = vld [vmem:[%s203 + $0xe0] sm:$0xff]
      %v245 = vld [vmem:[%s203 + $0xe8] sm:$0xff]
      %v246 = vld [vmem:[%s203 + $0xf0] sm:$0xff]
      %v247 = vld [vmem:[%s203 + $0xf8] sm:$0xff]
      %vm281 = vcmask 1040384
      %v282 = vrot.slane 0.0, 7
      %v283 = vsel %vm281, %v282, %v282
      %v284 = vrot.slane %v216, 7
      %v285 = vrot.slane %v217, 7
      %v286 = vsel %vm281, %v284, %v285
      %v287 = vrot.slane %v218, 7
      %v288 = vrot.slane %v219, 7
      %v289 = vsel %vm281, %v287, %v288
      %v290 = vrot.slane %v220, 7
      %v291 = vrot.slane %v221, 7
      %v292 = vsel %vm281, %v290, %v291
      %v293 = vrot.slane %v222, 7
      %v294 = vrot.slane %v223, 7
      %v295 = vsel %vm281, %v293, %v294
      %v296 = vrot.slane %v224, 7
      %v297 = vrot.slane %v225, 7
      %v298 = vsel %vm281, %v296, %v297
      %v299 = vrot.slane %v226, 7
      %v300 = vrot.slane %v227, 7
      %v301 = vsel %vm281, %v299, %v300
      %v302 = vrot.slane %v228, 7
      %v303 = vrot.slane %v229, 7
      %v304 = vsel %vm281, %v302, %v303
      %v305 = vrot.slane %v230, 7
      %v306 = vrot.slane %v231, 7
      %v307 = vsel %vm281, %v305, %v306
      %v308 = vrot.slane %v232, 7
      %v309 = vrot.slane %v233, 7
      %v310 = vsel %vm281, %v308, %v309
      %v311 = vrot.slane %v234, 7
      %v312 = vrot.slane %v235, 7
      %v313 = vsel %vm281, %v311, %v312
      %v314 = vrot.slane %v236, 7
      %v315 = vrot.slane %v237, 7
      %v316 = vsel %vm281, %v314, %v315
      %v317 = vrot.slane %v238, 7
      %v318 = vrot.slane %v239, 7
      %v319 = vsel %vm281, %v317, %v318
      %v320 = vrot.slane %v240, 7
      %v321 = vrot.slane %v241, 7
      %v322 = vsel %vm281, %v320, %v321
      %v323 = vrot.slane %v242, 7
      %v324 = vrot.slane %v243, 7
      %v325 = vsel %vm281, %v323, %v324
      %v326 = vrot.slane %v244, 7
      %v327 = vrot.slane %v245, 7
      %v328 = vsel %vm281, %v326, %v327
      %v329 = vrot.slane %v246, 7
      %v330 = vrot.slane %v247, 7
      %v331 = vsel %vm281, %v329, %v330
      %v381 = vsel %vm281, 0.0, %v282
      %v382 = vsel %vm281, 0.0, %v284
      %v383 = vsel %vm281, 0.0, %v287
      %v384 = vsel %vm281, 0.0, %v290
      %v385 = vsel %vm281, 0.0, %v293
      %v386 = vsel %vm281, 0.0, %v296
      %v387 = vsel %vm281, 0.0, %v299
      %v388 = vsel %vm281, 0.0, %v302
      %v389 = vsel %vm281, 0.0, %v305
      %v390 = vsel %vm281, 0.0, %v308
      %v391 = vsel %vm281, 0.0, %v311
      %v392 = vsel %vm281, 0.0, %v314
      %v393 = vsel %vm281, 0.0, %v317
      %v394 = vsel %vm281, 0.0, %v320
      %v395 = vsel %vm281, 0.0, %v323
      %v396 = vsel %vm281, 0.0, %v326
      %v397 = vsel %vm281, 0.0, %v329
      %v398 = vsel %vm281, %v282, 0.0
      %v399 = vsel %vm281, %v285, 0.0
      %v400 = vsel %vm281, %v288, 0.0
      %v401 = vsel %vm281, %v291, 0.0
      %v402 = vsel %vm281, %v294, 0.0
      %v403 = vsel %vm281, %v297, 0.0
      %v404 = vsel %vm281, %v300, 0.0
      %v405 = vsel %vm281, %v303, 0.0
      %v406 = vsel %vm281, %v306, 0.0
      %v407 = vsel %vm281, %v309, 0.0
      %v408 = vsel %vm281, %v312, 0.0
      %v409 = vsel %vm281, %v315, 0.0
      %v410 = vsel %vm281, %v318, 0.0
      %v411 = vsel %vm281, %v321, 0.0
      %v412 = vsel %vm281, %v324, 0.0
      %v413 = vsel %vm281, %v327, 0.0
      %v414 = vsel %vm281, %v330, 0.0
      %vm447 = vcmask 1046528
      %v448 = vrot.slane %v381, 1
      %v449 = vrot.slane %v283, 1
      %v450 = vsel %vm447, %v448, %v449
      %v451 = vrot.slane %v398, 1
      %v452 = vsel %vm447, %v449, %v451
      %v453 = vrot.slane %v382, 1
      %v454 = vrot.slane %v286, 1
      %v455 = vsel %vm447, %v453, %v454
      %v456 = vrot.slane %v399, 1
      %v457 = vsel %vm447, %v454, %v456
      %v458 = vrot.slane %v383, 1
      %v459 = vrot.slane %v289, 1
      %v460 = vsel %vm447, %v458, %v459
      %v461 = vrot.slane %v400, 1
      %v462 = vsel %vm447, %v459, %v461
      %v463 = vrot.slane %v384, 1
      %v464 = vrot.slane %v292, 1
      %v465 = vsel %vm447, %v463, %v464
      %v466 = vrot.slane %v401, 1
      %v467 = vsel %vm447, %v464, %v466
      %v468 = vrot.slane %v385, 1
      %v469 = vrot.slane %v295, 1
      %v470 = vsel %vm447, %v468, %v469
      %v471 = vrot.slane %v402, 1
      %v472 = vsel %vm447, %v469, %v471
      %v473 = vrot.slane %v386, 1
      %v474 = vrot.slane %v298, 1
      %v475 = vsel %vm447, %v473, %v474
      %v476 = vrot.slane %v403, 1
      %v477 = vsel %vm447, %v474, %v476
      %v478 = vrot.slane %v387, 1
      %v479 = vrot.slane %v301, 1
      %v480 = vsel %vm447, %v478, %v479
      %v481 = vrot.slane %v404, 1
      %v482 = vsel %vm447, %v479, %v481
      %v483 = vrot.slane %v388, 1
      %v484 = vrot.slane %v304, 1
      %v485 = vsel %vm447, %v483, %v484
      %v486 = vrot.slane %v405, 1
      %v487 = vsel %vm447, %v484, %v486
      %v488 = vrot.slane %v389, 1
      %v489 = vrot.slane %v307, 1
      %v490 = vsel %vm447, %v488, %v489
      %v491 = vrot.slane %v406, 1
      %v492 = vsel %vm447, %v489, %v491
      %v493 = vrot.slane %v390, 1
      %v494 = vrot.slane %v310, 1
      %v495 = vsel %vm447, %v493, %v494
      %v496 = vrot.slane %v407, 1
      %v497 = vsel %vm447, %v494, %v496
      %v498 = vrot.slane %v391, 1
      %v499 = vrot.slane %v313, 1
      %v500 = vsel %vm447, %v498, %v499
      %v501 = vrot.slane %v408, 1
      %v502 = vsel %vm447, %v499, %v501
      %v503 = vrot.slane %v392, 1
      %v504 = vrot.slane %v316, 1
      %v505 = vsel %vm447, %v503, %v504
      %v506 = vrot.slane %v409, 1
      %v507 = vsel %vm447, %v504, %v506
      %v508 = vrot.slane %v393, 1
      %v509 = vrot.slane %v319, 1
      %v510 = vsel %vm447, %v508, %v509
      %v511 = vrot.slane %v410, 1
      %v512 = vsel %vm447, %v509, %v511
      %v513 = vrot.slane %v394, 1
      %v514 = vrot.slane %v322, 1
      %v515 = vsel %vm447, %v513, %v514
      %v516 = vrot.slane %v411, 1
      %v517 = vsel %vm447, %v514, %v516
      %v518 = vrot.slane %v395, 1
      %v519 = vrot.slane %v325, 1
      %v520 = vsel %vm447, %v518, %v519
      %v521 = vrot.slane %v412, 1
      %v522 = vsel %vm447, %v519, %v521
      %v523 = vrot.slane %v396, 1
      %v524 = vrot.slane %v328, 1
      %v525 = vsel %vm447, %v523, %v524
      %v526 = vrot.slane %v413, 1
      %v527 = vsel %vm447, %v524, %v526
      %528 = vrot.lane.b32.xlu0 %v450, 4
      %v529 = vpop.permute.xlu0 %528
      %530 = vrot.lane.b32.xlu0 %v452, 4
      %v531 = vpop.permute.xlu0 %530
      %532 = vrot.lane.b32.xlu0 %v455, 4
      %v533 = vpop.permute.xlu0 %532
      %534 = vrot.lane.b32.xlu0 %v457, 4
      %v535 = vpop.permute.xlu0 %534
      %536 = vrot.lane.b32.xlu0 %v460, 4
      %v537 = vpop.permute.xlu0 %536
      %538 = vrot.lane.b32.xlu0 %v462, 4
      %v539 = vpop.permute.xlu0 %538
      %540 = vrot.lane.b32.xlu0 %v465, 4
      %v541 = vpop.permute.xlu0 %540
      %542 = vrot.lane.b32.xlu0 %v467, 4
      %v543 = vpop.permute.xlu0 %542
      %544 = vrot.lane.b32.xlu0 %v470, 4
      %v545 = vpop.permute.xlu0 %544
      %546 = vrot.lane.b32.xlu0 %v472, 4
      %v547 = vpop.permute.xlu0 %546
      %548 = vrot.lane.b32.xlu0 %v475, 4
      %v549 = vpop.permute.xlu0 %548
      %550 = vrot.lane.b32.xlu0 %v477, 4
      %v551 = vpop.permute.xlu0 %550
      %552 = vrot.lane.b32.xlu0 %v480, 4
      %v553 = vpop.permute.xlu0 %552
      %554 = vrot.lane.b32.xlu0 %v482, 4
      %v555 = vpop.permute.xlu0 %554
      %556 = vrot.lane.b32.xlu0 %v485, 4
      %v557 = vpop.permute.xlu0 %556
      %558 = vrot.lane.b32.xlu0 %v487, 4
      %v559 = vpop.permute.xlu0 %558
      %560 = vrot.lane.b32.xlu0 %v490, 4
      %v561 = vpop.permute.xlu0 %560
      %562 = vrot.lane.b32.xlu0 %v492, 4
      %v563 = vpop.permute.xlu0 %562
      %564 = vrot.lane.b32.xlu0 %v495, 4
      %v565 = vpop.permute.xlu0 %564
      %566 = vrot.lane.b32.xlu0 %v497, 4
      %v567 = vpop.permute.xlu0 %566
      %568 = vrot.lane.b32.xlu0 %v500, 4
      %v569 = vpop.permute.xlu0 %568
      %570 = vrot.lane.b32.xlu0 %v502, 4
      %v571 = vpop.permute.xlu0 %570
      %572 = vrot.lane.b32.xlu0 %v505, 4
      %v573 = vpop.permute.xlu0 %572
      %574 = vrot.lane.b32.xlu0 %v507, 4
      %v575 = vpop.permute.xlu0 %574
      %576 = vrot.lane.b32.xlu0 %v510, 4
      %v577 = vpop.permute.xlu0 %576
      %578 = vrot.lane.b32.xlu0 %v512, 4
      %v579 = vpop.permute.xlu0 %578
      %580 = vrot.lane.b32.xlu0 %v515, 4
      %v581 = vpop.permute.xlu0 %580
      %582 = vrot.lane.b32.xlu0 %v517, 4
      %v583 = vpop.permute.xlu0 %582
      %584 = vrot.lane.b32.xlu0 %v520, 4
      %v585 = vpop.permute.xlu0 %584
      %586 = vrot.lane.b32.xlu0 %v522, 4
      %v587 = vpop.permute.xlu0 %586
      %588 = vrot.lane.b32.xlu0 %v525, 4
      %v589 = vpop.permute.xlu0 %588
      %590 = vrot.lane.b32.xlu0 %v527, 4
      %v591 = vpop.permute.xlu0 %590
      %vm624 = vcmask 1045504
      %v625 = vrot.slane %v381, 2
      %v626 = vrot.slane %v283, 2
      %v627 = vsel %vm624, %v625, %v626
      %v628 = vrot.slane %v398, 2
      %v629 = vsel %vm624, %v626, %v628
      %v630 = vrot.slane %v382, 2
      %v631 = vrot.slane %v286, 2
      %v632 = vsel %vm624, %v630, %v631
      %v633 = vrot.slane %v399, 2
      %v634 = vsel %vm624, %v631, %v633
      %v635 = vrot.slane %v383, 2
      %v636 = vrot.slane %v289, 2
      %v637 = vsel %vm624, %v635, %v636
      %v638 = vrot.slane %v400, 2
      %v639 = vsel %vm624, %v636, %v638
      %v640 = vrot.slane %v384, 2
      %v641 = vrot.slane %v292, 2
      %v642 = vsel %vm624, %v640, %v641
      %v643 = vrot.slane %v401, 2
      %v644 = vsel %vm624, %v641, %v643
      %v645 = vrot.slane %v385, 2
      %v646 = vrot.slane %v295, 2
      %v647 = vsel %vm624, %v645, %v646
      %v648 = vrot.slane %v402, 2
      %v649 = vsel %vm624, %v646, %v648
      %v650 = vrot.slane %v386, 2
      %v651 = vrot.slane %v298, 2
      %v652 = vsel %vm624, %v650, %v651
      %v653 = vrot.slane %v403, 2
      %v654 = vsel %vm624, %v651, %v653
      %v655 = vrot.slane %v387, 2
      %v656 = vrot.slane %v301, 2
      %v657 = vsel %vm624, %v655, %v656
      %v658 = vrot.slane %v404, 2
      %v659 = vsel %vm624, %v656, %v658
      %v660 = vrot.slane %v388, 2
      %v661 = vrot.slane %v304, 2
      %v662 = vsel %vm624, %v660, %v661
      %v663 = vrot.slane %v405, 2
      %v664 = vsel %vm624, %v661, %v663
      %v665 = vrot.slane %v389, 2
      %v666 = vrot.slane %v307, 2
      %v667 = vsel %vm624, %v665, %v666
      %v668 = vrot.slane %v406, 2
      %v669 = vsel %vm624, %v666, %v668
      %v670 = vrot.slane %v390, 2
      %v671 = vrot.slane %v310, 2
      %v672 = vsel %vm624, %v670, %v671
      %v673 = vrot.slane %v407, 2
      %v674 = vsel %vm624, %v671, %v673
      %v675 = vrot.slane %v391, 2
      %v676 = vrot.slane %v313, 2
      %v677 = vsel %vm624, %v675, %v676
      %v678 = vrot.slane %v408, 2
      %v679 = vsel %vm624, %v676, %v678
      %v680 = vrot.slane %v392, 2
      %v681 = vrot.slane %v316, 2
      %v682 = vsel %vm624, %v680, %v681
      %v683 = vrot.slane %v409, 2
      %v684 = vsel %vm624, %v681, %v683
      %v685 = vrot.slane %v393, 2
      %v686 = vrot.slane %v319, 2
      %v687 = vsel %vm624, %v685, %v686
      %v688 = vrot.slane %v410, 2
      %v689 = vsel %vm624, %v686, %v688
      %v690 = vrot.slane %v394, 2
      %v691 = vrot.slane %v322, 2
      %v692 = vsel %vm624, %v690, %v691
      %v693 = vrot.slane %v411, 2
      %v694 = vsel %vm624, %v691, %v693
      %v695 = vrot.slane %v395, 2
      %v696 = vrot.slane %v325, 2
      %v697 = vsel %vm624, %v695, %v696
      %v698 = vrot.slane %v412, 2
      %v699 = vsel %vm624, %v696, %v698
      %v700 = vrot.slane %v396, 2
      %v701 = vrot.slane %v328, 2
      %v702 = vsel %vm624, %v700, %v701
      %v703 = vrot.slane %v413, 2
      %v704 = vsel %vm624, %v701, %v703
      %705 = vrot.lane.b32.xlu0 %v627, 8
      %v706 = vpop.permute.xlu0 %705
      %707 = vrot.lane.b32.xlu0 %v629, 8
      %v708 = vpop.permute.xlu0 %707
      %709 = vrot.lane.b32.xlu0 %v632, 8
      %v710 = vpop.permute.xlu0 %709
      %711 = vrot.lane.b32.xlu0 %v634, 8
      %v712 = vpop.permute.xlu0 %711
      %713 = vrot.lane.b32.xlu0 %v637, 8
      %v714 = vpop.permute.xlu0 %713
      %715 = vrot.lane.b32.xlu0 %v639, 8
      %v716 = vpop.permute.xlu0 %715
      %717 = vrot.lane.b32.xlu0 %v642, 8
      %v718 = vpop.permute.xlu0 %717
      %719 = vrot.lane.b32.xlu0 %v644, 8
      %v720 = vpop.permute.xlu0 %719
      %721 = vrot.lane.b32.xlu0 %v647, 8
      %v722 = vpop.permute.xlu0 %721
      %723 = vrot.lane.b32.xlu0 %v649, 8
      %v724 = vpop.permute.xlu0 %723
      %725 = vrot.lane.b32.xlu0 %v652, 8
      %v726 = vpop.permute.xlu0 %725
      %727 = vrot.lane.b32.xlu0 %v654, 8
      %v728 = vpop.permute.xlu0 %727
      %729 = vrot.lane.b32.xlu0 %v657, 8
      %v730 = vpop.permute.xlu0 %729
      %731 = vrot.lane.b32.xlu0 %v659, 8
      %v732 = vpop.permute.xlu0 %731
      %733 = vrot.lane.b32.xlu0 %v662, 8
      %v734 = vpop.permute.xlu0 %733
      %735 = vrot.lane.b32.xlu0 %v664, 8
      %v736 = vpop.permute.xlu0 %735
      %737 = vrot.lane.b32.xlu0 %v667, 8
      %v738 = vpop.permute.xlu0 %737
      %739 = vrot.lane.b32.xlu0 %v669, 8
      %v740 = vpop.permute.xlu0 %739
      %741 = vrot.lane.b32.xlu0 %v672, 8
      %v742 = vpop.permute.xlu0 %741
      %743 = vrot.lane.b32.xlu0 %v674, 8
      %v744 = vpop.permute.xlu0 %743
      %745 = vrot.lane.b32.xlu0 %v677, 8
      %v746 = vpop.permute.xlu0 %745
      %747 = vrot.lane.b32.xlu0 %v679, 8
      %v748 = vpop.permute.xlu0 %747
      %749 = vrot.lane.b32.xlu0 %v682, 8
      %v750 = vpop.permute.xlu0 %749
      %751 = vrot.lane.b32.xlu0 %v684, 8
      %v752 = vpop.permute.xlu0 %751
      %753 = vrot.lane.b32.xlu0 %v687, 8
      %v754 = vpop.permute.xlu0 %753
      %755 = vrot.lane.b32.xlu0 %v689, 8
      %v756 = vpop.permute.xlu0 %755
      %757 = vrot.lane.b32.xlu0 %v692, 8
      %v758 = vpop.permute.xlu0 %757
      %759 = vrot.lane.b32.xlu0 %v694, 8
      %v760 = vpop.permute.xlu0 %759
      %761 = vrot.lane.b32.xlu0 %v697, 8
      %v762 = vpop.permute.xlu0 %761
      %763 = vrot.lane.b32.xlu0 %v699, 8
      %v764 = vpop.permute.xlu0 %763
      %765 = vrot.lane.b32.xlu0 %v702, 8
      %v766 = vpop.permute.xlu0 %765
      %767 = vrot.lane.b32.xlu0 %v704, 8
      %v768 = vpop.permute.xlu0 %767
      %802 = vrot.lane.b32.xlu0 %v382, 12
      %v803 = vpop.permute.xlu0 %802
      %804 = vrot.lane.b32.xlu0 %v286, 12
      %v805 = vpop.permute.xlu0 %804
      %806 = vrot.lane.b32.xlu0 %v383, 12
      %v807 = vpop.permute.xlu0 %806
      %808 = vrot.lane.b32.xlu0 %v289, 12
      %v809 = vpop.permute.xlu0 %808
      %810 = vrot.lane.b32.xlu0 %v384, 12
      %v811 = vpop.permute.xlu0 %810
      %812 = vrot.lane.b32.xlu0 %v292, 12
      %v813 = vpop.permute.xlu0 %812
      %814 = vrot.lane.b32.xlu0 %v385, 12
      %v815 = vpop.permute.xlu0 %814
      %816 = vrot.lane.b32.xlu0 %v295, 12
      %v817 = vpop.permute.xlu0 %816
      %818 = vrot.lane.b32.xlu0 %v386, 12
      %v819 = vpop.permute.xlu0 %818
      %820 = vrot.lane.b32.xlu0 %v298, 12
      %v821 = vpop.permute.xlu0 %820
      %822 = vrot.lane.b32.xlu0 %v387, 12
      %v823 = vpop.permute.xlu0 %822
      %824 = vrot.lane.b32.xlu0 %v301, 12
      %v825 = vpop.permute.xlu0 %824
      %826 = vrot.lane.b32.xlu0 %v388, 12
      %v827 = vpop.permute.xlu0 %826
      %828 = vrot.lane.b32.xlu0 %v304, 12
      %v829 = vpop.permute.xlu0 %828
      %830 = vrot.lane.b32.xlu0 %v389, 12
      %v831 = vpop.permute.xlu0 %830
      %832 = vrot.lane.b32.xlu0 %v307, 12
      %v833 = vpop.permute.xlu0 %832
      %834 = vrot.lane.b32.xlu0 %v390, 12
      %v835 = vpop.permute.xlu0 %834
      %836 = vrot.lane.b32.xlu0 %v310, 12
      %v837 = vpop.permute.xlu0 %836
      %838 = vrot.lane.b32.xlu0 %v391, 12
      %v839 = vpop.permute.xlu0 %838
      %840 = vrot.lane.b32.xlu0 %v313, 12
      %v841 = vpop.permute.xlu0 %840
      %842 = vrot.lane.b32.xlu0 %v392, 12
      %v843 = vpop.permute.xlu0 %842
      %844 = vrot.lane.b32.xlu0 %v316, 12
      %v845 = vpop.permute.xlu0 %844
      %846 = vrot.lane.b32.xlu0 %v393, 12
      %v847 = vpop.permute.xlu0 %846
      %848 = vrot.lane.b32.xlu0 %v319, 12
      %v849 = vpop.permute.xlu0 %848
      %850 = vrot.lane.b32.xlu0 %v394, 12
      %v851 = vpop.permute.xlu0 %850
      %852 = vrot.lane.b32.xlu0 %v322, 12
      %v853 = vpop.permute.xlu0 %852
      %854 = vrot.lane.b32.xlu0 %v395, 12
      %v855 = vpop.permute.xlu0 %854
      %856 = vrot.lane.b32.xlu0 %v325, 12
      %v857 = vpop.permute.xlu0 %856
      %858 = vrot.lane.b32.xlu0 %v396, 12
      %v859 = vpop.permute.xlu0 %858
      %860 = vrot.lane.b32.xlu0 %v328, 12
      %v861 = vpop.permute.xlu0 %860
      %862 = vrot.lane.b32.xlu0 %v397, 12
      %v863 = vpop.permute.xlu0 %862
      %864 = vrot.lane.b32.xlu0 %v331, 12
      %v865 = vpop.permute.xlu0 %864
      %v899 = vrot.slane %v397, 1
      %v900 = vrot.slane %v331, 1
      %v901 = vsel %vm447, %v899, %v900
      %v902 = vrot.slane %v414, 1
      %v903 = vsel %vm447, %v900, %v902
      %904 = vrot.lane.b32.xlu0 %v455, 16
      %v905 = vpop.permute.xlu0 %904
      %906 = vrot.lane.b32.xlu0 %v457, 16
      %v907 = vpop.permute.xlu0 %906
      %908 = vrot.lane.b32.xlu0 %v460, 16
      %v909 = vpop.permute.xlu0 %908
      %910 = vrot.lane.b32.xlu0 %v462, 16
      %v911 = vpop.permute.xlu0 %910
      %912 = vrot.lane.b32.xlu0 %v465, 16
      %v913 = vpop.permute.xlu0 %912
      %914 = vrot.lane.b32.xlu0 %v467, 16
      %v915 = vpop.permute.xlu0 %914
      %916 = vrot.lane.b32.xlu0 %v470, 16
      %v917 = vpop.permute.xlu0 %916
      %918 = vrot.lane.b32.xlu0 %v472, 16
      %v919 = vpop.permute.xlu0 %918
      %920 = vrot.lane.b32.xlu0 %v475, 16
      %v921 = vpop.permute.xlu0 %920
      %922 = vrot.lane.b32.xlu0 %v477, 16
      %v923 = vpop.permute.xlu0 %922
      %924 = vrot.lane.b32.xlu0 %v480, 16
      %v925 = vpop.permute.xlu0 %924
      %926 = vrot.lane.b32.xlu0 %v482, 16
      %v927 = vpop.permute.xlu0 %926
      %928 = vrot.lane.b32.xlu0 %v485, 16
      %v929 = vpop.permute.xlu0 %928
      %930 = vrot.lane.b32.xlu0 %v487, 16
      %v931 = vpop.permute.xlu0 %930
      %932 = vrot.lane.b32.xlu0 %v490, 16
      %v933 = vpop.permute.xlu0 %932
      %934 = vrot.lane.b32.xlu0 %v492, 16
      %v935 = vpop.permute.xlu0 %934
      %936 = vrot.lane.b32.xlu0 %v495, 16
      %v937 = vpop.permute.xlu0 %936
      %938 = vrot.lane.b32.xlu0 %v497, 16
      %v939 = vpop.permute.xlu0 %938
      %940 = vrot.lane.b32.xlu0 %v500, 16
      %v941 = vpop.permute.xlu0 %940
      %942 = vrot.lane.b32.xlu0 %v502, 16
      %v943 = vpop.permute.xlu0 %942
      %944 = vrot.lane.b32.xlu0 %v505, 16
      %v945 = vpop.permute.xlu0 %944
      %946 = vrot.lane.b32.xlu0 %v507, 16
      %v947 = vpop.permute.xlu0 %946
      %948 = vrot.lane.b32.xlu0 %v510, 16
      %v949 = vpop.permute.xlu0 %948
      %950 = vrot.lane.b32.xlu0 %v512, 16
      %v951 = vpop.permute.xlu0 %950
      %952 = vrot.lane.b32.xlu0 %v515, 16
      %v953 = vpop.permute.xlu0 %952
      %954 = vrot.lane.b32.xlu0 %v517, 16
      %v955 = vpop.permute.xlu0 %954
      %956 = vrot.lane.b32.xlu0 %v520, 16
      %v957 = vpop.permute.xlu0 %956
      %958 = vrot.lane.b32.xlu0 %v522, 16
      %v959 = vpop.permute.xlu0 %958
      %960 = vrot.lane.b32.xlu0 %v525, 16
      %v961 = vpop.permute.xlu0 %960
      %962 = vrot.lane.b32.xlu0 %v527, 16
      %v963 = vpop.permute.xlu0 %962
      %964 = vrot.lane.b32.xlu0 %v901, 16
      %v965 = vpop.permute.xlu0 %964
      %966 = vrot.lane.b32.xlu0 %v903, 16
      %v967 = vpop.permute.xlu0 %966
      %v1000 = vrot.slane %v397, 2
      %v1001 = vrot.slane %v331, 2
      %v1002 = vsel %vm624, %v1000, %v1001
      %v1003 = vrot.slane %v414, 2
      %v1004 = vsel %vm624, %v1001, %v1003
      %1005 = vrot.lane.b32.xlu0 %v632, 20
      %v1006 = vpop.permute.xlu0 %1005
      %1007 = vrot.lane.b32.xlu0 %v634, 20
      %v1008 = vpop.permute.xlu0 %1007
      %1009 = vrot.lane.b32.xlu0 %v637, 20
      %v1010 = vpop.permute.xlu0 %1009
      %1011 = vrot.lane.b32.xlu0 %v639, 20
      %v1012 = vpop.permute.xlu0 %1011
      %1013 = vrot.lane.b32.xlu0 %v642, 20
      %v1014 = vpop.permute.xlu0 %1013
      %1015 = vrot.lane.b32.xlu0 %v644, 20
      %v1016 = vpop.permute.xlu0 %1015
      %1017 = vrot.lane.b32.xlu0 %v647, 20
      %v1018 = vpop.permute.xlu0 %1017
      %1019 = vrot.lane.b32.xlu0 %v649, 20
      %v1020 = vpop.permute.xlu0 %1019
      %1021 = vrot.lane.b32.xlu0 %v652, 20
      %v1022 = vpop.permute.xlu0 %1021
      %1023 = vrot.lane.b32.xlu0 %v654, 20
      %v1024 = vpop.permute.xlu0 %1023
      %1025 = vrot.lane.b32.xlu0 %v657, 20
      %v1026 = vpop.permute.xlu0 %1025
      %1027 = vrot.lane.b32.xlu0 %v659, 20
      %v1028 = vpop.permute.xlu0 %1027
      %1029 = vrot.lane.b32.xlu0 %v662, 20
      %v1030 = vpop.permute.xlu0 %1029
      %1031 = vrot.lane.b32.xlu0 %v664, 20
      %v1032 = vpop.permute.xlu0 %1031
      %1033 = vrot.lane.b32.xlu0 %v667, 20
      %v1034 = vpop.permute.xlu0 %1033
      %1035 = vrot.lane.b32.xlu0 %v669, 20
      %v1036 = vpop.permute.xlu0 %1035
      %1037 = vrot.lane.b32.xlu0 %v672, 20
      %v1038 = vpop.permute.xlu0 %1037
      %1039 = vrot.lane.b32.xlu0 %v674, 20
      %v1040 = vpop.permute.xlu0 %1039
      %1041 = vrot.lane.b32.xlu0 %v677, 20
      %v1042 = vpop.permute.xlu0 %1041
      %1043 = vrot.lane.b32.xlu0 %v679, 20
      %v1044 = vpop.permute.xlu0 %1043
      %1045 = vrot.lane.b32.xlu0 %v682, 20
      %v1046 = vpop.permute.xlu0 %1045
      %1047 = vrot.lane.b32.xlu0 %v684, 20
      %v1048 = vpop.permute.xlu0 %1047
      %1049 = vrot.lane.b32.xlu0 %v687, 20
      %v1050 = vpop.permute.xlu0 %1049
      %1051 = vrot.lane.b32.xlu0 %v689, 20
      %v1052 = vpop.permute.xlu0 %1051
      %1053 = vrot.lane.b32.xlu0 %v692, 20
      %v1054 = vpop.permute.xlu0 %1053
      %1055 = vrot.lane.b32.xlu0 %v694, 20
      %v1056 = vpop.permute.xlu0 %1055
      %1057 = vrot.lane.b32.xlu0 %v697, 20
      %v1058 = vpop.permute.xlu0 %1057
      %1059 = vrot.lane.b32.xlu0 %v699, 20
      %v1060 = vpop.permute.xlu0 %1059
      %1061 = vrot.lane.b32.xlu0 %v702, 20
      %v1062 = vpop.permute.xlu0 %1061
      %1063 = vrot.lane.b32.xlu0 %v704, 20
      %v1064 = vpop.permute.xlu0 %1063
      %1065 = vrot.lane.b32.xlu0 %v1002, 20
      %v1066 = vpop.permute.xlu0 %1065
      %1067 = vrot.lane.b32.xlu0 %v1004, 20
      %v1068 = vpop.permute.xlu0 %1067
      %1101 = vrot.lane.b32.xlu0 %v383, 24
      %v1102 = vpop.permute.xlu0 %1101
      %1103 = vrot.lane.b32.xlu0 %v289, 24
      %v1104 = vpop.permute.xlu0 %1103
      %1105 = vrot.lane.b32.xlu0 %v384, 24
      %v1106 = vpop.permute.xlu0 %1105
      %1107 = vrot.lane.b32.xlu0 %v292, 24
      %v1108 = vpop.permute.xlu0 %1107
      %1109 = vrot.lane.b32.xlu0 %v385, 24
      %v1110 = vpop.permute.xlu0 %1109
      %1111 = vrot.lane.b32.xlu0 %v295, 24
      %v1112 = vpop.permute.xlu0 %1111
      %1113 = vrot.lane.b32.xlu0 %v386, 24
      %v1114 = vpop.permute.xlu0 %1113
      %1115 = vrot.lane.b32.xlu0 %v298, 24
      %v1116 = vpop.permute.xlu0 %1115
      %1117 = vrot.lane.b32.xlu0 %v387, 24
      %v1118 = vpop.permute.xlu0 %1117
      %1119 = vrot.lane.b32.xlu0 %v301, 24
      %v1120 = vpop.permute.xlu0 %1119
      %1121 = vrot.lane.b32.xlu0 %v388, 24
      %v1122 = vpop.permute.xlu0 %1121
      %1123 = vrot.lane.b32.xlu0 %v304, 24
      %v1124 = vpop.permute.xlu0 %1123
      %1125 = vrot.lane.b32.xlu0 %v389, 24
      %v1126 = vpop.permute.xlu0 %1125
      %1127 = vrot.lane.b32.xlu0 %v307, 24
      %v1128 = vpop.permute.xlu0 %1127
      %1129 = vrot.lane.b32.xlu0 %v390, 24
      %v1130 = vpop.permute.xlu0 %1129
      %1131 = vrot.lane.b32.xlu0 %v310, 24
      %v1132 = vpop.permute.xlu0 %1131
      %1133 = vrot.lane.b32.xlu0 %v391, 24
      %v1134 = vpop.permute.xlu0 %1133
      %1135 = vrot.lane.b32.xlu0 %v313, 24
      %v1136 = vpop.permute.xlu0 %1135
      %1137 = vrot.lane.b32.xlu0 %v392, 24
      %v1138 = vpop.permute.xlu0 %1137
      %1139 = vrot.lane.b32.xlu0 %v316, 24
      %v1140 = vpop.permute.xlu0 %1139
      %1141 = vrot.lane.b32.xlu0 %v393, 24
      %v1142 = vpop.permute.xlu0 %1141
      %1143 = vrot.lane.b32.xlu0 %v319, 24
      %v1144 = vpop.permute.xlu0 %1143
      %1145 = vrot.lane.b32.xlu0 %v394, 24
      %v1146 = vpop.permute.xlu0 %1145
      %1147 = vrot.lane.b32.xlu0 %v322, 24
      %v1148 = vpop.permute.xlu0 %1147
      %1149 = vrot.lane.b32.xlu0 %v395, 24
      %v1150 = vpop.permute.xlu0 %1149
      %1151 = vrot.lane.b32.xlu0 %v325, 24
      %v1152 = vpop.permute.xlu0 %1151
      %1153 = vrot.lane.b32.xlu0 %v396, 24
      %v1154 = vpop.permute.xlu0 %1153
      %1155 = vrot.lane.b32.xlu0 %v328, 24
      %v1156 = vpop.permute.xlu0 %1155
      %1157 = vrot.lane.b32.xlu0 %v397, 24
      %v1158 = vpop.permute.xlu0 %1157
      %1159 = vrot.lane.b32.xlu0 %v331, 24
      %v1160 = vpop.permute.xlu0 %1159
      %1161 = vrot.lane.b32.xlu0 %v381, 24
      %v1162 = vpop.permute.xlu0 %1161
      %1163 = vrot.lane.b32.xlu0 %v283, 24
      %v1164 = vpop.permute.xlu0 %1163
      %1197 = vrot.lane.b32.xlu0 %v460, 28
      %v1198 = vpop.permute.xlu0 %1197
      %1199 = vrot.lane.b32.xlu0 %v462, 28
      %v1200 = vpop.permute.xlu0 %1199
      %1201 = vrot.lane.b32.xlu0 %v465, 28
      %v1202 = vpop.permute.xlu0 %1201
      %1203 = vrot.lane.b32.xlu0 %v467, 28
      %v1204 = vpop.permute.xlu0 %1203
      %1205 = vrot.lane.b32.xlu0 %v470, 28
      %v1206 = vpop.permute.xlu0 %1205
      %1207 = vrot.lane.b32.xlu0 %v472, 28
      %v1208 = vpop.permute.xlu0 %1207
      %1209 = vrot.lane.b32.xlu0 %v475, 28
      %v1210 = vpop.permute.xlu0 %1209
      %1211 = vrot.lane.b32.xlu0 %v477, 28
      %v1212 = vpop.permute.xlu0 %1211
      %1213 = vrot.lane.b32.xlu0 %v480, 28
      %v1214 = vpop.permute.xlu0 %1213
      %1215 = vrot.lane.b32.xlu0 %v482, 28
      %v1216 = vpop.permute.xlu0 %1215
      %1217 = vrot.lane.b32.xlu0 %v485, 28
      %v1218 = vpop.permute.xlu0 %1217
      %1219 = vrot.lane.b32.xlu0 %v487, 28
      %v1220 = vpop.permute.xlu0 %1219
      %1221 = vrot.lane.b32.xlu0 %v490, 28
      %v1222 = vpop.permute.xlu0 %1221
      %1223 = vrot.lane.b32.xlu0 %v492, 28
      %v1224 = vpop.permute.xlu0 %1223
      %1225 = vrot.lane.b32.xlu0 %v495, 28
      %v1226 = vpop.permute.xlu0 %1225
      %1227 = vrot.lane.b32.xlu0 %v497, 28
      %v1228 = vpop.permute.xlu0 %1227
      %1229 = vrot.lane.b32.xlu0 %v500, 28
      %v1230 = vpop.permute.xlu0 %1229
      %1231 = vrot.lane.b32.xlu0 %v502, 28
      %v1232 = vpop.permute.xlu0 %1231
      %1233 = vrot.lane.b32.xlu0 %v505, 28
      %v1234 = vpop.permute.xlu0 %1233
      %1235 = vrot.lane.b32.xlu0 %v507, 28
      %v1236 = vpop.permute.xlu0 %1235
      %1237 = vrot.lane.b32.xlu0 %v510, 28
      %v1238 = vpop.permute.xlu0 %1237
      %1239 = vrot.lane.b32.xlu0 %v512, 28
      %v1240 = vpop.permute.xlu0 %1239
      %1241 = vrot.lane.b32.xlu0 %v515, 28
      %v1242 = vpop.permute.xlu0 %1241
      %1243 = vrot.lane.b32.xlu0 %v517, 28
      %v1244 = vpop.permute.xlu0 %1243
      %1245 = vrot.lane.b32.xlu0 %v520, 28
      %v1246 = vpop.permute.xlu0 %1245
      %1247 = vrot.lane.b32.xlu0 %v522, 28
      %v1248 = vpop.permute.xlu0 %1247
      %1249 = vrot.lane.b32.xlu0 %v525, 28
      %v1250 = vpop.permute.xlu0 %1249
      %1251 = vrot.lane.b32.xlu0 %v527, 28
      %v1252 = vpop.permute.xlu0 %1251
      %1253 = vrot.lane.b32.xlu0 %v901, 28
      %v1254 = vpop.permute.xlu0 %1253
      %1255 = vrot.lane.b32.xlu0 %v903, 28
      %v1256 = vpop.permute.xlu0 %1255
      %1257 = vrot.lane.b32.xlu0 %v450, 28
      %v1258 = vpop.permute.xlu0 %1257
      %1259 = vrot.lane.b32.xlu0 %v452, 28
      %v1260 = vpop.permute.xlu0 %1259
      %1293 = vrot.lane.b32.xlu0 %v637, 32
      %v1294 = vpop.permute.xlu0 %1293
      %1295 = vrot.lane.b32.xlu0 %v639, 32
      %v1296 = vpop.permute.xlu0 %1295
      %1297 = vrot.lane.b32.xlu0 %v642, 32
      %v1298 = vpop.permute.xlu0 %1297
      %1299 = vrot.lane.b32.xlu0 %v644, 32
      %v1300 = vpop.permute.xlu0 %1299
      %1301 = vrot.lane.b32.xlu0 %v647, 32
      %v1302 = vpop.permute.xlu0 %1301
      %1303 = vrot.lane.b32.xlu0 %v649, 32
      %v1304 = vpop.permute.xlu0 %1303
      %1305 = vrot.lane.b32.xlu0 %v652, 32
      %v1306 = vpop.permute.xlu0 %1305
      %1307 = vrot.lane.b32.xlu0 %v654, 32
      %v1308 = vpop.permute.xlu0 %1307
      %1309 = vrot.lane.b32.xlu0 %v657, 32
      %v1310 = vpop.permute.xlu0 %1309
      %1311 = vrot.lane.b32.xlu0 %v659, 32
      %v1312 = vpop.permute.xlu0 %1311
      %1313 = vrot.lane.b32.xlu0 %v662, 32
      %v1314 = vpop.permute.xlu0 %1313
      %1315 = vrot.lane.b32.xlu0 %v664, 32
      %v1316 = vpop.permute.xlu0 %1315
      %1317 = vrot.lane.b32.xlu0 %v667, 32
      %v1318 = vpop.permute.xlu0 %1317
      %1319 = vrot.lane.b32.xlu0 %v669, 32
      %v1320 = vpop.permute.xlu0 %1319
      %1321 = vrot.lane.b32.xlu0 %v672, 32
      %v1322 = vpop.permute.xlu0 %1321
      %1323 = vrot.lane.b32.xlu0 %v674, 32
      %v1324 = vpop.permute.xlu0 %1323
      %1325 = vrot.lane.b32.xlu0 %v677, 32
      %v1326 = vpop.permute.xlu0 %1325
      %1327 = vrot.lane.b32.xlu0 %v679, 32
      %v1328 = vpop.permute.xlu0 %1327
      %1329 = vrot.lane.b32.xlu0 %v682, 32
      %v1330 = vpop.permute.xlu0 %1329
      %1331 = vrot.lane.b32.xlu0 %v684, 32
      %v1332 = vpop.permute.xlu0 %1331
      %1333 = vrot.lane.b32.xlu0 %v687, 32
      %v1334 = vpop.permute.xlu0 %1333
      %1335 = vrot.lane.b32.xlu0 %v689, 32
      %v1336 = vpop.permute.xlu0 %1335
      %1337 = vrot.lane.b32.xlu0 %v692, 32
      %v1338 = vpop.permute.xlu0 %1337
      %1339 = vrot.lane.b32.xlu0 %v694, 32
      %v1340 = vpop.permute.xlu0 %1339
      %1341 = vrot.lane.b32.xlu0 %v697, 32
      %v1342 = vpop.permute.xlu0 %1341
      %1343 = vrot.lane.b32.xlu0 %v699, 32
      %v1344 = vpop.permute.xlu0 %1343
      %1345 = vrot.lane.b32.xlu0 %v702, 32
      %v1346 = vpop.permute.xlu0 %1345
      %1347 = vrot.lane.b32.xlu0 %v704, 32
      %v1348 = vpop.permute.xlu0 %1347
      %1349 = vrot.lane.b32.xlu0 %v1002, 32
      %v1350 = vpop.permute.xlu0 %1349
      %1351 = vrot.lane.b32.xlu0 %v1004, 32
      %v1352 = vpop.permute.xlu0 %1351
      %1353 = vrot.lane.b32.xlu0 %v627, 32
      %v1354 = vpop.permute.xlu0 %1353
      %1355 = vrot.lane.b32.xlu0 %v629, 32
      %v1356 = vpop.permute.xlu0 %1355
      %vm1389 = vcmask 31744
      %v1390 = vsel %vm1389, %v381, %v529
      %v1391 = vsel %vm1389, %v283, %v531
      %v1392 = vsel %vm1389, %v382, %v533
      %v1393 = vsel %vm1389, %v286, %v535
      %v1394 = vsel %vm1389, %v383, %v537
      %v1395 = vsel %vm1389, %v289, %v539
      %v1396 = vsel %vm1389, %v384, %v541
      %v1397 = vsel %vm1389, %v292, %v543
      %v1398 = vsel %vm1389, %v385, %v545
      %v1399 = vsel %vm1389, %v295, %v547
      %v1400 = vsel %vm1389, %v386, %v549
      %v1401 = vsel %vm1389, %v298, %v551
      %v1402 = vsel %vm1389, %v387, %v553
      %v1403 = vsel %vm1389, %v301, %v555
      %v1404 = vsel %vm1389, %v388, %v557
      %v1405 = vsel %vm1389, %v304, %v559
      %v1406 = vsel %vm1389, %v389, %v561
      %v1407 = vsel %vm1389, %v307, %v563
      %v1408 = vsel %vm1389, %v390, %v565
      %v1409 = vsel %vm1389, %v310, %v567
      %v1410 = vsel %vm1389, %v391, %v569
      %v1411 = vsel %vm1389, %v313, %v571
      %v1412 = vsel %vm1389, %v392, %v573
      %v1413 = vsel %vm1389, %v316, %v575
      %v1414 = vsel %vm1389, %v393, %v577
      %v1415 = vsel %vm1389, %v319, %v579
      %v1416 = vsel %vm1389, %v394, %v581
      %v1417 = vsel %vm1389, %v322, %v583
      %v1418 = vsel %vm1389, %v395, %v585
      %v1419 = vsel %vm1389, %v325, %v587
      %v1420 = vsel %vm1389, %v396, %v589
      %v1421 = vsel %vm1389, %v328, %v591
      %vm1422 = vcmask 64512
      %v1423 = vsel %vm1422, %v1390, %v706
      %v1424 = vsel %vm1422, %v1391, %v708
      %v1425 = vsel %vm1422, %v1392, %v710
      %v1426 = vsel %vm1422, %v1393, %v712
      %v1427 = vsel %vm1422, %v1394, %v714
      %v1428 = vsel %vm1422, %v1395, %v716
      %v1429 = vsel %vm1422, %v1396, %v718
      %v1430 = vsel %vm1422, %v1397, %v720
      %v1431 = vsel %vm1422, %v1398, %v722
      %v1432 = vsel %vm1422, %v1399, %v724
      %v1433 = vsel %vm1422, %v1400, %v726
      %v1434 = vsel %vm1422, %v1401, %v728
      %v1435 = vsel %vm1422, %v1402, %v730
      %v1436 = vsel %vm1422, %v1403, %v732
      %v1437 = vsel %vm1422, %v1404, %v734
      %v1438 = vsel %vm1422, %v1405, %v736
      %v1439 = vsel %vm1422, %v1406, %v738
      %v1440 = vsel %vm1422, %v1407, %v740
      %v1441 = vsel %vm1422, %v1408, %v742
      %v1442 = vsel %vm1422, %v1409, %v744
      %v1443 = vsel %vm1422, %v1410, %v746
      %v1444 = vsel %vm1422, %v1411, %v748
      %v1445 = vsel %vm1422, %v1412, %v750
      %v1446 = vsel %vm1422, %v1413, %v752
      %v1447 = vsel %vm1422, %v1414, %v754
      %v1448 = vsel %vm1422, %v1415, %v756
      %v1449 = vsel %vm1422, %v1416, %v758
      %v1450 = vsel %vm1422, %v1417, %v760
      %v1451 = vsel %vm1422, %v1418, %v762
      %v1452 = vsel %vm1422, %v1419, %v764
      %v1453 = vsel %vm1422, %v1420, %v766
      %v1454 = vsel %vm1422, %v1421, %v768
      %vm1455 = vcmask 97280
      %v1456 = vsel %vm1455, %v1423, %v803
      %v1457 = vsel %vm1455, %v1424, %v805
      %v1458 = vsel %vm1455, %v1425, %v807
      %v1459 = vsel %vm1455, %v1426, %v809
      %v1460 = vsel %vm1455, %v1427, %v811
      %v1461 = vsel %vm1455, %v1428, %v813
      %v1462 = vsel %vm1455, %v1429, %v815
      %v1463 = vsel %vm1455, %v1430, %v817
      %v1464 = vsel %vm1455, %v1431, %v819
      %v1465 = vsel %vm1455, %v1432, %v821
      %v1466 = vsel %vm1455, %v1433, %v823
      %v1467 = vsel %vm1455, %v1434, %v825
      %v1468 = vsel %vm1455, %v1435, %v827
      %v1469 = vsel %vm1455, %v1436, %v829
      %v1470 = vsel %vm1455, %v1437, %v831
      %v1471 = vsel %vm1455, %v1438, %v833
      %v1472 = vsel %vm1455, %v1439, %v835
      %v1473 = vsel %vm1455, %v1440, %v837
      %v1474 = vsel %vm1455, %v1441, %v839
      %v1475 = vsel %vm1455, %v1442, %v841
      %v1476 = vsel %vm1455, %v1443, %v843
      %v1477 = vsel %vm1455, %v1444, %v845
      %v1478 = vsel %vm1455, %v1445, %v847
      %v1479 = vsel %vm1455, %v1446, %v849
      %v1480 = vsel %vm1455, %v1447, %v851
      %v1481 = vsel %vm1455, %v1448, %v853
      %v1482 = vsel %vm1455, %v1449, %v855
      %v1483 = vsel %vm1455, %v1450, %v857
      %v1484 = vsel %vm1455, %v1451, %v859
      %v1485 = vsel %vm1455, %v1452, %v861
      %v1486 = vsel %vm1455, %v1453, %v863
      %v1487 = vsel %vm1455, %v1454, %v865
      %vm1488 = vcmask 130048
      %v1489 = vsel %vm1488, %v1456, %v905
      %v1490 = vsel %vm1488, %v1457, %v907
      %v1491 = vsel %vm1488, %v1458, %v909
      %v1492 = vsel %vm1488, %v1459, %v911
      %v1493 = vsel %vm1488, %v1460, %v913
      %v1494 = vsel %vm1488, %v1461, %v915
      %v1495 = vsel %vm1488, %v1462, %v917
      %v1496 = vsel %vm1488, %v1463, %v919
      %v1497 = vsel %vm1488, %v1464, %v921
      %v1498 = vsel %vm1488, %v1465, %v923
      %v1499 = vsel %vm1488, %v1466, %v925
      %v1500 = vsel %vm1488, %v1467, %v927
      %v1501 = vsel %vm1488, %v1468, %v929
      %v1502 = vsel %vm1488, %v1469, %v931
      %v1503 = vsel %vm1488, %v1470, %v933
      %v1504 = vsel %vm1488, %v1471, %v935
      %v1505 = vsel %vm1488, %v1472, %v937
      %v1506 = vsel %vm1488, %v1473, %v939
      %v1507 = vsel %vm1488, %v1474, %v941
      %v1508 = vsel %vm1488, %v1475, %v943
      %v1509 = vsel %vm1488, %v1476, %v945
      %v1510 = vsel %vm1488, %v1477, %v947
      %v1511 = vsel %vm1488, %v1478, %v949
      %v1512 = vsel %vm1488, %v1479, %v951
      %v1513 = vsel %vm1488, %v1480, %v953
      %v1514 = vsel %vm1488, %v1481, %v955
      %v1515 = vsel %vm1488, %v1482, %v957
      %v1516 = vsel %vm1488, %v1483, %v959
      %v1517 = vsel %vm1488, %v1484, %v961
      %v1518 = vsel %vm1488, %v1485, %v963
      %v1519 = vsel %vm1488, %v1486, %v965
      %v1520 = vsel %vm1488, %v1487, %v967
      %vm1521 = vcmask 162816
      %v1522 = vsel %vm1521, %v1489, %v1006
      %v1523 = vsel %vm1521, %v1490, %v1008
      %v1524 = vsel %vm1521, %v1491, %v1010
      %v1525 = vsel %vm1521, %v1492, %v1012
      %v1526 = vsel %vm1521, %v1493, %v1014
      %v1527 = vsel %vm1521, %v1494, %v1016
      %v1528 = vsel %vm1521, %v1495, %v1018
      %v1529 = vsel %vm1521, %v1496, %v1020
      %v1530 = vsel %vm1521, %v1497, %v1022
      %v1531 = vsel %vm1521, %v1498, %v1024
      %v1532 = vsel %vm1521, %v1499, %v1026
      %v1533 = vsel %vm1521, %v1500, %v1028
      %v1534 = vsel %vm1521, %v1501, %v1030
      %v1535 = vsel %vm1521, %v1502, %v1032
      %v1536 = vsel %vm1521, %v1503, %v1034
      %v1537 = vsel %vm1521, %v1504, %v1036
      %v1538 = vsel %vm1521, %v1505, %v1038
      %v1539 = vsel %vm1521, %v1506, %v1040
      %v1540 = vsel %vm1521, %v1507, %v1042
      %v1541 = vsel %vm1521, %v1508, %v1044
      %v1542 = vsel %vm1521, %v1509, %v1046
      %v1543 = vsel %vm1521, %v1510, %v1048
      %v1544 = vsel %vm1521, %v1511, %v1050
      %v1545 = vsel %vm1521, %v1512, %v1052
      %v1546 = vsel %vm1521, %v1513, %v1054
      %v1547 = vsel %vm1521, %v1514, %v1056
      %v1548 = vsel %vm1521, %v1515, %v1058
      %v1549 = vsel %vm1521, %v1516, %v1060
      %v1550 = vsel %vm1521, %v1517, %v1062
      %v1551 = vsel %vm1521, %v1518, %v1064
      %v1552 = vsel %vm1521, %v1519, %v1066
      %v1553 = vsel %vm1521, %v1520, %v1068
      %vm1554 = vcmask 195584
      %v1555 = vsel %vm1554, %v1522, %v1102
      %v1556 = vsel %vm1554, %v1523, %v1104
      %v1557 = vsel %vm1554, %v1524, %v1106
      %v1558 = vsel %vm1554, %v1525, %v1108
      %v1559 = vsel %vm1554, %v1526, %v1110
      %v1560 = vsel %vm1554, %v1527, %v1112
      %v1561 = vsel %vm1554, %v1528, %v1114
      %v1562 = vsel %vm1554, %v1529, %v1116
      %v1563 = vsel %vm1554, %v1530, %v1118
      %v1564 = vsel %vm1554, %v1531, %v1120
      %v1565 = vsel %vm1554, %v1532, %v1122
      %v1566 = vsel %vm1554, %v1533, %v1124
      %v1567 = vsel %vm1554, %v1534, %v1126
      %v1568 = vsel %vm1554, %v1535, %v1128
      %v1569 = vsel %vm1554, %v1536, %v1130
      %v1570 = vsel %vm1554, %v1537, %v1132
      %v1571 = vsel %vm1554, %v1538, %v1134
      %v1572 = vsel %vm1554, %v1539, %v1136
      %v1573 = vsel %vm1554, %v1540, %v1138
      %v1574 = vsel %vm1554, %v1541, %v1140
      %v1575 = vsel %vm1554, %v1542, %v1142
      %v1576 = vsel %vm1554, %v1543, %v1144
      %v1577 = vsel %vm1554, %v1544, %v1146
      %v1578 = vsel %vm1554, %v1545, %v1148
      %v1579 = vsel %vm1554, %v1546, %v1150
      %v1580 = vsel %vm1554, %v1547, %v1152
      %v1581 = vsel %vm1554, %v1548, %v1154
      %v1582 = vsel %vm1554, %v1549, %v1156
      %v1583 = vsel %vm1554, %v1550, %v1158
      %v1584 = vsel %vm1554, %v1551, %v1160
      %v1585 = vsel %vm1554, %v1552, %v1162
      %v1586 = vsel %vm1554, %v1553, %v1164
      %vm1587 = vcmask 228352
      %v1588 = vsel %vm1587, %v1555, %v1198
      %v1589 = vsel %vm1587, %v1556, %v1200
      %v1590 = vsel %vm1587, %v1557, %v1202
      %v1591 = vsel %vm1587, %v1558, %v1204
      %v1592 = vsel %vm1587, %v1559, %v1206
      %v1593 = vsel %vm1587, %v1560, %v1208
      %v1594 = vsel %vm1587, %v1561, %v1210
      %v1595 = vsel %vm1587, %v1562, %v1212
      %v1596 = vsel %vm1587, %v1563, %v1214
      %v1597 = vsel %vm1587, %v1564, %v1216
      %v1598 = vsel %vm1587, %v1565, %v1218
      %v1599 = vsel %vm1587, %v1566, %v1220
      %v1600 = vsel %vm1587, %v1567, %v1222
      %v1601 = vsel %vm1587, %v1568, %v1224
      %v1602 = vsel %vm1587, %v1569, %v1226
      %v1603 = vsel %vm1587, %v1570, %v1228
      %v1604 = vsel %vm1587, %v1571, %v1230
      %v1605 = vsel %vm1587, %v1572, %v1232
      %v1606 = vsel %vm1587, %v1573, %v1234
      %v1607 = vsel %vm1587, %v1574, %v1236
      %v1608 = vsel %vm1587, %v1575, %v1238
      %v1609 = vsel %vm1587, %v1576, %v1240
      %v1610 = vsel %vm1587, %v1577, %v1242
      %v1611 = vsel %vm1587, %v1578, %v1244
      %v1612 = vsel %vm1587, %v1579, %v1246
      %v1613 = vsel %vm1587, %v1580, %v1248
      %v1614 = vsel %vm1587, %v1581, %v1250
      %v1615 = vsel %vm1587, %v1582, %v1252
      %v1616 = vsel %vm1587, %v1583, %v1254
      %v1617 = vsel %vm1587, %v1584, %v1256
      %v1618 = vsel %vm1587, %v1585, %v1258
      %v1619 = vsel %vm1587, %v1586, %v1260
      %vm1620 = vcmask 261120
      %v1621 = vsel %vm1620, %v1588, %v1294
      %v1622 = vsel %vm1620, %v1589, %v1296
      %v1623 = vsel %vm1620, %v1590, %v1298
      %v1624 = vsel %vm1620, %v1591, %v1300
      %v1625 = vsel %vm1620, %v1592, %v1302
      %v1626 = vsel %vm1620, %v1593, %v1304
      %v1627 = vsel %vm1620, %v1594, %v1306
      %v1628 = vsel %vm1620, %v1595, %v1308
      %v1629 = vsel %vm1620, %v1596, %v1310
      %v1630 = vsel %vm1620, %v1597, %v1312
      %v1631 = vsel %vm1620, %v1598, %v1314
      %v1632 = vsel %vm1620, %v1599, %v1316
      %v1633 = vsel %vm1620, %v1600, %v1318
      %v1634 = vsel %vm1620, %v1601, %v1320
      %v1635 = vsel %vm1620, %v1602, %v1322
      %v1636 = vsel %vm1620, %v1603, %v1324
      %v1637 = vsel %vm1620, %v1604, %v1326
      %v1638 = vsel %vm1620, %v1605, %v1328
      %v1639 = vsel %vm1620, %v1606, %v1330
      %v1640 = vsel %vm1620, %v1607, %v1332
      %v1641 = vsel %vm1620, %v1608, %v1334
      %v1642 = vsel %vm1620, %v1609, %v1336
      %v1643 = vsel %vm1620, %v1610, %v1338
      %v1644 = vsel %vm1620, %v1611, %v1340
      %v1645 = vsel %vm1620, %v1612, %v1342
      %v1646 = vsel %vm1620, %v1613, %v1344
      %v1647 = vsel %vm1620, %v1614, %v1346
      %v1648 = vsel %vm1620, %v1615, %v1348
      %v1649 = vsel %vm1620, %v1616, %v1350
      %v1650 = vsel %vm1620, %v1617, %v1352
      %v1651 = vsel %vm1620, %v1618, %v1354
      %v1652 = vsel %vm1620, %v1619, %v1356
      %v1653 = vpack.c.bf16 %v1622, %v1621
      %v1654 = vpack.c.bf16 %v1624, %v1623
      %v1655 = vpack.c.bf16 %v1626, %v1625
      %v1656 = vpack.c.bf16 %v1628, %v1627
      %v1657 = vpack.c.bf16 %v1630, %v1629
      %v1658 = vpack.c.bf16 %v1632, %v1631
      %v1659 = vpack.c.bf16 %v1634, %v1633
      %v1660 = vpack.c.bf16 %v1636, %v1635
      %v1661 = vpack.c.bf16 %v1638, %v1637
      %v1662 = vpack.c.bf16 %v1640, %v1639
      %v1663 = vpack.c.bf16 %v1642, %v1641
      %v1664 = vpack.c.bf16 %v1644, %v1643
      %v1665 = vpack.c.bf16 %v1646, %v1645
      %v1666 = vpack.c.bf16 %v1648, %v1647
      %v1667 = vpack.c.bf16 %v1650, %v1649
      %v1668 = vpack.c.bf16 %v1652, %v1651
      %v1669 = vld [vmem:[%s1] sm:$0xf]
      %v1670 = vld [vmem:[%s1 + $0x4] sm:$0xf]
      %v1671 = vld [vmem:[%s1 + $0x8] sm:$0xf]
      %v1672 = vld [vmem:[%s1 + $0xc] sm:$0xf]
      %v1673 = vld [vmem:[%s1 + $0x10] sm:$0x3]
      %v1679 = vunpack.c.l.b16 %v1669
      %v1680 = vunpack.c.l.b16 %v1670
      %v1681 = vunpack.c.l.b16 %v1671
      %v1682 = vunpack.c.l.b16 %v1672
      %v1683 = vunpack.c.l.b16 %v1673
      %v1684 = vpack.c.b16 %v1680, %v1679
      %v1685 = vpack.c.b16 %v1682, %v1681
      %v1686 = vpack.c.b16 %v1683, %v1683
      %vm1689 = vcmask 293888
      %v1691 = vsel %vm1689, %v1653, 0
      %v1694 = vsel %vm1689, %v1654, 0
      %v1697 = vsel %vm1689, %v1655, 0
      %v1700 = vsel %vm1689, %v1656, 0
      %v1703 = vsel %vm1689, %v1657, 0
      %v1706 = vsel %vm1689, %v1658, 0
      %v1709 = vsel %vm1689, %v1659, 0
      %v1712 = vsel %vm1689, %v1660, 0
      %v1715 = vsel %vm1689, %v1661, 0
      %v1718 = vsel %vm1689, %v1662, 0
      %v1721 = vsel %vm1689, %v1663, 0
      %v1724 = vsel %vm1689, %v1664, 0
      %v1727 = vsel %vm1689, %v1665, 0
      %v1730 = vsel %vm1689, %v1666, 0
      %v1733 = vsel %vm1689, %v1667, 0
      %v1736 = vsel %vm1689, %v1668, 0
      %vm1738 = vcmask 1041408
      %v1740 = vsel %vm1738, %v1686, 0
      %1742 = vmatprep.subr.bf16.mxu0 0
      %1743 = vmatpush1.bf16.msra.mxu0 %v1684
      %1744 = vmatprep.subr.bf16.mxu0 0
      %1745 = vmatpush1.bf16.msra.mxu0 %v1685
      %1746 = vmatprep.subr.bf16.mxu0 0
      %1747 = vmatpush1.bf16.msra.mxu0 %v1740
      %1748 = vmatprep.subr.bf16.mxu0 0
      %1749 = vmatpush1.bf16.msra.mxu0 0
      %1750 = vmatprep.subr.bf16.mxu0 0
      %1751 = vmatpush1.bf16.msra.mxu0 0
      %1752 = vmatprep.subr.bf16.mxu0 0
      %1753 = vmatpush1.bf16.msra.mxu0 0
      %1754 = vmatprep.subr.bf16.mxu0 0
      %1755 = vmatpush1.bf16.msra.mxu0 0
      %1756 = vmatprep.subr.bf16.mxu0 0
      %1757 = vmatpush1.bf16.msra.mxu0 0
      %1758 = vmatprep.subr.bf16.mxu0 0
      %1759 = vmatpush1.bf16.msra.mxu0 0
      %1760 = vmatprep.subr.bf16.mxu0 0
      %1761 = vmatpush1.bf16.msra.mxu0 0
      %1762 = vmatprep.subr.bf16.mxu0 0
      %1763 = vmatpush1.bf16.msra.mxu0 0
      %1764 = vmatprep.subr.bf16.mxu0 0
      %1765 = vmatpush1.bf16.msra.mxu0 0
      %1766 = vmatprep.subr.bf16.mxu0 0
      %1767 = vmatpush1.bf16.msra.mxu0 0
      %1768 = vmatprep.subr.bf16.mxu0 0
      %1769 = vmatpush1.bf16.msra.mxu0 0
      %1770 = vmatprep.subr.bf16.mxu0 0
      %1771 = vmatpush1.bf16.msra.mxu0 0
      %1772 = vmatprep.subr.bf16.mxu0 0
      %1773 = vmatpush1.bf16.msra.mxu0 0
      %1774 = vmatprep.mubr.bf16.mxu0 0
      %1775 = vmatmul.mubr.bf16.gmra.mrb[0].mxu0 %v1691
      %v1776 = vpop.f32.mrb[0].mxu0
      %v1777 = vadd.f32 0.0, %v1776
      %v1778 = vpop.f32.mrb[0].mxu0
      %v1779 = vpop.f32.mrb[0].mxu0
      %v1780 = vadd.f32 0.0, %v1779
      %v1781 = vpop.f32.mrb[0].mxu0
      %1782 = vmatprep.mubr.bf16.mxu0 0
      %1783 = vmatmul.mubr.bf16.gmra.mrb[0].mxu0 %v1694
      %v1784 = vpop.f32.mrb[0].mxu0
      %v1785 = vadd.f32 0.0, %v1784
      %v1786 = vpop.f32.mrb[0].mxu0
      %v1787 = vpop.f32.mrb[0].mxu0
      %v1788 = vadd.f32 0.0, %v1787
      %v1789 = vpop.f32.mrb[0].mxu0
      %1790 = vmatprep.mubr.bf16.mxu0 0
      %1791 = vmatmul.mubr.bf16.gmra.mrb[0].mxu0 %v1697
      %v1792 = vpop.f32.mrb[0].mxu0
      %v1793 = vadd.f32 0.0, %v1792
      %v1794 = vpop.f32.mrb[0].mxu0
      %v1795 = vpop.f32.mrb[0].mxu0
      %v1796 = vadd.f32 0.0, %v1795
      %v1797 = vpop.f32.mrb[0].mxu0
      %1798 = vmatprep.mubr.bf16.mxu0 0
      %1799 = vmatmul.mubr.bf16.gmra.mrb[0].mxu0 %v1700
      %v1800 = vpop.f32.mrb[0].mxu0
      %v1801 = vadd.f32 0.0, %v1800
      %v1802 = vpop.f32.mrb[0].mxu0
      %v1803 = vpop.f32.mrb[0].mxu0
      %v1804 = vadd.f32 0.0, %v1803
      %v1805 = vpop.f32.mrb[0].mxu0
      %1806 = vmatprep.mubr.bf16.mxu0 0
      %1807 = vmatmul.mubr.bf16.gmra.mrb[0].mxu0 %v1703
      %v1808 = vpop.f32.mrb[0].mxu0
      %v1809 = vadd.f32 0.0, %v1808
      %v1810 = vpop.f32.mrb[0].mxu0
      %v1811 = vpop.f32.mrb[0].mxu0
      %v1812 = vadd.f32 0.0, %v1811
      %v1813 = vpop.f32.mrb[0].mxu0
      %1814 = vmatprep.mubr.bf16.mxu0 0
      %1815 = vmatmul.mubr.bf16.gmra.mrb[0].mxu0 %v1706
      %v1816 = vpop.f32.mrb[0].mxu0
      %v1817 = vadd.f32 0.0, %v1816
      %v1818 = vpop.f32.mrb[0].mxu0
      %v1819 = vpop.f32.mrb[0].mxu0
      %v1820 = vadd.f32 0.0, %v1819
      %v1821 = vpop.f32.mrb[0].mxu0
      %1822 = vmatprep.mubr.bf16.mxu0 0
      %1823 = vmatmul.mubr.bf16.gmra.mrb[0].mxu0 %v1709
      %v1824 = vpop.f32.mrb[0].mxu0
      %v1825 = vadd.f32 0.0, %v1824
      %v1826 = vpop.f32.mrb[0].mxu0
      %v1827 = vpop.f32.mrb[0].mxu0
      %v1828 = vadd.f32 0.0, %v1827
      %v1829 = vpop.f32.mrb[0].mxu0
      %1830 = vmatprep.mubr.bf16.mxu0 0
      %1831 = vmatmul.mubr.bf16.gmra.mrb[0].mxu0 %v1712
      %v1832 = vpop.f32.mrb[0].mxu0
      %v1833 = vadd.f32 0.0, %v1832
      %v1834 = vpop.f32.mrb[0].mxu0
      %v1835 = vpop.f32.mrb[0].mxu0
      %v1836 = vadd.f32 0.0, %v1835
      %v1837 = vpop.f32.mrb[0].mxu0
      %1838 = vmatprep.mubr.bf16.mxu0 0
      %1839 = vmatmul.mubr.bf16.gmra.mrb[0].mxu0 %v1715
      %v1840 = vpop.f32.mrb[0].mxu0
      %v1841 = vadd.f32 0.0, %v1840
      %v1842 = vpop.f32.mrb[0].mxu0
      %v1843 = vpop.f32.mrb[0].mxu0
      %v1844 = vadd.f32 0.0, %v1843
      %v1845 = vpop.f32.mrb[0].mxu0
      %1846 = vmatprep.mubr.bf16.mxu0 0
      %1847 = vmatmul.mubr.bf16.gmra.mrb[0].mxu0 %v1718
      %v1848 = vpop.f32.mrb[0].mxu0
      %v1849 = vadd.f32 0.0, %v1848
      %v1850 = vpop.f32.mrb[0].mxu0
      %v1851 = vpop.f32.mrb[0].mxu0
      %v1852 = vadd.f32 0.0, %v1851
      %v1853 = vpop.f32.mrb[0].mxu0
      %1854 = vmatprep.mubr.bf16.mxu0 0
      %1855 = vmatmul.mubr.bf16.gmra.mrb[0].mxu0 %v1721
      %v1856 = vpop.f32.mrb[0].mxu0
      %v1857 = vadd.f32 0.0, %v1856
      %v1858 = vpop.f32.mrb[0].mxu0
      %v1859 = vpop.f32.mrb[0].mxu0
      %v1860 = vadd.f32 0.0, %v1859
      %v1861 = vpop.f32.mrb[0].mxu0
      %1862 = vmatprep.mubr.bf16.mxu0 0
      %1863 = vmatmul.mubr.bf16.gmra.mrb[0].mxu0 %v1724
      %v1864 = vpop.f32.mrb[0].mxu0
      %v1865 = vadd.f32 0.0, %v1864
      %v1866 = vpop.f32.mrb[0].mxu0
      %v1867 = vpop.f32.mrb[0].mxu0
      %v1868 = vadd.f32 0.0, %v1867
      %v1869 = vpop.f32.mrb[0].mxu0
      %1870 = vmatprep.mubr.bf16.mxu0 0
      %1871 = vmatmul.mubr.bf16.gmra.mrb[0].mxu0 %v1727
      %v1872 = vpop.f32.mrb[0].mxu0
      %v1873 = vadd.f32 0.0, %v1872
      %v1874 = vpop.f32.mrb[0].mxu0
      %v1875 = vpop.f32.mrb[0].mxu0
      %v1876 = vadd.f32 0.0, %v1875
      %v1877 = vpop.f32.mrb[0].mxu0
      %1878 = vmatprep.mubr.bf16.mxu0 0
      %1879 = vmatmul.mubr.bf16.gmra.mrb[0].mxu0 %v1730
      %v1880 = vpop.f32.mrb[0].mxu0
      %v1881 = vadd.f32 0.0, %v1880
      %v1882 = vpop.f32.mrb[0].mxu0
      %v1883 = vpop.f32.mrb[0].mxu0
      %v1884 = vadd.f32 0.0, %v1883
      %v1885 = vpop.f32.mrb[0].mxu0
      %1886 = vmatprep.mubr.bf16.mxu0 0
      %1887 = vmatmul.mubr.bf16.gmra.mrb[0].mxu0 %v1733
      %v1888 = vpop.f32.mrb[0].mxu0
      %v1889 = vadd.f32 0.0, %v1888
      %v1890 = vpop.f32.mrb[0].mxu0
      %v1891 = vpop.f32.mrb[0].mxu0
      %v1892 = vadd.f32 0.0, %v1891
      %v1893 = vpop.f32.mrb[0].mxu0
      %1894 = vmatprep.mubr.bf16.mxu0 0
      %1895 = vmatmul.mubr.bf16.gmra.mrb[0].mxu0 %v1736
      %v1896 = vpop.f32.mrb[0].mxu0
      %v1897 = vadd.f32 0.0, %v1896
      %v1898 = vpop.f32.mrb[0].mxu0
      %v1899 = vpop.f32.mrb[0].mxu0
      %v1900 = vadd.f32 0.0, %v1899
      %v1901 = vpop.f32.mrb[0].mxu0
      %1902 = vdwg.mxu0
      %v1903 = vpack.c.bf16 %v1780, %v1777
      %v1904 = vpack.c.bf16 %v1788, %v1785
      %v1905 = vpack.c.bf16 %v1796, %v1793
      %v1906 = vpack.c.bf16 %v1804, %v1801
      %v1907 = vpack.c.bf16 %v1812, %v1809
      %v1908 = vpack.c.bf16 %v1820, %v1817
      %v1909 = vpack.c.bf16 %v1828, %v1825
      %v1910 = vpack.c.bf16 %v1836, %v1833
      %v1911 = vpack.c.bf16 %v1844, %v1841
      %v1912 = vpack.c.bf16 %v1852, %v1849
      %v1913 = vpack.c.bf16 %v1860, %v1857
      %v1914 = vpack.c.bf16 %v1868, %v1865
      %v1915 = vpack.c.bf16 %v1876, %v1873
      %v1916 = vpack.c.bf16 %v1884, %v1881
      %v1917 = vpack.c.bf16 %v1892, %v1889
      %v1918 = vpack.c.bf16 %v1900, %v1897
      %v1935 = vunpack.c.l.b16 %v1903
      %v1936 = vunpack.c.h.b16 %v1903
      %v1937 = vunpack.c.l.b16 %v1904
      %v1938 = vunpack.c.h.b16 %v1904
      %v1939 = vunpack.c.l.b16 %v1905
      %v1940 = vunpack.c.h.b16 %v1905
      %v1941 = vunpack.c.l.b16 %v1906
      %v1942 = vunpack.c.h.b16 %v1906
      %v1943 = vunpack.c.l.b16 %v1907
      %v1944 = vunpack.c.h.b16 %v1907
      %v1945 = vunpack.c.l.b16 %v1908
      %v1946 = vunpack.c.h.b16 %v1908
      %v1947 = vunpack.c.l.b16 %v1909
      %v1948 = vunpack.c.h.b16 %v1909
      %v1949 = vunpack.c.l.b16 %v1910
      %v1950 = vunpack.c.h.b16 %v1910
      %v1951 = vunpack.c.l.b16 %v1911
      %v1952 = vunpack.c.h.b16 %v1911
      %v1953 = vunpack.c.l.b16 %v1912
      %v1954 = vunpack.c.h.b16 %v1912
      %v1955 = vunpack.c.l.b16 %v1913
      %v1956 = vunpack.c.h.b16 %v1913
      %v1957 = vunpack.c.l.b16 %v1914
      %v1958 = vunpack.c.h.b16 %v1914
      %v1959 = vunpack.c.l.b16 %v1915
      %v1960 = vunpack.c.h.b16 %v1915
      %v1961 = vunpack.c.l.b16 %v1916
      %v1962 = vunpack.c.h.b16 %v1916
      %v1963 = vunpack.c.l.b16 %v1917
      %v1964 = vunpack.c.h.b16 %v1917
      %v1965 = vunpack.c.l.b16 %v1918
      %v1966 = vunpack.c.h.b16 %v1918
      %v1967 = vpack.c.b16 %v1935, %v1935
      %v1968 = vpack.c.b16 %v1936, %v1936
      %v1969 = vpack.c.b16 %v1937, %v1937
      %v1970 = vpack.c.b16 %v1938, %v1938
      %v1971 = vpack.c.b16 %v1939, %v1939
      %v1972 = vpack.c.b16 %v1940, %v1940
      %v1973 = vpack.c.b16 %v1941, %v1941
      %v1974 = vpack.c.b16 %v1942, %v1942
      %v1975 = vpack.c.b16 %v1943, %v1943
      %v1976 = vpack.c.b16 %v1944, %v1944
      %v1977 = vpack.c.b16 %v1945, %v1945
      %v1978 = vpack.c.b16 %v1946, %v1946
      %v1979 = vpack.c.b16 %v1947, %v1947
      %v1980 = vpack.c.b16 %v1948, %v1948
      %v1981 = vpack.c.b16 %v1949, %v1949
      %v1982 = vpack.c.b16 %v1950, %v1950
      %v1983 = vpack.c.b16 %v1951, %v1951
      %v1984 = vpack.c.b16 %v1952, %v1952
      %v1985 = vpack.c.b16 %v1953, %v1953
      %v1986 = vpack.c.b16 %v1954, %v1954
      %v1987 = vpack.c.b16 %v1955, %v1955
      %v1988 = vpack.c.b16 %v1956, %v1956
      %v1989 = vpack.c.b16 %v1957, %v1957
      %v1990 = vpack.c.b16 %v1958, %v1958
      %v1991 = vpack.c.b16 %v1959, %v1959
      %v1992 = vpack.c.b16 %v1960, %v1960
      %v1993 = vpack.c.b16 %v1961, %v1961
      %v1994 = vpack.c.b16 %v1962, %v1962
      %v1995 = vpack.c.b16 %v1963, %v1963
      %v1996 = vpack.c.b16 %v1964, %v1964
      %v1997 = vpack.c.b16 %v1965, %v1965
      %v1998 = vpack.c.b16 %v1966, %v1966
      %vm2031 = vcmask 27648
      %2032 = vst.msk [vmem:[%s208] sm:$0xf] %vm2031, %v1967
      %2033 = vst.msk [vmem:[%s208 + $0x4] sm:$0xf] %vm2031, %v1968
      %2034 = vst.msk [vmem:[%s208 + $0x8] sm:$0xf] %vm2031, %v1969
      %2035 = vst.msk [vmem:[%s208 + $0xc] sm:$0xf] %vm2031, %v1970
      %2036 = vst.msk [vmem:[%s208 + $0x10] sm:$0xf] %vm2031, %v1971
      %2037 = vst.msk [vmem:[%s208 + $0x14] sm:$0xf] %vm2031, %v1972
      %2038 = vst.msk [vmem:[%s208 + $0x18] sm:$0xf] %vm2031, %v1973
      %2039 = vst.msk [vmem:[%s208 + $0x1c] sm:$0xf] %vm2031, %v1974
      %2040 = vst.msk [vmem:[%s208 + $0x20] sm:$0xf] %vm2031, %v1975
      %2041 = vst.msk [vmem:[%s208 + $0x24] sm:$0xf] %vm2031, %v1976
      %2042 = vst.msk [vmem:[%s208 + $0x28] sm:$0xf] %vm2031, %v1977
      %2043 = vst.msk [vmem:[%s208 + $0x2c] sm:$0xf] %vm2031, %v1978
      %2044 = vst.msk [vmem:[%s208 + $0x30] sm:$0xf] %vm2031, %v1979
      %2045 = vst.msk [vmem:[%s208 + $0x34] sm:$0xf] %vm2031, %v1980
      %2046 = vst.msk [vmem:[%s208 + $0x38] sm:$0xf] %vm2031, %v1981
      %2047 = vst.msk [vmem:[%s208 + $0x3c] sm:$0xf] %vm2031, %v1982
      %2048 = vst.msk [vmem:[%s208 + $0x40] sm:$0xf] %vm2031, %v1983
      %2049 = vst.msk [vmem:[%s208 + $0x44] sm:$0xf] %vm2031, %v1984
      %2050 = vst.msk [vmem:[%s208 + $0x48] sm:$0xf] %vm2031, %v1985
      %2051 = vst.msk [vmem:[%s208 + $0x4c] sm:$0xf] %vm2031, %v1986
      %2052 = vst.msk [vmem:[%s208 + $0x50] sm:$0xf] %vm2031, %v1987
      %2053 = vst.msk [vmem:[%s208 + $0x54] sm:$0xf] %vm2031, %v1988
      %2054 = vst.msk [vmem:[%s208 + $0x58] sm:$0xf] %vm2031, %v1989
      %2055 = vst.msk [vmem:[%s208 + $0x5c] sm:$0xf] %vm2031, %v1990
      %2056 = vst.msk [vmem:[%s208 + $0x60] sm:$0xf] %vm2031, %v1991
      %2057 = vst.msk [vmem:[%s208 + $0x64] sm:$0xf] %vm2031, %v1992
      %2058 = vst.msk [vmem:[%s208 + $0x68] sm:$0xf] %vm2031, %v1993
      %2059 = vst.msk [vmem:[%s208 + $0x6c] sm:$0xf] %vm2031, %v1994
      %2060 = vst.msk [vmem:[%s208 + $0x70] sm:$0xf] %vm2031, %v1995
      %2061 = vst.msk [vmem:[%s208 + $0x74] sm:$0xf] %vm2031, %v1996
      %2062 = vst.msk [vmem:[%s208 + $0x78] sm:$0xf] %vm2031, %v1997
      %2063 = vst.msk [vmem:[%s208 + $0x7c] sm:$0xf] %vm2031, %v1998
      %v2064 = vsel %vm1389, %v1777, 0.0
      %v2065 = vsel %vm1389, %v1780, 0.0
      %v2066 = vadd.f32 %v2064, %v2065
      %v2067 = vsel %vm1389, %v1785, 0.0
      %v2068 = vadd.f32 %v2066, %v2067
      %v2069 = vsel %vm1389, %v1788, 0.0
      %v2070 = vadd.f32 %v2068, %v2069
      %v2071 = vsel %vm1389, %v1793, 0.0
      %v2072 = vadd.f32 %v2070, %v2071
      %v2073 = vsel %vm1389, %v1796, 0.0
      %v2074 = vadd.f32 %v2072, %v2073
      %v2075 = vsel %vm1389, %v1801, 0.0
      %v2076 = vadd.f32 %v2074, %v2075
      %v2077 = vsel %vm1389, %v1804, 0.0
      %v2078 = vadd.f32 %v2076, %v2077
      %v2079 = vsel %vm1389, %v1809, 0.0
      %v2080 = vadd.f32 %v2078, %v2079
      %v2081 = vsel %vm1389, %v1812, 0.0
      %v2082 = vadd.f32 %v2080, %v2081
      %v2083 = vsel %vm1389, %v1817, 0.0
      %v2084 = vadd.f32 %v2082, %v2083
      %v2085 = vsel %vm1389, %v1820, 0.0
      %v2086 = vadd.f32 %v2084, %v2085
      %v2087 = vsel %vm1389, %v1825, 0.0
      %v2088 = vadd.f32 %v2086, %v2087
      %v2089 = vsel %vm1389, %v1828, 0.0
      %v2090 = vadd.f32 %v2088, %v2089
      %v2091 = vsel %vm1389, %v1833, 0.0
      %v2092 = vadd.f32 %v2090, %v2091
      %v2093 = vsel %vm1389, %v1836, 0.0
      %v2094 = vadd.f32 %v2092, %v2093
      %v2095 = vsel %vm1389, %v1841, 0.0
      %v2096 = vadd.f32 %v2094, %v2095
      %v2097 = vsel %vm1389, %v1844, 0.0
      %v2098 = vadd.f32 %v2096, %v2097
      %v2099 = vsel %vm1389, %v1849, 0.0
      %v2100 = vadd.f32 %v2098, %v2099
      %v2101 = vsel %vm1389, %v1852, 0.0
      %v2102 = vadd.f32 %v2100, %v2101
      %v2103 = vsel %vm1389, %v1857, 0.0
      %v2104 = vadd.f32 %v2102, %v2103
      %v2105 = vsel %vm1389, %v1860, 0.0
      %v2106 = vadd.f32 %v2104, %v2105
      %v2107 = vsel %vm1389, %v1865, 0.0
      %v2108 = vadd.f32 %v2106, %v2107
      %v2109 = vsel %vm1389, %v1868, 0.0
      %v2110 = vadd.f32 %v2108, %v2109
      %v2111 = vsel %vm1389, %v1873, 0.0
      %v2112 = vadd.f32 %v2110, %v2111
      %v2113 = vsel %vm1389, %v1876, 0.0
      %v2114 = vadd.f32 %v2112, %v2113
      %v2115 = vsel %vm1389, %v1881, 0.0
      %v2116 = vadd.f32 %v2114, %v2115
      %v2117 = vsel %vm1389, %v1884, 0.0
      %v2118 = vadd.f32 %v2116, %v2117
      %v2119 = vsel %vm1389, %v1889, 0.0
      %v2120 = vadd.f32 %v2118, %v2119
      %v2121 = vsel %vm1389, %v1892, 0.0
      %v2122 = vadd.f32 %v2120, %v2121
      %v2123 = vsel %vm1389, %v1897, 0.0
      %v2124 = vadd.f32 %v2122, %v2123
      %v2125 = vsel %vm1389, %v1900, 0.0
      %v2126 = vadd.f32 %v2124, %v2125
      %v2127 = vrot.slane %v2126, 4
      %v2128 = vadd.f32 %v2126, %v2127
      %v2129 = vrot.slane %v2128, 2
      %v2130 = vadd.f32 %v2128, %v2129
      %v2131 = vrot.slane %v2130, 1
      %v2132 = vadd.f32 %v2130, %v2131
      %vm2133 = vcmask 24576
      %2134 = vst.msk [vmem:[%s211] sm:$0x1] %vm2133, %v2132
      %v2135 = vmul.f32 %v1777, %v1777
      %v2136 = vmul.f32 %v1780, %v1780
      %v2137 = vmul.f32 %v1785, %v1785
      %v2138 = vmul.f32 %v1788, %v1788
      %v2139 = vmul.f32 %v1793, %v1793
      %v2140 = vmul.f32 %v1796, %v1796
      %v2141 = vmul.f32 %v1801, %v1801
      %v2142 = vmul.f32 %v1804, %v1804
      %v2143 = vmul.f32 %v1809, %v1809
      %v2144 = vmul.f32 %v1812, %v1812
      %v2145 = vmul.f32 %v1817, %v1817
      %v2146 = vmul.f32 %v1820, %v1820
      %v2147 = vmul.f32 %v1825, %v1825
      %v2148 = vmul.f32 %v1828, %v1828
      %v2149 = vmul.f32 %v1833, %v1833
      %v2150 = vmul.f32 %v1836, %v1836
      %v2151 = vmul.f32 %v1841, %v1841
      %v2152 = vmul.f32 %v1844, %v1844
      %v2153 = vmul.f32 %v1849, %v1849
      %v2154 = vmul.f32 %v1852, %v1852
      %v2155 = vmul.f32 %v1857, %v1857
      %v2156 = vmul.f32 %v1860, %v1860
      %v2157 = vmul.f32 %v1865, %v1865
      %v2158 = vmul.f32 %v1868, %v1868
      %v2159 = vmul.f32 %v1873, %v1873
      %v2160 = vmul.f32 %v1876, %v1876
      %v2161 = vmul.f32 %v1881, %v1881
      %v2162 = vmul.f32 %v1884, %v1884
      %v2163 = vmul.f32 %v1889, %v1889
      %v2164 = vmul.f32 %v1892, %v1892
      %v2165 = vmul.f32 %v1897, %v1897
      %v2166 = vmul.f32 %v1900, %v1900
      %v2167 = vsel %vm1389, %v2135, 0.0
      %v2168 = vsel %vm1389, %v2136, 0.0
      %v2169 = vadd.f32 %v2167, %v2168
      %v2170 = vsel %vm1389, %v2137, 0.0
      %v2171 = vadd.f32 %v2169, %v2170
      %v2172 = vsel %vm1389, %v2138, 0.0
      %v2173 = vadd.f32 %v2171, %v2172
      %v2174 = vsel %vm1389, %v2139, 0.0
      %v2175 = vadd.f32 %v2173, %v2174
      %v2176 = vsel %vm1389, %v2140, 0.0
      %v2177 = vadd.f32 %v2175, %v2176
      %v2178 = vsel %vm1389, %v2141, 0.0
      %v2179 = vadd.f32 %v2177, %v2178
      %v2180 = vsel %vm1389, %v2142, 0.0
      %v2181 = vadd.f32 %v2179, %v2180
      %v2182 = vsel %vm1389, %v2143, 0.0
      %v2183 = vadd.f32 %v2181, %v2182
      %v2184 = vsel %vm1389, %v2144, 0.0
      %v2185 = vadd.f32 %v2183, %v2184
      %v2186 = vsel %vm1389, %v2145, 0.0
      %v2187 = vadd.f32 %v2185, %v2186
      %v2188 = vsel %vm1389, %v2146, 0.0
      %v2189 = vadd.f32 %v2187, %v2188
      %v2190 = vsel %vm1389, %v2147, 0.0
      %v2191 = vadd.f32 %v2189, %v2190
      %v2192 = vsel %vm1389, %v2148, 0.0
      %v2193 = vadd.f32 %v2191, %v2192
      %v2194 = vsel %vm1389, %v2149, 0.0
      %v2195 = vadd.f32 %v2193, %v2194
      %v2196 = vsel %vm1389, %v2150, 0.0
      %v2197 = vadd.f32 %v2195, %v2196
      %v2198 = vsel %vm1389, %v2151, 0.0
      %v2199 = vadd.f32 %v2197, %v2198
      %v2200 = vsel %vm1389, %v2152, 0.0
      %v2201 = vadd.f32 %v2199, %v2200
      %v2202 = vsel %vm1389, %v2153, 0.0
      %v2203 = vadd.f32 %v2201, %v2202
      %v2204 = vsel %vm1389, %v2154, 0.0
      %v2205 = vadd.f32 %v2203, %v2204
      %v2206 = vsel %vm1389, %v2155, 0.0
      %v2207 = vadd.f32 %v2205, %v2206
      %v2208 = vsel %vm1389, %v2156, 0.0
      %v2209 = vadd.f32 %v2207, %v2208
      %v2210 = vsel %vm1389, %v2157, 0.0
      %v2211 = vadd.f32 %v2209, %v2210
      %v2212 = vsel %vm1389, %v2158, 0.0
      %v2213 = vadd.f32 %v2211, %v2212
      %v2214 = vsel %vm1389, %v2159, 0.0
      %v2215 = vadd.f32 %v2213, %v2214
      %v2216 = vsel %vm1389, %v2160, 0.0
      %v2217 = vadd.f32 %v2215, %v2216
      %v2218 = vsel %vm1389, %v2161, 0.0
      %v2219 = vadd.f32 %v2217, %v2218
      %v2220 = vsel %vm1389, %v2162, 0.0
      %v2221 = vadd.f32 %v2219, %v2220
      %v2222 = vsel %vm1389, %v2163, 0.0
      %v2223 = vadd.f32 %v2221, %v2222
      %v2224 = vsel %vm1389, %v2164, 0.0
      %v2225 = vadd.f32 %v2223, %v2224
      %v2226 = vsel %vm1389, %v2165, 0.0
      %v2227 = vadd.f32 %v2225, %v2226
      %v2228 = vsel %vm1389, %v2166, 0.0
      %v2229 = vadd.f32 %v2227, %v2228
      %v2230 = vrot.slane %v2229, 4
      %v2231 = vadd.f32 %v2229, %v2230
      %v2232 = vrot.slane %v2231, 2
      %v2233 = vadd.f32 %v2231, %v2232
      %v2234 = vrot.slane %v2233, 1
      %v2235 = vadd.f32 %v2233, %v2234
      %2236 = vst.msk [vmem:[%s214] sm:$0x1] %vm2133, %v2235
      %p2237 = scmp.lt.s32.totalorder %s16, 1
      %s2238 = scalar_select %p2237, %s16, 1
      %s2239 = smul.addr %s2238, 32
      %s2240 = smul.addr %s2239, 4
      %s2241 = scalar_lea.vmem %s2, %s2240
      %p2242 = scmp.lt.s32.totalorder %s16, 1
      %s2243 = scalar_select %p2242, %s16, 1
      %s2244 = scalar_lea.vmem %s3, %s2243
      %p2245 = scmp.lt.s32.totalorder %s16, 1
      %s2246 = scalar_select %p2245, %s16, 1
      %s2247 = scalar_lea.vmem %s4, %s2246
      // Predicated region
      $region29: #{res_block_forward.3} parent=27 // pred_check
        %p2248 = pneg %p81
      $region30: #{res_block_forward.3} parent=27 // pred_check_branch
        %2250 = sbr.rel (%p2248) target = $region32
      $region31: #{res_block_forward.3} parent=27 // pred_region
        _
      $region32: #{res_block_forward.3} parent=27 // pred_fallthru
        _
      // Predicated region
      $region33: #{res_block_forward.3} parent=27 // pred_check
        %p2251 = pneg %p107
      $region34: #{res_block_forward.3} parent=27 // pred_check_branch
        %2253 = sbr.rel (%p2251) target = $region36
      $region35: #{res_block_forward.3} parent=27 // pred_region
        _
      $region36: #{res_block_forward.3} parent=27 // pred_fallthru
        _
      // Predicated region
      $region37: #{res_block_forward.3} parent=27 // pred_check
        %p2254 = pneg %p133
      $region38: #{res_block_forward.3} parent=27 // pred_check_branch
        %2256 = sbr.rel (%p2254) target = $region40
      $region39: #{res_block_forward.3} parent=27 // pred_region
        _
      $region40: #{res_block_forward.3} parent=27 // pred_fallthru
        _
    $region28: #{res_block_forward.3} parent=5 // pred_fallthru
      _
    %p2257 = scmp.le.s32.totalorder 2, %s11
    // Predicated region
    $region41: #{res_block_forward.3} parent=5 // pred_check
      %p2258 = pneg %p2257
    $region42: #{res_block_forward.3} parent=5 // pred_check_branch
      %2260 = sbr.rel (%p2258) target = $region44
    $region43: #{res_block_forward.3} parent=5 // pred_region
      %s2261 = ssub.s32 %s11, 2
      // Predicated region
      $region45: #{res_block_forward.3} parent=43 // pred_check
        %p2262 = pneg %p87
      $region46: #{res_block_forward.3} parent=43 // pred_check_branch
        %2264 = sbr.rel (%p2262) target = $region48
      $region47: #{res_block_forward.3} parent=43 // pred_region
        %p2265 = scmp.lt.s32.totalorder %s17, 1
        %s2266 = scalar_select %p2265, %s17, 1
        %s2267 = smul.addr %s2266, 32
        %s2268 = smul.addr %s2267, 4
        %s2269 = scalar_lea.vmem %s2, %s2268
      $region48: #{res_block_forward.3} parent=43 // pred_fallthru
        _
      // Predicated region
      $region49: #{res_block_forward.3} parent=43 // pred_check
        %p2270 = pneg %p113
      $region50: #{res_block_forward.3} parent=43 // pred_check_branch
        %2272 = sbr.rel (%p2270) target = $region52
      $region51: #{res_block_forward.3} parent=43 // pred_region
        %p2273 = scmp.lt.s32.totalorder %s17, 1
        %s2274 = scalar_select %p2273, %s17, 1
        %s2275 = scalar_lea.vmem %s3, %s2274
      $region52: #{res_block_forward.3} parent=43 // pred_fallthru
        _
      // Predicated region
      $region53: #{res_block_forward.3} parent=43 // pred_check
        %p2276 = pneg %p139
      $region54: #{res_block_forward.3} parent=43 // pred_check_branch
        %2278 = sbr.rel (%p2276) target = $region56
      $region55: #{res_block_forward.3} parent=43 // pred_region
        %p2279 = scmp.lt.s32.totalorder %s17, 1
        %s2280 = scalar_select %p2279, %s17, 1
        %s2281 = scalar_lea.vmem %s4, %s2280
      $region56: #{res_block_forward.3} parent=43 // pred_fallthru
        _
    $region44: #{res_block_forward.3} parent=5 // pred_fallthru
      _
  $region6: #{res_block_forward.3} parent=0 // loop_footer
    %s15 = sadd.s32 1, %s11
  $region7: #{res_block_forward.3} parent=0 // loop_footer_branch
    %10 = sbr.rel target = $region3
  $region8: #{res_block_forward.3} parent=0 // loop_exit
    _

// kernel: res_block_forward.4
$region0: #{res_block_forward.4}
  #allocation0 [shape = 'u32[]', space=smem, size = 0x4, offset = 0x4, fixed_abs, tag = 'smem constant byte address 0x4 - core index']
  #allocation1 [shape = 'u32[144,128]{1,0:T(1,128)}', space=vmem, size = 0x12000, scoped, tag = 'internal scratch']
  %s0 = inlined_call_operand.vmem [shape: bf16[2,16,16,4], index: 0, kind: input, shape index: {}]
  %s1 = inlined_call_operand.vmem [shape: bf16[36,4], index: 1, kind: input, shape index: {}]
  %s2 = inlined_call_operand.vmem [shape: f32[1,4], index: 2, kind: input, shape index: {}]
  %s3 = inlined_call_operand.vmem [shape: f32[1,4], index: 3, kind: input, shape index: {}]
  %s4 = inlined_call_operand.vmem [shape: bf16[2,256,4], index: 4, kind: output, shape index: {0}]
  %s5 = inlined_call_operand.vmem [shape: f32[2,1,4], index: 5, kind: output, shape index: {1}]
  %s6 = inlined_call_operand.vmem [shape: f32[2,1,4], index: 6, kind: output, shape index: {2}]
  %7 = xla_tuple %s4, %s5, %s6
  %s8 = sld [smem:[#allocation0]]
  $region65: #{res_block_forward.4} parent=0
    _
  %s10 = ssub.s32 1, %s8
  %s11 = scalar_select 0, %s10, %s8
  loop: start=0, step=1, limit=4
  $region2: #{res_block_forward.4} parent=0 // loop_pre_header
    _
  $region3: #{res_block_forward.4} parent=0 // loop_header
    %s13 = sphi 0, %s17
    %p14 = scmp.ge.s32.totalorder %s13, 4
    %s23 = sphi 0, %s25
    %s26 = sphi 0, %s23
    %s27 = sphi 0, %s26
    %s43 = sphi 0, %s27
    %s47 = sphi 0, %s47
    %s49 = sphi 0, %s47
    %s50 = sphi 0, %s49
    %s64 = sphi 0, %s50
    %s68 = sphi 0, %s68
    %s70 = sphi 0, %s68
    %s71 = sphi 0, %s70
    %s85 = sphi 0, %s71
    %s89 = sphi 0, %s89
    %s91 = sphi 0, %s89
    %s92 = sphi 0, %s91
    %s106 = sphi 0, %s92
    %s112 = sphi 0, %s114
    %s115 = sphi 0, %s112
    %s116 = sphi 0, %s115
    %s132 = sphi 0, %s116
    %s138 = sphi 0, %s140
    %s141 = sphi 0, %s138
    %s142 = sphi 0, %s141
    %s158 = sphi 0, %s142
    %s164 = sphi 0, %s166
    %s167 = sphi 0, %s164
    %s168 = sphi 0, %s167
    %s184 = sphi 0, %s168
  $region4: #{res_block_forward.4} parent=0 // loop_header_branch
    %16 = sbr.rel (%p14) target = $region8
  $region5: #{res_block_forward.4} parent=0 // loop_body
    %s18 = ssub.s32 %s13, 1
    %s19 = ssub.s32 %s13, 2
    %s20 = sadd.s32 %s13, 1
    %s21 = ssub.s32 %s13, %s20
    %p22 = scmp.eq.s32.totalorder %s21, 0
    %s24 = sadd.s32 %s23, 1
    %s25 = scalar_select %p22, %s23, %s24
    %p28 = pneg %p22
    %p29 = scmp.eq.s32.totalorder %s13, 1
    %p30 = por %p28, %p29
    %p31 = scmp.ne.s32.totalorder %s23, %s26
    %p32 = scmp.eq.s32.totalorder %s13, 0
    %p33 = por %p31, %p32
    %p34 = scmp.ne.s32.totalorder %s23, %s26
    %p35 = scmp.eq.s32.totalorder %s18, 1
    %p36 = por %p34, %p35
    %p37 = scmp.ne.s32.totalorder %s26, %s27
    %p38 = scmp.eq.s32.totalorder %s18, 0
    %p39 = por %p37, %p38
    %p40 = scmp.ne.s32.totalorder %s26, %s27
    %p41 = scmp.eq.s32.totalorder %s19, 1
    %p42 = por %p40, %p41
    %p44 = scmp.ne.s32.totalorder %s27, %s43
    %p45 = scmp.eq.s32.totalorder %s19, 0
    %p46 = por %p44, %p45
    %s48 = sadd.s32 %s47, 1
    %p51 = scmp.eq.s32.totalorder %s13, 1
    %p52 = scmp.ne.s32.totalorder %s47, %s49
    %p53 = scmp.eq.s32.totalorder %s13, 0
    %p54 = por %p52, %p53
    %p55 = scmp.ne.s32.totalorder %s47, %s49
    %p56 = scmp.eq.s32.totalorder %s18, 1
    %p57 = por %p55, %p56
    %p58 = scmp.ne.s32.totalorder %s49, %s50
    %p59 = scmp.eq.s32.totalorder %s18, 0
    %p60 = por %p58, %p59
    %p61 = scmp.ne.s32.totalorder %s49, %s50
    %p62 = scmp.eq.s32.totalorder %s19, 1
    %p63 = por %p61, %p62
    %p65 = scmp.ne.s32.totalorder %s50, %s64
    %p66 = scmp.eq.s32.totalorder %s19, 0
    %p67 = por %p65, %p66
    %s69 = sadd.s32 %s68, 1
    %p72 = scmp.eq.s32.totalorder %s13, 1
    %p73 = scmp.ne.s32.totalorder %s68, %s70
    %p74 = scmp.eq.s32.totalorder %s13, 0
    %p75 = por %p73, %p74
    %p76 = scmp.ne.s32.totalorder %s68, %s70
    %p77 = scmp.eq.s32.totalorder %s18, 1
    %p78 = por %p76, %p77
    %p79 = scmp.ne.s32.totalorder %s70, %s71
    %p80 = scmp.eq.s32.totalorder %s18, 0
    %p81 = por %p79, %p80
    %p82 = scmp.ne.s32.totalorder %s70, %s71
    %p83 = scmp.eq.s32.totalorder %s19, 1
    %p84 = por %p82, %p83
    %p86 = scmp.ne.s32.totalorder %s71, %s85
    %p87 = scmp.eq.s32.totalorder %s19, 0
    %p88 = por %p86, %p87
    %s90 = sadd.s32 %s89, 1
    %p93 = scmp.eq.s32.totalorder %s13, 1
    %p94 = scmp.ne.s32.totalorder %s89, %s91
    %p95 = scmp.eq.s32.totalorder %s13, 0
    %p96 = por %p94, %p95
    %p97 = scmp.ne.s32.totalorder %s89, %s91
    %p98 = scmp.eq.s32.totalorder %s18, 1
    %p99 = por %p97, %p98
    %p100 = scmp.ne.s32.totalorder %s91, %s92
    %p101 = scmp.eq.s32.totalorder %s18, 0
    %p102 = por %p100, %p101
    %p103 = scmp.ne.s32.totalorder %s91, %s92
    %p104 = scmp.eq.s32.totalorder %s19, 1
    %p105 = por %p103, %p104
    %p107 = scmp.ne.s32.totalorder %s92, %s106
    %p108 = scmp.eq.s32.totalorder %s19, 0
    %p109 = por %p107, %p108
    %s110 = ssub.s32 %s13, %s20
    %p111 = scmp.eq.s32.totalorder %s110, 0
    %s113 = sadd.s32 %s112, 1
    %s114 = scalar_select %p111, %s112, %s113
    %p117 = pneg %p111
    %p118 = scmp.eq.s32.totalorder %s13, 1
    %p119 = por %p117, %p118
    %p120 = scmp.ne.s32.totalorder %s112, %s115
    %p121 = scmp.eq.s32.totalorder %s13, 0
    %p122 = por %p120, %p121
    %p123 = scmp.ne.s32.totalorder %s112, %s115
    %p124 = scmp.eq.s32.totalorder %s18, 1
    %p125 = por %p123, %p124
    %p126 = scmp.ne.s32.totalorder %s115, %s116
    %p127 = scmp.eq.s32.totalorder %s18, 0
    %p128 = por %p126, %p127
    %p129 = scmp.ne.s32.totalorder %s115, %s116
    %p130 = scmp.eq.s32.totalorder %s19, 1
    %p131 = por %p129, %p130
    %p133 = scmp.ne.s32.totalorder %s116, %s132
    %p134 = scmp.eq.s32.totalorder %s19, 0
    %p135 = por %p133, %p134
    %s136 = ssub.s32 %s13, %s20
    %p137 = scmp.eq.s32.totalorder %s136, 0
    %s139 = sadd.s32 %s138, 1
    %s140 = scalar_select %p137, %s138, %s139
    %p143 = pneg %p137
    %p144 = scmp.eq.s32.totalorder %s13, 1
    %p145 = por %p143, %p144
    %p146 = scmp.ne.s32.totalorder %s138, %s141
    %p147 = scmp.eq.s32.totalorder %s13, 0
    %p148 = por %p146, %p147
    %p149 = scmp.ne.s32.totalorder %s138, %s141
    %p150 = scmp.eq.s32.totalorder %s18, 1
    %p151 = por %p149, %p150
    %p152 = scmp.ne.s32.totalorder %s141, %s142
    %p153 = scmp.eq.s32.totalorder %s18, 0
    %p154 = por %p152, %p153
    %p155 = scmp.ne.s32.totalorder %s141, %s142
    %p156 = scmp.eq.s32.totalorder %s19, 1
    %p157 = por %p155, %p156
    %p159 = scmp.ne.s32.totalorder %s142, %s158
    %p160 = scmp.eq.s32.totalorder %s19, 0
    %p161 = por %p159, %p160
    %s162 = ssub.s32 %s13, %s20
    %p163 = scmp.eq.s32.totalorder %s162, 0
    %s165 = sadd.s32 %s164, 1
    %s166 = scalar_select %p163, %s164, %s165
    %p169 = pneg %p163
    %p170 = scmp.eq.s32.totalorder %s13, 1
    %p171 = por %p169, %p170
    %p172 = scmp.ne.s32.totalorder %s164, %s167
    %p173 = scmp.eq.s32.totalorder %s13, 0
    %p174 = por %p172, %p173
    %p175 = scmp.ne.s32.totalorder %s164, %s167
    %p176 = scmp.eq.s32.totalorder %s18, 1
    %p177 = por %p175, %p176
    %p178 = scmp.ne.s32.totalorder %s167, %s168
    %p179 = scmp.eq.s32.totalorder %s18, 0
    %p180 = por %p178, %p179
    %p181 = scmp.ne.s32.totalorder %s167, %s168
    %p182 = scmp.eq.s32.totalorder %s19, 1
    %p183 = por %p181, %p182
    %p185 = scmp.ne.s32.totalorder %s168, %s184
    %p186 = scmp.eq.s32.totalorder %s19, 0
    %p187 = por %p185, %p186
    %p188 = scmp.le.s32.totalorder 1, %s13
    %p189 = scmp.lt.s32.totalorder %s13, 3
    %p190 = pnand %p188, %p189
    %p191 = pneg %p190
    // Predicated region
    $region9: #{res_block_forward.4} parent=5 // pred_check
      _
    $region10: #{res_block_forward.4} parent=5 // pred_check_branch
      %193 = sbr.rel (%p190) target = $region12
    $region11: #{res_block_forward.4} parent=5 // pred_region
      %s194 = ssub.s32 %s13, 1
      // Predicated region
      $region13: #{res_block_forward.4} parent=11 // pred_check
        %p195 = pneg %p60
      $region14: #{res_block_forward.4} parent=11 // pred_check_branch
        %197 = sbr.rel (%p195) target = $region16
      $region15: #{res_block_forward.4} parent=11 // pred_region
        _
      $region16: #{res_block_forward.4} parent=11 // pred_fallthru
        _
      // Predicated region
      $region17: #{res_block_forward.4} parent=11 // pred_check
        %p198 = pneg %p81
      $region18: #{res_block_forward.4} parent=11 // pred_check_branch
        %200 = sbr.rel (%p198) target = $region20
      $region19: #{res_block_forward.4} parent=11 // pred_region
        _
      $region20: #{res_block_forward.4} parent=11 // pred_fallthru
        _
      // Predicated region
      $region21: #{res_block_forward.4} parent=11 // pred_check
        %p201 = pneg %p102
      $region22: #{res_block_forward.4} parent=11 // pred_check_branch
        %203 = sbr.rel (%p201) target = $region24
      $region23: #{res_block_forward.4} parent=11 // pred_region
        _
      $region24: #{res_block_forward.4} parent=11 // pred_fallthru
        _
    $region12: #{res_block_forward.4} parent=5 // pred_fallthru
      _
    %p204 = scmp.lt.s32.totalorder %s13, 2
    // Predicated region
    $region25: #{res_block_forward.4} parent=5 // pred_check
      %p205 = pneg %p204
    $region26: #{res_block_forward.4} parent=5 // pred_check_branch
      %207 = sbr.rel (%p205) target = $region28
    $region27: #{res_block_forward.4} parent=5 // pred_region
      // Predicated region
      $region29: #{res_block_forward.4} parent=27 // pred_check
        %p208 = pneg %p33
      $region30: #{res_block_forward.4} parent=27 // pred_check_branch
        %210 = sbr.rel (%p208) target = $region32
      $region31: #{res_block_forward.4} parent=27 // pred_region
        %p211 = scmp.lt.s32.totalorder %s13, 1
        %s212 = scalar_select %p211, %s13, 1
        %s213 = smul.addr %s212, 32
        %s214 = smul.addr %s213, 4
        %s215 = scalar_lea.vmem %s0, %s214
      $region32: #{res_block_forward.4} parent=27 // pred_fallthru
        _
    $region28: #{res_block_forward.4} parent=5 // pred_fallthru
      _
    %p216 = scmp.le.s32.totalorder 1, %s13
    %p217 = scmp.lt.s32.totalorder %s13, 3
    %p218 = pnand %p216, %p217
    %p219 = pneg %p218
    // Predicated region
    $region33: #{res_block_forward.4} parent=5 // pred_check
      _
    $region34: #{res_block_forward.4} parent=5 // pred_check_branch
      %221 = sbr.rel (%p218) target = $region36
    $region35: #{res_block_forward.4} parent=5 // pred_region
      %s222 = ssub.s32 %s13, 1
      %p223 = scmp.lt.s32.totalorder %s18, 1
      %s224 = scalar_select %p223, %s18, 1
      %s225 = smul.addr %s224, 32
      %s226 = smul.addr %s225, 4
      %s227 = scalar_lea.vmem %s0, %s226
      %p228 = pneg %p39
      %p229 = pneg %p36
      %p230 = pneg %p60
      %p231 = pneg %p57
      %p232 = pneg %p81
      %p233 = pneg %p78
      %p234 = pneg %p102
      %p235 = pneg %p99
      %p236 = pneg %p128
      %p237 = pneg %p125
      %p238 = scmp.lt.s32.totalorder %s18, 1
      %s239 = scalar_select %p238, %s18, 1
      %s240 = smul.addr %s239, 32
      %s241 = smul.addr %s240, 4
      %s242 = scalar_lea.vmem %s4, %s241
      %p243 = pneg %p154
      %p244 = pneg %p151
      %p245 = scmp.lt.s32.totalorder %s18, 1
      %s246 = scalar_select %p245, %s18, 1
      %s247 = scalar_lea.vmem %s5, %s246
      %p248 = pneg %p180
      %p249 = pneg %p177
      %p250 = scmp.lt.s32.totalorder %s18, 1
      %s251 = scalar_select %p250, %s18, 1
      %s252 = scalar_lea.vmem %s6, %s251
      %p253 = scmp.lt.s32.totalorder %s18, 1
      %s254 = scalar_select %p253, %s18, 1
      %s255 = smul.addr %s254, 32
      %s256 = smul.addr %s255, 4
      %s257 = scalar_lea.vmem %s0, %s256
      %p258 = scmp.lt.s32.totalorder %s18, 1
      %s259 = scalar_select %p258, %s18, 1
      %s260 = smul.addr %s259, 32
      %s261 = smul.addr %s260, 4
      %s262 = scalar_lea.vmem %s4, %s261
      %p263 = scmp.lt.s32.totalorder %s18, 1
      %s264 = scalar_select %p263, %s18, 1
      %s265 = scalar_lea.vmem %s5, %s264
      %p266 = scmp.lt.s32.totalorder %s18, 1
      %s267 = scalar_select %p266, %s18, 1
      %s268 = scalar_lea.vmem %s6, %s267
      %v270 = vld [vmem:[%s257] sm:$0xf]
      %v271 = vld [vmem:[%s257 + $0x4] sm:$0xf]
      %v272 = vld [vmem:[%s257 + $0x8] sm:$0xf]
      %v273 = vld [vmem:[%s257 + $0xc] sm:$0xf]
      %v274 = vld [vmem:[%s257 + $0x10] sm:$0xf]
      %v275 = vld [vmem:[%s257 + $0x14] sm:$0xf]
      %v276 = vld [vmem:[%s257 + $0x18] sm:$0xf]
      %v277 = vld [vmem:[%s257 + $0x1c] sm:$0xf]
      %v278 = vld [vmem:[%s257 + $0x20] sm:$0xf]
      %v279 = vld [vmem:[%s257 + $0x24] sm:$0xf]
      %v280 = vld [vmem:[%s257 + $0x28] sm:$0xf]
      %v281 = vld [vmem:[%s257 + $0x2c] sm:$0xf]
      %v282 = vld [vmem:[%s257 + $0x30] sm:$0xf]
      %v283 = vld [vmem:[%s257 + $0x34] sm:$0xf]
      %v284 = vld [vmem:[%s257 + $0x38] sm:$0xf]
      %v285 = vld [vmem:[%s257 + $0x3c] sm:$0xf]
      %v286 = vld [vmem:[%s257 + $0x40] sm:$0xf]
      %v287 = vld [vmem:[%s257 + $0x44] sm:$0xf]
      %v288 = vld [vmem:[%s257 + $0x48] sm:$0xf]
      %v289 = vld [vmem:[%s257 + $0x4c] sm:$0xf]
      %v290 = vld [vmem:[%s257 + $0x50] sm:$0xf]
      %v291 = vld [vmem:[%s257 + $0x54] sm:$0xf]
      %v292 = vld [vmem:[%s257 + $0x58] sm:$0xf]
      %v293 = vld [vmem:[%s257 + $0x5c] sm:$0xf]
      %v294 = vld [vmem:[%s257 + $0x60] sm:$0xf]
      %v295 = vld [vmem:[%s257 + $0x64] sm:$0xf]
      %v296 = vld [vmem:[%s257 + $0x68] sm:$0xf]
      %v297 = vld [vmem:[%s257 + $0x6c] sm:$0xf]
      %v298 = vld [vmem:[%s257 + $0x70] sm:$0xf]
      %v299 = vld [vmem:[%s257 + $0x74] sm:$0xf]
      %v300 = vld [vmem:[%s257 + $0x78] sm:$0xf]
      %v301 = vld [vmem:[%s257 + $0x7c] sm:$0xf]
      %v302 = vunpack.c.l.bf16 %v270
      %v303 = vunpack.c.l.bf16 %v271
      %v304 = vunpack.c.l.bf16 %v272
      %v305 = vunpack.c.l.bf16 %v273
      %v306 = vunpack.c.l.bf16 %v274
      %v307 = vunpack.c.l.bf16 %v275
      %v308 = vunpack.c.l.bf16 %v276
      %v309 = vunpack.c.l.bf16 %v277
      %v310 = vunpack.c.l.bf16 %v278
      %v311 = vunpack.c.l.bf16 %v279
      %v312 = vunpack.c.l.bf16 %v280
      %v313 = vunpack.c.l.bf16 %v281
      %v314 = vunpack.c.l.bf16 %v282
      %v315 = vunpack.c.l.bf16 %v283
      %v316 = vunpack.c.l.bf16 %v284
      %v317 = vunpack.c.l.bf16 %v285
      %v318 = vunpack.c.l.bf16 %v286
      %v319 = vunpack.c.l.bf16 %v287
      %v320 = vunpack.c.l.bf16 %v288
      %v321 = vunpack.c.l.bf16 %v289
      %v322 = vunpack.c.l.bf16 %v290
      %v323 = vunpack.c.l.bf16 %v291
      %v324 = vunpack.c.l.bf16 %v292
      %v325 = vunpack.c.l.bf16 %v293
      %v326 = vunpack.c.l.bf16 %v294
      %v327 = vunpack.c.l.bf16 %v295
      %v328 = vunpack.c.l.bf16 %v296
      %v329 = vunpack.c.l.bf16 %v297
      %v330 = vunpack.c.l.bf16 %v298
      %v331 = vunpack.c.l.bf16 %v299
      %v332 = vunpack.c.l.bf16 %v300
      %v333 = vunpack.c.l.bf16 %v301
      %v334 = vld [vmem:[%s2] sm:$0x1]
      %v336 = vlaneseq
      %v337 = vshrl.u32 %v336, 7
      %v338 = vsub.s32 0, %v337
      %v339 = vrot.slane %v334, %v338
      %v341 = vmul.f32 %v302, %v339
      %v342 = vmul.f32 %v303, %v339
      %v343 = vmul.f32 %v304, %v339
      %v344 = vmul.f32 %v305, %v339
      %v345 = vmul.f32 %v306, %v339
      %v346 = vmul.f32 %v307, %v339
      %v347 = vmul.f32 %v308, %v339
      %v348 = vmul.f32 %v309, %v339
      %v349 = vmul.f32 %v310, %v339
      %v350 = vmul.f32 %v311, %v339
      %v351 = vmul.f32 %v312, %v339
      %v352 = vmul.f32 %v313, %v339
      %v353 = vmul.f32 %v314, %v339
      %v354 = vmul.f32 %v315, %v339
      %v355 = vmul.f32 %v316, %v339
      %v356 = vmul.f32 %v317, %v339
      %v357 = vmul.f32 %v318, %v339
      %v358 = vmul.f32 %v319, %v339
      %v359 = vmul.f32 %v320, %v339
      %v360 = vmul.f32 %v321, %v339
      %v361 = vmul.f32 %v322, %v339
      %v362 = vmul.f32 %v323, %v339
      %v363 = vmul.f32 %v324, %v339
      %v364 = vmul.f32 %v325, %v339
      %v365 = vmul.f32 %v326, %v339
      %v366 = vmul.f32 %v327, %v339
      %v367 = vmul.f32 %v328, %v339
      %v368 = vmul.f32 %v329, %v339
      %v369 = vmul.f32 %v330, %v339
      %v370 = vmul.f32 %v331, %v339
      %v371 = vmul.f32 %v332, %v339
      %v372 = vmul.f32 %v333, %v339
      %v373 = vld [vmem:[%s3] sm:$0x1]
      %v375 = vlaneseq
      %v376 = vshrl.u32 %v375, 7
      %v377 = vsub.s32 0, %v376
      %v378 = vrot.slane %v373, %v377
      %v380 = vadd.f32 %v341, %v378
      %v381 = vadd.f32 %v342, %v378
      %v382 = vadd.f32 %v343, %v378
      %v383 = vadd.f32 %v344, %v378
      %v384 = vadd.f32 %v345, %v378
      %v385 = vadd.f32 %v346, %v378
      %v386 = vadd.f32 %v347, %v378
      %v387 = vadd.f32 %v348, %v378
      %v388 = vadd.f32 %v349, %v378
      %v389 = vadd.f32 %v350, %v378
      %v390 = vadd.f32 %v351, %v378
      %v391 = vadd.f32 %v352, %v378
      %v392 = vadd.f32 %v353, %v378
      %v393 = vadd.f32 %v354, %v378
      %v394 = vadd.f32 %v355, %v378
      %v395 = vadd.f32 %v356, %v378
      %v396 = vadd.f32 %v357, %v378
      %v397 = vadd.f32 %v358, %v378
      %v398 = vadd.f32 %v359, %v378
      %v399 = vadd.f32 %v360, %v378
      %v400 = vadd.f32 %v361, %v378
      %v401 = vadd.f32 %v362, %v378
      %v402 = vadd.f32 %v363, %v378
      %v403 = vadd.f32 %v364, %v378
      %v404 = vadd.f32 %v365, %v378
      %v405 = vadd.f32 %v366, %v378
      %v406 = vadd.f32 %v367, %v378
      %v407 = vadd.f32 %v368, %v378
      %v408 = vadd.f32 %v369, %v378
      %v409 = vadd.f32 %v370, %v378
      %v410 = vadd.f32 %v371, %v378
      %v411 = vadd.f32 %v372, %v378
      %v412 = vmax.f32 %v380, 0.0
      %v413 = vmax.f32 %v381, 0.0
      %v414 = vmax.f32 %v382, 0.0
      %v415 = vmax.f32 %v383, 0.0
      %v416 = vmax.f32 %v384, 0.0
      %v417 = vmax.f32 %v385, 0.0
      %v418 = vmax.f32 %v386, 0.0
      %v419 = vmax.f32 %v387, 0.0
      %v420 = vmax.f32 %v388, 0.0
      %v421 = vmax.f32 %v389, 0.0
      %v422 = vmax.f32 %v390, 0.0
      %v423 = vmax.f32 %v391, 0.0
      %v424 = vmax.f32 %v392, 0.0
      %v425 = vmax.f32 %v393, 0.0
      %v426 = vmax.f32 %v394, 0.0
      %v427 = vmax.f32 %v395, 0.0
      %v428 = vmax.f32 %v396, 0.0
      %v429 = vmax.f32 %v397, 0.0
      %v430 = vmax.f32 %v398, 0.0
      %v431 = vmax.f32 %v399, 0.0
      %v432 = vmax.f32 %v400, 0.0
      %v433 = vmax.f32 %v401, 0.0
      %v434 = vmax.f32 %v402, 0.0
      %v435 = vmax.f32 %v403, 0.0
      %v436 = vmax.f32 %v404, 0.0
      %v437 = vmax.f32 %v405, 0.0
      %v438 = vmax.f32 %v406, 0.0
      %v439 = vmax.f32 %v407, 0.0
      %v440 = vmax.f32 %v408, 0.0
      %v441 = vmax.f32 %v409, 0.0
      %v442 = vmax.f32 %v410, 0.0
      %v443 = vmax.f32 %v411, 0.0
      %vm477 = vcmask 1040384
      %v478 = vrot.slane 0.0, 7
      %v479 = vsel %vm477, %v478, %v478
      %v480 = vrot.slane %v412, 7
      %v481 = vrot.slane %v413, 7
      %v482 = vsel %vm477, %v480, %v481
      %v483 = vrot.slane %v414, 7
      %v484 = vrot.slane %v415, 7
      %v485 = vsel %vm477, %v483, %v484
      %v486 = vrot.slane %v416, 7
      %v487 = vrot.slane %v417, 7
      %v488 = vsel %vm477, %v486, %v487
      %v489 = vrot.slane %v418, 7
      %v490 = vrot.slane %v419, 7
      %v491 = vsel %vm477, %v489, %v490
      %v492 = vrot.slane %v420, 7
      %v493 = vrot.slane %v421, 7
      %v494 = vsel %vm477, %v492, %v493
      %v495 = vrot.slane %v422, 7
      %v496 = vrot.slane %v423, 7
      %v497 = vsel %vm477, %v495, %v496
      %v498 = vrot.slane %v424, 7
      %v499 = vrot.slane %v425, 7
      %v500 = vsel %vm477, %v498, %v499
      %v501 = vrot.slane %v426, 7
      %v502 = vrot.slane %v427, 7
      %v503 = vsel %vm477, %v501, %v502
      %v504 = vrot.slane %v428, 7
      %v505 = vrot.slane %v429, 7
      %v506 = vsel %vm477, %v504, %v505
      %v507 = vrot.slane %v430, 7
      %v508 = vrot.slane %v431, 7
      %v509 = vsel %vm477, %v507, %v508
      %v510 = vrot.slane %v432, 7
      %v511 = vrot.slane %v433, 7
      %v512 = vsel %vm477, %v510, %v511
      %v513 = vrot.slane %v434, 7
      %v514 = vrot.slane %v435, 7
      %v515 = vsel %vm477, %v513, %v514
      %v516 = vrot.slane %v436, 7
      %v517 = vrot.slane %v437, 7
      %v518 = vsel %vm477, %v516, %v517
      %v519 = vrot.slane %v438, 7
      %v520 = vrot.slane %v439, 7
      %v521 = vsel %vm477, %v519, %v520
      %v522 = vrot.slane %v440, 7
      %v523 = vrot.slane %v441, 7
      %v524 = vsel %vm477, %v522, %v523
      %v525 = vrot.slane %v442, 7
      %v526 = vrot.slane %v443, 7
      %v527 = vsel %vm477, %v525, %v526
      %v577 = vsel %vm477, 0.0, %v478
      %v578 = vsel %vm477, 0.0, %v480
      %v579 = vsel %vm477, 0.0, %v483
      %v580 = vsel %vm477, 0.0, %v486
      %v581 = vsel %vm477, 0.0, %v489
      %v582 = vsel %vm477, 0.0, %v492
      %v583 = vsel %vm477, 0.0, %v495
      %v584 = vsel %vm477, 0.0, %v498
      %v585 = vsel %vm477, 0.0, %v501
      %v586 = vsel %vm477, 0.0, %v504
      %v587 = vsel %vm477, 0.0, %v507
      %v588 = vsel %vm477, 0.0, %v510
      %v589 = vsel %vm477, 0.0, %v513
      %v590 = vsel %vm477, 0.0, %v516
      %v591 = vsel %vm477, 0.0, %v519
      %v592 = vsel %vm477, 0.0, %v522
      %v593 = vsel %vm477, 0.0, %v525
      %v594 = vsel %vm477, %v478, 0.0
      %v595 = vsel %vm477, %v481, 0.0
      %v596 = vsel %vm477, %v484, 0.0
      %v597 = vsel %vm477, %v487, 0.0
      %v598 = vsel %vm477, %v490, 0.0
      %v599 = vsel %vm477, %v493, 0.0
      %v600 = vsel %vm477, %v496, 0.0
      %v601 = vsel %vm477, %v499, 0.0
      %v602 = vsel %vm477, %v502, 0.0
      %v603 = vsel %vm477, %v505, 0.0
      %v604 = vsel %vm477, %v508, 0.0
      %v605 = vsel %vm477, %v511, 0.0
      %v606 = vsel %vm477, %v514, 0.0
      %v607 = vsel %vm477, %v517, 0.0
      %v608 = vsel %vm477, %v520, 0.0
      %v609 = vsel %vm477, %v523, 0.0
      %v610 = vsel %vm477, %v526, 0.0
      %vm643 = vcmask 1046528
      %v644 = vrot.slane %v577, 1
      %v645 = vrot.slane %v479, 1
      %v646 = vsel %vm643, %v644, %v645
      %v647 = vrot.slane %v594, 1
      %v648 = vsel %vm643, %v645, %v647
      %v649 = vrot.slane %v578, 1
      %v650 = vrot.slane %v482, 1
      %v651 = vsel %vm643, %v649, %v650
      %v652 = vrot.slane %v595, 1
      %v653 = vsel %vm643, %v650, %v652
      %v654 = vrot.slane %v579, 1
      %v655 = vrot.slane %v485, 1
      %v656 = vsel %vm643, %v654, %v655
      %v657 = vrot.slane %v596, 1
      %v658 = vsel %vm643, %v655, %v657
      %v659 = vrot.slane %v580, 1
      %v660 = vrot.slane %v488, 1
      %v661 = vsel %vm643, %v659, %v660
      %v662 = vrot.slane %v597, 1
      %v663 = vsel %vm643, %v660, %v662
      %v664 = vrot.slane %v581, 1
      %v665 = vrot.slane %v491, 1
      %v666 = vsel %vm643, %v664, %v665
      %v667 = vrot.slane %v598, 1
      %v668 = vsel %vm643, %v665, %v667
      %v669 = vrot.slane %v582, 1
      %v670 = vrot.slane %v494, 1
      %v671 = vsel %vm643, %v669, %v670
      %v672 = vrot.slane %v599, 1
      %v673 = vsel %vm643, %v670, %v672
      %v674 = vrot.slane %v583, 1
      %v675 = vrot.slane %v497, 1
      %v676 = vsel %vm643, %v674, %v675
      %v677 = vrot.slane %v600, 1
      %v678 = vsel %vm643, %v675, %v677
      %v679 = vrot.slane %v584, 1
      %v680 = vrot.slane %v500, 1
      %v681 = vsel %vm643, %v679, %v680
      %v682 = vrot.slane %v601, 1
      %v683 = vsel %vm643, %v680, %v682
      %v684 = vrot.slane %v585, 1
      %v685 = vrot.slane %v503, 1
      %v686 = vsel %vm643, %v684, %v685
      %v687 = vrot.slane %v602, 1
      %v688 = vsel %vm643, %v685, %v687
      %v689 = vrot.slane %v586, 1
      %v690 = vrot.slane %v506, 1
      %v691 = vsel %vm643, %v689, %v690
      %v692 = vrot.slane %v603, 1
      %v693 = vsel %vm643, %v690, %v692
      %v694 = vrot.slane %v587, 1
      %v695 = vrot.slane %v509, 1
      %v696 = vsel %vm643, %v694, %v695
      %v697 = vrot.slane %v604, 1
      %v698 = vsel %vm643, %v695, %v697
      %v699 = vrot.slane %v588, 1
      %v700 = vrot.slane %v512, 1
      %v701 = vsel %vm643, %v699, %v700
      %v702 = vrot.slane %v605, 1
      %v703 = vsel %vm643, %v700, %v702
      %v704 = vrot.slane %v589, 1
      %v705 = vrot.slane %v515, 1
      %v706 = vsel %vm643, %v704, %v705
      %v707 = vrot.slane %v606, 1
      %v708 = vsel %vm643, %v705, %v707
      %v709 = vrot.slane %v590, 1
      %v710 = vrot.slane %v518, 1
      %v711 = vsel %vm643, %v709, %v710
      %v712 = vrot.slane %v607, 1
      %v713 = vsel %vm643, %v710, %v712
      %v714 = vrot.slane %v591, 1
      %v715 = vrot.slane %v521, 1
      %v716 = vsel %vm643, %v714, %v715
      %v717 = vrot.slane %v608, 1
      %v718 = vsel %vm643, %v715, %v717
      %v719 = vrot.slane %v592, 1
      %v720 = vrot.slane %v524, 1
      %v721 = vsel %vm643, %v719, %v720
      %v722 = vrot.slane %v609, 1
      %v723 = vsel %vm643, %v720, %v722
      %724 = vrot.lane.b32.xlu0 %v646, 4
      %v725 = vpop.permute.xlu0 %724
      %726 = vrot.lane.b32.xlu0 %v648, 4
      %v727 = vpop.permute.xlu0 %726
      %728 = vrot.lane.b32.xlu0 %v651, 4
      %v729 = vpop.permute.xlu0 %728
      %730 = vrot.lane.b32.xlu0 %v653, 4
      %v731 = vpop.permute.xlu0 %730
      %732 = vrot.lane.b32.xlu0 %v656, 4
      %v733 = vpop.permute.xlu0 %732
      %734 = vrot.lane.b32.xlu0 %v658, 4
      %v735 = vpop.permute.xlu0 %734
      %736 = vrot.lane.b32.xlu0 %v661, 4
      %v737 = vpop.permute.xlu0 %736
      %738 = vrot.lane.b32.xlu0 %v663, 4
      %v739 = vpop.permute.xlu0 %738
      %740 = vrot.lane.b32.xlu0 %v666, 4
      %v741 = vpop.permute.xlu0 %740
      %742 = vrot.lane.b32.xlu0 %v668, 4
      %v743 = vpop.permute.xlu0 %742
      %744 = vrot.lane.b32.xlu0 %v671, 4
      %v745 = vpop.permute.xlu0 %744
      %746 = vrot.lane.b32.xlu0 %v673, 4
      %v747 = vpop.permute.xlu0 %746
      %748 = vrot.lane.b32.xlu0 %v676, 4
      %v749 = vpop.permute.xlu0 %748
      %750 = vrot.lane.b32.xlu0 %v678, 4
      %v751 = vpop.permute.xlu0 %750
      %752 = vrot.lane.b32.xlu0 %v681, 4
      %v753 = vpop.permute.xlu0 %752
      %754 = vrot.lane.b32.xlu0 %v683, 4
      %v755 = vpop.permute.xlu0 %754
      %756 = vrot.lane.b32.xlu0 %v686, 4
      %v757 = vpop.permute.xlu0 %756
      %758 = vrot.lane.b32.xlu0 %v688, 4
      %v759 = vpop.permute.xlu0 %758
      %760 = vrot.lane.b32.xlu0 %v691, 4
      %v761 = vpop.permute.xlu0 %760
      %762 = vrot.lane.b32.xlu0 %v693, 4
      %v763 = vpop.permute.xlu0 %762
      %764 = vrot.lane.b32.xlu0 %v696, 4
      %v765 = vpop.permute.xlu0 %764
      %766 = vrot.lane.b32.xlu0 %v698, 4
      %v767 = vpop.permute.xlu0 %766
      %768 = vrot.lane.b32.xlu0 %v701, 4
      %v769 = vpop.permute.xlu0 %768
      %770 = vrot.lane.b32.xlu0 %v703, 4
      %v771 = vpop.permute.xlu0 %770
      %772 = vrot.lane.b32.xlu0 %v706, 4
      %v773 = vpop.permute.xlu0 %772
      %774 = vrot.lane.b32.xlu0 %v708, 4
      %v775 = vpop.permute.xlu0 %774
      %776 = vrot.lane.b32.xlu0 %v711, 4
      %v777 = vpop.permute.xlu0 %776
      %778 = vrot.lane.b32.xlu0 %v713, 4
      %v779 = vpop.permute.xlu0 %778
      %780 = vrot.lane.b32.xlu0 %v716, 4
      %v781 = vpop.permute.xlu0 %780
      %782 = vrot.lane.b32.xlu0 %v718, 4
      %v783 = vpop.permute.xlu0 %782
      %784 = vrot.lane.b32.xlu0 %v721, 4
      %v785 = vpop.permute.xlu0 %784
      %786 = vrot.lane.b32.xlu0 %v723, 4
      %v787 = vpop.permute.xlu0 %786
      %vm820 = vcmask 1045504
      %v821 = vrot.slane %v577, 2
      %v822 = vrot.slane %v479, 2
      %v823 = vsel %vm820, %v821, %v822
      %v824 = vrot.slane %v594, 2
      %v825 = vsel %vm820, %v822, %v824
      %v826 = vrot.slane %v578, 2
      %v827 = vrot.slane %v482, 2
      %v828 = vsel %vm820, %v826, %v827
      %v829 = vrot.slane %v595, 2
      %v830 = vsel %vm820, %v827, %v829
      %v831 = vrot.slane %v579, 2
      %v832 = vrot.slane %v485, 2
      %v833 = vsel %vm820, %v831, %v832
      %v834 = vrot.slane %v596, 2
      %v835 = vsel %vm820, %v832, %v834
      %v836 = vrot.slane %v580, 2
      %v837 = vrot.slane %v488, 2
      %v838 = vsel %vm820, %v836, %v837
      %v839 = vrot.slane %v597, 2
      %v840 = vsel %vm820, %v837, %v839
      %v841 = vrot.slane %v581, 2
      %v842 = vrot.slane %v491, 2
      %v843 = vsel %vm820, %v841, %v842
      %v844 = vrot.slane %v598, 2
      %v845 = vsel %vm820, %v842, %v844
      %v846 = vrot.slane %v582, 2
      %v847 = vrot.slane %v494, 2
      %v848 = vsel %vm820, %v846, %v847
      %v849 = vrot.slane %v599, 2
      %v850 = vsel %vm820, %v847, %v849
      %v851 = vrot.slane %v583, 2
      %v852 = vrot.slane %v497, 2
      %v853 = vsel %vm820, %v851, %v852
      %v854 = vrot.slane %v600, 2
      %v855 = vsel %vm820, %v852, %v854
      %v856 = vrot.slane %v584, 2
      %v857 = vrot.slane %v500, 2
      %v858 = vsel %vm820, %v856, %v857
      %v859 = vrot.slane %v601, 2
      %v860 = vsel %vm820, %v857, %v859
      %v861 = vrot.slane %v585, 2
      %v862 = vrot.slane %v503, 2
      %v863 = vsel %vm820, %v861, %v862
      %v864 = vrot.slane %v602, 2
      %v865 = vsel %vm820, %v862, %v864
      %v866 = vrot.slane %v586, 2
      %v867 = vrot.slane %v506, 2
      %v868 = vsel %vm820, %v866, %v867
      %v869 = vrot.slane %v603, 2
      %v870 = vsel %vm820, %v867, %v869
      %v871 = vrot.slane %v587, 2
      %v872 = vrot.slane %v509, 2
      %v873 = vsel %vm820, %v871, %v872
      %v874 = vrot.slane %v604, 2
      %v875 = vsel %vm820, %v872, %v874
      %v876 = vrot.slane %v588, 2
      %v877 = vrot.slane %v512, 2
      %v878 = vsel %vm820, %v876, %v877
      %v879 = vrot.slane %v605, 2
      %v880 = vsel %vm820, %v877, %v879
      %v881 = vrot.slane %v589, 2
      %v882 = vrot.slane %v515, 2
      %v883 = vsel %vm820, %v881, %v882
      %v884 = vrot.slane %v606, 2
      %v885 = vsel %vm820, %v882, %v884
      %v886 = vrot.slane %v590, 2
      %v887 = vrot.slane %v518, 2
      %v888 = vsel %vm820, %v886, %v887
      %v889 = vrot.slane %v607, 2
      %v890 = vsel %vm820, %v887, %v889
      %v891 = vrot.slane %v591, 2
      %v892 = vrot.slane %v521, 2
      %v893 = vsel %vm820, %v891, %v892
      %v894 = vrot.slane %v608, 2
      %v895 = vsel %vm820, %v892, %v894
      %v896 = vrot.slane %v592, 2
      %v897 = vrot.slane %v524, 2
      %v898 = vsel %vm820, %v896, %v897
      %v899 = vrot.slane %v609, 2
      %v900 = vsel %vm820, %v897, %v899
      %901 = vrot.lane.b32.xlu0 %v823, 8
      %v902 = vpop.permute.xlu0 %901
      %903 = vrot.lane.b32.xlu0 %v825, 8
      %v904 = vpop.permute.xlu0 %903
      %905 = vrot.lane.b32.xlu0 %v828, 8
      %v906 = vpop.permute.xlu0 %905
      %907 = vrot.lane.b32.xlu0 %v830, 8
      %v908 = vpop.permute.xlu0 %907
      %909 = vrot.lane.b32.xlu0 %v833, 8
      %v910 = vpop.permute.xlu0 %909
      %911 = vrot.lane.b32.xlu0 %v835, 8
      %v912 = vpop.permute.xlu0 %911
      %913 = vrot.lane.b32.xlu0 %v838, 8
      %v914 = vpop.permute.xlu0 %913
      %915 = vrot.lane.b32.xlu0 %v840, 8
      %v916 = vpop.permute.xlu0 %915
      %917 = vrot.lane.b32.xlu0 %v843, 8
      %v918 = vpop.permute.xlu0 %917
      %919 = vrot.lane.b32.xlu0 %v845, 8
      %v920 = vpop.permute.xlu0 %919
      %921 = vrot.lane.b32.xlu0 %v848, 8
      %v922 = vpop.permute.xlu0 %921
      %923 = vrot.lane.b32.xlu0 %v850, 8
      %v924 = vpop.permute.xlu0 %923
      %925 = vrot.lane.b32.xlu0 %v853, 8
      %v926 = vpop.permute.xlu0 %925
      %927 = vrot.lane.b32.xlu0 %v855, 8
      %v928 = vpop.permute.xlu0 %927
      %929 = vrot.lane.b32.xlu0 %v858, 8
      %v930 = vpop.permute.xlu0 %929
      %931 = vrot.lane.b32.xlu0 %v860, 8
      %v932 = vpop.permute.xlu0 %931
      %933 = vrot.lane.b32.xlu0 %v863, 8
      %v934 = vpop.permute.xlu0 %933
      %935 = vrot.lane.b32.xlu0 %v865, 8
      %v936 = vpop.permute.xlu0 %935
      %937 = vrot.lane.b32.xlu0 %v868, 8
      %v938 = vpop.permute.xlu0 %937
      %939 = vrot.lane.b32.xlu0 %v870, 8
      %v940 = vpop.permute.xlu0 %939
      %941 = vrot.lane.b32.xlu0 %v873, 8
      %v942 = vpop.permute.xlu0 %941
      %943 = vrot.lane.b32.xlu0 %v875, 8
      %v944 = vpop.permute.xlu0 %943
      %945 = vrot.lane.b32.xlu0 %v878, 8
      %v946 = vpop.permute.xlu0 %945
      %947 = vrot.lane.b32.xlu0 %v880, 8
      %v948 = vpop.permute.xlu0 %947
      %949 = vrot.lane.b32.xlu0 %v883, 8
      %v950 = vpop.permute.xlu0 %949
      %951 = vrot.lane.b32.xlu0 %v885, 8
      %v952 = vpop.permute.xlu0 %951
      %953 = vrot.lane.b32.xlu0 %v888, 8
      %v954 = vpop.permute.xlu0 %953
      %955 = vrot.lane.b32.xlu0 %v890, 8
      %v956 = vpop.permute.xlu0 %955
      %957 = vrot.lane.b32.xlu0 %v893, 8
      %v958 = vpop.permute.xlu0 %957
      %959 = vrot.lane.b32.xlu0 %v895, 8
      %v960 = vpop.permute.xlu0 %959
      %961 = vrot.lane.b32.xlu0 %v898, 8
      %v962 = vpop.permute.xlu0 %961
      %963 = vrot.lane.b32.xlu0 %v900, 8
      %v964 = vpop.permute.xlu0 %963
      %998 = vrot.lane.b32.xlu0 %v578, 12
      %v999 = vpop.permute.xlu0 %998
      %1000 = vrot.lane.b32.xlu0 %v482, 12
      %v1001 = vpop.permute.xlu0 %1000
      %1002 = vrot.lane.b32.xlu0 %v579, 12
      %v1003 = vpop.permute.xlu0 %1002
      %1004 = vrot.lane.b32.xlu0 %v485, 12
      %v1005 = vpop.permute.xlu0 %1004
      %1006 = vrot.lane.b32.xlu0 %v580, 12
      %v1007 = vpop.permute.xlu0 %1006
      %1008 = vrot.lane.b32.xlu0 %v488, 12
      %v1009 = vpop.permute.xlu0 %1008
      %1010 = vrot.lane.b32.xlu0 %v581, 12
      %v1011 = vpop.permute.xlu0 %1010
      %1012 = vrot.lane.b32.xlu0 %v491, 12
      %v1013 = vpop.permute.xlu0 %1012
      %1014 = vrot.lane.b32.xlu0 %v582, 12
      %v1015 = vpop.permute.xlu0 %1014
      %1016 = vrot.lane.b32.xlu0 %v494, 12
      %v1017 = vpop.permute.xlu0 %1016
      %1018 = vrot.lane.b32.xlu0 %v583, 12
      %v1019 = vpop.permute.xlu0 %1018
      %1020 = vrot.lane.b32.xlu0 %v497, 12
      %v1021 = vpop.permute.xlu0 %1020
      %1022 = vrot.lane.b32.xlu0 %v584, 12
      %v1023 = vpop.permute.xlu0 %1022
      %1024 = vrot.lane.b32.xlu0 %v500, 12
      %v1025 = vpop.permute.xlu0 %1024
      %1026 = vrot.lane.b32.xlu0 %v585, 12
      %v1027 = vpop.permute.xlu0 %1026
      %1028 = vrot.lane.b32.xlu0 %v503, 12
      %v1029 = vpop.permute.xlu0 %1028
      %1030 = vrot.lane.b32.xlu0 %v586, 12
      %v1031 = vpop.permute.xlu0 %1030
      %1032 = vrot.lane.b32.xlu0 %v506, 12
      %v1033 = vpop.permute.xlu0 %1032
      %1034 = vrot.lane.b32.xlu0 %v587, 12
      %v1035 = vpop.permute.xlu0 %1034
      %1036 = vrot.lane.b32.xlu0 %v509, 12
      %v1037 = vpop.permute.xlu0 %1036
      %1038 = vrot.lane.b32.xlu0 %v588, 12
      %v1039 = vpop.permute.xlu0 %1038
      %1040 = vrot.lane.b32.xlu0 %v512, 12
      %v1041 = vpop.permute.xlu0 %1040
      %1042 = vrot.lane.b32.xlu0 %v589, 12
      %v1043 = vpop.permute.xlu0 %1042
      %1044 = vrot.lane.b32.xlu0 %v515, 12
      %v1045 = vpop.permute.xlu0 %1044
      %1046 = vrot.lane.b32.xlu0 %v590, 12
      %v1047 = vpop.permute.xlu0 %1046
      %1048 = vrot.lane.b32.xlu0 %v518, 12
      %v1049 = vpop.permute.xlu0 %1048
      %1050 = vrot.lane.b32.xlu0 %v591, 12
      %v1051 = vpop.permute.xlu0 %1050
      %1052 = vrot.lane.b32.xlu0 %v521, 12
      %v1053 = vpop.permute.xlu0 %1052
      %1054 = vrot.lane.b32.xlu0 %v592, 12
      %v1055 = vpop.permute.xlu0 %1054
      %1056 = vrot.lane.b32.xlu0 %v524, 12
      %v1057 = vpop.permute.xlu0 %1056
      %1058 = vrot.lane.b32.xlu0 %v593, 12
      %v1059 = vpop.permute.xlu0 %1058
      %1060 = vrot.lane.b32.xlu0 %v527, 12
      %v1061 = vpop.permute.xlu0 %1060
      %v1095 = vrot.slane %v593, 1
      %v1096 = vrot.slane %v527, 1
      %v1097 = vsel %vm643, %v1095, %v1096
      %v1098 = vrot.slane %v610, 1
      %v1099 = vsel %vm643, %v1096, %v1098
      %1100 = vrot.lane.b32.xlu0 %v651, 16
      %v1101 = vpop.permute.xlu0 %1100
      %1102 = vrot.lane.b32.xlu0 %v653, 16
      %v1103 = vpop.permute.xlu0 %1102
      %1104 = vrot.lane.b32.xlu0 %v656, 16
      %v1105 = vpop.permute.xlu0 %1104
      %1106 = vrot.lane.b32.xlu0 %v658, 16
      %v1107 = vpop.permute.xlu0 %1106
      %1108 = vrot.lane.b32.xlu0 %v661, 16
      %v1109 = vpop.permute.xlu0 %1108
      %1110 = vrot.lane.b32.xlu0 %v663, 16
      %v1111 = vpop.permute.xlu0 %1110
      %1112 = vrot.lane.b32.xlu0 %v666, 16
      %v1113 = vpop.permute.xlu0 %1112
      %1114 = vrot.lane.b32.xlu0 %v668, 16
      %v1115 = vpop.permute.xlu0 %1114
      %1116 = vrot.lane.b32.xlu0 %v671, 16
      %v1117 = vpop.permute.xlu0 %1116
      %1118 = vrot.lane.b32.xlu0 %v673, 16
      %v1119 = vpop.permute.xlu0 %1118
      %1120 = vrot.lane.b32.xlu0 %v676, 16
      %v1121 = vpop.permute.xlu0 %1120
      %1122 = vrot.lane.b32.xlu0 %v678, 16
      %v1123 = vpop.permute.xlu0 %1122
      %1124 = vrot.lane.b32.xlu0 %v681, 16
      %v1125 = vpop.permute.xlu0 %1124
      %1126 = vrot.lane.b32.xlu0 %v683, 16
      %v1127 = vpop.permute.xlu0 %1126
      %1128 = vrot.lane.b32.xlu0 %v686, 16
      %v1129 = vpop.permute.xlu0 %1128
      %1130 = vrot.lane.b32.xlu0 %v688, 16
      %v1131 = vpop.permute.xlu0 %1130
      %1132 = vrot.lane.b32.xlu0 %v691, 16
      %v1133 = vpop.permute.xlu0 %1132
      %1134 = vrot.lane.b32.xlu0 %v693, 16
      %v1135 = vpop.permute.xlu0 %1134
      %1136 = vrot.lane.b32.xlu0 %v696, 16
      %v1137 = vpop.permute.xlu0 %1136
      %1138 = vrot.lane.b32.xlu0 %v698, 16
      %v1139 = vpop.permute.xlu0 %1138
      %1140 = vrot.lane.b32.xlu0 %v701, 16
      %v1141 = vpop.permute.xlu0 %1140
      %1142 = vrot.lane.b32.xlu0 %v703, 16
      %v1143 = vpop.permute.xlu0 %1142
      %1144 = vrot.lane.b32.xlu0 %v706, 16
      %v1145 = vpop.permute.xlu0 %1144
      %1146 = vrot.lane.b32.xlu0 %v708, 16
      %v1147 = vpop.permute.xlu0 %1146
      %1148 = vrot.lane.b32.xlu0 %v711, 16
      %v1149 = vpop.permute.xlu0 %1148
      %1150 = vrot.lane.b32.xlu0 %v713, 16
      %v1151 = vpop.permute.xlu0 %1150
      %1152 = vrot.lane.b32.xlu0 %v716, 16
      %v1153 = vpop.permute.xlu0 %1152
      %1154 = vrot.lane.b32.xlu0 %v718, 16
      %v1155 = vpop.permute.xlu0 %1154
      %1156 = vrot.lane.b32.xlu0 %v721, 16
      %v1157 = vpop.permute.xlu0 %1156
      %1158 = vrot.lane.b32.xlu0 %v723, 16
      %v1159 = vpop.permute.xlu0 %1158
      %1160 = vrot.lane.b32.xlu0 %v1097, 16
      %v1161 = vpop.permute.xlu0 %1160
      %1162 = vrot.lane.b32.xlu0 %v1099, 16
      %v1163 = vpop.permute.xlu0 %1162
      %v1196 = vrot.slane %v593, 2
      %v1197 = vrot.slane %v527, 2
      %v1198 = vsel %vm820, %v1196, %v1197
      %v1199 = vrot.slane %v610, 2
      %v1200 = vsel %vm820, %v1197, %v1199
      %1201 = vrot.lane.b32.xlu0 %v828, 20
      %v1202 = vpop.permute.xlu0 %1201
      %1203 = vrot.lane.b32.xlu0 %v830, 20
      %v1204 = vpop.permute.xlu0 %1203
      %1205 = vrot.lane.b32.xlu0 %v833, 20
      %v1206 = vpop.permute.xlu0 %1205
      %1207 = vrot.lane.b32.xlu0 %v835, 20
      %v1208 = vpop.permute.xlu0 %1207
      %1209 = vrot.lane.b32.xlu0 %v838, 20
      %v1210 = vpop.permute.xlu0 %1209
      %1211 = vrot.lane.b32.xlu0 %v840, 20
      %v1212 = vpop.permute.xlu0 %1211
      %1213 = vrot.lane.b32.xlu0 %v843, 20
      %v1214 = vpop.permute.xlu0 %1213
      %1215 = vrot.lane.b32.xlu0 %v845, 20
      %v1216 = vpop.permute.xlu0 %1215
      %1217 = vrot.lane.b32.xlu0 %v848, 20
      %v1218 = vpop.permute.xlu0 %1217
      %1219 = vrot.lane.b32.xlu0 %v850, 20
      %v1220 = vpop.permute.xlu0 %1219
      %1221 = vrot.lane.b32.xlu0 %v853, 20
      %v1222 = vpop.permute.xlu0 %1221
      %1223 = vrot.lane.b32.xlu0 %v855, 20
      %v1224 = vpop.permute.xlu0 %1223
      %1225 = vrot.lane.b32.xlu0 %v858, 20
      %v1226 = vpop.permute.xlu0 %1225
      %1227 = vrot.lane.b32.xlu0 %v860, 20
      %v1228 = vpop.permute.xlu0 %1227
      %1229 = vrot.lane.b32.xlu0 %v863, 20
      %v1230 = vpop.permute.xlu0 %1229
      %1231 = vrot.lane.b32.xlu0 %v865, 20
      %v1232 = vpop.permute.xlu0 %1231
      %1233 = vrot.lane.b32.xlu0 %v868, 20
      %v1234 = vpop.permute.xlu0 %1233
      %1235 = vrot.lane.b32.xlu0 %v870, 20
      %v1236 = vpop.permute.xlu0 %1235
      %1237 = vrot.lane.b32.xlu0 %v873, 20
      %v1238 = vpop.permute.xlu0 %1237
      %1239 = vrot.lane.b32.xlu0 %v875, 20
      %v1240 = vpop.permute.xlu0 %1239
      %1241 = vrot.lane.b32.xlu0 %v878, 20
      %v1242 = vpop.permute.xlu0 %1241
      %1243 = vrot.lane.b32.xlu0 %v880, 20
      %v1244 = vpop.permute.xlu0 %1243
      %1245 = vrot.lane.b32.xlu0 %v883, 20
      %v1246 = vpop.permute.xlu0 %1245
      %1247 = vrot.lane.b32.xlu0 %v885, 20
      %v1248 = vpop.permute.xlu0 %1247
      %1249 = vrot.lane.b32.xlu0 %v888, 20
      %v1250 = vpop.permute.xlu0 %1249
      %1251 = vrot.lane.b32.xlu0 %v890, 20
      %v1252 = vpop.permute.xlu0 %1251
      %1253 = vrot.lane.b32.xlu0 %v893, 20
      %v1254 = vpop.permute.xlu0 %1253
      %1255 = vrot.lane.b32.xlu0 %v895, 20
      %v1256 = vpop.permute.xlu0 %1255
      %1257 = vrot.lane.b32.xlu0 %v898, 20
      %v1258 = vpop.permute.xlu0 %1257
      %1259 = vrot.lane.b32.xlu0 %v900, 20
      %v1260 = vpop.permute.xlu0 %1259
      %1261 = vrot.lane.b32.xlu0 %v1198, 20
      %v1262 = vpop.permute.xlu0 %1261
      %1263 = vrot.lane.b32.xlu0 %v1200, 20
      %v1264 = vpop.permute.xlu0 %1263
      %1297 = vrot.lane.b32.xlu0 %v579, 24
      %v1298 = vpop.permute.xlu0 %1297
      %1299 = vrot.lane.b32.xlu0 %v485, 24
      %v1300 = vpop.permute.xlu0 %1299
      %1301 = vrot.lane.b32.xlu0 %v580, 24
      %v1302 = vpop.permute.xlu0 %1301
      %1303 = vrot.lane.b32.xlu0 %v488, 24
      %v1304 = vpop.permute.xlu0 %1303
      %1305 = vrot.lane.b32.xlu0 %v581, 24
      %v1306 = vpop.permute.xlu0 %1305
      %1307 = vrot.lane.b32.xlu0 %v491, 24
      %v1308 = vpop.permute.xlu0 %1307
      %1309 = vrot.lane.b32.xlu0 %v582, 24
      %v1310 = vpop.permute.xlu0 %1309
      %1311 = vrot.lane.b32.xlu0 %v494, 24
      %v1312 = vpop.permute.xlu0 %1311
      %1313 = vrot.lane.b32.xlu0 %v583, 24
      %v1314 = vpop.permute.xlu0 %1313
      %1315 = vrot.lane.b32.xlu0 %v497, 24
      %v1316 = vpop.permute.xlu0 %1315
      %1317 = vrot.lane.b32.xlu0 %v584, 24
      %v1318 = vpop.permute.xlu0 %1317
      %1319 = vrot.lane.b32.xlu0 %v500, 24
      %v1320 = vpop.permute.xlu0 %1319
      %1321 = vrot.lane.b32.xlu0 %v585, 24
      %v1322 = vpop.permute.xlu0 %1321
      %1323 = vrot.lane.b32.xlu0 %v503, 24
      %v1324 = vpop.permute.xlu0 %1323
      %1325 = vrot.lane.b32.xlu0 %v586, 24
      %v1326 = vpop.permute.xlu0 %1325
      %1327 = vrot.lane.b32.xlu0 %v506, 24
      %v1328 = vpop.permute.xlu0 %1327
      %1329 = vrot.lane.b32.xlu0 %v587, 24
      %v1330 = vpop.permute.xlu0 %1329
      %1331 = vrot.lane.b32.xlu0 %v509, 24
      %v1332 = vpop.permute.xlu0 %1331
      %1333 = vrot.lane.b32.xlu0 %v588, 24
      %v1334 = vpop.permute.xlu0 %1333
      %1335 = vrot.lane.b32.xlu0 %v512, 24
      %v1336 = vpop.permute.xlu0 %1335
      %1337 = vrot.lane.b32.xlu0 %v589, 24
      %v1338 = vpop.permute.xlu0 %1337
      %1339 = vrot.lane.b32.xlu0 %v515, 24
      %v1340 = vpop.permute.xlu0 %1339
      %1341 = vrot.lane.b32.xlu0 %v590, 24
      %v1342 = vpop.permute.xlu0 %1341
      %1343 = vrot.lane.b32.xlu0 %v518, 24
      %v1344 = vpop.permute.xlu0 %1343
      %1345 = vrot.lane.b32.xlu0 %v591, 24
      %v1346 = vpop.permute.xlu0 %1345
      %1347 = vrot.lane.b32.xlu0 %v521, 24
      %v1348 = vpop.permute.xlu0 %1347
      %1349 = vrot.lane.b32.xlu0 %v592, 24
      %v1350 = vpop.permute.xlu0 %1349
      %1351 = vrot.lane.b32.xlu0 %v524, 24
      %v1352 = vpop.permute.xlu0 %1351
      %1353 = vrot.lane.b32.xlu0 %v593, 24
      %v1354 = vpop.permute.xlu0 %1353
      %1355 = vrot.lane.b32.xlu0 %v527, 24
      %v1356 = vpop.permute.xlu0 %1355
      %1357 = vrot.lane.b32.xlu0 %v577, 24
      %v1358 = vpop.permute.xlu0 %1357
      %1359 = vrot.lane.b32.xlu0 %v479, 24
      %v1360 = vpop.permute.xlu0 %1359
      %1393 = vrot.lane.b32.xlu0 %v656, 28
      %v1394 = vpop.permute.xlu0 %1393
      %1395 = vrot.lane.b32.xlu0 %v658, 28
      %v1396 = vpop.permute.xlu0 %1395
      %1397 = vrot.lane.b32.xlu0 %v661, 28
      %v1398 = vpop.permute.xlu0 %1397
      %1399 = vrot.lane.b32.xlu0 %v663, 28
      %v1400 = vpop.permute.xlu0 %1399
      %1401 = vrot.lane.b32.xlu0 %v666, 28
      %v1402 = vpop.permute.xlu0 %1401
      %1403 = vrot.lane.b32.xlu0 %v668, 28
      %v1404 = vpop.permute.xlu0 %1403
      %1405 = vrot.lane.b32.xlu0 %v671, 28
      %v1406 = vpop.permute.xlu0 %1405
      %1407 = vrot.lane.b32.xlu0 %v673, 28
      %v1408 = vpop.permute.xlu0 %1407
      %1409 = vrot.lane.b32.xlu0 %v676, 28
      %v1410 = vpop.permute.xlu0 %1409
      %1411 = vrot.lane.b32.xlu0 %v678, 28
      %v1412 = vpop.permute.xlu0 %1411
      %1413 = vrot.lane.b32.xlu0 %v681, 28
      %v1414 = vpop.permute.xlu0 %1413
      %1415 = vrot.lane.b32.xlu0 %v683, 28
      %v1416 = vpop.permute.xlu0 %1415
      %1417 = vrot.lane.b32.xlu0 %v686, 28
      %v1418 = vpop.permute.xlu0 %1417
      %1419 = vrot.lane.b32.xlu0 %v688, 28
      %v1420 = vpop.permute.xlu0 %1419
      %1421 = vrot.lane.b32.xlu0 %v691, 28
      %v1422 = vpop.permute.xlu0 %1421
      %1423 = vrot.lane.b32.xlu0 %v693, 28
      %v1424 = vpop.permute.xlu0 %1423
      %1425 = vrot.lane.b32.xlu0 %v696, 28
      %v1426 = vpop.permute.xlu0 %1425
      %1427 = vrot.lane.b32.xlu0 %v698, 28
      %v1428 = vpop.permute.xlu0 %1427
      %1429 = vrot.lane.b32.xlu0 %v701, 28
      %v1430 = vpop.permute.xlu0 %1429
      %1431 = vrot.lane.b32.xlu0 %v703, 28
      %v1432 = vpop.permute.xlu0 %1431
      %1433 = vrot.lane.b32.xlu0 %v706, 28
      %v1434 = vpop.permute.xlu0 %1433
      %1435 = vrot.lane.b32.xlu0 %v708, 28
      %v1436 = vpop.permute.xlu0 %1435
      %1437 = vrot.lane.b32.xlu0 %v711, 28
      %v1438 = vpop.permute.xlu0 %1437
      %1439 = vrot.lane.b32.xlu0 %v713, 28
      %v1440 = vpop.permute.xlu0 %1439
      %1441 = vrot.lane.b32.xlu0 %v716, 28
      %v1442 = vpop.permute.xlu0 %1441
      %1443 = vrot.lane.b32.xlu0 %v718, 28
      %v1444 = vpop.permute.xlu0 %1443
      %1445 = vrot.lane.b32.xlu0 %v721, 28
      %v1446 = vpop.permute.xlu0 %1445
      %1447 = vrot.lane.b32.xlu0 %v723, 28
      %v1448 = vpop.permute.xlu0 %1447
      %1449 = vrot.lane.b32.xlu0 %v1097, 28
      %v1450 = vpop.permute.xlu0 %1449
      %1451 = vrot.lane.b32.xlu0 %v1099, 28
      %v1452 = vpop.permute.xlu0 %1451
      %1453 = vrot.lane.b32.xlu0 %v646, 28
      %v1454 = vpop.permute.xlu0 %1453
      %1455 = vrot.lane.b32.xlu0 %v648, 28
      %v1456 = vpop.permute.xlu0 %1455
      %1489 = vrot.lane.b32.xlu0 %v833, 32
      %v1490 = vpop.permute.xlu0 %1489
      %1491 = vrot.lane.b32.xlu0 %v835, 32
      %v1492 = vpop.permute.xlu0 %1491
      %1493 = vrot.lane.b32.xlu0 %v838, 32
      %v1494 = vpop.permute.xlu0 %1493
      %1495 = vrot.lane.b32.xlu0 %v840, 32
      %v1496 = vpop.permute.xlu0 %1495
      %1497 = vrot.lane.b32.xlu0 %v843, 32
      %v1498 = vpop.permute.xlu0 %1497
      %1499 = vrot.lane.b32.xlu0 %v845, 32
      %v1500 = vpop.permute.xlu0 %1499
      %1501 = vrot.lane.b32.xlu0 %v848, 32
      %v1502 = vpop.permute.xlu0 %1501
      %1503 = vrot.lane.b32.xlu0 %v850, 32
      %v1504 = vpop.permute.xlu0 %1503
      %1505 = vrot.lane.b32.xlu0 %v853, 32
      %v1506 = vpop.permute.xlu0 %1505
      %1507 = vrot.lane.b32.xlu0 %v855, 32
      %v1508 = vpop.permute.xlu0 %1507
      %1509 = vrot.lane.b32.xlu0 %v858, 32
      %v1510 = vpop.permute.xlu0 %1509
      %1511 = vrot.lane.b32.xlu0 %v860, 32
      %v1512 = vpop.permute.xlu0 %1511
      %1513 = vrot.lane.b32.xlu0 %v863, 32
      %v1514 = vpop.permute.xlu0 %1513
      %1515 = vrot.lane.b32.xlu0 %v865, 32
      %v1516 = vpop.permute.xlu0 %1515
      %1517 = vrot.lane.b32.xlu0 %v868, 32
      %v1518 = vpop.permute.xlu0 %1517
      %1519 = vrot.lane.b32.xlu0 %v870, 32
      %v1520 = vpop.permute.xlu0 %1519
      %1521 = vrot.lane.b32.xlu0 %v873, 32
      %v1522 = vpop.permute.xlu0 %1521
      %1523 = vrot.lane.b32.xlu0 %v875, 32
      %v1524 = vpop.permute.xlu0 %1523
      %1525 = vrot.lane.b32.xlu0 %v878, 32
      %v1526 = vpop.permute.xlu0 %1525
      %1527 = vrot.lane.b32.xlu0 %v880, 32
      %v1528 = vpop.permute.xlu0 %1527
      %1529 = vrot.lane.b32.xlu0 %v883, 32
      %v1530 = vpop.permute.xlu0 %1529
      %1531 = vrot.lane.b32.xlu0 %v885, 32
      %v1532 = vpop.permute.xlu0 %1531
      %1533 = vrot.lane.b32.xlu0 %v888, 32
      %v1534 = vpop.permute.xlu0 %1533
      %1535 = vrot.lane.b32.xlu0 %v890, 32
      %v1536 = vpop.permute.xlu0 %1535
      %1537 = vrot.lane.b32.xlu0 %v893, 32
      %v1538 = vpop.permute.xlu0 %1537
      %1539 = vrot.lane.b32.xlu0 %v895, 32
      %v1540 = vpop.permute.xlu0 %1539
      %1541 = vrot.lane.b32.xlu0 %v898, 32
      %v1542 = vpop.permute.xlu0 %1541
      %1543 = vrot.lane.b32.xlu0 %v900, 32
      %v1544 = vpop.permute.xlu0 %1543
      %1545 = vrot.lane.b32.xlu0 %v1198, 32
      %v1546 = vpop.permute.xlu0 %1545
      %1547 = vrot.lane.b32.xlu0 %v1200, 32
      %v1548 = vpop.permute.xlu0 %1547
      %1549 = vrot.lane.b32.xlu0 %v823, 32
      %v1550 = vpop.permute.xlu0 %1549
      %1551 = vrot.lane.b32.xlu0 %v825, 32
      %v1552 = vpop.permute.xlu0 %1551
      %vm1585 = vcmask 31744
      %v1586 = vsel %vm1585, %v577, %v725
      %v1587 = vsel %vm1585, %v479, %v727
      %v1588 = vsel %vm1585, %v578, %v729
      %v1589 = vsel %vm1585, %v482, %v731
      %v1590 = vsel %vm1585, %v579, %v733
      %v1591 = vsel %vm1585, %v485, %v735
      %v1592 = vsel %vm1585, %v580, %v737
      %v1593 = vsel %vm1585, %v488, %v739
      %v1594 = vsel %vm1585, %v581, %v741
      %v1595 = vsel %vm1585, %v491, %v743
      %v1596 = vsel %vm1585, %v582, %v745
      %v1597 = vsel %vm1585, %v494, %v747
      %v1598 = vsel %vm1585, %v583, %v749
      %v1599 = vsel %vm1585, %v497, %v751
      %v1600 = vsel %vm1585, %v584, %v753
      %v1601 = vsel %vm1585, %v500, %v755
      %v1602 = vsel %vm1585, %v585, %v757
      %v1603 = vsel %vm1585, %v503, %v759
      %v1604 = vsel %vm1585, %v586, %v761
      %v1605 = vsel %vm1585, %v506, %v763
      %v1606 = vsel %vm1585, %v587, %v765
      %v1607 = vsel %vm1585, %v509, %v767
      %v1608 = vsel %vm1585, %v588, %v769
      %v1609 = vsel %vm1585, %v512, %v771
      %v1610 = vsel %vm1585, %v589, %v773
      %v1611 = vsel %vm1585, %v515, %v775
      %v1612 = vsel %vm1585, %v590, %v777
      %v1613 = vsel %vm1585, %v518, %v779
      %v1614 = vsel %vm1585, %v591, %v781
      %v1615 = vsel %vm1585, %v521, %v783
      %v1616 = vsel %vm1585, %v592, %v785
      %v1617 = vsel %vm1585, %v524, %v787
      %vm1618 = vcmask 64512
      %v1619 = vsel %vm1618, %v1586, %v902
      %v1620 = vsel %vm1618, %v1587, %v904
      %v1621 = vsel %vm1618, %v1588, %v906
      %v1622 = vsel %vm1618, %v1589, %v908
      %v1623 = vsel %vm1618, %v1590, %v910
      %v1624 = vsel %vm1618, %v1591, %v912
      %v1625 = vsel %vm1618, %v1592, %v914
      %v1626 = vsel %vm1618, %v1593, %v916
      %v1627 = vsel %vm1618, %v1594, %v918
      %v1628 = vsel %vm1618, %v1595, %v920
      %v1629 = vsel %vm1618, %v1596, %v922
      %v1630 = vsel %vm1618, %v1597, %v924
      %v1631 = vsel %vm1618, %v1598, %v926
      %v1632 = vsel %vm1618, %v1599, %v928
      %v1633 = vsel %vm1618, %v1600, %v930
      %v1634 = vsel %vm1618, %v1601, %v932
      %v1635 = vsel %vm1618, %v1602, %v934
      %v1636 = vsel %vm1618, %v1603, %v936
      %v1637 = vsel %vm1618, %v1604, %v938
      %v1638 = vsel %vm1618, %v1605, %v940
      %v1639 = vsel %vm1618, %v1606, %v942
      %v1640 = vsel %vm1618, %v1607, %v944
      %v1641 = vsel %vm1618, %v1608, %v946
      %v1642 = vsel %vm1618, %v1609, %v948
      %v1643 = vsel %vm1618, %v1610, %v950
      %v1644 = vsel %vm1618, %v1611, %v952
      %v1645 = vsel %vm1618, %v1612, %v954
      %v1646 = vsel %vm1618, %v1613, %v956
      %v1647 = vsel %vm1618, %v1614, %v958
      %v1648 = vsel %vm1618, %v1615, %v960
      %v1649 = vsel %vm1618, %v1616, %v962
      %v1650 = vsel %vm1618, %v1617, %v964
      %vm1651 = vcmask 97280
      %v1652 = vsel %vm1651, %v1619, %v999
      %v1653 = vsel %vm1651, %v1620, %v1001
      %v1654 = vsel %vm1651, %v1621, %v1003
      %v1655 = vsel %vm1651, %v1622, %v1005
      %v1656 = vsel %vm1651, %v1623, %v1007
      %v1657 = vsel %vm1651, %v1624, %v1009
      %v1658 = vsel %vm1651, %v1625, %v1011
      %v1659 = vsel %vm1651, %v1626, %v1013
      %v1660 = vsel %vm1651, %v1627, %v1015
      %v1661 = vsel %vm1651, %v1628, %v1017
      %v1662 = vsel %vm1651, %v1629, %v1019
      %v1663 = vsel %vm1651, %v1630, %v1021
      %v1664 = vsel %vm1651, %v1631, %v1023
      %v1665 = vsel %vm1651, %v1632, %v1025
      %v1666 = vsel %vm1651, %v1633, %v1027
      %v1667 = vsel %vm1651, %v1634, %v1029
      %v1668 = vsel %vm1651, %v1635, %v1031
      %v1669 = vsel %vm1651, %v1636, %v1033
      %v1670 = vsel %vm1651, %v1637, %v1035
      %v1671 = vsel %vm1651, %v1638, %v1037
      %v1672 = vsel %vm1651, %v1639, %v1039
      %v1673 = vsel %vm1651, %v1640, %v1041
      %v1674 = vsel %vm1651, %v1641, %v1043
      %v1675 = vsel %vm1651, %v1642, %v1045
      %v1676 = vsel %vm1651, %v1643, %v1047
      %v1677 = vsel %vm1651, %v1644, %v1049
      %v1678 = vsel %vm1651, %v1645, %v1051
      %v1679 = vsel %vm1651, %v1646, %v1053
      %v1680 = vsel %vm1651, %v1647, %v1055
      %v1681 = vsel %vm1651, %v1648, %v1057
      %v1682 = vsel %vm1651, %v1649, %v1059
      %v1683 = vsel %vm1651, %v1650, %v1061
      %vm1684 = vcmask 130048
      %v1685 = vsel %vm1684, %v1652, %v1101
      %v1686 = vsel %vm1684, %v1653, %v1103
      %v1687 = vsel %vm1684, %v1654, %v1105
      %v1688 = vsel %vm1684, %v1655, %v1107
      %v1689 = vsel %vm1684, %v1656, %v1109
      %v1690 = vsel %vm1684, %v1657, %v1111
      %v1691 = vsel %vm1684, %v1658, %v1113
      %v1692 = vsel %vm1684, %v1659, %v1115
      %v1693 = vsel %vm1684, %v1660, %v1117
      %v1694 = vsel %vm1684, %v1661, %v1119
      %v1695 = vsel %vm1684, %v1662, %v1121
      %v1696 = vsel %vm1684, %v1663, %v1123
      %v1697 = vsel %vm1684, %v1664, %v1125
      %v1698 = vsel %vm1684, %v1665, %v1127
      %v1699 = vsel %vm1684, %v1666, %v1129
      %v1700 = vsel %vm1684, %v1667, %v1131
      %v1701 = vsel %vm1684, %v1668, %v1133
      %v1702 = vsel %vm1684, %v1669, %v1135
      %v1703 = vsel %vm1684, %v1670, %v1137
      %v1704 = vsel %vm1684, %v1671, %v1139
      %v1705 = vsel %vm1684, %v1672, %v1141
      %v1706 = vsel %vm1684, %v1673, %v1143
      %v1707 = vsel %vm1684, %v1674, %v1145
      %v1708 = vsel %vm1684, %v1675, %v1147
      %v1709 = vsel %vm1684, %v1676, %v1149
      %v1710 = vsel %vm1684, %v1677, %v1151
      %v1711 = vsel %vm1684, %v1678, %v1153
      %v1712 = vsel %vm1684, %v1679, %v1155
      %v1713 = vsel %vm1684, %v1680, %v1157
      %v1714 = vsel %vm1684, %v1681, %v1159
      %v1715 = vsel %vm1684, %v1682, %v1161
      %v1716 = vsel %vm1684, %v1683, %v1163
      %vm1717 = vcmask 162816
      %v1718 = vsel %vm1717, %v1685, %v1202
      %v1719 = vsel %vm1717, %v1686, %v1204
      %v1720 = vsel %vm1717, %v1687, %v1206
      %v1721 = vsel %vm1717, %v1688, %v1208
      %v1722 = vsel %vm1717, %v1689, %v1210
      %v1723 = vsel %vm1717, %v1690, %v1212
      %v1724 = vsel %vm1717, %v1691, %v1214
      %v1725 = vsel %vm1717, %v1692, %v1216
      %v1726 = vsel %vm1717, %v1693, %v1218
      %v1727 = vsel %vm1717, %v1694, %v1220
      %v1728 = vsel %vm1717, %v1695, %v1222
      %v1729 = vsel %vm1717, %v1696, %v1224
      %v1730 = vsel %vm1717, %v1697, %v1226
      %v1731 = vsel %vm1717, %v1698, %v1228
      %v1732 = vsel %vm1717, %v1699, %v1230
      %v1733 = vsel %vm1717, %v1700, %v1232
      %v1734 = vsel %vm1717, %v1701, %v1234
      %v1735 = vsel %vm1717, %v1702, %v1236
      %v1736 = vsel %vm1717, %v1703, %v1238
      %v1737 = vsel %vm1717, %v1704, %v1240
      %v1738 = vsel %vm1717, %v1705, %v1242
      %v1739 = vsel %vm1717, %v1706, %v1244
      %v1740 = vsel %vm1717, %v1707, %v1246
      %v1741 = vsel %vm1717, %v1708, %v1248
      %v1742 = vsel %vm1717, %v1709, %v1250
      %v1743 = vsel %vm1717, %v1710, %v1252
      %v1744 = vsel %vm1717, %v1711, %v1254
      %v1745 = vsel %vm1717, %v1712, %v1256
      %v1746 = vsel %vm1717, %v1713, %v1258
      %v1747 = vsel %vm1717, %v1714, %v1260
      %v1748 = vsel %vm1717, %v1715, %v1262
      %v1749 = vsel %vm1717, %v1716, %v1264
      %vm1750 = vcmask 195584
      %v1751 = vsel %vm1750, %v1718, %v1298
      %v1752 = vsel %vm1750, %v1719, %v1300
      %v1753 = vsel %vm1750, %v1720, %v1302
      %v1754 = vsel %vm1750, %v1721, %v1304
      %v1755 = vsel %vm1750, %v1722, %v1306
      %v1756 = vsel %vm1750, %v1723, %v1308
      %v1757 = vsel %vm1750, %v1724, %v1310
      %v1758 = vsel %vm1750, %v1725, %v1312
      %v1759 = vsel %vm1750, %v1726, %v1314
      %v1760 = vsel %vm1750, %v1727, %v1316
      %v1761 = vsel %vm1750, %v1728, %v1318
      %v1762 = vsel %vm1750, %v1729, %v1320
      %v1763 = vsel %vm1750, %v1730, %v1322
      %v1764 = vsel %vm1750, %v1731, %v1324
      %v1765 = vsel %vm1750, %v1732, %v1326
      %v1766 = vsel %vm1750, %v1733, %v1328
      %v1767 = vsel %vm1750, %v1734, %v1330
      %v1768 = vsel %vm1750, %v1735, %v1332
      %v1769 = vsel %vm1750, %v1736, %v1334
      %v1770 = vsel %vm1750, %v1737, %v1336
      %v1771 = vsel %vm1750, %v1738, %v1338
      %v1772 = vsel %vm1750, %v1739, %v1340
      %v1773 = vsel %vm1750, %v1740, %v1342
      %v1774 = vsel %vm1750, %v1741, %v1344
      %v1775 = vsel %vm1750, %v1742, %v1346
      %v1776 = vsel %vm1750, %v1743, %v1348
      %v1777 = vsel %vm1750, %v1744, %v1350
      %v1778 = vsel %vm1750, %v1745, %v1352
      %v1779 = vsel %vm1750, %v1746, %v1354
      %v1780 = vsel %vm1750, %v1747, %v1356
      %v1781 = vsel %vm1750, %v1748, %v1358
      %v1782 = vsel %vm1750, %v1749, %v1360
      %vm1783 = vcmask 228352
      %v1784 = vsel %vm1783, %v1751, %v1394
      %v1785 = vsel %vm1783, %v1752, %v1396
      %v1786 = vsel %vm1783, %v1753, %v1398
      %v1787 = vsel %vm1783, %v1754, %v1400
      %v1788 = vsel %vm1783, %v1755, %v1402
      %v1789 = vsel %vm1783, %v1756, %v1404
      %v1790 = vsel %vm1783, %v1757, %v1406
      %v1791 = vsel %vm1783, %v1758, %v1408
      %v1792 = vsel %vm1783, %v1759, %v1410
      %v1793 = vsel %vm1783, %v1760, %v1412
      %v1794 = vsel %vm1783, %v1761, %v1414
      %v1795 = vsel %vm1783, %v1762, %v1416
      %v1796 = vsel %vm1783, %v1763, %v1418
      %v1797 = vsel %vm1783, %v1764, %v1420
      %v1798 = vsel %vm1783, %v1765, %v1422
      %v1799 = vsel %vm1783, %v1766, %v1424
      %v1800 = vsel %vm1783, %v1767, %v1426
      %v1801 = vsel %vm1783, %v1768, %v1428
      %v1802 = vsel %vm1783, %v1769, %v1430
      %v1803 = vsel %vm1783, %v1770, %v1432
      %v1804 = vsel %vm1783, %v1771, %v1434
      %v1805 = vsel %vm1783, %v1772, %v1436
      %v1806 = vsel %vm1783, %v1773, %v1438
      %v1807 = vsel %vm1783, %v1774, %v1440
      %v1808 = vsel %vm1783, %v1775, %v1442
      %v1809 = vsel %vm1783, %v1776, %v1444
      %v1810 = vsel %vm1783, %v1777, %v1446
      %v1811 = vsel %vm1783, %v1778, %v1448
      %v1812 = vsel %vm1783, %v1779, %v1450
      %v1813 = vsel %vm1783, %v1780, %v1452
      %v1814 = vsel %vm1783, %v1781, %v1454
      %v1815 = vsel %vm1783, %v1782, %v1456
      %vm1816 = vcmask 261120
      %v1817 = vsel %vm1816, %v1784, %v1490
      %v1818 = vsel %vm1816, %v1785, %v1492
      %v1819 = vsel %vm1816, %v1786, %v1494
      %v1820 = vsel %vm1816, %v1787, %v1496
      %v1821 = vsel %vm1816, %v1788, %v1498
      %v1822 = vsel %vm1816, %v1789, %v1500
      %v1823 = vsel %vm1816, %v1790, %v1502
      %v1824 = vsel %vm1816, %v1791, %v1504
      %v1825 = vsel %vm1816, %v1792, %v1506
      %v1826 = vsel %vm1816, %v1793, %v1508
      %v1827 = vsel %vm1816, %v1794, %v1510
      %v1828 = vsel %vm1816, %v1795, %v1512
      %v1829 = vsel %vm1816, %v1796, %v1514
      %v1830 = vsel %vm1816, %v1797, %v1516
      %v1831 = vsel %vm1816, %v1798, %v1518
      %v1832 = vsel %vm1816, %v1799, %v1520
      %v1833 = vsel %vm1816, %v1800, %v1522
      %v1834 = vsel %vm1816, %v1801, %v1524
      %v1835 = vsel %vm1816, %v1802, %v1526
      %v1836 = vsel %vm1816, %v1803, %v1528
      %v1837 = vsel %vm1816, %v1804, %v1530
      %v1838 = vsel %vm1816, %v1805, %v1532
      %v1839 = vsel %vm1816, %v1806, %v1534
      %v1840 = vsel %vm1816, %v1807, %v1536
      %v1841 = vsel %vm1816, %v1808, %v1538
      %v1842 = vsel %vm1816, %v1809, %v1540
      %v1843 = vsel %vm1816, %v1810, %v1542
      %v1844 = vsel %vm1816, %v1811, %v1544
      %v1845 = vsel %vm1816, %v1812, %v1546
      %v1846 = vsel %vm1816, %v1813, %v1548
      %v1847 = vsel %vm1816, %v1814, %v1550
      %v1848 = vsel %vm1816, %v1815, %v1552
      %v1849 = vpack.c.bf16 %v1818, %v1817
      %v1850 = vpack.c.bf16 %v1820, %v1819
      %v1851 = vpack.c.bf16 %v1822, %v1821
      %v1852 = vpack.c.bf16 %v1824, %v1823
      %v1853 = vpack.c.bf16 %v1826, %v1825
      %v1854 = vpack.c.bf16 %v1828, %v1827
      %v1855 = vpack.c.bf16 %v1830, %v1829
      %v1856 = vpack.c.bf16 %v1832, %v1831
      %v1857 = vpack.c.bf16 %v1834, %v1833
      %v1858 = vpack.c.bf16 %v1836, %v1835
      %v1859 = vpack.c.bf16 %v1838, %v1837
      %v1860 = vpack.c.bf16 %v1840, %v1839
      %v1861 = vpack.c.bf16 %v1842, %v1841
      %v1862 = vpack.c.bf16 %v1844, %v1843
      %v1863 = vpack.c.bf16 %v1846, %v1845
      %v1864 = vpack.c.bf16 %v1848, %v1847
      %v1865 = vld [vmem:[%s1] sm:$0xf]
      %v1866 = vld [vmem:[%s1 + $0x4] sm:$0xf]
      %v1867 = vld [vmem:[%s1 + $0x8] sm:$0xf]
      %v1868 = vld [vmem:[%s1 + $0xc] sm:$0xf]
      %v1869 = vld [vmem:[%s1 + $0x10] sm:$0x3]
      %v1875 = vunpack.c.l.b16 %v1865
      %v1876 = vunpack.c.l.b16 %v1866
      %v1877 = vunpack.c.l.b16 %v1867
      %v1878 = vunpack.c.l.b16 %v1868
      %v1879 = vunpack.c.l.b16 %v1869
      %v1880 = vpack.c.b16 %v1876, %v1875
      %v1881 = vpack.c.b16 %v1878, %v1877
      %v1882 = vpack.c.b16 %v1879, %v1879
      %vm1885 = vcmask 293888
      %v1887 = vsel %vm1885, %v1849, 0
      %v1890 = vsel %vm1885, %v1850, 0
      %v1893 = vsel %vm1885, %v1851, 0
      %v1896 = vsel %vm1885, %v1852, 0
      %v1899 = vsel %vm1885, %v1853, 0
      %v1902 = vsel %vm1885, %v1854, 0
      %v1905 = vsel %vm1885, %v1855, 0
      %v1908 = vsel %vm1885, %v1856, 0
      %v1911 = vsel %vm1885, %v1857, 0
      %v1914 = vsel %vm1885, %v1858, 0
      %v1917 = vsel %vm1885, %v1859, 0
      %v1920 = vsel %vm1885, %v1860, 0
      %v1923 = vsel %vm1885, %v1861, 0
      %v1926 = vsel %vm1885, %v1862, 0
      %v1929 = vsel %vm1885, %v1863, 0
      %v1932 = vsel %vm1885, %v1864, 0
      %vm1934 = vcmask 1041408
      %v1936 = vsel %vm1934, %v1882, 0
      %1938 = vmatprep.subr.bf16.mxu0 0
      %1939 = vmatpush1.bf16.msra.mxu0 %v1880
      %1940 = vmatprep.subr.bf16.mxu0 0
      %1941 = vmatpush1.bf16.msra.mxu0 %v1881
      %1942 = vmatprep.subr.bf16.mxu0 0
      %1943 = vmatpush1.bf16.msra.mxu0 %v1936
      %1944 = vmatprep.subr.bf16.mxu0 0
      %1945 = vmatpush1.bf16.msra.mxu0 0
      %1946 = vmatprep.subr.bf16.mxu0 0
      %1947 = vmatpush1.bf16.msra.mxu0 0
      %1948 = vmatprep.subr.bf16.mxu0 0
      %1949 = vmatpush1.bf16.msra.mxu0 0
      %1950 = vmatprep.subr.bf16.mxu0 0
      %1951 = vmatpush1.bf16.msra.mxu0 0
      %1952 = vmatprep.subr.bf16.mxu0 0
      %1953 = vmatpush1.bf16.msra.mxu0 0
      %1954 = vmatprep.subr.bf16.mxu0 0
      %1955 = vmatpush1.bf16.msra.mxu0 0
      %1956 = vmatprep.subr.bf16.mxu0 0
      %1957 = vmatpush1.bf16.msra.mxu0 0
      %1958 = vmatprep.subr.bf16.mxu0 0
      %1959 = vmatpush1.bf16.msra.mxu0 0
      %1960 = vmatprep.subr.bf16.mxu0 0
      %1961 = vmatpush1.bf16.msra.mxu0 0
      %1962 = vmatprep.subr.bf16.mxu0 0
      %1963 = vmatpush1.bf16.msra.mxu0 0
      %1964 = vmatprep.subr.bf16.mxu0 0
      %1965 = vmatpush1.bf16.msra.mxu0 0
      %1966 = vmatprep.subr.bf16.mxu0 0
      %1967 = vmatpush1.bf16.msra.mxu0 0
      %1968 = vmatprep.subr.bf16.mxu0 0
      %1969 = vmatpush1.bf16.msra.mxu0 0
      %1970 = vmatprep.mubr.bf16.mxu0 0
      %1971 = vmatmul.mubr.bf16.gmra.mrb[0].mxu0 %v1887
      %v1972 = vpop.f32.mrb[0].mxu0
      %v1973 = vadd.f32 0.0, %v1972
      %v1974 = vpop.f32.mrb[0].mxu0
      %v1975 = vpop.f32.mrb[0].mxu0
      %v1976 = vadd.f32 0.0, %v1975
      %v1977 = vpop.f32.mrb[0].mxu0
      %1978 = vmatprep.mubr.bf16.mxu0 0
      %1979 = vmatmul.mubr.bf16.gmra.mrb[0].mxu0 %v1890
      %v1980 = vpop.f32.mrb[0].mxu0
      %v1981 = vadd.f32 0.0, %v1980
      %v1982 = vpop.f32.mrb[0].mxu0
      %v1983 = vpop.f32.mrb[0].mxu0
      %v1984 = vadd.f32 0.0, %v1983
      %v1985 = vpop.f32.mrb[0].mxu0
      %1986 = vmatprep.mubr.bf16.mxu0 0
      %1987 = vmatmul.mubr.bf16.gmra.mrb[0].mxu0 %v1893
      %v1988 = vpop.f32.mrb[0].mxu0
      %v1989 = vadd.f32 0.0, %v1988
      %v1990 = vpop.f32.mrb[0].mxu0
      %v1991 = vpop.f32.mrb[0].mxu0
      %v1992 = vadd.f32 0.0, %v1991
      %v1993 = vpop.f32.mrb[0].mxu0
      %1994 = vmatprep.mubr.bf16.mxu0 0
      %1995 = vmatmul.mubr.bf16.gmra.mrb[0].mxu0 %v1896
      %v1996 = vpop.f32.mrb[0].mxu0
      %v1997 = vadd.f32 0.0, %v1996
      %v1998 = vpop.f32.mrb[0].mxu0
      %v1999 = vpop.f32.mrb[0].mxu0
      %v2000 = vadd.f32 0.0, %v1999
      %v2001 = vpop.f32.mrb[0].mxu0
      %2002 = vmatprep.mubr.bf16.mxu0 0
      %2003 = vmatmul.mubr.bf16.gmra.mrb[0].mxu0 %v1899
      %v2004 = vpop.f32.mrb[0].mxu0
      %v2005 = vadd.f32 0.0, %v2004
      %v2006 = vpop.f32.mrb[0].mxu0
      %v2007 = vpop.f32.mrb[0].mxu0
      %v2008 = vadd.f32 0.0, %v2007
      %v2009 = vpop.f32.mrb[0].mxu0
      %2010 = vmatprep.mubr.bf16.mxu0 0
      %2011 = vmatmul.mubr.bf16.gmra.mrb[0].mxu0 %v1902
      %v2012 = vpop.f32.mrb[0].mxu0
      %v2013 = vadd.f32 0.0, %v2012
      %v2014 = vpop.f32.mrb[0].mxu0
      %v2015 = vpop.f32.mrb[0].mxu0
      %v2016 = vadd.f32 0.0, %v2015
      %v2017 = vpop.f32.mrb[0].mxu0
      %2018 = vmatprep.mubr.bf16.mxu0 0
      %2019 = vmatmul.mubr.bf16.gmra.mrb[0].mxu0 %v1905
      %v2020 = vpop.f32.mrb[0].mxu0
      %v2021 = vadd.f32 0.0, %v2020
      %v2022 = vpop.f32.mrb[0].mxu0
      %v2023 = vpop.f32.mrb[0].mxu0
      %v2024 = vadd.f32 0.0, %v2023
      %v2025 = vpop.f32.mrb[0].mxu0
      %2026 = vmatprep.mubr.bf16.mxu0 0
      %2027 = vmatmul.mubr.bf16.gmra.mrb[0].mxu0 %v1908
      %v2028 = vpop.f32.mrb[0].mxu0
      %v2029 = vadd.f32 0.0, %v2028
      %v2030 = vpop.f32.mrb[0].mxu0
      %v2031 = vpop.f32.mrb[0].mxu0
      %v2032 = vadd.f32 0.0, %v2031
      %v2033 = vpop.f32.mrb[0].mxu0
      %2034 = vmatprep.mubr.bf16.mxu0 0
      %2035 = vmatmul.mubr.bf16.gmra.mrb[0].mxu0 %v1911
      %v2036 = vpop.f32.mrb[0].mxu0
      %v2037 = vadd.f32 0.0, %v2036
      %v2038 = vpop.f32.mrb[0].mxu0
      %v2039 = vpop.f32.mrb[0].mxu0
      %v2040 = vadd.f32 0.0, %v2039
      %v2041 = vpop.f32.mrb[0].mxu0
      %2042 = vmatprep.mubr.bf16.mxu0 0
      %2043 = vmatmul.mubr.bf16.gmra.mrb[0].mxu0 %v1914
      %v2044 = vpop.f32.mrb[0].mxu0
      %v2045 = vadd.f32 0.0, %v2044
      %v2046 = vpop.f32.mrb[0].mxu0
      %v2047 = vpop.f32.mrb[0].mxu0
      %v2048 = vadd.f32 0.0, %v2047
      %v2049 = vpop.f32.mrb[0].mxu0
      %2050 = vmatprep.mubr.bf16.mxu0 0
      %2051 = vmatmul.mubr.bf16.gmra.mrb[0].mxu0 %v1917
      %v2052 = vpop.f32.mrb[0].mxu0
      %v2053 = vadd.f32 0.0, %v2052
      %v2054 = vpop.f32.mrb[0].mxu0
      %v2055 = vpop.f32.mrb[0].mxu0
      %v2056 = vadd.f32 0.0, %v2055
      %v2057 = vpop.f32.mrb[0].mxu0
      %2058 = vmatprep.mubr.bf16.mxu0 0
      %2059 = vmatmul.mubr.bf16.gmra.mrb[0].mxu0 %v1920
      %v2060 = vpop.f32.mrb[0].mxu0
      %v2061 = vadd.f32 0.0, %v2060
      %v2062 = vpop.f32.mrb[0].mxu0
      %v2063 = vpop.f32.mrb[0].mxu0
      %v2064 = vadd.f32 0.0, %v2063
      %v2065 = vpop.f32.mrb[0].mxu0
      %2066 = vmatprep.mubr.bf16.mxu0 0
      %2067 = vmatmul.mubr.bf16.gmra.mrb[0].mxu0 %v1923
      %v2068 = vpop.f32.mrb[0].mxu0
      %v2069 = vadd.f32 0.0, %v2068
      %v2070 = vpop.f32.mrb[0].mxu0
      %v2071 = vpop.f32.mrb[0].mxu0
      %v2072 = vadd.f32 0.0, %v2071
      %v2073 = vpop.f32.mrb[0].mxu0
      %2074 = vmatprep.mubr.bf16.mxu0 0
      %2075 = vmatmul.mubr.bf16.gmra.mrb[0].mxu0 %v1926
      %v2076 = vpop.f32.mrb[0].mxu0
      %v2077 = vadd.f32 0.0, %v2076
      %v2078 = vpop.f32.mrb[0].mxu0
      %v2079 = vpop.f32.mrb[0].mxu0
      %v2080 = vadd.f32 0.0, %v2079
      %v2081 = vpop.f32.mrb[0].mxu0
      %2082 = vmatprep.mubr.bf16.mxu0 0
      %2083 = vmatmul.mubr.bf16.gmra.mrb[0].mxu0 %v1929
      %v2084 = vpop.f32.mrb[0].mxu0
      %v2085 = vadd.f32 0.0, %v2084
      %v2086 = vpop.f32.mrb[0].mxu0
      %v2087 = vpop.f32.mrb[0].mxu0
      %v2088 = vadd.f32 0.0, %v2087
      %v2089 = vpop.f32.mrb[0].mxu0
      %2090 = vmatprep.mubr.bf16.mxu0 0
      %2091 = vmatmul.mubr.bf16.gmra.mrb[0].mxu0 %v1932
      %v2092 = vpop.f32.mrb[0].mxu0
      %v2093 = vadd.f32 0.0, %v2092
      %v2094 = vpop.f32.mrb[0].mxu0
      %v2095 = vpop.f32.mrb[0].mxu0
      %v2096 = vadd.f32 0.0, %v2095
      %v2097 = vpop.f32.mrb[0].mxu0
      %2098 = vdwg.mxu0
      %v2099 = vpack.c.bf16 %v1976, %v1973
      %v2100 = vpack.c.bf16 %v1984, %v1981
      %v2101 = vpack.c.bf16 %v1992, %v1989
      %v2102 = vpack.c.bf16 %v2000, %v1997
      %v2103 = vpack.c.bf16 %v2008, %v2005
      %v2104 = vpack.c.bf16 %v2016, %v2013
      %v2105 = vpack.c.bf16 %v2024, %v2021
      %v2106 = vpack.c.bf16 %v2032, %v2029
      %v2107 = vpack.c.bf16 %v2040, %v2037
      %v2108 = vpack.c.bf16 %v2048, %v2045
      %v2109 = vpack.c.bf16 %v2056, %v2053
      %v2110 = vpack.c.bf16 %v2064, %v2061
      %v2111 = vpack.c.bf16 %v2072, %v2069
      %v2112 = vpack.c.bf16 %v2080, %v2077
      %v2113 = vpack.c.bf16 %v2088, %v2085
      %v2114 = vpack.c.bf16 %v2096, %v2093
      %v2131 = vunpack.c.l.b16 %v2099
      %v2132 = vunpack.c.h.b16 %v2099
      %v2133 = vunpack.c.l.b16 %v2100
      %v2134 = vunpack.c.h.b16 %v2100
      %v2135 = vunpack.c.l.b16 %v2101
      %v2136 = vunpack.c.h.b16 %v2101
      %v2137 = vunpack.c.l.b16 %v2102
      %v2138 = vunpack.c.h.b16 %v2102
      %v2139 = vunpack.c.l.b16 %v2103
      %v2140 = vunpack.c.h.b16 %v2103
      %v2141 = vunpack.c.l.b16 %v2104
      %v2142 = vunpack.c.h.b16 %v2104
      %v2143 = vunpack.c.l.b16 %v2105
      %v2144 = vunpack.c.h.b16 %v2105
      %v2145 = vunpack.c.l.b16 %v2106
      %v2146 = vunpack.c.h.b16 %v2106
      %v2147 = vunpack.c.l.b16 %v2107
      %v2148 = vunpack.c.h.b16 %v2107
      %v2149 = vunpack.c.l.b16 %v2108
      %v2150 = vunpack.c.h.b16 %v2108
      %v2151 = vunpack.c.l.b16 %v2109
      %v2152 = vunpack.c.h.b16 %v2109
      %v2153 = vunpack.c.l.b16 %v2110
      %v2154 = vunpack.c.h.b16 %v2110
      %v2155 = vunpack.c.l.b16 %v2111
      %v2156 = vunpack.c.h.b16 %v2111
      %v2157 = vunpack.c.l.b16 %v2112
      %v2158 = vunpack.c.h.b16 %v2112
      %v2159 = vunpack.c.l.b16 %v2113
      %v2160 = vunpack.c.h.b16 %v2113
      %v2161 = vunpack.c.l.b16 %v2114
      %v2162 = vunpack.c.h.b16 %v2114
      %v2163 = vpack.c.b16 %v2131, %v2131
      %v2164 = vpack.c.b16 %v2132, %v2132
      %v2165 = vpack.c.b16 %v2133, %v2133
      %v2166 = vpack.c.b16 %v2134, %v2134
      %v2167 = vpack.c.b16 %v2135, %v2135
      %v2168 = vpack.c.b16 %v2136, %v2136
      %v2169 = vpack.c.b16 %v2137, %v2137
      %v2170 = vpack.c.b16 %v2138, %v2138
      %v2171 = vpack.c.b16 %v2139, %v2139
      %v2172 = vpack.c.b16 %v2140, %v2140
      %v2173 = vpack.c.b16 %v2141, %v2141
      %v2174 = vpack.c.b16 %v2142, %v2142
      %v2175 = vpack.c.b16 %v2143, %v2143
      %v2176 = vpack.c.b16 %v2144, %v2144
      %v2177 = vpack.c.b16 %v2145, %v2145
      %v2178 = vpack.c.b16 %v2146, %v2146
      %v2179 = vpack.c.b16 %v2147, %v2147
      %v2180 = vpack.c.b16 %v2148, %v2148
      %v2181 = vpack.c.b16 %v2149, %v2149
      %v2182 = vpack.c.b16 %v2150, %v2150
      %v2183 = vpack.c.b16 %v2151, %v2151
      %v2184 = vpack.c.b16 %v2152, %v2152
      %v2185 = vpack.c.b16 %v2153, %v2153
      %v2186 = vpack.c.b16 %v2154, %v2154
      %v2187 = vpack.c.b16 %v2155, %v2155
      %v2188 = vpack.c.b16 %v2156, %v2156
      %v2189 = vpack.c.b16 %v2157, %v2157
      %v2190 = vpack.c.b16 %v2158, %v2158
      %v2191 = vpack.c.b16 %v2159, %v2159
      %v2192 = vpack.c.b16 %v2160, %v2160
      %v2193 = vpack.c.b16 %v2161, %v2161
      %v2194 = vpack.c.b16 %v2162, %v2162
      %vm2227 = vcmask 27648
      %2228 = vst.msk [vmem:[%s262] sm:$0xf] %vm2227, %v2163
      %2229 = vst.msk [vmem:[%s262 + $0x4] sm:$0xf] %vm2227, %v2164
      %2230 = vst.msk [vmem:[%s262 + $0x8] sm:$0xf] %vm2227, %v2165
      %2231 = vst.msk [vmem:[%s262 + $0xc] sm:$0xf] %vm2227, %v2166
      %2232 = vst.msk [vmem:[%s262 + $0x10] sm:$0xf] %vm2227, %v2167
      %2233 = vst.msk [vmem:[%s262 + $0x14] sm:$0xf] %vm2227, %v2168
      %2234 = vst.msk [vmem:[%s262 + $0x18] sm:$0xf] %vm2227, %v2169
      %2235 = vst.msk [vmem:[%s262 + $0x1c] sm:$0xf] %vm2227, %v2170
      %2236 = vst.msk [vmem:[%s262 + $0x20] sm:$0xf] %vm2227, %v2171
      %2237 = vst.msk [vmem:[%s262 + $0x24] sm:$0xf] %vm2227, %v2172
      %2238 = vst.msk [vmem:[%s262 + $0x28] sm:$0xf] %vm2227, %v2173
      %2239 = vst.msk [vmem:[%s262 + $0x2c] sm:$0xf] %vm2227, %v2174
      %2240 = vst.msk [vmem:[%s262 + $0x30] sm:$0xf] %vm2227, %v2175
      %2241 = vst.msk [vmem:[%s262 + $0x34] sm:$0xf] %vm2227, %v2176
      %2242 = vst.msk [vmem:[%s262 + $0x38] sm:$0xf] %vm2227, %v2177
      %2243 = vst.msk [vmem:[%s262 + $0x3c] sm:$0xf] %vm2227, %v2178
      %2244 = vst.msk [vmem:[%s262 + $0x40] sm:$0xf] %vm2227, %v2179
      %2245 = vst.msk [vmem:[%s262 + $0x44] sm:$0xf] %vm2227, %v2180
      %2246 = vst.msk [vmem:[%s262 + $0x48] sm:$0xf] %vm2227, %v2181
      %2247 = vst.msk [vmem:[%s262 + $0x4c] sm:$0xf] %vm2227, %v2182
      %2248 = vst.msk [vmem:[%s262 + $0x50] sm:$0xf] %vm2227, %v2183
      %2249 = vst.msk [vmem:[%s262 + $0x54] sm:$0xf] %vm2227, %v2184
      %2250 = vst.msk [vmem:[%s262 + $0x58] sm:$0xf] %vm2227, %v2185
      %2251 = vst.msk [vmem:[%s262 + $0x5c] sm:$0xf] %vm2227, %v2186
      %2252 = vst.msk [vmem:[%s262 + $0x60] sm:$0xf] %vm2227, %v2187
      %2253 = vst.msk [vmem:[%s262 + $0x64] sm:$0xf] %vm2227, %v2188
      %2254 = vst.msk [vmem:[%s262 + $0x68] sm:$0xf] %vm2227, %v2189
      %2255 = vst.msk [vmem:[%s262 + $0x6c] sm:$0xf] %vm2227, %v2190
      %2256 = vst.msk [vmem:[%s262 + $0x70] sm:$0xf] %vm2227, %v2191
      %2257 = vst.msk [vmem:[%s262 + $0x74] sm:$0xf] %vm2227, %v2192
      %2258 = vst.msk [vmem:[%s262 + $0x78] sm:$0xf] %vm2227, %v2193
      %2259 = vst.msk [vmem:[%s262 + $0x7c] sm:$0xf] %vm2227, %v2194
      %v2260 = vsel %vm1585, %v1973, 0.0
      %v2261 = vsel %vm1585, %v1976, 0.0
      %v2262 = vadd.f32 %v2260, %v2261
      %v2263 = vsel %vm1585, %v1981, 0.0
      %v2264 = vadd.f32 %v2262, %v2263
      %v2265 = vsel %vm1585, %v1984, 0.0
      %v2266 = vadd.f32 %v2264, %v2265
      %v2267 = vsel %vm1585, %v1989, 0.0
      %v2268 = vadd.f32 %v2266, %v2267
      %v2269 = vsel %vm1585, %v1992, 0.0
      %v2270 = vadd.f32 %v2268, %v2269
      %v2271 = vsel %vm1585, %v1997, 0.0
      %v2272 = vadd.f32 %v2270, %v2271
      %v2273 = vsel %vm1585, %v2000, 0.0
      %v2274 = vadd.f32 %v2272, %v2273
      %v2275 = vsel %vm1585, %v2005, 0.0
      %v2276 = vadd.f32 %v2274, %v2275
      %v2277 = vsel %vm1585, %v2008, 0.0
      %v2278 = vadd.f32 %v2276, %v2277
      %v2279 = vsel %vm1585, %v2013, 0.0
      %v2280 = vadd.f32 %v2278, %v2279
      %v2281 = vsel %vm1585, %v2016, 0.0
      %v2282 = vadd.f32 %v2280, %v2281
      %v2283 = vsel %vm1585, %v2021, 0.0
      %v2284 = vadd.f32 %v2282, %v2283
      %v2285 = vsel %vm1585, %v2024, 0.0
      %v2286 = vadd.f32 %v2284, %v2285
      %v2287 = vsel %vm1585, %v2029, 0.0
      %v2288 = vadd.f32 %v2286, %v2287
      %v2289 = vsel %vm1585, %v2032, 0.0
      %v2290 = vadd.f32 %v2288, %v2289
      %v2291 = vsel %vm1585, %v2037, 0.0
      %v2292 = vadd.f32 %v2290, %v2291
      %v2293 = vsel %vm1585, %v2040, 0.0
      %v2294 = vadd.f32 %v2292, %v2293
      %v2295 = vsel %vm1585, %v2045, 0.0
      %v2296 = vadd.f32 %v2294, %v2295
      %v2297 = vsel %vm1585, %v2048, 0.0
      %v2298 = vadd.f32 %v2296, %v2297
      %v2299 = vsel %vm1585, %v2053, 0.0
      %v2300 = vadd.f32 %v2298, %v2299
      %v2301 = vsel %vm1585, %v2056, 0.0
      %v2302 = vadd.f32 %v2300, %v2301
      %v2303 = vsel %vm1585, %v2061, 0.0
      %v2304 = vadd.f32 %v2302, %v2303
      %v2305 = vsel %vm1585, %v2064, 0.0
      %v2306 = vadd.f32 %v2304, %v2305
      %v2307 = vsel %vm1585, %v2069, 0.0
      %v2308 = vadd.f32 %v2306, %v2307
      %v2309 = vsel %vm1585, %v2072, 0.0
      %v2310 = vadd.f32 %v2308, %v2309
      %v2311 = vsel %vm1585, %v2077, 0.0
      %v2312 = vadd.f32 %v2310, %v2311
      %v2313 = vsel %vm1585, %v2080, 0.0
      %v2314 = vadd.f32 %v2312, %v2313
      %v2315 = vsel %vm1585, %v2085, 0.0
      %v2316 = vadd.f32 %v2314, %v2315
      %v2317 = vsel %vm1585, %v2088, 0.0
      %v2318 = vadd.f32 %v2316, %v2317
      %v2319 = vsel %vm1585, %v2093, 0.0
      %v2320 = vadd.f32 %v2318, %v2319
      %v2321 = vsel %vm1585, %v2096, 0.0
      %v2322 = vadd.f32 %v2320, %v2321
      %v2323 = vrot.slane %v2322, 4
      %v2324 = vadd.f32 %v2322, %v2323
      %v2325 = vrot.slane %v2324, 2
      %v2326 = vadd.f32 %v2324, %v2325
      %v2327 = vrot.slane %v2326, 1
      %v2328 = vadd.f32 %v2326, %v2327
      %vm2329 = vcmask 24576
      %2330 = vst.msk [vmem:[%s265] sm:$0x1] %vm2329, %v2328
      %v2331 = vmul.f32 %v1973, %v1973
      %v2332 = vmul.f32 %v1976, %v1976
      %v2333 = vmul.f32 %v1981, %v1981
      %v2334 = vmul.f32 %v1984, %v1984
      %v2335 = vmul.f32 %v1989, %v1989
      %v2336 = vmul.f32 %v1992, %v1992
      %v2337 = vmul.f32 %v1997, %v1997
      %v2338 = vmul.f32 %v2000, %v2000
      %v2339 = vmul.f32 %v2005, %v2005
      %v2340 = vmul.f32 %v2008, %v2008
      %v2341 = vmul.f32 %v2013, %v2013
      %v2342 = vmul.f32 %v2016, %v2016
      %v2343 = vmul.f32 %v2021, %v2021
      %v2344 = vmul.f32 %v2024, %v2024
      %v2345 = vmul.f32 %v2029, %v2029
      %v2346 = vmul.f32 %v2032, %v2032
      %v2347 = vmul.f32 %v2037, %v2037
      %v2348 = vmul.f32 %v2040, %v2040
      %v2349 = vmul.f32 %v2045, %v2045
      %v2350 = vmul.f32 %v2048, %v2048
      %v2351 = vmul.f32 %v2053, %v2053
      %v2352 = vmul.f32 %v2056, %v2056
      %v2353 = vmul.f32 %v2061, %v2061
      %v2354 = vmul.f32 %v2064, %v2064
      %v2355 = vmul.f32 %v2069, %v2069
      %v2356 = vmul.f32 %v2072, %v2072
      %v2357 = vmul.f32 %v2077, %v2077
      %v2358 = vmul.f32 %v2080, %v2080
      %v2359 = vmul.f32 %v2085, %v2085
      %v2360 = vmul.f32 %v2088, %v2088
      %v2361 = vmul.f32 %v2093, %v2093
      %v2362 = vmul.f32 %v2096, %v2096
      %v2363 = vsel %vm1585, %v2331, 0.0
      %v2364 = vsel %vm1585, %v2332, 0.0
      %v2365 = vadd.f32 %v2363, %v2364
      %v2366 = vsel %vm1585, %v2333, 0.0
      %v2367 = vadd.f32 %v2365, %v2366
      %v2368 = vsel %vm1585, %v2334, 0.0
      %v2369 = vadd.f32 %v2367, %v2368
      %v2370 = vsel %vm1585, %v2335, 0.0
      %v2371 = vadd.f32 %v2369, %v2370
      %v2372 = vsel %vm1585, %v2336, 0.0
      %v2373 = vadd.f32 %v2371, %v2372
      %v2374 = vsel %vm1585, %v2337, 0.0
      %v2375 = vadd.f32 %v2373, %v2374
      %v2376 = vsel %vm1585, %v2338, 0.0
      %v2377 = vadd.f32 %v2375, %v2376
      %v2378 = vsel %vm1585, %v2339, 0.0
      %v2379 = vadd.f32 %v2377, %v2378
      %v2380 = vsel %vm1585, %v2340, 0.0
      %v2381 = vadd.f32 %v2379, %v2380
      %v2382 = vsel %vm1585, %v2341, 0.0
      %v2383 = vadd.f32 %v2381, %v2382
      %v2384 = vsel %vm1585, %v2342, 0.0
      %v2385 = vadd.f32 %v2383, %v2384
      %v2386 = vsel %vm1585, %v2343, 0.0
      %v2387 = vadd.f32 %v2385, %v2386
      %v2388 = vsel %vm1585, %v2344, 0.0
      %v2389 = vadd.f32 %v2387, %v2388
      %v2390 = vsel %vm1585, %v2345, 0.0
      %v2391 = vadd.f32 %v2389, %v2390
      %v2392 = vsel %vm1585, %v2346, 0.0
      %v2393 = vadd.f32 %v2391, %v2392
      %v2394 = vsel %vm1585, %v2347, 0.0
      %v2395 = vadd.f32 %v2393, %v2394
      %v2396 = vsel %vm1585, %v2348, 0.0
      %v2397 = vadd.f32 %v2395, %v2396
      %v2398 = vsel %vm1585, %v2349, 0.0
      %v2399 = vadd.f32 %v2397, %v2398
      %v2400 = vsel %vm1585, %v2350, 0.0
      %v2401 = vadd.f32 %v2399, %v2400
      %v2402 = vsel %vm1585, %v2351, 0.0
      %v2403 = vadd.f32 %v2401, %v2402
      %v2404 = vsel %vm1585, %v2352, 0.0
      %v2405 = vadd.f32 %v2403, %v2404
      %v2406 = vsel %vm1585, %v2353, 0.0
      %v2407 = vadd.f32 %v2405, %v2406
      %v2408 = vsel %vm1585, %v2354, 0.0
      %v2409 = vadd.f32 %v2407, %v2408
      %v2410 = vsel %vm1585, %v2355, 0.0
      %v2411 = vadd.f32 %v2409, %v2410
      %v2412 = vsel %vm1585, %v2356, 0.0
      %v2413 = vadd.f32 %v2411, %v2412
      %v2414 = vsel %vm1585, %v2357, 0.0
      %v2415 = vadd.f32 %v2413, %v2414
      %v2416 = vsel %vm1585, %v2358, 0.0
      %v2417 = vadd.f32 %v2415, %v2416
      %v2418 = vsel %vm1585, %v2359, 0.0
      %v2419 = vadd.f32 %v2417, %v2418
      %v2420 = vsel %vm1585, %v2360, 0.0
      %v2421 = vadd.f32 %v2419, %v2420
      %v2422 = vsel %vm1585, %v2361, 0.0
      %v2423 = vadd.f32 %v2421, %v2422
      %v2424 = vsel %vm1585, %v2362, 0.0
      %v2425 = vadd.f32 %v2423, %v2424
      %v2426 = vrot.slane %v2425, 4
      %v2427 = vadd.f32 %v2425, %v2426
      %v2428 = vrot.slane %v2427, 2
      %v2429 = vadd.f32 %v2427, %v2428
      %v2430 = vrot.slane %v2429, 1
      %v2431 = vadd.f32 %v2429, %v2430
      %2432 = vst.msk [vmem:[%s268] sm:$0x1] %vm2329, %v2431
      %p2433 = scmp.lt.s32.totalorder %s18, 1
      %s2434 = scalar_select %p2433, %s18, 1
      %s2435 = smul.addr %s2434, 32
      %s2436 = smul.addr %s2435, 4
      %s2437 = scalar_lea.vmem %s4, %s2436
      %p2438 = scmp.lt.s32.totalorder %s18, 1
      %s2439 = scalar_select %p2438, %s18, 1
      %s2440 = scalar_lea.vmem %s5, %s2439
      %p2441 = scmp.lt.s32.totalorder %s18, 1
      %s2442 = scalar_select %p2441, %s18, 1
      %s2443 = scalar_lea.vmem %s6, %s2442
      // Predicated region
      $region37: #{res_block_forward.4} parent=35 // pred_check
        %p2444 = pneg %p125
      $region38: #{res_block_forward.4} parent=35 // pred_check_branch
        %2446 = sbr.rel (%p2444) target = $region40
      $region39: #{res_block_forward.4} parent=35 // pred_region
        _
      $region40: #{res_block_forward.4} parent=35 // pred_fallthru
        _
      // Predicated region
      $region41: #{res_block_forward.4} parent=35 // pred_check
        %p2447 = pneg %p151
      $region42: #{res_block_forward.4} parent=35 // pred_check_branch
        %2449 = sbr.rel (%p2447) target = $region44
      $region43: #{res_block_forward.4} parent=35 // pred_region
        _
      $region44: #{res_block_forward.4} parent=35 // pred_fallthru
        _
      // Predicated region
      $region45: #{res_block_forward.4} parent=35 // pred_check
        %p2450 = pneg %p177
      $region46: #{res_block_forward.4} parent=35 // pred_check_branch
        %2452 = sbr.rel (%p2450) target = $region48
      $region47: #{res_block_forward.4} parent=35 // pred_region
        _
      $region48: #{res_block_forward.4} parent=35 // pred_fallthru
        _
    $region36: #{res_block_forward.4} parent=5 // pred_fallthru
      _
    %p2453 = scmp.le.s32.totalorder 2, %s13
    // Predicated region
    $region49: #{res_block_forward.4} parent=5 // pred_check
      %p2454 = pneg %p2453
    $region50: #{res_block_forward.4} parent=5 // pred_check_branch
      %2456 = sbr.rel (%p2454) target = $region52
    $region51: #{res_block_forward.4} parent=5 // pred_region
      %s2457 = ssub.s32 %s13, 2
      // Predicated region
      $region53: #{res_block_forward.4} parent=51 // pred_check
        %p2458 = pneg %p131
      $region54: #{res_block_forward.4} parent=51 // pred_check_branch
        %2460 = sbr.rel (%p2458) target = $region56
      $region55: #{res_block_forward.4} parent=51 // pred_region
        %p2461 = scmp.lt.s32.totalorder %s19, 1
        %s2462 = scalar_select %p2461, %s19, 1
        %s2463 = smul.addr %s2462, 32
        %s2464 = smul.addr %s2463, 4
        %s2465 = scalar_lea.vmem %s4, %s2464
      $region56: #{res_block_forward.4} parent=51 // pred_fallthru
        _
      // Predicated region
      $region57: #{res_block_forward.4} parent=51 // pred_check
        %p2466 = pneg %p157
      $region58: #{res_block_forward.4} parent=51 // pred_check_branch
        %2468 = sbr.rel (%p2466) target = $region60
      $region59: #{res_block_forward.4} parent=51 // pred_region
        %p2469 = scmp.lt.s32.totalorder %s19, 1
        %s2470 = scalar_select %p2469, %s19, 1
        %s2471 = scalar_lea.vmem %s5, %s2470
      $region60: #{res_block_forward.4} parent=51 // pred_fallthru
        _
      // Predicated region
      $region61: #{res_block_forward.4} parent=51 // pred_check
        %p2472 = pneg %p183
      $region62: #{res_block_forward.4} parent=51 // pred_check_branch
        %2474 = sbr.rel (%p2472) target = $region64
      $region63: #{res_block_forward.4} parent=51 // pred_region
        %p2475 = scmp.lt.s32.totalorder %s19, 1
        %s2476 = scalar_select %p2475, %s19, 1
        %s2477 = scalar_lea.vmem %s6, %s2476
      $region64: #{res_block_forward.4} parent=51 // pred_fallthru
        _
    $region52: #{res_block_forward.4} parent=5 // pred_fallthru
      _
  $region6: #{res_block_forward.4} parent=0 // loop_footer
    %s17 = sadd.s32 1, %s13
  $region7: #{res_block_forward.4} parent=0 // loop_footer_branch
    %12 = sbr.rel target = $region3
  $region8: #{res_block_forward.4} parent=0 // loop_exit
    _

// kernel: res_block_forward.5
$region0: #{res_block_forward.5}
  #allocation0 [shape = 'u32[]', space=smem, size = 0x4, offset = 0x4, fixed_abs, tag = 'smem constant byte address 0x4 - core index']
  #allocation1 [shape = 'u32[144,128]{1,0:T(1,128)}', space=vmem, size = 0x12000, scoped, tag = 'internal scratch']
  %s0 = inlined_call_operand.vmem [shape: bf16[1,2048], index: 0, kind: input, shape index: {}]
  %s1 = inlined_call_operand.vmem [shape: f32[1,2048], index: 1, kind: input, shape index: {}]
  %s2 = inlined_call_operand.vmem [shape: f32[1,2048], index: 2, kind: input, shape index: {}]
  %s3 = inlined_call_operand.vmem [shape: f32[1,2048], index: 3, kind: input, shape index: {}]
  %s4 = inlined_call_operand.vmem [shape: f32[1,2048], index: 4, kind: output, shape index: {}]
  %s5 = sld [smem:[#allocation0]]
  $region26: #{res_block_forward.5} parent=0
    _
  %s7 = ssub.s32 1, %s5
  %s8 = scalar_select 0, %s7, %s5
  // Predicated region
  $region2: #{res_block_forward.5} parent=0 // pred_check
    _
  $region3: #{res_block_forward.5} parent=0 // pred_check_branch
    %10 = sbr.rel (0) target = $region5
  $region4: #{res_block_forward.5} parent=0 // pred_region
    _
  $region5: #{res_block_forward.5} parent=0 // pred_fallthru
    _
  // Predicated region
  $region6: #{res_block_forward.5} parent=0 // pred_check
    _
  $region7: #{res_block_forward.5} parent=0 // pred_check_branch
    %12 = sbr.rel (0) target = $region9
  $region8: #{res_block_forward.5} parent=0 // pred_region
    _
  $region9: #{res_block_forward.5} parent=0 // pred_fallthru
    _
  // Predicated region
  $region10: #{res_block_forward.5} parent=0 // pred_check
    _
  $region11: #{res_block_forward.5} parent=0 // pred_check_branch
    %14 = sbr.rel (0) target = $region13
  $region12: #{res_block_forward.5} parent=0 // pred_region
    _
  $region13: #{res_block_forward.5} parent=0 // pred_fallthru
    _
  // Predicated region
  $region14: #{res_block_forward.5} parent=0 // pred_check
    _
  $region15: #{res_block_forward.5} parent=0 // pred_check_branch
    %16 = sbr.rel (0) target = $region17
  $region16: #{res_block_forward.5} parent=0 // pred_region
    _
  $region17: #{res_block_forward.5} parent=0 // pred_fallthru
    _
  %v17 = vld [vmem:[%s0] sm:$0xff]
  %v18 = vld [vmem:[%s0 + $0x8] sm:$0xff]
  %v19 = vunpack.c.l.bf16 %v17
  %v20 = vunpack.c.h.bf16 %v17
  %v21 = vunpack.c.l.bf16 %v18
  %v22 = vunpack.c.h.bf16 %v18
  %v23 = vld [vmem:[%s1] sm:$0xff]
  %v24 = vld [vmem:[%s1 + $0x8] sm:$0xff]
  %v28 = vunpack.c.l.s4 857870592
  %v29 = vunpack.c.0.s8 %v28
  %v30 = vlaneseq
  %v31 = vshrl.u32 %v30, 7
  %v32 = vsub.s32 %v29, %v31
  %v33 = vrot.slane %v23, %v32
  %v35 = vunpack.c.l.s4 2003195204
  %v36 = vunpack.c.0.s8 %v35
  %v37 = vlaneseq
  %v38 = vshrl.u32 %v37, 7
  %v39 = vsub.s32 %v36, %v38
  %v40 = vrot.slane %v23, %v39
  %v42 = vunpack.c.l.s4 857870592
  %v43 = vunpack.c.0.s8 %v42
  %v44 = vlaneseq
  %v45 = vshrl.u32 %v44, 7
  %v46 = vsub.s32 %v43, %v45
  %v47 = vrot.slane %v24, %v46
  %v49 = vunpack.c.l.s4 2003195204
  %v50 = vunpack.c.0.s8 %v49
  %v51 = vlaneseq
  %v52 = vshrl.u32 %v51, 7
  %v53 = vsub.s32 %v50, %v52
  %v54 = vrot.slane %v24, %v53
  %v59 = vmul.f32 %v19, %v33
  %v60 = vmul.f32 %v20, %v40
  %v61 = vmul.f32 %v21, %v47
  %v62 = vmul.f32 %v22, %v54
  %v63 = vld [vmem:[%s2] sm:$0xff]
  %v64 = vld [vmem:[%s2 + $0x8] sm:$0xff]
  %v68 = vunpack.c.l.s4 857870592
  %v69 = vunpack.c.0.s8 %v68
  %v70 = vlaneseq
  %v71 = vshrl.u32 %v70, 7
  %v72 = vsub.s32 %v69, %v71
  %v73 = vrot.slane %v63, %v72
  %v75 = vunpack.c.l.s4 2003195204
  %v76 = vunpack.c.0.s8 %v75
  %v77 = vlaneseq
  %v78 = vshrl.u32 %v77, 7
  %v79 = vsub.s32 %v76, %v78
  %v80 = vrot.slane %v63, %v79
  %v82 = vunpack.c.l.s4 857870592
  %v83 = vunpack.c.0.s8 %v82
  %v84 = vlaneseq
  %v85 = vshrl.u32 %v84, 7
  %v86 = vsub.s32 %v83, %v85
  %v87 = vrot.slane %v64, %v86
  %v89 = vunpack.c.l.s4 2003195204
  %v90 = vunpack.c.0.s8 %v89
  %v91 = vlaneseq
  %v92 = vshrl.u32 %v91, 7
  %v93 = vsub.s32 %v90, %v92
  %v94 = vrot.slane %v64, %v93
  %v99 = vadd.f32 %v59, %v73
  %v100 = vadd.f32 %v60, %v80
  %v101 = vadd.f32 %v61, %v87
  %v102 = vadd.f32 %v62, %v94
  %v103 = vld [vmem:[%s3] sm:$0xff]
  %v104 = vld [vmem:[%s3 + $0x8] sm:$0xff]
  %v108 = vunpack.c.l.s4 857870592
  %v109 = vunpack.c.0.s8 %v108
  %v110 = vlaneseq
  %v111 = vshrl.u32 %v110, 7
  %v112 = vsub.s32 %v109, %v111
  %v113 = vrot.slane %v103, %v112
  %v115 = vunpack.c.l.s4 2003195204
  %v116 = vunpack.c.0.s8 %v115
  %v117 = vlaneseq
  %v118 = vshrl.u32 %v117, 7
  %v119 = vsub.s32 %v116, %v118
  %v120 = vrot.slane %v103, %v119
  %v122 = vunpack.c.l.s4 857870592
  %v123 = vunpack.c.0.s8 %v122
  %v124 = vlaneseq
  %v125 = vshrl.u32 %v124, 7
  %v126 = vsub.s32 %v123, %v125
  %v127 = vrot.slane %v104, %v126
  %v129 = vunpack.c.l.s4 2003195204
  %v130 = vunpack.c.0.s8 %v129
  %v131 = vlaneseq
  %v132 = vshrl.u32 %v131, 7
  %v133 = vsub.s32 %v130, %v132
  %v134 = vrot.slane %v104, %v133
  %v139 = vadd.f32 %v99, %v113
  %v140 = vadd.f32 %v100, %v120
  %v141 = vadd.f32 %v101, %v127
  %v142 = vadd.f32 %v102, %v134
  %v148 = vunpack.c.l.s4 1966171168
  %v149 = vunpack.c.0.s8 %v148
  %v150 = vlaneseq
  %v151 = vshrl.u32 %v150, 7
  %v152 = vsub.s32 %v149, %v151
  %v153 = vrot.slane %v139, %v152
  %v155 = vunpack.c.l.s4 1966171168
  %v156 = vunpack.c.0.s8 %v155
  %v157 = vlaneseq
  %v158 = vshrl.u32 %v157, 7
  %v159 = vsub.s32 %v156, %v158
  %v160 = vrot.slane %v140, %v159
  %v161 = vcombine.low %v153, %v160
  %v163 = vunpack.c.l.s4 1966171168
  %v164 = vunpack.c.0.s8 %v163
  %v165 = vlaneseq
  %v166 = vshrl.u32 %v165, 7
  %v167 = vsub.s32 %v164, %v166
  %v168 = vrot.slane %v141, %v167
  %v170 = vunpack.c.l.s4 1966171168
  %v171 = vunpack.c.0.s8 %v170
  %v172 = vlaneseq
  %v173 = vshrl.u32 %v172, 7
  %v174 = vsub.s32 %v171, %v173
  %v175 = vrot.slane %v142, %v174
  %v176 = vcombine.low %v168, %v175
  %179 = vst [vmem:[%s4] sm:$0xff] %v161
  %180 = vst [vmem:[%s4 + $0x8] sm:$0xff] %v176
  // Predicated region
  $region18: #{res_block_forward.5} parent=0 // pred_check
    _
  $region19: #{res_block_forward.5} parent=0 // pred_check_branch
    %182 = sbr.rel (0) target = $region21
  $region20: #{res_block_forward.5} parent=0 // pred_region
    _
  $region21: #{res_block_forward.5} parent=0 // pred_fallthru
    _
  // Predicated region
  $region22: #{res_block_forward.5} parent=0 // pred_check
    _
  $region23: #{res_block_forward.5} parent=0 // pred_check_branch
    %184 = sbr.rel (0) target = $region25
  $region24: #{res_block_forward.5} parent=0 // pred_region
    _
  $region25: #{res_block_forward.5} parent=0 // pred_fallthru
    _

</llo_original>
